<compile_context>
chip_gen: v7x
topology: tpu7x:2x2x1
jax: 0.10.0
libtpu: 0.0.40
codegen_flags: <defaults>
</compile_context>

<pallas_src>
import numpy as np
import jax
import jax.numpy as jnp
from jax.experimental import pallas as pl
from jax.experimental.pallas import tpu as pltpu  # noqa: F401  (kept for grid/megacore extension)

WIDTH = 64          # `width` in the torch script
LEVEL = 8           # `level` in the torch script
# architecture = [wavelet_idx, act_idx] * n_layers  (4 wavelet-integral layers)
ARCHITECTURE = (0, 0, 0, 0, 0, 0, 0, 0)   # db6 wavelet + gelu everywhere

# ----------------------------- db6 filter bank (pywt conventions) ------------------
_DB6_REC_LO = np.array([
    0.11154074335008017, 0.4946238903983854, 0.7511339080215775, 0.3152503517092432,
    -0.22626469396516913, -0.12976686756709563, 0.09750160558707936, 0.02752286553001629,
    -0.031582039318031156, 0.000553842200993802, 0.004777257511010651, -0.00107730108499558,
], dtype=np.float64)
_L = len(_DB6_REC_LO)
_DB6_DEC_LO = _DB6_REC_LO[::-1].copy()
_DB6_REC_HI = np.array([(-1.0) ** k * _DB6_REC_LO[_L - 1 - k] for k in range(_L)])
_DB6_DEC_HI = _DB6_REC_HI[::-1].copy()

# ----------------------------- activations -----------------------------------------
def _gelu(x):
    # tanh-approx GELU (torch default is exact erf; tanh keeps the transcendental on the EUP)
    c = 0.7978845608028654  # sqrt(2/pi)
    return 0.5 * x * (1.0 + jnp.tanh(c * (x + 0.044715 * x * x * x)))

def _elu(x):
    return jnp.where(x > 0, x, jnp.exp(x) - 1.0)

def _leaky_relu(x):
    return jnp.where(x >= 0, x, 0.01 * x)

def _selu(x):
    alpha, scale = 1.6732632423543772, 1.0507009873554805
    return scale * jnp.where(x > 0, x, alpha * (jnp.exp(x) - 1.0))

def _sigmoid(x):
    return jax.nn.sigmoid(x)

_ACTIVATIONS = (_gelu, _elu, _leaky_relu, _selu, _sigmoid)

# ----------------------------- composite DWT / IDWT operators (numpy, build-time) ---
def _analysis_level_mats(n):
    """Per-level banded matrices: signal (n,) @ [Lo | Hi] = one DWT level with
    pytorch_wavelets 'symmetric' padding folded in."""
    outsize = (n + _L - 1) // 2
    p = 2 * (outsize - 1) - n + _L
    pad_l = p // 2
    n_pad = n + p
    P = np.zeros((n, n_pad), np.float64)
    for jp in range(n_pad):
        if jp < pad_l:
            src = pad_l - 1 - jp
        elif jp < pad_l + n:
            src = jp - pad_l
        else:
            src = n - 1 - (jp - pad_l - n)
        P[src, jp] = 1.0
    h0f = _DB6_DEC_LO[::-1]   # conv2d is x-corr; pytorch_wavelets flips dec filters
    h1f = _DB6_DEC_HI[::-1]
    M = np.zeros((n_pad, 2 * outsize), np.float64)
    for j in range(outsize):
        for k in range(_L):
            M[2 * j + k, j] = h0f[k]
            M[2 * j + k, outsize + j] = h1f[k]
    F = P @ M
    return F[:, :outsize], F[:, outsize:]


def _synthesis_level_mat(n_in):
    """[lo | hi] @ M = one inverse DWT level (conv_transpose, stride 2, pad L-2)."""
    n_out = 2 * n_in + 2 - _L
    m = np.zeros((2 * n_in, n_out), np.float64)
    for k in range(n_in):
        for t in range(_L):
            nidx = t - (_L - 2) + 2 * k
            if 0 <= nidx < n_out:
                m[k, nidx] = _DB6_REC_LO[t]
                m[n_in + k, nidx] = _DB6_REC_HI[t]
    return m


def _build_wavelet_operators(s, n_levels, batch):
    """Compose all DWT/IDWT levels, then split into:
         P_k   (s*B, s*B)        : precomposed pass-through (unmodified detail levels)
         A_pad (2*modes1*8, s*B) : analysis rows for the modified blocks (approx +
                                   coarsest detail), each mode padded to 8 rows
         S_pad (s*B, 2*modes1*8) : matching synthesis columns
       Activation-slab rows are ordered (x-major, batch-minor): row = x*B + b."""
    cur = np.eye(s, dtype=np.float64)
    details = []
    for _ in range(n_levels):
        n = cur.shape[1]
        Lo, Hi = _analysis_level_mats(n)
        details.append(cur @ Hi)     # detail at this level, as a matrix acting on x
        cur = cur @ Lo               # approx passed to the next level
    approx_mat = cur                 # (s, modes1)
    modes1 = approx_mat.shape[1]
    det_lens = [d.shape[1] for d in details]          # finest .. coarsest
    assert det_lens[-1] == modes1

    T = modes1 + int(sum(det_lens))
    # coefficient layout: [approx, detail_J (coarsest), detail_{J-1}, ..., detail_1]
    Acomp = np.zeros((s, T), np.float64)
    Acomp[:, :modes1] = approx_mat
    starts = {}
    off = modes1
    for j in range(n_levels, 0, -1):
        lj = det_lens[j - 1]
        starts[j] = off
        Acomp[:, off:off + lj] = details[j - 1]
        off += lj
    assert off == T

    # composite synthesis: run the IDWT recursion symbolically on selector matrices
    Mlo = np.zeros((T, modes1), np.float64)
    Mlo[:modes1, :modes1] = np.eye(modes1)
    for j in range(n_levels, 0, -1):
        lj = det_lens[j - 1]
        Mhi = np.zeros((T, lj), np.float64)
        Mhi[starts[j]:starts[j] + lj, :] = np.eye(lj)
        if Mlo.shape[1] > lj:
            Mlo = Mlo[:, :lj]
        Mlo = np.hstack([Mlo, Mhi]) @ _synthesis_level_mat(lj)
    assert Mlo.shape[1] == s, Mlo.shape

    m2 = 2 * modes1                       # modified blocks: approx + coarsest detail
    pad_rows = ((batch + 7) // 8) * 8     # pad each mode block to a full sublane tile
    A_pad = np.zeros((m2 * pad_rows, s * batch), np.float64)
    S_pad = np.zeros((s * batch, m2 * pad_rows), np.float64)
    for t in range(m2):
        for b in range(batch):
            A_pad[t * pad_rows + b, b::batch] = Acomp[:, t]
            S_pad[b::batch, t * pad_rows + b] = Mlo[t, :]
    # pass-through: all coefficients with index >= 2*modes1 go straight through
    P_sp = Acomp[:, m2:] @ Mlo[m2:, :]                          # (s, s), row-vector conv
    P_k = np.kron(P_sp.T, np.eye(batch, dtype=np.float64))      # (s*B, s*B)

    return (jnp.asarray(A_pad, jnp.float32), jnp.asarray(S_pad, jnp.float32),
            jnp.asarray(P_k, jnp.float32), modes1, pad_rows)


# ----------------------------- fused forward kernel --------------------------------
def _make_wno_kernel(n_layers, acts, modes1, pad_rows, width):
    m2 = 2 * modes1

    def kernel(xin_ref, fc0w_ref, fc0b_ref, ap_ref, sp_ref, pp_ref,
               w12_ref, cw_ref, cb_ref, fc1w_ref, fc1b_ref, fc2w_ref, fc2b_ref,
               out_ref):
        f32, bf16 = jnp.float32, jnp.bfloat16
        # lifting: fc0 on (s*B, 2) rows, channels land on lanes
        v = jnp.dot(xin_ref[...], fc0w_ref[...], preferred_element_type=f32) + fc0b_ref[...]

        for i in range(n_layers):
            act = acts[i]
            v_bf = v.astype(bf16)

            # local linear branch (1x1 Conv1d): per-row channel mix (bf16 MXU, f32 acc)
            x2 = jnp.dot(v_bf, cw_ref[i], preferred_element_type=f32) + cb_ref[i]

            # wavelet branch, modified modes only: A_mod @ v -> (2*modes1*pad, width)
            cm = jnp.dot(ap_ref[...], v, preferred_element_type=f32)
            # tile-aligned regroup to (mode, pad_rows, width); padded rows are zero
            cm3 = cm.reshape(m2, pad_rows, width).astype(bf16)
            # mul1d on approx (weights1) + coarsest detail (weights2): ONE batched einsum
            mod = jnp.einsum('mbi,mio->mbo', cm3, w12_ref[i],
                             preferred_element_type=f32)
            # pass-through path precomposed into P; synthesize modified modes and add
            x1 = (jnp.dot(pp_ref[...], v, preferred_element_type=f32)
                  + jnp.dot(sp_ref[...], mod.reshape(m2 * pad_rows, width),
                            preferred_element_type=f32))

            u = x1 + x2
            if i == n_layers - 1:
                h = (jnp.dot(u.astype(bf16), fc1w_ref[...], preferred_element_type=f32)
                     + fc1b_ref[...])
                h = act(h)
                # fc2 has out-dim 1: VPU multiply + lane reduction (no padded MXU op)
                out_ref[...] = (jnp.sum(h * fc2w_ref[...], axis=-1, keepdims=True)
                                + fc2b_ref[...])
            else:
                v = act(u)

    return kernel


# ----------------------------- parameters & forward ---------------------------------
def init_params(key, width, modes1, architecture):
    # NOTE: placeholder init ranges (do not match torch nn.Linear/Conv1d defaults).
    n_layers = len(architecture) // 2
    keys = jax.random.split(key, 8)
    scale = 1.0 / (width * width)
    m2 = 2 * modes1
    return {
        'fc0_w': jax.random.uniform(keys[0], (2, width), jnp.float32, -0.5, 0.5),
        'fc0_b': jax.random.uniform(keys[1], (1, width), jnp.float32, -0.5, 0.5),
        'fc1_w': jax.random.uniform(keys[2], (width, 128), jnp.float32, -0.1, 0.1),
        'fc1_b': jnp.zeros((1, 128), jnp.float32),
        'fc2_w': jax.random.uniform(keys[3], (1, 128), jnp.float32, -0.1, 0.1),  # row vector
        'fc2_b': jnp.zeros((1, 1), jnp.float32),
        # spectral weights per layer: [weights1 (approx modes); weights2 (coarsest detail)]
        'w12': scale * jax.random.uniform(keys[4], (n_layers, m2, width, width), jnp.float32),
        # 1x1 conv weights as (layer, in, out) and bias (layer, 1, out)
        'cw': jax.random.uniform(keys[5], (n_layers, width, width), jnp.float32, -0.1, 0.1),
        'cb': jax.random.uniform(keys[6], (n_layers, 1, width), jnp.float32, -0.1, 0.1),
    }


def make_forward(width, level, architecture, s, batch):
    A_pad, S_pad, P_k, modes1, pad_rows = _build_wavelet_operators(s, level, batch)
    n_layers = len(architecture) // 2
    for i in range(n_layers):
        assert int(architecture[2 * i]) == 0, "only db6 filters are hardcoded in this script"
    acts = tuple(_ACTIVATIONS[int(architecture[2 * i + 1])] for i in range(n_layers))

    kernel = _make_wno_kernel(n_layers, acts, modes1, pad_rows, width)
    fused = pl.pallas_call(
        kernel,
        out_shape=jax.ShapeDtypeStruct((s * batch, 1), jnp.float32),
    )

    gridx = jnp.linspace(0.0, 1.0, s, dtype=jnp.float32)

    def forward(params, x):
        b = x.shape[0]
        g = jnp.broadcast_to(gridx.reshape(1, s, 1), (b, s, 1))
        xin = jnp.concatenate([x, g], axis=-1)                     # (B, s, 2)
        xin = jnp.transpose(xin, (1, 0, 2)).reshape(s * b, 2)      # rows ordered (x, b)
        bf = jnp.bfloat16
        out = fused(xin, params['fc0_w'], params['fc0_b'],
                    A_pad, S_pad, P_k,
                    params['w12'].astype(bf), params['cw'].astype(bf), params['cb'],
                    params['fc1_w'].astype(bf), params['fc1_b'],
                    params['fc2_w'], params['fc2_b'])
        return jnp.transpose(out.reshape(s, b, 1), (1, 0, 2))      # (B, s, 1)

    return jax.jit(forward), modes1


if __name__ == "__main__":
    key = jax.random.PRNGKey(0)
    batch, s = 2, 64
    fwd, modes1 = make_forward(WIDTH, LEVEL, ARCHITECTURE, s, batch)
    k_param, k_x = jax.random.split(key)
    params = init_params(k_param, WIDTH, modes1, ARCHITECTURE)
    x = jax.random.normal(k_x, (batch, s, 1), jnp.float32)   # (a(x),) over the grid
    out = jax.block_until_ready(fwd(params, x))
    assert out.shape == (batch, s, 1), out.shape
    assert bool(jnp.all(jnp.isfinite(out)))
    print("KERNEL_OK")
</pallas_src>

<mosaic_0001>
module attributes {stable_mosaic.version = 11 : i64} {
  func.func @kernel(%arg0: memref<128x2xf32, #tpu.memory_space<vmem>>, %arg1: memref<2x64xf32, #tpu.memory_space<vmem>>, %arg2: memref<1x64xf32, #tpu.memory_space<vmem>>, %arg3: memref<176x128xf32, #tpu.memory_space<vmem>>, %arg4: memref<128x176xf32, #tpu.memory_space<vmem>>, %arg5: memref<128x128xf32, #tpu.memory_space<vmem>>, %arg6: memref<4x22x64x64xbf16, #tpu.memory_space<vmem>>, %arg7: memref<4x64x64xbf16, #tpu.memory_space<vmem>>, %arg8: memref<4x1x64xf32, #tpu.memory_space<vmem>>, %arg9: memref<64x128xbf16, #tpu.memory_space<vmem>>, %arg10: memref<1x128xf32, #tpu.memory_space<vmem>>, %arg11: memref<1x128xf32, #tpu.memory_space<vmem>>, %arg12: memref<1x1xf32, #tpu.memory_space<vmem>>, %arg13: memref<128x1xf32, #tpu.memory_space<vmem>>) attributes {dimension_semantics = [], scalar_prefetch = 0 : i64, scratch_operands = 0 : i64, tpu.core_type = #tpu.core_type<tc>} {
    %c0 = arith.constant 0 : index
    %c0_0 = arith.constant 0 : index
    %0 = vector.load %arg0[%c0, %c0_0] : memref<128x2xf32, #tpu.memory_space<vmem>>, vector<128x2xf32>
    %c0_1 = arith.constant 0 : index
    %c0_2 = arith.constant 0 : index
    %1 = vector.load %arg1[%c0_1, %c0_2] : memref<2x64xf32, #tpu.memory_space<vmem>>, vector<2x64xf32>
    %cst = arith.constant dense<0.000000e+00> : vector<128x64xf32>
    %2 = tpu.matmul %0, %1, %cst {dimension_numbers = #tpu.dot_dimension_numbers<[1], [0], [0], [1], [0, 0, 1, 1], [], []>} : vector<128x2xf32>, vector<2x64xf32>, vector<128x64xf32> -> vector<128x64xf32>
    %c0_3 = arith.constant 0 : index
    %c0_4 = arith.constant 0 : index
    %3 = vector.load %arg2[%c0_3, %c0_4] : memref<1x64xf32, #tpu.memory_space<vmem>>, vector<1x64xf32>
    %4 = vector.broadcast %3 : vector<1x64xf32> to vector<128x64xf32>
    %5 = arith.addf %2, %4 : vector<128x64xf32>
    %6 = arith.truncf %5 : vector<128x64xf32> to vector<128x64xbf16>
    %c0_5 = arith.constant 0 : index
    %c0_6 = arith.constant 0 : index
    %c0_7 = arith.constant 0 : index
    %7 = vector.load %arg7[%c0_5, %c0_6, %c0_7] : memref<4x64x64xbf16, #tpu.memory_space<vmem>>, vector<1x64x64xbf16>
    %8 = vector.shape_cast %7 : vector<1x64x64xbf16> to vector<64x64xbf16>
    %cst_8 = arith.constant dense<0.000000e+00> : vector<128x64xf32>
    %9 = tpu.matmul %6, %8, %cst_8 {dimension_numbers = #tpu.dot_dimension_numbers<[1], [0], [0], [1], [0, 0, 1, 1], [], []>} : vector<128x64xbf16>, vector<64x64xbf16>, vector<128x64xf32> -> vector<128x64xf32>
    %c0_9 = arith.constant 0 : index
    %c0_10 = arith.constant 0 : index
    %c0_11 = arith.constant 0 : index
    %10 = vector.load %arg8[%c0_9, %c0_10, %c0_11] : memref<4x1x64xf32, #tpu.memory_space<vmem>>, vector<1x1x64xf32>
    %11 = vector.shape_cast %10 : vector<1x1x64xf32> to vector<1x64xf32>
    %12 = vector.broadcast %11 : vector<1x64xf32> to vector<128x64xf32>
    %13 = arith.addf %9, %12 : vector<128x64xf32>
    %c0_12 = arith.constant 0 : index
    %c0_13 = arith.constant 0 : index
    %14 = vector.load %arg3[%c0_12, %c0_13] : memref<176x128xf32, #tpu.memory_space<vmem>>, vector<176x128xf32>
    %cst_14 = arith.constant dense<0.000000e+00> : vector<176x64xf32>
    %15 = tpu.matmul %14, %5, %cst_14 {dimension_numbers = #tpu.dot_dimension_numbers<[1], [0], [0], [1], [0, 0, 1, 1], [], []>} : vector<176x128xf32>, vector<128x64xf32>, vector<176x64xf32> -> vector<176x64xf32>
    %16 = vector.shape_cast %15 : vector<176x64xf32> to vector<22x8x64xf32>
    %17 = arith.truncf %16 : vector<22x8x64xf32> to vector<22x8x64xbf16>
    %c0_15 = arith.constant 0 : index
    %c0_16 = arith.constant 0 : index
    %c0_17 = arith.constant 0 : index
    %c0_18 = arith.constant 0 : index
    %18 = vector.load %arg6[%c0_15, %c0_16, %c0_17, %c0_18] : memref<4x22x64x64xbf16, #tpu.memory_space<vmem>>, vector<1x22x64x64xbf16>
    %19 = vector.shape_cast %18 : vector<1x22x64x64xbf16> to vector<22x64x64xbf16>
    "tpu.trace_start"() <{level = 10 : i32, message = "mbi,mio->mbo"}> : () -> ()
    %cst_19 = arith.constant dense<0.000000e+00> : vector<22x8x64xf32>
    %20 = tpu.matmul %17, %19, %cst_19 {dimension_numbers = #tpu.dot_dimension_numbers<[2], [1], [1], [2], [0, 0, 0, 1, 1, 2], [0], [0]>} : vector<22x8x64xbf16>, vector<22x64x64xbf16>, vector<22x8x64xf32> -> vector<22x8x64xf32>
    "tpu.trace_stop"() : () -> ()
    %c0_20 = arith.constant 0 : index
    %c0_21 = arith.constant 0 : index
    %21 = vector.load %arg5[%c0_20, %c0_21] : memref<128x128xf32, #tpu.memory_space<vmem>>, vector<128x128xf32>
    %cst_22 = arith.constant dense<0.000000e+00> : vector<128x64xf32>
    %22 = tpu.matmul %21, %5, %cst_22 {dimension_numbers = #tpu.dot_dimension_numbers<[1], [0], [0], [1], [0, 0, 1, 1], [], []>} : vector<128x128xf32>, vector<128x64xf32>, vector<128x64xf32> -> vector<128x64xf32>
    %c0_23 = arith.constant 0 : index
    %c0_24 = arith.constant 0 : index
    %23 = vector.load %arg4[%c0_23, %c0_24] : memref<128x176xf32, #tpu.memory_space<vmem>>, vector<128x176xf32>
    %24 = vector.shape_cast %20 : vector<22x8x64xf32> to vector<176x64xf32>
    %cst_25 = arith.constant dense<0.000000e+00> : vector<128x64xf32>
    %25 = tpu.matmul %23, %24, %cst_25 {dimension_numbers = #tpu.dot_dimension_numbers<[1], [0], [0], [1], [0, 0, 1, 1], [], []>} : vector<128x176xf32>, vector<176x64xf32>, vector<128x64xf32> -> vector<128x64xf32>
    %26 = arith.addf %22, %25 : vector<128x64xf32>
    %27 = arith.addf %26, %13 : vector<128x64xf32>
    %cst_26 = arith.constant 5.000000e-01 : f32
    %28 = vector.broadcast %cst_26 : f32 to vector<128x64xf32>
    %29 = arith.mulf %28, %27 : vector<128x64xf32>
    %cst_27 = arith.constant 4.471500e-02 : f32
    %30 = vector.broadcast %cst_27 : f32 to vector<128x64xf32>
    %31 = arith.mulf %30, %27 : vector<128x64xf32>
    %32 = arith.mulf %31, %27 : vector<128x64xf32>
    %33 = arith.mulf %32, %27 : vector<128x64xf32>
    %34 = arith.addf %27, %33 : vector<128x64xf32>
    %cst_28 = arith.constant 0.797884583 : f32
    %35 = vector.broadcast %cst_28 : f32 to vector<128x64xf32>
    %36 = arith.mulf %35, %34 : vector<128x64xf32>
    %37 = math.tanh %36 : vector<128x64xf32>
    %cst_29 = arith.constant 1.000000e+00 : f32
    %38 = vector.broadcast %cst_29 : f32 to vector<128x64xf32>
    %39 = arith.addf %38, %37 : vector<128x64xf32>
    %40 = arith.mulf %29, %39 : vector<128x64xf32>
    %41 = arith.truncf %40 : vector<128x64xf32> to vector<128x64xbf16>
    %c1 = arith.constant 1 : index
    %c0_30 = arith.constant 0 : index
    %c0_31 = arith.constant 0 : index
    %42 = vector.load %arg7[%c1, %c0_30, %c0_31] : memref<4x64x64xbf16, #tpu.memory_space<vmem>>, vector<1x64x64xbf16>
    %43 = vector.shape_cast %42 : vector<1x64x64xbf16> to vector<64x64xbf16>
    %cst_32 = arith.constant dense<0.000000e+00> : vector<128x64xf32>
    %44 = tpu.matmul %41, %43, %cst_32 {dimension_numbers = #tpu.dot_dimension_numbers<[1], [0], [0], [1], [0, 0, 1, 1], [], []>} : vector<128x64xbf16>, vector<64x64xbf16>, vector<128x64xf32> -> vector<128x64xf32>
    %c1_33 = arith.constant 1 : index
    %c0_34 = arith.constant 0 : index
    %c0_35 = arith.constant 0 : index
    %45 = vector.load %arg8[%c1_33, %c0_34, %c0_35] : memref<4x1x64xf32, #tpu.memory_space<vmem>>, vector<1x1x64xf32>
    %46 = vector.shape_cast %45 : vector<1x1x64xf32> to vector<1x64xf32>
    %47 = vector.broadcast %46 : vector<1x64xf32> to vector<128x64xf32>
    %48 = arith.addf %44, %47 : vector<128x64xf32>
    %c0_36 = arith.constant 0 : index
    %c0_37 = arith.constant 0 : index
    %49 = vector.load %arg3[%c0_36, %c0_37] : memref<176x128xf32, #tpu.memory_space<vmem>>, vector<176x128xf32>
    %cst_38 = arith.constant dense<0.000000e+00> : vector<176x64xf32>
    %50 = tpu.matmul %49, %40, %cst_38 {dimension_numbers = #tpu.dot_dimension_numbers<[1], [0], [0], [1], [0, 0, 1, 1], [], []>} : vector<176x128xf32>, vector<128x64xf32>, vector<176x64xf32> -> vector<176x64xf32>
    %51 = vector.shape_cast %50 : vector<176x64xf32> to vector<22x8x64xf32>
    %52 = arith.truncf %51 : vector<22x8x64xf32> to vector<22x8x64xbf16>
    %c1_39 = arith.constant 1 : index
    %c0_40 = arith.constant 0 : index
    %c0_41 = arith.constant 0 : index
    %c0_42 = arith.constant 0 : index
    %53 = vector.load %arg6[%c1_39, %c0_40, %c0_41, %c0_42] : memref<4x22x64x64xbf16, #tpu.memory_space<vmem>>, vector<1x22x64x64xbf16>
    %54 = vector.shape_cast %53 : vector<1x22x64x64xbf16> to vector<22x64x64xbf16>
    "tpu.trace_start"() <{level = 10 : i32, message = "mbi,mio->mbo"}> : () -> ()
    %cst_43 = arith.constant dense<0.000000e+00> : vector<22x8x64xf32>
    %55 = tpu.matmul %52, %54, %cst_43 {dimension_numbers = #tpu.dot_dimension_numbers<[2], [1], [1], [2], [0, 0, 0, 1, 1, 2], [0], [0]>} : vector<22x8x64xbf16>, vector<22x64x64xbf16>, vector<22x8x64xf32> -> vector<22x8x64xf32>
    "tpu.trace_stop"() : () -> ()
    %c0_44 = arith.constant 0 : index
    %c0_45 = arith.constant 0 : index
    %56 = vector.load %arg5[%c0_44, %c0_45] : memref<128x128xf32, #tpu.memory_space<vmem>>, vector<128x128xf32>
    %cst_46 = arith.constant dense<0.000000e+00> : vector<128x64xf32>
    %57 = tpu.matmul %56, %40, %cst_46 {dimension_numbers = #tpu.dot_dimension_numbers<[1], [0], [0], [1], [0, 0, 1, 1], [], []>} : vector<128x128xf32>, vector<128x64xf32>, vector<128x64xf32> -> vector<128x64xf32>
    %c0_47 = arith.constant 0 : index
    %c0_48 = arith.constant 0 : index
    %58 = vector.load %arg4[%c0_47, %c0_48] : memref<128x176xf32, #tpu.memory_space<vmem>>, vector<128x176xf32>
    %59 = vector.shape_cast %55 : vector<22x8x64xf32> to vector<176x64xf32>
    %cst_49 = arith.constant dense<0.000000e+00> : vector<128x64xf32>
    %60 = tpu.matmul %58, %59, %cst_49 {dimension_numbers = #tpu.dot_dimension_numbers<[1], [0], [0], [1], [0, 0, 1, 1], [], []>} : vector<128x176xf32>, vector<176x64xf32>, vector<128x64xf32> -> vector<128x64xf32>
    %61 = arith.addf %57, %60 : vector<128x64xf32>
    %62 = arith.addf %61, %48 : vector<128x64xf32>
    %cst_50 = arith.constant 5.000000e-01 : f32
    %63 = vector.broadcast %cst_50 : f32 to vector<128x64xf32>
    %64 = arith.mulf %63, %62 : vector<128x64xf32>
    %cst_51 = arith.constant 4.471500e-02 : f32
    %65 = vector.broadcast %cst_51 : f32 to vector<128x64xf32>
    %66 = arith.mulf %65, %62 : vector<128x64xf32>
    %67 = arith.mulf %66, %62 : vector<128x64xf32>
    %68 = arith.mulf %67, %62 : vector<128x64xf32>
    %69 = arith.addf %62, %68 : vector<128x64xf32>
    %cst_52 = arith.constant 0.797884583 : f32
    %70 = vector.broadcast %cst_52 : f32 to vector<128x64xf32>
    %71 = arith.mulf %70, %69 : vector<128x64xf32>
    %72 = math.tanh %71 : vector<128x64xf32>
    %cst_53 = arith.constant 1.000000e+00 : f32
    %73 = vector.broadcast %cst_53 : f32 to vector<128x64xf32>
    %74 = arith.addf %73, %72 : vector<128x64xf32>
    %75 = arith.mulf %64, %74 : vector<128x64xf32>
    %76 = arith.truncf %75 : vector<128x64xf32> to vector<128x64xbf16>
    %c2 = arith.constant 2 : index
    %c0_54 = arith.constant 0 : index
    %c0_55 = arith.constant 0 : index
    %77 = vector.load %arg7[%c2, %c0_54, %c0_55] : memref<4x64x64xbf16, #tpu.memory_space<vmem>>, vector<1x64x64xbf16>
    %78 = vector.shape_cast %77 : vector<1x64x64xbf16> to vector<64x64xbf16>
    %cst_56 = arith.constant dense<0.000000e+00> : vector<128x64xf32>
    %79 = tpu.matmul %76, %78, %cst_56 {dimension_numbers = #tpu.dot_dimension_numbers<[1], [0], [0], [1], [0, 0, 1, 1], [], []>} : vector<128x64xbf16>, vector<64x64xbf16>, vector<128x64xf32> -> vector<128x64xf32>
    %c2_57 = arith.constant 2 : index
    %c0_58 = arith.constant 0 : index
    %c0_59 = arith.constant 0 : index
    %80 = vector.load %arg8[%c2_57, %c0_58, %c0_59] : memref<4x1x64xf32, #tpu.memory_space<vmem>>, vector<1x1x64xf32>
    %81 = vector.shape_cast %80 : vector<1x1x64xf32> to vector<1x64xf32>
    %82 = vector.broadcast %81 : vector<1x64xf32> to vector<128x64xf32>
    %83 = arith.addf %79, %82 : vector<128x64xf32>
    %c0_60 = arith.constant 0 : index
    %c0_61 = arith.constant 0 : index
    %84 = vector.load %arg3[%c0_60, %c0_61] : memref<176x128xf32, #tpu.memory_space<vmem>>, vector<176x128xf32>
    %cst_62 = arith.constant dense<0.000000e+00> : vector<176x64xf32>
    %85 = tpu.matmul %84, %75, %cst_62 {dimension_numbers = #tpu.dot_dimension_numbers<[1], [0], [0], [1], [0, 0, 1, 1], [], []>} : vector<176x128xf32>, vector<128x64xf32>, vector<176x64xf32> -> vector<176x64xf32>
    %86 = vector.shape_cast %85 : vector<176x64xf32> to vector<22x8x64xf32>
    %87 = arith.truncf %86 : vector<22x8x64xf32> to vector<22x8x64xbf16>
    %c2_63 = arith.constant 2 : index
    %c0_64 = arith.constant 0 : index
    %c0_65 = arith.constant 0 : index
    %c0_66 = arith.constant 0 : index
    %88 = vector.load %arg6[%c2_63, %c0_64, %c0_65, %c0_66] : memref<4x22x64x64xbf16, #tpu.memory_space<vmem>>, vector<1x22x64x64xbf16>
    %89 = vector.shape_cast %88 : vector<1x22x64x64xbf16> to vector<22x64x64xbf16>
    "tpu.trace_start"() <{level = 10 : i32, message = "mbi,mio->mbo"}> : () -> ()
    %cst_67 = arith.constant dense<0.000000e+00> : vector<22x8x64xf32>
    %90 = tpu.matmul %87, %89, %cst_67 {dimension_numbers = #tpu.dot_dimension_numbers<[2], [1], [1], [2], [0, 0, 0, 1, 1, 2], [0], [0]>} : vector<22x8x64xbf16>, vector<22x64x64xbf16>, vector<22x8x64xf32> -> vector<22x8x64xf32>
    "tpu.trace_stop"() : () -> ()
    %c0_68 = arith.constant 0 : index
    %c0_69 = arith.constant 0 : index
    %91 = vector.load %arg5[%c0_68, %c0_69] : memref<128x128xf32, #tpu.memory_space<vmem>>, vector<128x128xf32>
    %cst_70 = arith.constant dense<0.000000e+00> : vector<128x64xf32>
    %92 = tpu.matmul %91, %75, %cst_70 {dimension_numbers = #tpu.dot_dimension_numbers<[1], [0], [0], [1], [0, 0, 1, 1], [], []>} : vector<128x128xf32>, vector<128x64xf32>, vector<128x64xf32> -> vector<128x64xf32>
    %c0_71 = arith.constant 0 : index
    %c0_72 = arith.constant 0 : index
    %93 = vector.load %arg4[%c0_71, %c0_72] : memref<128x176xf32, #tpu.memory_space<vmem>>, vector<128x176xf32>
    %94 = vector.shape_cast %90 : vector<22x8x64xf32> to vector<176x64xf32>
    %cst_73 = arith.constant dense<0.000000e+00> : vector<128x64xf32>
    %95 = tpu.matmul %93, %94, %cst_73 {dimension_numbers = #tpu.dot_dimension_numbers<[1], [0], [0], [1], [0, 0, 1, 1], [], []>} : vector<128x176xf32>, vector<176x64xf32>, vector<128x64xf32> -> vector<128x64xf32>
    %96 = arith.addf %92, %95 : vector<128x64xf32>
    %97 = arith.addf %96, %83 : vector<128x64xf32>
    %cst_74 = arith.constant 5.000000e-01 : f32
    %98 = vector.broadcast %cst_74 : f32 to vector<128x64xf32>
    %99 = arith.mulf %98, %97 : vector<128x64xf32>
    %cst_75 = arith.constant 4.471500e-02 : f32
    %100 = vector.broadcast %cst_75 : f32 to vector<128x64xf32>
    %101 = arith.mulf %100, %97 : vector<128x64xf32>
    %102 = arith.mulf %101, %97 : vector<128x64xf32>
    %103 = arith.mulf %102, %97 : vector<128x64xf32>
    %104 = arith.addf %97, %103 : vector<128x64xf32>
    %cst_76 = arith.constant 0.797884583 : f32
    %105 = vector.broadcast %cst_76 : f32 to vector<128x64xf32>
    %106 = arith.mulf %105, %104 : vector<128x64xf32>
    %107 = math.tanh %106 : vector<128x64xf32>
    %cst_77 = arith.constant 1.000000e+00 : f32
    %108 = vector.broadcast %cst_77 : f32 to vector<128x64xf32>
    %109 = arith.addf %108, %107 : vector<128x64xf32>
    %110 = arith.mulf %99, %109 : vector<128x64xf32>
    %111 = arith.truncf %110 : vector<128x64xf32> to vector<128x64xbf16>
    %c3 = arith.constant 3 : index
    %c0_78 = arith.constant 0 : index
    %c0_79 = arith.constant 0 : index
    %112 = vector.load %arg7[%c3, %c0_78, %c0_79] : memref<4x64x64xbf16, #tpu.memory_space<vmem>>, vector<1x64x64xbf16>
    %113 = vector.shape_cast %112 : vector<1x64x64xbf16> to vector<64x64xbf16>
    %cst_80 = arith.constant dense<0.000000e+00> : vector<128x64xf32>
    %114 = tpu.matmul %111, %113, %cst_80 {dimension_numbers = #tpu.dot_dimension_numbers<[1], [0], [0], [1], [0, 0, 1, 1], [], []>} : vector<128x64xbf16>, vector<64x64xbf16>, vector<128x64xf32> -> vector<128x64xf32>
    %c3_81 = arith.constant 3 : index
    %c0_82 = arith.constant 0 : index
    %c0_83 = arith.constant 0 : index
    %115 = vector.load %arg8[%c3_81, %c0_82, %c0_83] : memref<4x1x64xf32, #tpu.memory_space<vmem>>, vector<1x1x64xf32>
    %116 = vector.shape_cast %115 : vector<1x1x64xf32> to vector<1x64xf32>
    %117 = vector.broadcast %116 : vector<1x64xf32> to vector<128x64xf32>
    %118 = arith.addf %114, %117 : vector<128x64xf32>
    %c0_84 = arith.constant 0 : index
    %c0_85 = arith.constant 0 : index
    %119 = vector.load %arg3[%c0_84, %c0_85] : memref<176x128xf32, #tpu.memory_space<vmem>>, vector<176x128xf32>
    %cst_86 = arith.constant dense<0.000000e+00> : vector<176x64xf32>
    %120 = tpu.matmul %119, %110, %cst_86 {dimension_numbers = #tpu.dot_dimension_numbers<[1], [0], [0], [1], [0, 0, 1, 1], [], []>} : vector<176x128xf32>, vector<128x64xf32>, vector<176x64xf32> -> vector<176x64xf32>
    %121 = vector.shape_cast %120 : vector<176x64xf32> to vector<22x8x64xf32>
    %122 = arith.truncf %121 : vector<22x8x64xf32> to vector<22x8x64xbf16>
    %c3_87 = arith.constant 3 : index
    %c0_88 = arith.constant 0 : index
    %c0_89 = arith.constant 0 : index
    %c0_90 = arith.constant 0 : index
    %123 = vector.load %arg6[%c3_87, %c0_88, %c0_89, %c0_90] : memref<4x22x64x64xbf16, #tpu.memory_space<vmem>>, vector<1x22x64x64xbf16>
    %124 = vector.shape_cast %123 : vector<1x22x64x64xbf16> to vector<22x64x64xbf16>
    "tpu.trace_start"() <{level = 10 : i32, message = "mbi,mio->mbo"}> : () -> ()
    %cst_91 = arith.constant dense<0.000000e+00> : vector<22x8x64xf32>
    %125 = tpu.matmul %122, %124, %cst_91 {dimension_numbers = #tpu.dot_dimension_numbers<[2], [1], [1], [2], [0, 0, 0, 1, 1, 2], [0], [0]>} : vector<22x8x64xbf16>, vector<22x64x64xbf16>, vector<22x8x64xf32> -> vector<22x8x64xf32>
    "tpu.trace_stop"() : () -> ()
    %c0_92 = arith.constant 0 : index
    %c0_93 = arith.constant 0 : index
    %126 = vector.load %arg5[%c0_92, %c0_93] : memref<128x128xf32, #tpu.memory_space<vmem>>, vector<128x128xf32>
    %cst_94 = arith.constant dense<0.000000e+00> : vector<128x64xf32>
    %127 = tpu.matmul %126, %110, %cst_94 {dimension_numbers = #tpu.dot_dimension_numbers<[1], [0], [0], [1], [0, 0, 1, 1], [], []>} : vector<128x128xf32>, vector<128x64xf32>, vector<128x64xf32> -> vector<128x64xf32>
    %c0_95 = arith.constant 0 : index
    %c0_96 = arith.constant 0 : index
    %128 = vector.load %arg4[%c0_95, %c0_96] : memref<128x176xf32, #tpu.memory_space<vmem>>, vector<128x176xf32>
    %129 = vector.shape_cast %125 : vector<22x8x64xf32> to vector<176x64xf32>
    %cst_97 = arith.constant dense<0.000000e+00> : vector<128x64xf32>
    %130 = tpu.matmul %128, %129, %cst_97 {dimension_numbers = #tpu.dot_dimension_numbers<[1], [0], [0], [1], [0, 0, 1, 1], [], []>} : vector<128x176xf32>, vector<176x64xf32>, vector<128x64xf32> -> vector<128x64xf32>
    %131 = arith.addf %127, %130 : vector<128x64xf32>
    %132 = arith.addf %131, %118 : vector<128x64xf32>
    %133 = arith.truncf %132 : vector<128x64xf32> to vector<128x64xbf16>
    %c0_98 = arith.constant 0 : index
    %c0_99 = arith.constant 0 : index
    %134 = vector.load %arg9[%c0_98, %c0_99] : memref<64x128xbf16, #tpu.memory_space<vmem>>, vector<64x128xbf16>
    %cst_100 = arith.constant dense<0.000000e+00> : vector<128x128xf32>
    %135 = tpu.matmul %133, %134, %cst_100 {dimension_numbers = #tpu.dot_dimension_numbers<[1], [0], [0], [1], [0, 0, 1, 1], [], []>} : vector<128x64xbf16>, vector<64x128xbf16>, vector<128x128xf32> -> vector<128x128xf32>
    %c0_101 = arith.constant 0 : index
    %c0_102 = arith.constant 0 : index
    %136 = vector.load %arg10[%c0_101, %c0_102] : memref<1x128xf32, #tpu.memory_space<vmem>>, vector<1x128xf32>
    %137 = vector.broadcast %136 : vector<1x128xf32> to vector<128x128xf32>
    %138 = arith.addf %135, %137 : vector<128x128xf32>
    %cst_103 = arith.constant 5.000000e-01 : f32
    %139 = vector.broadcast %cst_103 : f32 to vector<128x128xf32>
    %140 = arith.mulf %139, %138 : vector<128x128xf32>
    %cst_104 = arith.constant 4.471500e-02 : f32
    %141 = vector.broadcast %cst_104 : f32 to vector<128x128xf32>
    %142 = arith.mulf %141, %138 : vector<128x128xf32>
    %143 = arith.mulf %142, %138 : vector<128x128xf32>
    %144 = arith.mulf %143, %138 : vector<128x128xf32>
    %145 = arith.addf %138, %144 : vector<128x128xf32>
    %cst_105 = arith.constant 0.797884583 : f32
    %146 = vector.broadcast %cst_105 : f32 to vector<128x128xf32>
    %147 = arith.mulf %146, %145 : vector<128x128xf32>
    %148 = math.tanh %147 : vector<128x128xf32>
    %cst_106 = arith.constant 1.000000e+00 : f32
    %149 = vector.broadcast %cst_106 : f32 to vector<128x128xf32>
    %150 = arith.addf %149, %148 : vector<128x128xf32>
    %151 = arith.mulf %140, %150 : vector<128x128xf32>
    %c0_107 = arith.constant 0 : index
    %c0_108 = arith.constant 0 : index
    %152 = vector.load %arg11[%c0_107, %c0_108] : memref<1x128xf32, #tpu.memory_space<vmem>>, vector<1x128xf32>
    %153 = vector.broadcast %152 : vector<1x128xf32> to vector<128x128xf32>
    %154 = arith.mulf %151, %153 : vector<128x128xf32>
    %cst_109 = arith.constant dense<0.000000e+00> : vector<128xf32>
    %155 = vector.multi_reduction <add>, %154, %cst_109 [1] : vector<128x128xf32> to vector<128xf32>
    %156 = vector.shape_cast %155 : vector<128xf32> to vector<128x1xf32>
    %c0_110 = arith.constant 0 : index
    %c0_111 = arith.constant 0 : index
    %157 = vector.load %arg12[%c0_110, %c0_111] : memref<1x1xf32, #tpu.memory_space<vmem>>, vector<1x1xf32>
    %158 = vector.broadcast %157 : vector<1x1xf32> to vector<128x1xf32>
    %159 = arith.addf %156, %158 : vector<128x1xf32>
    %c0_112 = arith.constant 0 : index
    %c0_113 = arith.constant 0 : index
    %160 = vector.load %arg13[%c0_112, %c0_113] : memref<128x1xf32, #tpu.memory_space<vmem>>, vector<128x1xf32>
    tpu.vector_store %arg13[%c0_112, %c0_113], %159 {strides = array<i32>} : memref<128x1xf32, #tpu.memory_space<vmem>>, vector<128x1xf32>,
    return
  }
}

</mosaic_0001>

<llo_original>
// kernel: forward.1
$region0: #{forward.1}
  #allocation0 [shape = 'u32[]', space=smem, size = 0x4, offset = 0x4, fixed_abs, tag = 'smem constant byte address 0x4 - core index']
  #allocation1 [shape = 'u32[144,128]{1,0:T(1,128)}', space=vmem, size = 0x12000, scoped, tag = 'internal scratch']
  #allocation2 [shape = 'f32[1,1]{1,0:T(1,128)S(1)}', space=vmem, size = 0x200, scoped, tag = 'scoped memory for forward.1']
  %s0 = inlined_call_operand.vmem [shape: f32[128,2], index: 0, kind: input, shape index: {}]
  %s1 = inlined_call_operand.vmem [shape: f32[2,64], index: 1, kind: input, shape index: {}]
  %s2 = inlined_call_operand.vmem [shape: f32[1,64], index: 2, kind: input, shape index: {}]
  %s3 = inlined_call_operand.vmem [shape: f32[176,128], index: 3, kind: input, shape index: {}]
  %s4 = inlined_call_operand.vmem [shape: f32[128,176], index: 4, kind: input, shape index: {}]
  %s5 = inlined_call_operand.vmem [shape: f32[128,128], index: 5, kind: input, shape index: {}]
  %s6 = inlined_call_operand.vmem [shape: bf16[4,22,64,64], index: 6, kind: input, shape index: {}]
  %s7 = inlined_call_operand.vmem [shape: bf16[4,64,64], index: 7, kind: input, shape index: {}]
  %s8 = inlined_call_operand.vmem [shape: f32[4,1,64], index: 8, kind: input, shape index: {}]
  %s9 = inlined_call_operand.vmem [shape: bf16[64,128], index: 9, kind: input, shape index: {}]
  %s10 = inlined_call_operand.vmem [shape: f32[1,128], index: 10, kind: input, shape index: {}]
  %s11 = inlined_call_operand.vmem [shape: f32[1,128], index: 11, kind: input, shape index: {}]
  %s12 = inlined_call_operand.<no memory space> [shape: f32[1,1], index: 12, kind: input, shape index: {}]
  %s13 = inlined_call_operand.vmem [shape: f32[128,1], index: 13, kind: output, shape index: {}]
  %s14 = sld [smem:[#allocation0]]
  $region62: #{forward.1} parent=0
    _
  %s16 = ssub.s32 1, %s14
  %s17 = scalar_select 0, %s16, %s14
  %v18 = vstv %s12
  %19 = vst [vmem:[#allocation2] sm:$0x1] %v18
  // Predicated region
  $region2: #{forward.1} parent=0 // pred_check
    _
  $region3: #{forward.1} parent=0 // pred_check_branch
    %21 = sbr.rel (0) target = $region5
  $region4: #{forward.1} parent=0 // pred_region
    _
  $region5: #{forward.1} parent=0 // pred_fallthru
    _
  // Predicated region
  $region6: #{forward.1} parent=0 // pred_check
    _
  $region7: #{forward.1} parent=0 // pred_check_branch
    %23 = sbr.rel (0) target = $region9
  $region8: #{forward.1} parent=0 // pred_region
    _
  $region9: #{forward.1} parent=0 // pred_fallthru
    _
  // Predicated region
  $region10: #{forward.1} parent=0 // pred_check
    _
  $region11: #{forward.1} parent=0 // pred_check_branch
    %25 = sbr.rel (0) target = $region13
  $region12: #{forward.1} parent=0 // pred_region
    _
  $region13: #{forward.1} parent=0 // pred_fallthru
    _
  // Predicated region
  $region14: #{forward.1} parent=0 // pred_check
    _
  $region15: #{forward.1} parent=0 // pred_check_branch
    %27 = sbr.rel (0) target = $region17
  $region16: #{forward.1} parent=0 // pred_region
    _
  $region17: #{forward.1} parent=0 // pred_fallthru
    _
  // Predicated region
  $region18: #{forward.1} parent=0 // pred_check
    _
  $region19: #{forward.1} parent=0 // pred_check_branch
    %29 = sbr.rel (0) target = $region21
  $region20: #{forward.1} parent=0 // pred_region
    _
  $region21: #{forward.1} parent=0 // pred_fallthru
    _
  // Predicated region
  $region22: #{forward.1} parent=0 // pred_check
    _
  $region23: #{forward.1} parent=0 // pred_check_branch
    %31 = sbr.rel (0) target = $region25
  $region24: #{forward.1} parent=0 // pred_region
    _
  $region25: #{forward.1} parent=0 // pred_fallthru
    _
  // Predicated region
  $region26: #{forward.1} parent=0 // pred_check
    _
  $region27: #{forward.1} parent=0 // pred_check_branch
    %33 = sbr.rel (0) target = $region29
  $region28: #{forward.1} parent=0 // pred_region
    _
  $region29: #{forward.1} parent=0 // pred_fallthru
    _
  // Predicated region
  $region30: #{forward.1} parent=0 // pred_check
    _
  $region31: #{forward.1} parent=0 // pred_check_branch
    %35 = sbr.rel (0) target = $region33
  $region32: #{forward.1} parent=0 // pred_region
    _
  $region33: #{forward.1} parent=0 // pred_fallthru
    _
  // Predicated region
  $region34: #{forward.1} parent=0 // pred_check
    _
  $region35: #{forward.1} parent=0 // pred_check_branch
    %37 = sbr.rel (0) target = $region37
  $region36: #{forward.1} parent=0 // pred_region
    _
  $region37: #{forward.1} parent=0 // pred_fallthru
    _
  // Predicated region
  $region38: #{forward.1} parent=0 // pred_check
    _
  $region39: #{forward.1} parent=0 // pred_check_branch
    %39 = sbr.rel (0) target = $region41
  $region40: #{forward.1} parent=0 // pred_region
    _
  $region41: #{forward.1} parent=0 // pred_fallthru
    _
  // Predicated region
  $region42: #{forward.1} parent=0 // pred_check
    _
  $region43: #{forward.1} parent=0 // pred_check_branch
    %41 = sbr.rel (0) target = $region45
  $region44: #{forward.1} parent=0 // pred_region
    _
  $region45: #{forward.1} parent=0 // pred_fallthru
    _
  // Predicated region
  $region46: #{forward.1} parent=0 // pred_check
    _
  $region47: #{forward.1} parent=0 // pred_check_branch
    %43 = sbr.rel (0) target = $region49
  $region48: #{forward.1} parent=0 // pred_region
    _
  $region49: #{forward.1} parent=0 // pred_fallthru
    _
  // Predicated region
  $region50: #{forward.1} parent=0 // pred_check
    _
  $region51: #{forward.1} parent=0 // pred_check_branch
    %45 = sbr.rel (0) target = $region53
  $region52: #{forward.1} parent=0 // pred_region
    _
  $region53: #{forward.1} parent=0 // pred_fallthru
    _
  %v47 = vld [vmem:[%s0] sm:$0xff]
  %v48 = vld [vmem:[%s0 + $0x8] sm:$0xff]
  %v49 = vld [vmem:[%s0 + $0x10] sm:$0xff]
  %v50 = vld [vmem:[%s0 + $0x18] sm:$0xff]
  %v51 = vld [vmem:[%s0 + $0x20] sm:$0xff]
  %v52 = vld [vmem:[%s0 + $0x28] sm:$0xff]
  %v53 = vld [vmem:[%s0 + $0x30] sm:$0xff]
  %v54 = vld [vmem:[%s0 + $0x38] sm:$0xff]
  %v55 = vld [vmem:[%s0 + $0x40] sm:$0xff]
  %v56 = vld [vmem:[%s0 + $0x48] sm:$0xff]
  %v57 = vld [vmem:[%s0 + $0x50] sm:$0xff]
  %v58 = vld [vmem:[%s0 + $0x58] sm:$0xff]
  %v59 = vld [vmem:[%s0 + $0x60] sm:$0xff]
  %v60 = vld [vmem:[%s0 + $0x68] sm:$0xff]
  %v61 = vld [vmem:[%s0 + $0x70] sm:$0xff]
  %v62 = vld [vmem:[%s0 + $0x78] sm:$0xff]
  %v63 = vld [vmem:[%s1] sm:$0x3]
  %v64 = vld [vmem:[%s2] sm:$0x1]
  %v66 = vlaneseq
  %v67 = vshrl.u32 %v66, 7
  %v68 = vsub.s32 0, %v67
  %v69 = vrot.slane %v64, %v68
  %vm71 = vcmask 15360
  %v73 = vsel %vm71, %v47, 0
  %v76 = vsel %vm71, %v48, 0
  %v79 = vsel %vm71, %v49, 0
  %v82 = vsel %vm71, %v50, 0
  %v85 = vsel %vm71, %v51, 0
  %v88 = vsel %vm71, %v52, 0
  %v91 = vsel %vm71, %v53, 0
  %v94 = vsel %vm71, %v54, 0
  %v97 = vsel %vm71, %v55, 0
  %v100 = vsel %vm71, %v56, 0
  %v103 = vsel %vm71, %v57, 0
  %v106 = vsel %vm71, %v58, 0
  %v109 = vsel %vm71, %v59, 0
  %v112 = vsel %vm71, %v60, 0
  %v115 = vsel %vm71, %v61, 0
  %v118 = vsel %vm71, %v62, 0
  %vm120 = vcmask 1041408
  %v122 = vsel %vm120, %v63, 0
  %124 = vmatprep.subr.mxu0 0.0
  %125 = vmatpush1.msra.mxu0 %v122
  %126 = vmatprep.subr.mxu0 0.0
  %127 = vmatpush1.msra.mxu0 0.0
  %128 = vmatprep.subr.mxu0 0.0
  %129 = vmatpush1.msra.mxu0 0.0
  %130 = vmatprep.subr.mxu0 0.0
  %131 = vmatpush1.msra.mxu0 0.0
  %132 = vmatprep.subr.mxu0 0.0
  %133 = vmatpush1.msra.mxu0 0.0
  %134 = vmatprep.subr.mxu0 0.0
  %135 = vmatpush1.msra.mxu0 0.0
  %136 = vmatprep.subr.mxu0 0.0
  %137 = vmatpush1.msra.mxu0 0.0
  %138 = vmatprep.subr.mxu0 0.0
  %139 = vmatpush1.msra.mxu0 0.0
  %140 = vmatprep.subr.mxu0 0.0
  %141 = vmatpush1.msra.mxu0 0.0
  %142 = vmatprep.subr.mxu0 0.0
  %143 = vmatpush1.msra.mxu0 0.0
  %144 = vmatprep.subr.mxu0 0.0
  %145 = vmatpush1.msra.mxu0 0.0
  %146 = vmatprep.subr.mxu0 0.0
  %147 = vmatpush1.msra.mxu0 0.0
  %148 = vmatprep.subr.mxu0 0.0
  %149 = vmatpush1.msra.mxu0 0.0
  %150 = vmatprep.subr.mxu0 0.0
  %151 = vmatpush1.msra.mxu0 0.0
  %152 = vmatprep.subr.mxu0 0.0
  %153 = vmatpush1.msra.mxu0 0.0
  %154 = vmatprep.subr.mxu0 0.0
  %155 = vmatpush1.msra.mxu0 0.0
  %156 = vmatprep.subr.mxu0 0.0
  %157 = vmatpush1.msra.mxu0 0.0
  %158 = vmatprep.subr.mxu0 0.0
  %159 = vmatpush1.msra.mxu0 0.0
  %160 = vmatprep.subr.mxu0 0.0
  %161 = vmatpush1.msra.mxu0 0.0
  %162 = vmatprep.subr.mxu0 0.0
  %163 = vmatpush1.msra.mxu0 0.0
  %164 = vmatprep.subr.mxu0 0.0
  %165 = vmatpush1.msra.mxu0 0.0
  %166 = vmatprep.subr.mxu0 0.0
  %167 = vmatpush1.msra.mxu0 0.0
  %168 = vmatprep.subr.mxu0 0.0
  %169 = vmatpush1.msra.mxu0 0.0
  %170 = vmatprep.subr.mxu0 0.0
  %171 = vmatpush1.msra.mxu0 0.0
  %172 = vmatprep.subr.mxu0 0.0
  %173 = vmatpush1.msra.mxu0 0.0
  %174 = vmatprep.subr.mxu0 0.0
  %175 = vmatpush1.msra.mxu0 0.0
  %176 = vmatprep.subr.mxu0 0.0
  %177 = vmatpush1.msra.mxu0 0.0
  %178 = vmatprep.subr.mxu0 0.0
  %179 = vmatpush1.msra.mxu0 0.0
  %180 = vmatprep.subr.mxu0 0.0
  %181 = vmatpush1.msra.mxu0 0.0
  %182 = vmatprep.subr.mxu0 0.0
  %183 = vmatpush1.msra.mxu0 0.0
  %184 = vmatprep.subr.mxu0 0.0
  %185 = vmatpush1.msra.mxu0 0.0
  %186 = vmatprep.subr.mxu0 0.0
  %187 = vmatpush1.msra.mxu0 0.0
  %188 = vmatprep.mubr.f32.mxu0 0.0
  %189 = vmatmul.mubr.f32.gmra.mrb[0].mxu0 %v73
  %v190 = vpop.f32.mrb[0].mxu0
  %v191 = vadd.f32 %v69, %v190
  %v192 = vpop.f32.mrb[0].mxu0
  %193 = vmatprep.mubr.f32.mxu0 0.0
  %194 = vmatmul.mubr.f32.gmra.mrb[0].mxu0 %v76
  %v195 = vpop.f32.mrb[0].mxu0
  %v196 = vadd.f32 %v69, %v195
  %v197 = vpop.f32.mrb[0].mxu0
  %198 = vmatprep.mubr.f32.mxu0 0.0
  %199 = vmatmul.mubr.f32.gmra.mrb[0].mxu0 %v79
  %v200 = vpop.f32.mrb[0].mxu0
  %v201 = vadd.f32 %v69, %v200
  %v202 = vpop.f32.mrb[0].mxu0
  %203 = vmatprep.mubr.f32.mxu0 0.0
  %204 = vmatmul.mubr.f32.gmra.mrb[0].mxu0 %v82
  %v205 = vpop.f32.mrb[0].mxu0
  %v206 = vadd.f32 %v69, %v205
  %v207 = vpop.f32.mrb[0].mxu0
  %208 = vmatprep.mubr.f32.mxu0 0.0
  %209 = vmatmul.mubr.f32.gmra.mrb[0].mxu0 %v85
  %v210 = vpop.f32.mrb[0].mxu0
  %v211 = vadd.f32 %v69, %v210
  %v212 = vpop.f32.mrb[0].mxu0
  %213 = vmatprep.mubr.f32.mxu0 0.0
  %214 = vmatmul.mubr.f32.gmra.mrb[0].mxu0 %v88
  %v215 = vpop.f32.mrb[0].mxu0
  %v216 = vadd.f32 %v69, %v215
  %v217 = vpop.f32.mrb[0].mxu0
  %218 = vmatprep.mubr.f32.mxu0 0.0
  %219 = vmatmul.mubr.f32.gmra.mrb[0].mxu0 %v91
  %v220 = vpop.f32.mrb[0].mxu0
  %v221 = vadd.f32 %v69, %v220
  %v222 = vpop.f32.mrb[0].mxu0
  %223 = vmatprep.mubr.f32.mxu0 0.0
  %224 = vmatmul.mubr.f32.gmra.mrb[0].mxu0 %v94
  %v225 = vpop.f32.mrb[0].mxu0
  %v226 = vadd.f32 %v69, %v225
  %v227 = vpop.f32.mrb[0].mxu0
  %228 = vmatprep.mubr.f32.mxu0 0.0
  %229 = vmatmul.mubr.f32.gmra.mrb[0].mxu0 %v97
  %v230 = vpop.f32.mrb[0].mxu0
  %v231 = vadd.f32 %v69, %v230
  %v232 = vpop.f32.mrb[0].mxu0
  %233 = vmatprep.mubr.f32.mxu0 0.0
  %234 = vmatmul.mubr.f32.gmra.mrb[0].mxu0 %v100
  %v235 = vpop.f32.mrb[0].mxu0
  %v236 = vadd.f32 %v69, %v235
  %v237 = vpop.f32.mrb[0].mxu0
  %238 = vmatprep.mubr.f32.mxu0 0.0
  %239 = vmatmul.mubr.f32.gmra.mrb[0].mxu0 %v103
  %v240 = vpop.f32.mrb[0].mxu0
  %v241 = vadd.f32 %v69, %v240
  %v242 = vpop.f32.mrb[0].mxu0
  %243 = vmatprep.mubr.f32.mxu0 0.0
  %244 = vmatmul.mubr.f32.gmra.mrb[0].mxu0 %v106
  %v245 = vpop.f32.mrb[0].mxu0
  %v246 = vadd.f32 %v69, %v245
  %v247 = vpop.f32.mrb[0].mxu0
  %248 = vmatprep.mubr.f32.mxu0 0.0
  %249 = vmatmul.mubr.f32.gmra.mrb[0].mxu0 %v109
  %v250 = vpop.f32.mrb[0].mxu0
  %v251 = vadd.f32 %v69, %v250
  %v252 = vpop.f32.mrb[0].mxu0
  %253 = vmatprep.mubr.f32.mxu0 0.0
  %254 = vmatmul.mubr.f32.gmra.mrb[0].mxu0 %v112
  %v255 = vpop.f32.mrb[0].mxu0
  %v256 = vadd.f32 %v69, %v255
  %v257 = vpop.f32.mrb[0].mxu0
  %258 = vmatprep.mubr.f32.mxu0 0.0
  %259 = vmatmul.mubr.f32.gmra.mrb[0].mxu0 %v115
  %v260 = vpop.f32.mrb[0].mxu0
  %v261 = vadd.f32 %v69, %v260
  %v262 = vpop.f32.mrb[0].mxu0
  %263 = vmatprep.mubr.f32.mxu0 0.0
  %264 = vmatmul.mubr.f32.gmra.mrb[0].mxu0 %v118
  %v265 = vpop.f32.mrb[0].mxu0
  %v266 = vadd.f32 %v69, %v265
  %v267 = vpop.f32.mrb[0].mxu0
  %268 = vdwg.mxu0
  %v269 = vpack.c.bf16 %v196, %v191
  %v270 = vpack.c.bf16 %v206, %v201
  %v271 = vpack.c.bf16 %v216, %v211
  %v272 = vpack.c.bf16 %v226, %v221
  %v273 = vpack.c.bf16 %v236, %v231
  %v274 = vpack.c.bf16 %v246, %v241
  %v275 = vpack.c.bf16 %v256, %v251
  %v276 = vpack.c.bf16 %v266, %v261
  %v277 = vld [vmem:[%s7] sm:$0xf]
  %v278 = vld [vmem:[%s7 + $0x4] sm:$0xf]
  %v279 = vld [vmem:[%s7 + $0x8] sm:$0xf]
  %v280 = vld [vmem:[%s7 + $0xc] sm:$0xf]
  %v281 = vld [vmem:[%s7 + $0x10] sm:$0xf]
  %v282 = vld [vmem:[%s7 + $0x14] sm:$0xf]
  %v283 = vld [vmem:[%s7 + $0x18] sm:$0xf]
  %v284 = vld [vmem:[%s7 + $0x1c] sm:$0xf]
  %v285 = vld [vmem:[%s8] sm:$0x1]
  %v287 = vlaneseq
  %v288 = vshrl.u32 %v287, 7
  %v289 = vsub.s32 0, %v288
  %v290 = vrot.slane %v285, %v289
  %v300 = vunpack.c.l.b16 %v277
  %v301 = vunpack.c.l.b16 %v278
  %v302 = vunpack.c.l.b16 %v279
  %v303 = vunpack.c.l.b16 %v280
  %v304 = vunpack.c.l.b16 %v281
  %v305 = vunpack.c.l.b16 %v282
  %v306 = vunpack.c.l.b16 %v283
  %v307 = vunpack.c.l.b16 %v284
  %v308 = vpack.c.b16 %v301, %v300
  %v309 = vpack.c.b16 %v303, %v302
  %v310 = vpack.c.b16 %v305, %v304
  %v311 = vpack.c.b16 %v307, %v306
  %vm316 = vcmask 523264
  %v318 = vsel %vm316, %v269, 0
  %v321 = vsel %vm316, %v270, 0
  %v324 = vsel %vm316, %v271, 0
  %v327 = vsel %vm316, %v272, 0
  %v330 = vsel %vm316, %v273, 0
  %v333 = vsel %vm316, %v274, 0
  %v336 = vsel %vm316, %v275, 0
  %v339 = vsel %vm316, %v276, 0
  %341 = vmatprep.subr.bf16.mxu0 0
  %342 = vmatpush1.bf16.msra.mxu0 %v308
  %343 = vmatprep.subr.bf16.mxu0 0
  %344 = vmatpush1.bf16.msra.mxu0 %v309
  %345 = vmatprep.subr.bf16.mxu0 0
  %346 = vmatpush1.bf16.msra.mxu0 %v310
  %347 = vmatprep.subr.bf16.mxu0 0
  %348 = vmatpush1.bf16.msra.mxu0 %v311
  %349 = vmatprep.subr.bf16.mxu0 0
  %350 = vmatpush1.bf16.msra.mxu0 0
  %351 = vmatprep.subr.bf16.mxu0 0
  %352 = vmatpush1.bf16.msra.mxu0 0
  %353 = vmatprep.subr.bf16.mxu0 0
  %354 = vmatpush1.bf16.msra.mxu0 0
  %355 = vmatprep.subr.bf16.mxu0 0
  %356 = vmatpush1.bf16.msra.mxu0 0
  %357 = vmatprep.subr.bf16.mxu0 0
  %358 = vmatpush1.bf16.msra.mxu0 0
  %359 = vmatprep.subr.bf16.mxu0 0
  %360 = vmatpush1.bf16.msra.mxu0 0
  %361 = vmatprep.subr.bf16.mxu0 0
  %362 = vmatpush1.bf16.msra.mxu0 0
  %363 = vmatprep.subr.bf16.mxu0 0
  %364 = vmatpush1.bf16.msra.mxu0 0
  %365 = vmatprep.subr.bf16.mxu0 0
  %366 = vmatpush1.bf16.msra.mxu0 0
  %367 = vmatprep.subr.bf16.mxu0 0
  %368 = vmatpush1.bf16.msra.mxu0 0
  %369 = vmatprep.subr.bf16.mxu0 0
  %370 = vmatpush1.bf16.msra.mxu0 0
  %371 = vmatprep.subr.bf16.mxu0 0
  %372 = vmatpush1.bf16.msra.mxu0 0
  %373 = vmatprep.mubr.bf16.mxu0 0
  %374 = vmatmul.mubr.bf16.gmra.mrb[0].mxu0 %v318
  %v375 = vpop.f32.mrb[0].mxu0
  %v376 = vadd.f32 %v290, %v375
  %v377 = vpop.f32.mrb[0].mxu0
  %v378 = vpop.f32.mrb[0].mxu0
  %v379 = vadd.f32 %v290, %v378
  %v380 = vpop.f32.mrb[0].mxu0
  %381 = vmatprep.mubr.bf16.mxu0 0
  %382 = vmatmul.mubr.bf16.gmra.mrb[0].mxu0 %v321
  %v383 = vpop.f32.mrb[0].mxu0
  %v384 = vadd.f32 %v290, %v383
  %v385 = vpop.f32.mrb[0].mxu0
  %v386 = vpop.f32.mrb[0].mxu0
  %v387 = vadd.f32 %v290, %v386
  %v388 = vpop.f32.mrb[0].mxu0
  %389 = vmatprep.mubr.bf16.mxu0 0
  %390 = vmatmul.mubr.bf16.gmra.mrb[0].mxu0 %v324
  %v391 = vpop.f32.mrb[0].mxu0
  %v392 = vadd.f32 %v290, %v391
  %v393 = vpop.f32.mrb[0].mxu0
  %v394 = vpop.f32.mrb[0].mxu0
  %v395 = vadd.f32 %v290, %v394
  %v396 = vpop.f32.mrb[0].mxu0
  %397 = vmatprep.mubr.bf16.mxu0 0
  %398 = vmatmul.mubr.bf16.gmra.mrb[0].mxu0 %v327
  %v399 = vpop.f32.mrb[0].mxu0
  %v400 = vadd.f32 %v290, %v399
  %v401 = vpop.f32.mrb[0].mxu0
  %v402 = vpop.f32.mrb[0].mxu0
  %v403 = vadd.f32 %v290, %v402
  %v404 = vpop.f32.mrb[0].mxu0
  %405 = vmatprep.mubr.bf16.mxu0 0
  %406 = vmatmul.mubr.bf16.gmra.mrb[0].mxu0 %v330
  %v407 = vpop.f32.mrb[0].mxu0
  %v408 = vadd.f32 %v290, %v407
  %v409 = vpop.f32.mrb[0].mxu0
  %v410 = vpop.f32.mrb[0].mxu0
  %v411 = vadd.f32 %v290, %v410
  %v412 = vpop.f32.mrb[0].mxu0
  %413 = vmatprep.mubr.bf16.mxu0 0
  %414 = vmatmul.mubr.bf16.gmra.mrb[0].mxu0 %v333
  %v415 = vpop.f32.mrb[0].mxu0
  %v416 = vadd.f32 %v290, %v415
  %v417 = vpop.f32.mrb[0].mxu0
  %v418 = vpop.f32.mrb[0].mxu0
  %v419 = vadd.f32 %v290, %v418
  %v420 = vpop.f32.mrb[0].mxu0
  %421 = vmatprep.mubr.bf16.mxu0 0
  %422 = vmatmul.mubr.bf16.gmra.mrb[0].mxu0 %v336
  %v423 = vpop.f32.mrb[0].mxu0
  %v424 = vadd.f32 %v290, %v423
  %v425 = vpop.f32.mrb[0].mxu0
  %v426 = vpop.f32.mrb[0].mxu0
  %v427 = vadd.f32 %v290, %v426
  %v428 = vpop.f32.mrb[0].mxu0
  %429 = vmatprep.mubr.bf16.mxu0 0
  %430 = vmatmul.mubr.bf16.gmra.mrb[0].mxu0 %v339
  %v431 = vpop.f32.mrb[0].mxu0
  %v432 = vadd.f32 %v290, %v431
  %v433 = vpop.f32.mrb[0].mxu0
  %v434 = vpop.f32.mrb[0].mxu0
  %v435 = vadd.f32 %v290, %v434
  %v436 = vpop.f32.mrb[0].mxu0
  %437 = vdwg.mxu0
  %v438 = vld [vmem:[%s3] sm:$0xff]
  %v439 = vld [vmem:[%s3 + $0x8] sm:$0xff]
  %v440 = vld [vmem:[%s3 + $0x10] sm:$0xff]
  %v441 = vld [vmem:[%s3 + $0x18] sm:$0xff]
  %v442 = vld [vmem:[%s3 + $0x20] sm:$0xff]
  %v443 = vld [vmem:[%s3 + $0x28] sm:$0xff]
  %v444 = vld [vmem:[%s3 + $0x30] sm:$0xff]
  %v445 = vld [vmem:[%s3 + $0x38] sm:$0xff]
  %v446 = vld [vmem:[%s3 + $0x40] sm:$0xff]
  %v447 = vld [vmem:[%s3 + $0x48] sm:$0xff]
  %v448 = vld [vmem:[%s3 + $0x50] sm:$0xff]
  %v449 = vld [vmem:[%s3 + $0x58] sm:$0xff]
  %v450 = vld [vmem:[%s3 + $0x60] sm:$0xff]
  %v451 = vld [vmem:[%s3 + $0x68] sm:$0xff]
  %v452 = vld [vmem:[%s3 + $0x70] sm:$0xff]
  %v453 = vld [vmem:[%s3 + $0x78] sm:$0xff]
  %v454 = vld [vmem:[%s3 + $0x80] sm:$0xff]
  %v455 = vld [vmem:[%s3 + $0x88] sm:$0xff]
  %v456 = vld [vmem:[%s3 + $0x90] sm:$0xff]
  %v457 = vld [vmem:[%s3 + $0x98] sm:$0xff]
  %v458 = vld [vmem:[%s3 + $0xa0] sm:$0xff]
  %v459 = vld [vmem:[%s3 + $0xa8] sm:$0xff]
  %460 = vmatprep.subr.mxu0 0.0
  %461 = vmatpush1.msra.mxu0 %v191
  %462 = vmatprep.subr.mxu0 0.0
  %463 = vmatpush1.msra.mxu0 %v196
  %464 = vmatprep.subr.mxu0 0.0
  %465 = vmatpush1.msra.mxu0 %v201
  %466 = vmatprep.subr.mxu0 0.0
  %467 = vmatpush1.msra.mxu0 %v206
  %468 = vmatprep.subr.mxu0 0.0
  %469 = vmatpush1.msra.mxu0 %v211
  %470 = vmatprep.subr.mxu0 0.0
  %471 = vmatpush1.msra.mxu0 %v216
  %472 = vmatprep.subr.mxu0 0.0
  %473 = vmatpush1.msra.mxu0 %v221
  %474 = vmatprep.subr.mxu0 0.0
  %475 = vmatpush1.msra.mxu0 %v226
  %476 = vmatprep.subr.mxu0 0.0
  %477 = vmatpush1.msra.mxu0 %v231
  %478 = vmatprep.subr.mxu0 0.0
  %479 = vmatpush1.msra.mxu0 %v236
  %480 = vmatprep.subr.mxu0 0.0
  %481 = vmatpush1.msra.mxu0 %v241
  %482 = vmatprep.subr.mxu0 0.0
  %483 = vmatpush1.msra.mxu0 %v246
  %484 = vmatprep.subr.mxu0 0.0
  %485 = vmatpush1.msra.mxu0 %v251
  %486 = vmatprep.subr.mxu0 0.0
  %487 = vmatpush1.msra.mxu0 %v256
  %488 = vmatprep.subr.mxu0 0.0
  %489 = vmatpush1.msra.mxu0 %v261
  %490 = vmatprep.subr.mxu0 0.0
  %491 = vmatpush1.msra.mxu0 %v266
  %492 = vmatprep.subr.mxu0 0.0
  %493 = vmatpush1.msra.mxu0 0.0
  %494 = vmatprep.subr.mxu0 0.0
  %495 = vmatpush1.msra.mxu0 0.0
  %496 = vmatprep.subr.mxu0 0.0
  %497 = vmatpush1.msra.mxu0 0.0
  %498 = vmatprep.subr.mxu0 0.0
  %499 = vmatpush1.msra.mxu0 0.0
  %500 = vmatprep.subr.mxu0 0.0
  %501 = vmatpush1.msra.mxu0 0.0
  %502 = vmatprep.subr.mxu0 0.0
  %503 = vmatpush1.msra.mxu0 0.0
  %504 = vmatprep.subr.mxu0 0.0
  %505 = vmatpush1.msra.mxu0 0.0
  %506 = vmatprep.subr.mxu0 0.0
  %507 = vmatpush1.msra.mxu0 0.0
  %508 = vmatprep.subr.mxu0 0.0
  %509 = vmatpush1.msra.mxu0 0.0
  %510 = vmatprep.subr.mxu0 0.0
  %511 = vmatpush1.msra.mxu0 0.0
  %512 = vmatprep.subr.mxu0 0.0
  %513 = vmatpush1.msra.mxu0 0.0
  %514 = vmatprep.subr.mxu0 0.0
  %515 = vmatpush1.msra.mxu0 0.0
  %516 = vmatprep.subr.mxu0 0.0
  %517 = vmatpush1.msra.mxu0 0.0
  %518 = vmatprep.subr.mxu0 0.0
  %519 = vmatpush1.msra.mxu0 0.0
  %520 = vmatprep.subr.mxu0 0.0
  %521 = vmatpush1.msra.mxu0 0.0
  %522 = vmatprep.subr.mxu0 0.0
  %523 = vmatpush1.msra.mxu0 0.0
  %524 = vmatprep.mubr.f32.mxu0 0.0
  %525 = vmatmul.mubr.f32.gmra.mrb[0].mxu0 %v438
  %v526 = vpop.f32.mrb[0].mxu0
  %v527 = vadd.f32 0.0, %v526
  %v528 = vpop.f32.mrb[0].mxu0
  %529 = vmatprep.mubr.f32.mxu0 0.0
  %530 = vmatmul.mubr.f32.gmra.mrb[0].mxu0 %v439
  %v531 = vpop.f32.mrb[0].mxu0
  %v532 = vadd.f32 0.0, %v531
  %v533 = vpop.f32.mrb[0].mxu0
  %534 = vmatprep.mubr.f32.mxu0 0.0
  %535 = vmatmul.mubr.f32.gmra.mrb[0].mxu0 %v440
  %v536 = vpop.f32.mrb[0].mxu0
  %v537 = vadd.f32 0.0, %v536
  %v538 = vpop.f32.mrb[0].mxu0
  %539 = vmatprep.mubr.f32.mxu0 0.0
  %540 = vmatmul.mubr.f32.gmra.mrb[0].mxu0 %v441
  %v541 = vpop.f32.mrb[0].mxu0
  %v542 = vadd.f32 0.0, %v541
  %v543 = vpop.f32.mrb[0].mxu0
  %544 = vmatprep.mubr.f32.mxu0 0.0
  %545 = vmatmul.mubr.f32.gmra.mrb[0].mxu0 %v442
  %v546 = vpop.f32.mrb[0].mxu0
  %v547 = vadd.f32 0.0, %v546
  %v548 = vpop.f32.mrb[0].mxu0
  %549 = vmatprep.mubr.f32.mxu0 0.0
  %550 = vmatmul.mubr.f32.gmra.mrb[0].mxu0 %v443
  %v551 = vpop.f32.mrb[0].mxu0
  %v552 = vadd.f32 0.0, %v551
  %v553 = vpop.f32.mrb[0].mxu0
  %554 = vmatprep.mubr.f32.mxu0 0.0
  %555 = vmatmul.mubr.f32.gmra.mrb[0].mxu0 %v444
  %v556 = vpop.f32.mrb[0].mxu0
  %v557 = vadd.f32 0.0, %v556
  %v558 = vpop.f32.mrb[0].mxu0
  %559 = vmatprep.mubr.f32.mxu0 0.0
  %560 = vmatmul.mubr.f32.gmra.mrb[0].mxu0 %v445
  %v561 = vpop.f32.mrb[0].mxu0
  %v562 = vadd.f32 0.0, %v561
  %v563 = vpop.f32.mrb[0].mxu0
  %564 = vmatprep.mubr.f32.mxu0 0.0
  %565 = vmatmul.mubr.f32.gmra.mrb[0].mxu0 %v446
  %v566 = vpop.f32.mrb[0].mxu0
  %v567 = vadd.f32 0.0, %v566
  %v568 = vpop.f32.mrb[0].mxu0
  %569 = vmatprep.mubr.f32.mxu0 0.0
  %570 = vmatmul.mubr.f32.gmra.mrb[0].mxu0 %v447
  %v571 = vpop.f32.mrb[0].mxu0
  %v572 = vadd.f32 0.0, %v571
  %v573 = vpop.f32.mrb[0].mxu0
  %574 = vmatprep.mubr.f32.mxu0 0.0
  %575 = vmatmul.mubr.f32.gmra.mrb[0].mxu0 %v448
  %v576 = vpop.f32.mrb[0].mxu0
  %v577 = vadd.f32 0.0, %v576
  %v578 = vpop.f32.mrb[0].mxu0
  %579 = vmatprep.mubr.f32.mxu0 0.0
  %580 = vmatmul.mubr.f32.gmra.mrb[0].mxu0 %v449
  %v581 = vpop.f32.mrb[0].mxu0
  %v582 = vadd.f32 0.0, %v581
  %v583 = vpop.f32.mrb[0].mxu0
  %584 = vmatprep.mubr.f32.mxu0 0.0
  %585 = vmatmul.mubr.f32.gmra.mrb[0].mxu0 %v450
  %v586 = vpop.f32.mrb[0].mxu0
  %v587 = vadd.f32 0.0, %v586
  %v588 = vpop.f32.mrb[0].mxu0
  %589 = vmatprep.mubr.f32.mxu0 0.0
  %590 = vmatmul.mubr.f32.gmra.mrb[0].mxu0 %v451
  %v591 = vpop.f32.mrb[0].mxu0
  %v592 = vadd.f32 0.0, %v591
  %v593 = vpop.f32.mrb[0].mxu0
  %594 = vmatprep.mubr.f32.mxu0 0.0
  %595 = vmatmul.mubr.f32.gmra.mrb[0].mxu0 %v452
  %v596 = vpop.f32.mrb[0].mxu0
  %v597 = vadd.f32 0.0, %v596
  %v598 = vpop.f32.mrb[0].mxu0
  %599 = vmatprep.mubr.f32.mxu0 0.0
  %600 = vmatmul.mubr.f32.gmra.mrb[0].mxu0 %v453
  %v601 = vpop.f32.mrb[0].mxu0
  %v602 = vadd.f32 0.0, %v601
  %v603 = vpop.f32.mrb[0].mxu0
  %604 = vmatprep.mubr.f32.mxu0 0.0
  %605 = vmatmul.mubr.f32.gmra.mrb[0].mxu0 %v454
  %v606 = vpop.f32.mrb[0].mxu0
  %v607 = vadd.f32 0.0, %v606
  %v608 = vpop.f32.mrb[0].mxu0
  %609 = vmatprep.mubr.f32.mxu0 0.0
  %610 = vmatmul.mubr.f32.gmra.mrb[0].mxu0 %v455
  %v611 = vpop.f32.mrb[0].mxu0
  %v612 = vadd.f32 0.0, %v611
  %v613 = vpop.f32.mrb[0].mxu0
  %614 = vmatprep.mubr.f32.mxu0 0.0
  %615 = vmatmul.mubr.f32.gmra.mrb[0].mxu0 %v456
  %v616 = vpop.f32.mrb[0].mxu0
  %v617 = vadd.f32 0.0, %v616
  %v618 = vpop.f32.mrb[0].mxu0
  %619 = vmatprep.mubr.f32.mxu0 0.0
  %620 = vmatmul.mubr.f32.gmra.mrb[0].mxu0 %v457
  %v621 = vpop.f32.mrb[0].mxu0
  %v622 = vadd.f32 0.0, %v621
  %v623 = vpop.f32.mrb[0].mxu0
  %624 = vmatprep.mubr.f32.mxu0 0.0
  %625 = vmatmul.mubr.f32.gmra.mrb[0].mxu0 %v458
  %v626 = vpop.f32.mrb[0].mxu0
  %v627 = vadd.f32 0.0, %v626
  %v628 = vpop.f32.mrb[0].mxu0
  %629 = vmatprep.mubr.f32.mxu0 0.0
  %630 = vmatmul.mubr.f32.gmra.mrb[0].mxu0 %v459
  %v631 = vpop.f32.mrb[0].mxu0
  %v632 = vadd.f32 0.0, %v631
  %v633 = vpop.f32.mrb[0].mxu0
  %634 = vdwg.mxu0
  %v635 = vpack.c.bf16 %v527, %v527
  %v636 = vpack.c.bf16 %v532, %v532
  %v637 = vpack.c.bf16 %v537, %v537
  %v638 = vpack.c.bf16 %v542, %v542
  %v639 = vpack.c.bf16 %v547, %v547
  %v640 = vpack.c.bf16 %v552, %v552
  %v641 = vpack.c.bf16 %v557, %v557
  %v642 = vpack.c.bf16 %v562, %v562
  %v643 = vpack.c.bf16 %v567, %v567
  %v644 = vpack.c.bf16 %v572, %v572
  %v645 = vpack.c.bf16 %v577, %v577
  %v646 = vpack.c.bf16 %v582, %v582
  %v647 = vpack.c.bf16 %v587, %v587
  %v648 = vpack.c.bf16 %v592, %v592
  %v649 = vpack.c.bf16 %v597, %v597
  %v650 = vpack.c.bf16 %v602, %v602
  %v651 = vpack.c.bf16 %v607, %v607
  %v652 = vpack.c.bf16 %v612, %v612
  %v653 = vpack.c.bf16 %v617, %v617
  %v654 = vpack.c.bf16 %v622, %v622
  %v655 = vpack.c.bf16 %v627, %v627
  %v656 = vpack.c.bf16 %v632, %v632
  %v657 = vld [vmem:[%s6] sm:$0xf]
  %v658 = vld [vmem:[%s6 + $0x4] sm:$0xf]
  %v659 = vld [vmem:[%s6 + $0x8] sm:$0xf]
  %v660 = vld [vmem:[%s6 + $0xc] sm:$0xf]
  %v661 = vld [vmem:[%s6 + $0x10] sm:$0xf]
  %v662 = vld [vmem:[%s6 + $0x14] sm:$0xf]
  %v663 = vld [vmem:[%s6 + $0x18] sm:$0xf]
  %v664 = vld [vmem:[%s6 + $0x1c] sm:$0xf]
  %v665 = vld [vmem:[%s6 + $0x20] sm:$0xf]
  %v666 = vld [vmem:[%s6 + $0x24] sm:$0xf]
  %v667 = vld [vmem:[%s6 + $0x28] sm:$0xf]
  %v668 = vld [vmem:[%s6 + $0x2c] sm:$0xf]
  %v669 = vld [vmem:[%s6 + $0x30] sm:$0xf]
  %v670 = vld [vmem:[%s6 + $0x34] sm:$0xf]
  %v671 = vld [vmem:[%s6 + $0x38] sm:$0xf]
  %v672 = vld [vmem:[%s6 + $0x3c] sm:$0xf]
  %v673 = vld [vmem:[%s6 + $0x40] sm:$0xf]
  %v674 = vld [vmem:[%s6 + $0x44] sm:$0xf]
  %v675 = vld [vmem:[%s6 + $0x48] sm:$0xf]
  %v676 = vld [vmem:[%s6 + $0x4c] sm:$0xf]
  %v677 = vld [vmem:[%s6 + $0x50] sm:$0xf]
  %v678 = vld [vmem:[%s6 + $0x54] sm:$0xf]
  %v679 = vld [vmem:[%s6 + $0x58] sm:$0xf]
  %v680 = vld [vmem:[%s6 + $0x5c] sm:$0xf]
  %v681 = vld [vmem:[%s6 + $0x60] sm:$0xf]
  %v682 = vld [vmem:[%s6 + $0x64] sm:$0xf]
  %v683 = vld [vmem:[%s6 + $0x68] sm:$0xf]
  %v684 = vld [vmem:[%s6 + $0x6c] sm:$0xf]
  %v685 = vld [vmem:[%s6 + $0x70] sm:$0xf]
  %v686 = vld [vmem:[%s6 + $0x74] sm:$0xf]
  %v687 = vld [vmem:[%s6 + $0x78] sm:$0xf]
  %v688 = vld [vmem:[%s6 + $0x7c] sm:$0xf]
  %v689 = vld [vmem:[%s6 + $0x80] sm:$0xf]
  %v690 = vld [vmem:[%s6 + $0x84] sm:$0xf]
  %v691 = vld [vmem:[%s6 + $0x88] sm:$0xf]
  %v692 = vld [vmem:[%s6 + $0x8c] sm:$0xf]
  %v693 = vld [vmem:[%s6 + $0x90] sm:$0xf]
  %v694 = vld [vmem:[%s6 + $0x94] sm:$0xf]
  %v695 = vld [vmem:[%s6 + $0x98] sm:$0xf]
  %v696 = vld [vmem:[%s6 + $0x9c] sm:$0xf]
  %v697 = vld [vmem:[%s6 + $0xa0] sm:$0xf]
  %v698 = vld [vmem:[%s6 + $0xa4] sm:$0xf]
  %v699 = vld [vmem:[%s6 + $0xa8] sm:$0xf]
  %v700 = vld [vmem:[%s6 + $0xac] sm:$0xf]
  %v701 = vld [vmem:[%s6 + $0xb0] sm:$0xf]
  %v702 = vld [vmem:[%s6 + $0xb4] sm:$0xf]
  %v703 = vld [vmem:[%s6 + $0xb8] sm:$0xf]
  %v704 = vld [vmem:[%s6 + $0xbc] sm:$0xf]
  %v705 = vld [vmem:[%s6 + $0xc0] sm:$0xf]
  %v706 = vld [vmem:[%s6 + $0xc4] sm:$0xf]
  %v707 = vld [vmem:[%s6 + $0xc8] sm:$0xf]
  %v708 = vld [vmem:[%s6 + $0xcc] sm:$0xf]
  %v709 = vld [vmem:[%s6 + $0xd0] sm:$0xf]
  %v710 = vld [vmem:[%s6 + $0xd4] sm:$0xf]
  %v711 = vld [vmem:[%s6 + $0xd8] sm:$0xf]
  %v712 = vld [vmem:[%s6 + $0xdc] sm:$0xf]
  %v713 = vld [vmem:[%s6 + $0xe0] sm:$0xf]
  %v714 = vld [vmem:[%s6 + $0xe4] sm:$0xf]
  %v715 = vld [vmem:[%s6 + $0xe8] sm:$0xf]
  %v716 = vld [vmem:[%s6 + $0xec] sm:$0xf]
  %v717 = vld [vmem:[%s6 + $0xf0] sm:$0xf]
  %v718 = vld [vmem:[%s6 + $0xf4] sm:$0xf]
  %v719 = vld [vmem:[%s6 + $0xf8] sm:$0xf]
  %v720 = vld [vmem:[%s6 + $0xfc] sm:$0xf]
  %v721 = vld [vmem:[%s6 + $0x100] sm:$0xf]
  %v722 = vld [vmem:[%s6 + $0x104] sm:$0xf]
  %v723 = vld [vmem:[%s6 + $0x108] sm:$0xf]
  %v724 = vld [vmem:[%s6 + $0x10c] sm:$0xf]
  %v725 = vld [vmem:[%s6 + $0x110] sm:$0xf]
  %v726 = vld [vmem:[%s6 + $0x114] sm:$0xf]
  %v727 = vld [vmem:[%s6 + $0x118] sm:$0xf]
  %v728 = vld [vmem:[%s6 + $0x11c] sm:$0xf]
  %v729 = vld [vmem:[%s6 + $0x120] sm:$0xf]
  %v730 = vld [vmem:[%s6 + $0x124] sm:$0xf]
  %v731 = vld [vmem:[%s6 + $0x128] sm:$0xf]
  %v732 = vld [vmem:[%s6 + $0x12c] sm:$0xf]
  %v733 = vld [vmem:[%s6 + $0x130] sm:$0xf]
  %v734 = vld [vmem:[%s6 + $0x134] sm:$0xf]
  %v735 = vld [vmem:[%s6 + $0x138] sm:$0xf]
  %v736 = vld [vmem:[%s6 + $0x13c] sm:$0xf]
  %v737 = vld [vmem:[%s6 + $0x140] sm:$0xf]
  %v738 = vld [vmem:[%s6 + $0x144] sm:$0xf]
  %v739 = vld [vmem:[%s6 + $0x148] sm:$0xf]
  %v740 = vld [vmem:[%s6 + $0x14c] sm:$0xf]
  %v741 = vld [vmem:[%s6 + $0x150] sm:$0xf]
  %v742 = vld [vmem:[%s6 + $0x154] sm:$0xf]
  %v743 = vld [vmem:[%s6 + $0x158] sm:$0xf]
  %v744 = vld [vmem:[%s6 + $0x15c] sm:$0xf]
  %v745 = vld [vmem:[%s6 + $0x160] sm:$0xf]
  %v746 = vld [vmem:[%s6 + $0x164] sm:$0xf]
  %v747 = vld [vmem:[%s6 + $0x168] sm:$0xf]
  %v748 = vld [vmem:[%s6 + $0x16c] sm:$0xf]
  %v749 = vld [vmem:[%s6 + $0x170] sm:$0xf]
  %v750 = vld [vmem:[%s6 + $0x174] sm:$0xf]
  %v751 = vld [vmem:[%s6 + $0x178] sm:$0xf]
  %v752 = vld [vmem:[%s6 + $0x17c] sm:$0xf]
  %v753 = vld [vmem:[%s6 + $0x180] sm:$0xf]
  %v754 = vld [vmem:[%s6 + $0x184] sm:$0xf]
  %v755 = vld [vmem:[%s6 + $0x188] sm:$0xf]
  %v756 = vld [vmem:[%s6 + $0x18c] sm:$0xf]
  %v757 = vld [vmem:[%s6 + $0x190] sm:$0xf]
  %v758 = vld [vmem:[%s6 + $0x194] sm:$0xf]
  %v759 = vld [vmem:[%s6 + $0x198] sm:$0xf]
  %v760 = vld [vmem:[%s6 + $0x19c] sm:$0xf]
  %v761 = vld [vmem:[%s6 + $0x1a0] sm:$0xf]
  %v762 = vld [vmem:[%s6 + $0x1a4] sm:$0xf]
  %v763 = vld [vmem:[%s6 + $0x1a8] sm:$0xf]
  %v764 = vld [vmem:[%s6 + $0x1ac] sm:$0xf]
  %v765 = vld [vmem:[%s6 + $0x1b0] sm:$0xf]
  %v766 = vld [vmem:[%s6 + $0x1b4] sm:$0xf]
  %v767 = vld [vmem:[%s6 + $0x1b8] sm:$0xf]
  %v768 = vld [vmem:[%s6 + $0x1bc] sm:$0xf]
  %v769 = vld [vmem:[%s6 + $0x1c0] sm:$0xf]
  %v770 = vld [vmem:[%s6 + $0x1c4] sm:$0xf]
  %v771 = vld [vmem:[%s6 + $0x1c8] sm:$0xf]
  %v772 = vld [vmem:[%s6 + $0x1cc] sm:$0xf]
  %v773 = vld [vmem:[%s6 + $0x1d0] sm:$0xf]
  %v774 = vld [vmem:[%s6 + $0x1d4] sm:$0xf]
  %v775 = vld [vmem:[%s6 + $0x1d8] sm:$0xf]
  %v776 = vld [vmem:[%s6 + $0x1dc] sm:$0xf]
  %v777 = vld [vmem:[%s6 + $0x1e0] sm:$0xf]
  %v778 = vld [vmem:[%s6 + $0x1e4] sm:$0xf]
  %v779 = vld [vmem:[%s6 + $0x1e8] sm:$0xf]
  %v780 = vld [vmem:[%s6 + $0x1ec] sm:$0xf]
  %v781 = vld [vmem:[%s6 + $0x1f0] sm:$0xf]
  %v782 = vld [vmem:[%s6 + $0x1f4] sm:$0xf]
  %v783 = vld [vmem:[%s6 + $0x1f8] sm:$0xf]
  %v784 = vld [vmem:[%s6 + $0x1fc] sm:$0xf]
  %v785 = vld [vmem:[%s6 + $0x200] sm:$0xf]
  %v786 = vld [vmem:[%s6 + $0x204] sm:$0xf]
  %v787 = vld [vmem:[%s6 + $0x208] sm:$0xf]
  %v788 = vld [vmem:[%s6 + $0x20c] sm:$0xf]
  %v789 = vld [vmem:[%s6 + $0x210] sm:$0xf]
  %v790 = vld [vmem:[%s6 + $0x214] sm:$0xf]
  %v791 = vld [vmem:[%s6 + $0x218] sm:$0xf]
  %v792 = vld [vmem:[%s6 + $0x21c] sm:$0xf]
  %v793 = vld [vmem:[%s6 + $0x220] sm:$0xf]
  %v794 = vld [vmem:[%s6 + $0x224] sm:$0xf]
  %v795 = vld [vmem:[%s6 + $0x228] sm:$0xf]
  %v796 = vld [vmem:[%s6 + $0x22c] sm:$0xf]
  %v797 = vld [vmem:[%s6 + $0x230] sm:$0xf]
  %v798 = vld [vmem:[%s6 + $0x234] sm:$0xf]
  %v799 = vld [vmem:[%s6 + $0x238] sm:$0xf]
  %v800 = vld [vmem:[%s6 + $0x23c] sm:$0xf]
  %v801 = vld [vmem:[%s6 + $0x240] sm:$0xf]
  %v802 = vld [vmem:[%s6 + $0x244] sm:$0xf]
  %v803 = vld [vmem:[%s6 + $0x248] sm:$0xf]
  %v804 = vld [vmem:[%s6 + $0x24c] sm:$0xf]
  %v805 = vld [vmem:[%s6 + $0x250] sm:$0xf]
  %v806 = vld [vmem:[%s6 + $0x254] sm:$0xf]
  %v807 = vld [vmem:[%s6 + $0x258] sm:$0xf]
  %v808 = vld [vmem:[%s6 + $0x25c] sm:$0xf]
  %v809 = vld [vmem:[%s6 + $0x260] sm:$0xf]
  %v810 = vld [vmem:[%s6 + $0x264] sm:$0xf]
  %v811 = vld [vmem:[%s6 + $0x268] sm:$0xf]
  %v812 = vld [vmem:[%s6 + $0x26c] sm:$0xf]
  %v813 = vld [vmem:[%s6 + $0x270] sm:$0xf]
  %v814 = vld [vmem:[%s6 + $0x274] sm:$0xf]
  %v815 = vld [vmem:[%s6 + $0x278] sm:$0xf]
  %v816 = vld [vmem:[%s6 + $0x27c] sm:$0xf]
  %v817 = vld [vmem:[%s6 + $0x280] sm:$0xf]
  %v818 = vld [vmem:[%s6 + $0x284] sm:$0xf]
  %v819 = vld [vmem:[%s6 + $0x288] sm:$0xf]
  %v820 = vld [vmem:[%s6 + $0x28c] sm:$0xf]
  %v821 = vld [vmem:[%s6 + $0x290] sm:$0xf]
  %v822 = vld [vmem:[%s6 + $0x294] sm:$0xf]
  %v823 = vld [vmem:[%s6 + $0x298] sm:$0xf]
  %v824 = vld [vmem:[%s6 + $0x29c] sm:$0xf]
  %v825 = vld [vmem:[%s6 + $0x2a0] sm:$0xf]
  %v826 = vld [vmem:[%s6 + $0x2a4] sm:$0xf]
  %v827 = vld [vmem:[%s6 + $0x2a8] sm:$0xf]
  %v828 = vld [vmem:[%s6 + $0x2ac] sm:$0xf]
  %v829 = vld [vmem:[%s6 + $0x2b0] sm:$0xf]
  %v830 = vld [vmem:[%s6 + $0x2b4] sm:$0xf]
  %v831 = vld [vmem:[%s6 + $0x2b8] sm:$0xf]
  %v832 = vld [vmem:[%s6 + $0x2bc] sm:$0xf]
  %v841 = vunpack.c.l.b16 %v657
  %v842 = vunpack.c.l.b16 %v658
  %v843 = vunpack.c.l.b16 %v659
  %v844 = vunpack.c.l.b16 %v660
  %v845 = vunpack.c.l.b16 %v661
  %v846 = vunpack.c.l.b16 %v662
  %v847 = vunpack.c.l.b16 %v663
  %v848 = vunpack.c.l.b16 %v664
  %v849 = vpack.c.b16 %v842, %v841
  %v850 = vpack.c.b16 %v844, %v843
  %v851 = vpack.c.b16 %v846, %v845
  %v852 = vpack.c.b16 %v848, %v847
  %v858 = vsel %vm316, %v635, 0
  %860 = vmatprep.subr.bf16.mxu0 0
  %861 = vmatpush1.bf16.msra.mxu0 %v849
  %862 = vmatprep.subr.bf16.mxu0 0
  %863 = vmatpush1.bf16.msra.mxu0 %v850
  %864 = vmatprep.subr.bf16.mxu0 0
  %865 = vmatpush1.bf16.msra.mxu0 %v851
  %866 = vmatprep.subr.bf16.mxu0 0
  %867 = vmatpush1.bf16.msra.mxu0 %v852
  %868 = vmatprep.subr.bf16.mxu0 0
  %869 = vmatpush1.bf16.msra.mxu0 0
  %870 = vmatprep.subr.bf16.mxu0 0
  %871 = vmatpush1.bf16.msra.mxu0 0
  %872 = vmatprep.subr.bf16.mxu0 0
  %873 = vmatpush1.bf16.msra.mxu0 0
  %874 = vmatprep.subr.bf16.mxu0 0
  %875 = vmatpush1.bf16.msra.mxu0 0
  %876 = vmatprep.subr.bf16.mxu0 0
  %877 = vmatpush1.bf16.msra.mxu0 0
  %878 = vmatprep.subr.bf16.mxu0 0
  %879 = vmatpush1.bf16.msra.mxu0 0
  %880 = vmatprep.subr.bf16.mxu0 0
  %881 = vmatpush1.bf16.msra.mxu0 0
  %882 = vmatprep.subr.bf16.mxu0 0
  %883 = vmatpush1.bf16.msra.mxu0 0
  %884 = vmatprep.subr.bf16.mxu0 0
  %885 = vmatpush1.bf16.msra.mxu0 0
  %886 = vmatprep.subr.bf16.mxu0 0
  %887 = vmatpush1.bf16.msra.mxu0 0
  %888 = vmatprep.subr.bf16.mxu0 0
  %889 = vmatpush1.bf16.msra.mxu0 0
  %890 = vmatprep.subr.bf16.mxu0 0
  %891 = vmatpush1.bf16.msra.mxu0 0
  %892 = vmatprep.mubr.bf16.mxu0 0
  %893 = vmatmul.mubr.bf16.gmra.mrb[0].mxu0 %v858
  %v894 = vpop.f32.mrb[0].mxu0
  %v895 = vadd.f32 0.0, %v894
  %v896 = vpop.f32.mrb[0].mxu0
  %v897 = vpop.f32.mrb[0].mxu0
  %v898 = vpop.f32.mrb[0].mxu0
  %899 = vdwg.mxu0
  %v908 = vunpack.c.l.b16 %v665
  %v909 = vunpack.c.l.b16 %v666
  %v910 = vunpack.c.l.b16 %v667
  %v911 = vunpack.c.l.b16 %v668
  %v912 = vunpack.c.l.b16 %v669
  %v913 = vunpack.c.l.b16 %v670
  %v914 = vunpack.c.l.b16 %v671
  %v915 = vunpack.c.l.b16 %v672
  %v916 = vpack.c.b16 %v909, %v908
  %v917 = vpack.c.b16 %v911, %v910
  %v918 = vpack.c.b16 %v913, %v912
  %v919 = vpack.c.b16 %v915, %v914
  %v925 = vsel %vm316, %v636, 0
  %927 = vmatprep.subr.bf16.mxu0 0
  %928 = vmatpush1.bf16.msra.mxu0 %v916
  %929 = vmatprep.subr.bf16.mxu0 0
  %930 = vmatpush1.bf16.msra.mxu0 %v917
  %931 = vmatprep.subr.bf16.mxu0 0
  %932 = vmatpush1.bf16.msra.mxu0 %v918
  %933 = vmatprep.subr.bf16.mxu0 0
  %934 = vmatpush1.bf16.msra.mxu0 %v919
  %935 = vmatprep.subr.bf16.mxu0 0
  %936 = vmatpush1.bf16.msra.mxu0 0
  %937 = vmatprep.subr.bf16.mxu0 0
  %938 = vmatpush1.bf16.msra.mxu0 0
  %939 = vmatprep.subr.bf16.mxu0 0
  %940 = vmatpush1.bf16.msra.mxu0 0
  %941 = vmatprep.subr.bf16.mxu0 0
  %942 = vmatpush1.bf16.msra.mxu0 0
  %943 = vmatprep.subr.bf16.mxu0 0
  %944 = vmatpush1.bf16.msra.mxu0 0
  %945 = vmatprep.subr.bf16.mxu0 0
  %946 = vmatpush1.bf16.msra.mxu0 0
  %947 = vmatprep.subr.bf16.mxu0 0
  %948 = vmatpush1.bf16.msra.mxu0 0
  %949 = vmatprep.subr.bf16.mxu0 0
  %950 = vmatpush1.bf16.msra.mxu0 0
  %951 = vmatprep.subr.bf16.mxu0 0
  %952 = vmatpush1.bf16.msra.mxu0 0
  %953 = vmatprep.subr.bf16.mxu0 0
  %954 = vmatpush1.bf16.msra.mxu0 0
  %955 = vmatprep.subr.bf16.mxu0 0
  %956 = vmatpush1.bf16.msra.mxu0 0
  %957 = vmatprep.subr.bf16.mxu0 0
  %958 = vmatpush1.bf16.msra.mxu0 0
  %959 = vmatprep.mubr.bf16.mxu0 0
  %960 = vmatmul.mubr.bf16.gmra.mrb[0].mxu0 %v925
  %v961 = vpop.f32.mrb[0].mxu0
  %v962 = vadd.f32 0.0, %v961
  %v963 = vpop.f32.mrb[0].mxu0
  %v964 = vpop.f32.mrb[0].mxu0
  %v965 = vpop.f32.mrb[0].mxu0
  %966 = vdwg.mxu0
  %v975 = vunpack.c.l.b16 %v673
  %v976 = vunpack.c.l.b16 %v674
  %v977 = vunpack.c.l.b16 %v675
  %v978 = vunpack.c.l.b16 %v676
  %v979 = vunpack.c.l.b16 %v677
  %v980 = vunpack.c.l.b16 %v678
  %v981 = vunpack.c.l.b16 %v679
  %v982 = vunpack.c.l.b16 %v680
  %v983 = vpack.c.b16 %v976, %v975
  %v984 = vpack.c.b16 %v978, %v977
  %v985 = vpack.c.b16 %v980, %v979
  %v986 = vpack.c.b16 %v982, %v981
  %v992 = vsel %vm316, %v637, 0
  %994 = vmatprep.subr.bf16.mxu0 0
  %995 = vmatpush1.bf16.msra.mxu0 %v983
  %996 = vmatprep.subr.bf16.mxu0 0
  %997 = vmatpush1.bf16.msra.mxu0 %v984
  %998 = vmatprep.subr.bf16.mxu0 0
  %999 = vmatpush1.bf16.msra.mxu0 %v985
  %1000 = vmatprep.subr.bf16.mxu0 0
  %1001 = vmatpush1.bf16.msra.mxu0 %v986
  %1002 = vmatprep.subr.bf16.mxu0 0
  %1003 = vmatpush1.bf16.msra.mxu0 0
  %1004 = vmatprep.subr.bf16.mxu0 0
  %1005 = vmatpush1.bf16.msra.mxu0 0
  %1006 = vmatprep.subr.bf16.mxu0 0
  %1007 = vmatpush1.bf16.msra.mxu0 0
  %1008 = vmatprep.subr.bf16.mxu0 0
  %1009 = vmatpush1.bf16.msra.mxu0 0
  %1010 = vmatprep.subr.bf16.mxu0 0
  %1011 = vmatpush1.bf16.msra.mxu0 0
  %1012 = vmatprep.subr.bf16.mxu0 0
  %1013 = vmatpush1.bf16.msra.mxu0 0
  %1014 = vmatprep.subr.bf16.mxu0 0
  %1015 = vmatpush1.bf16.msra.mxu0 0
  %1016 = vmatprep.subr.bf16.mxu0 0
  %1017 = vmatpush1.bf16.msra.mxu0 0
  %1018 = vmatprep.subr.bf16.mxu0 0
  %1019 = vmatpush1.bf16.msra.mxu0 0
  %1020 = vmatprep.subr.bf16.mxu0 0
  %1021 = vmatpush1.bf16.msra.mxu0 0
  %1022 = vmatprep.subr.bf16.mxu0 0
  %1023 = vmatpush1.bf16.msra.mxu0 0
  %1024 = vmatprep.subr.bf16.mxu0 0
  %1025 = vmatpush1.bf16.msra.mxu0 0
  %1026 = vmatprep.mubr.bf16.mxu0 0
  %1027 = vmatmul.mubr.bf16.gmra.mrb[0].mxu0 %v992
  %v1028 = vpop.f32.mrb[0].mxu0
  %v1029 = vadd.f32 0.0, %v1028
  %v1030 = vpop.f32.mrb[0].mxu0
  %v1031 = vpop.f32.mrb[0].mxu0
  %v1032 = vpop.f32.mrb[0].mxu0
  %1033 = vdwg.mxu0
  %v1042 = vunpack.c.l.b16 %v681
  %v1043 = vunpack.c.l.b16 %v682
  %v1044 = vunpack.c.l.b16 %v683
  %v1045 = vunpack.c.l.b16 %v684
  %v1046 = vunpack.c.l.b16 %v685
  %v1047 = vunpack.c.l.b16 %v686
  %v1048 = vunpack.c.l.b16 %v687
  %v1049 = vunpack.c.l.b16 %v688
  %v1050 = vpack.c.b16 %v1043, %v1042
  %v1051 = vpack.c.b16 %v1045, %v1044
  %v1052 = vpack.c.b16 %v1047, %v1046
  %v1053 = vpack.c.b16 %v1049, %v1048
  %v1059 = vsel %vm316, %v638, 0
  %1061 = vmatprep.subr.bf16.mxu0 0
  %1062 = vmatpush1.bf16.msra.mxu0 %v1050
  %1063 = vmatprep.subr.bf16.mxu0 0
  %1064 = vmatpush1.bf16.msra.mxu0 %v1051
  %1065 = vmatprep.subr.bf16.mxu0 0
  %1066 = vmatpush1.bf16.msra.mxu0 %v1052
  %1067 = vmatprep.subr.bf16.mxu0 0
  %1068 = vmatpush1.bf16.msra.mxu0 %v1053
  %1069 = vmatprep.subr.bf16.mxu0 0
  %1070 = vmatpush1.bf16.msra.mxu0 0
  %1071 = vmatprep.subr.bf16.mxu0 0
  %1072 = vmatpush1.bf16.msra.mxu0 0
  %1073 = vmatprep.subr.bf16.mxu0 0
  %1074 = vmatpush1.bf16.msra.mxu0 0
  %1075 = vmatprep.subr.bf16.mxu0 0
  %1076 = vmatpush1.bf16.msra.mxu0 0
  %1077 = vmatprep.subr.bf16.mxu0 0
  %1078 = vmatpush1.bf16.msra.mxu0 0
  %1079 = vmatprep.subr.bf16.mxu0 0
  %1080 = vmatpush1.bf16.msra.mxu0 0
  %1081 = vmatprep.subr.bf16.mxu0 0
  %1082 = vmatpush1.bf16.msra.mxu0 0
  %1083 = vmatprep.subr.bf16.mxu0 0
  %1084 = vmatpush1.bf16.msra.mxu0 0
  %1085 = vmatprep.subr.bf16.mxu0 0
  %1086 = vmatpush1.bf16.msra.mxu0 0
  %1087 = vmatprep.subr.bf16.mxu0 0
  %1088 = vmatpush1.bf16.msra.mxu0 0
  %1089 = vmatprep.subr.bf16.mxu0 0
  %1090 = vmatpush1.bf16.msra.mxu0 0
  %1091 = vmatprep.subr.bf16.mxu0 0
  %1092 = vmatpush1.bf16.msra.mxu0 0
  %1093 = vmatprep.mubr.bf16.mxu0 0
  %1094 = vmatmul.mubr.bf16.gmra.mrb[0].mxu0 %v1059
  %v1095 = vpop.f32.mrb[0].mxu0
  %v1096 = vadd.f32 0.0, %v1095
  %v1097 = vpop.f32.mrb[0].mxu0
  %v1098 = vpop.f32.mrb[0].mxu0
  %v1099 = vpop.f32.mrb[0].mxu0
  %1100 = vdwg.mxu0
  %v1109 = vunpack.c.l.b16 %v689
  %v1110 = vunpack.c.l.b16 %v690
  %v1111 = vunpack.c.l.b16 %v691
  %v1112 = vunpack.c.l.b16 %v692
  %v1113 = vunpack.c.l.b16 %v693
  %v1114 = vunpack.c.l.b16 %v694
  %v1115 = vunpack.c.l.b16 %v695
  %v1116 = vunpack.c.l.b16 %v696
  %v1117 = vpack.c.b16 %v1110, %v1109
  %v1118 = vpack.c.b16 %v1112, %v1111
  %v1119 = vpack.c.b16 %v1114, %v1113
  %v1120 = vpack.c.b16 %v1116, %v1115
  %v1126 = vsel %vm316, %v639, 0
  %1128 = vmatprep.subr.bf16.mxu0 0
  %1129 = vmatpush1.bf16.msra.mxu0 %v1117
  %1130 = vmatprep.subr.bf16.mxu0 0
  %1131 = vmatpush1.bf16.msra.mxu0 %v1118
  %1132 = vmatprep.subr.bf16.mxu0 0
  %1133 = vmatpush1.bf16.msra.mxu0 %v1119
  %1134 = vmatprep.subr.bf16.mxu0 0
  %1135 = vmatpush1.bf16.msra.mxu0 %v1120
  %1136 = vmatprep.subr.bf16.mxu0 0
  %1137 = vmatpush1.bf16.msra.mxu0 0
  %1138 = vmatprep.subr.bf16.mxu0 0
  %1139 = vmatpush1.bf16.msra.mxu0 0
  %1140 = vmatprep.subr.bf16.mxu0 0
  %1141 = vmatpush1.bf16.msra.mxu0 0
  %1142 = vmatprep.subr.bf16.mxu0 0
  %1143 = vmatpush1.bf16.msra.mxu0 0
  %1144 = vmatprep.subr.bf16.mxu0 0
  %1145 = vmatpush1.bf16.msra.mxu0 0
  %1146 = vmatprep.subr.bf16.mxu0 0
  %1147 = vmatpush1.bf16.msra.mxu0 0
  %1148 = vmatprep.subr.bf16.mxu0 0
  %1149 = vmatpush1.bf16.msra.mxu0 0
  %1150 = vmatprep.subr.bf16.mxu0 0
  %1151 = vmatpush1.bf16.msra.mxu0 0
  %1152 = vmatprep.subr.bf16.mxu0 0
  %1153 = vmatpush1.bf16.msra.mxu0 0
  %1154 = vmatprep.subr.bf16.mxu0 0
  %1155 = vmatpush1.bf16.msra.mxu0 0
  %1156 = vmatprep.subr.bf16.mxu0 0
  %1157 = vmatpush1.bf16.msra.mxu0 0
  %1158 = vmatprep.subr.bf16.mxu0 0
  %1159 = vmatpush1.bf16.msra.mxu0 0
  %1160 = vmatprep.mubr.bf16.mxu0 0
  %1161 = vmatmul.mubr.bf16.gmra.mrb[0].mxu0 %v1126
  %v1162 = vpop.f32.mrb[0].mxu0
  %v1163 = vadd.f32 0.0, %v1162
  %v1164 = vpop.f32.mrb[0].mxu0
  %v1165 = vpop.f32.mrb[0].mxu0
  %v1166 = vpop.f32.mrb[0].mxu0
  %1167 = vdwg.mxu0
  %v1176 = vunpack.c.l.b16 %v697
  %v1177 = vunpack.c.l.b16 %v698
  %v1178 = vunpack.c.l.b16 %v699
  %v1179 = vunpack.c.l.b16 %v700
  %v1180 = vunpack.c.l.b16 %v701
  %v1181 = vunpack.c.l.b16 %v702
  %v1182 = vunpack.c.l.b16 %v703
  %v1183 = vunpack.c.l.b16 %v704
  %v1184 = vpack.c.b16 %v1177, %v1176
  %v1185 = vpack.c.b16 %v1179, %v1178
  %v1186 = vpack.c.b16 %v1181, %v1180
  %v1187 = vpack.c.b16 %v1183, %v1182
  %v1193 = vsel %vm316, %v640, 0
  %1195 = vmatprep.subr.bf16.mxu0 0
  %1196 = vmatpush1.bf16.msra.mxu0 %v1184
  %1197 = vmatprep.subr.bf16.mxu0 0
  %1198 = vmatpush1.bf16.msra.mxu0 %v1185
  %1199 = vmatprep.subr.bf16.mxu0 0
  %1200 = vmatpush1.bf16.msra.mxu0 %v1186
  %1201 = vmatprep.subr.bf16.mxu0 0
  %1202 = vmatpush1.bf16.msra.mxu0 %v1187
  %1203 = vmatprep.subr.bf16.mxu0 0
  %1204 = vmatpush1.bf16.msra.mxu0 0
  %1205 = vmatprep.subr.bf16.mxu0 0
  %1206 = vmatpush1.bf16.msra.mxu0 0
  %1207 = vmatprep.subr.bf16.mxu0 0
  %1208 = vmatpush1.bf16.msra.mxu0 0
  %1209 = vmatprep.subr.bf16.mxu0 0
  %1210 = vmatpush1.bf16.msra.mxu0 0
  %1211 = vmatprep.subr.bf16.mxu0 0
  %1212 = vmatpush1.bf16.msra.mxu0 0
  %1213 = vmatprep.subr.bf16.mxu0 0
  %1214 = vmatpush1.bf16.msra.mxu0 0
  %1215 = vmatprep.subr.bf16.mxu0 0
  %1216 = vmatpush1.bf16.msra.mxu0 0
  %1217 = vmatprep.subr.bf16.mxu0 0
  %1218 = vmatpush1.bf16.msra.mxu0 0
  %1219 = vmatprep.subr.bf16.mxu0 0
  %1220 = vmatpush1.bf16.msra.mxu0 0
  %1221 = vmatprep.subr.bf16.mxu0 0
  %1222 = vmatpush1.bf16.msra.mxu0 0
  %1223 = vmatprep.subr.bf16.mxu0 0
  %1224 = vmatpush1.bf16.msra.mxu0 0
  %1225 = vmatprep.subr.bf16.mxu0 0
  %1226 = vmatpush1.bf16.msra.mxu0 0
  %1227 = vmatprep.mubr.bf16.mxu0 0
  %1228 = vmatmul.mubr.bf16.gmra.mrb[0].mxu0 %v1193
  %v1229 = vpop.f32.mrb[0].mxu0
  %v1230 = vadd.f32 0.0, %v1229
  %v1231 = vpop.f32.mrb[0].mxu0
  %v1232 = vpop.f32.mrb[0].mxu0
  %v1233 = vpop.f32.mrb[0].mxu0
  %1234 = vdwg.mxu0
  %v1243 = vunpack.c.l.b16 %v705
  %v1244 = vunpack.c.l.b16 %v706
  %v1245 = vunpack.c.l.b16 %v707
  %v1246 = vunpack.c.l.b16 %v708
  %v1247 = vunpack.c.l.b16 %v709
  %v1248 = vunpack.c.l.b16 %v710
  %v1249 = vunpack.c.l.b16 %v711
  %v1250 = vunpack.c.l.b16 %v712
  %v1251 = vpack.c.b16 %v1244, %v1243
  %v1252 = vpack.c.b16 %v1246, %v1245
  %v1253 = vpack.c.b16 %v1248, %v1247
  %v1254 = vpack.c.b16 %v1250, %v1249
  %v1260 = vsel %vm316, %v641, 0
  %1262 = vmatprep.subr.bf16.mxu0 0
  %1263 = vmatpush1.bf16.msra.mxu0 %v1251
  %1264 = vmatprep.subr.bf16.mxu0 0
  %1265 = vmatpush1.bf16.msra.mxu0 %v1252
  %1266 = vmatprep.subr.bf16.mxu0 0
  %1267 = vmatpush1.bf16.msra.mxu0 %v1253
  %1268 = vmatprep.subr.bf16.mxu0 0
  %1269 = vmatpush1.bf16.msra.mxu0 %v1254
  %1270 = vmatprep.subr.bf16.mxu0 0
  %1271 = vmatpush1.bf16.msra.mxu0 0
  %1272 = vmatprep.subr.bf16.mxu0 0
  %1273 = vmatpush1.bf16.msra.mxu0 0
  %1274 = vmatprep.subr.bf16.mxu0 0
  %1275 = vmatpush1.bf16.msra.mxu0 0
  %1276 = vmatprep.subr.bf16.mxu0 0
  %1277 = vmatpush1.bf16.msra.mxu0 0
  %1278 = vmatprep.subr.bf16.mxu0 0
  %1279 = vmatpush1.bf16.msra.mxu0 0
  %1280 = vmatprep.subr.bf16.mxu0 0
  %1281 = vmatpush1.bf16.msra.mxu0 0
  %1282 = vmatprep.subr.bf16.mxu0 0
  %1283 = vmatpush1.bf16.msra.mxu0 0
  %1284 = vmatprep.subr.bf16.mxu0 0
  %1285 = vmatpush1.bf16.msra.mxu0 0
  %1286 = vmatprep.subr.bf16.mxu0 0
  %1287 = vmatpush1.bf16.msra.mxu0 0
  %1288 = vmatprep.subr.bf16.mxu0 0
  %1289 = vmatpush1.bf16.msra.mxu0 0
  %1290 = vmatprep.subr.bf16.mxu0 0
  %1291 = vmatpush1.bf16.msra.mxu0 0
  %1292 = vmatprep.subr.bf16.mxu0 0
  %1293 = vmatpush1.bf16.msra.mxu0 0
  %1294 = vmatprep.mubr.bf16.mxu0 0
  %1295 = vmatmul.mubr.bf16.gmra.mrb[0].mxu0 %v1260
  %v1296 = vpop.f32.mrb[0].mxu0
  %v1297 = vadd.f32 0.0, %v1296
  %v1298 = vpop.f32.mrb[0].mxu0
  %v1299 = vpop.f32.mrb[0].mxu0
  %v1300 = vpop.f32.mrb[0].mxu0
  %1301 = vdwg.mxu0
  %v1310 = vunpack.c.l.b16 %v713
  %v1311 = vunpack.c.l.b16 %v714
  %v1312 = vunpack.c.l.b16 %v715
  %v1313 = vunpack.c.l.b16 %v716
  %v1314 = vunpack.c.l.b16 %v717
  %v1315 = vunpack.c.l.b16 %v718
  %v1316 = vunpack.c.l.b16 %v719
  %v1317 = vunpack.c.l.b16 %v720
  %v1318 = vpack.c.b16 %v1311, %v1310
  %v1319 = vpack.c.b16 %v1313, %v1312
  %v1320 = vpack.c.b16 %v1315, %v1314
  %v1321 = vpack.c.b16 %v1317, %v1316
  %v1327 = vsel %vm316, %v642, 0
  %1329 = vmatprep.subr.bf16.mxu0 0
  %1330 = vmatpush1.bf16.msra.mxu0 %v1318
  %1331 = vmatprep.subr.bf16.mxu0 0
  %1332 = vmatpush1.bf16.msra.mxu0 %v1319
  %1333 = vmatprep.subr.bf16.mxu0 0
  %1334 = vmatpush1.bf16.msra.mxu0 %v1320
  %1335 = vmatprep.subr.bf16.mxu0 0
  %1336 = vmatpush1.bf16.msra.mxu0 %v1321
  %1337 = vmatprep.subr.bf16.mxu0 0
  %1338 = vmatpush1.bf16.msra.mxu0 0
  %1339 = vmatprep.subr.bf16.mxu0 0
  %1340 = vmatpush1.bf16.msra.mxu0 0
  %1341 = vmatprep.subr.bf16.mxu0 0
  %1342 = vmatpush1.bf16.msra.mxu0 0
  %1343 = vmatprep.subr.bf16.mxu0 0
  %1344 = vmatpush1.bf16.msra.mxu0 0
  %1345 = vmatprep.subr.bf16.mxu0 0
  %1346 = vmatpush1.bf16.msra.mxu0 0
  %1347 = vmatprep.subr.bf16.mxu0 0
  %1348 = vmatpush1.bf16.msra.mxu0 0
  %1349 = vmatprep.subr.bf16.mxu0 0
  %1350 = vmatpush1.bf16.msra.mxu0 0
  %1351 = vmatprep.subr.bf16.mxu0 0
  %1352 = vmatpush1.bf16.msra.mxu0 0
  %1353 = vmatprep.subr.bf16.mxu0 0
  %1354 = vmatpush1.bf16.msra.mxu0 0
  %1355 = vmatprep.subr.bf16.mxu0 0
  %1356 = vmatpush1.bf16.msra.mxu0 0
  %1357 = vmatprep.subr.bf16.mxu0 0
  %1358 = vmatpush1.bf16.msra.mxu0 0
  %1359 = vmatprep.subr.bf16.mxu0 0
  %1360 = vmatpush1.bf16.msra.mxu0 0
  %1361 = vmatprep.mubr.bf16.mxu0 0
  %1362 = vmatmul.mubr.bf16.gmra.mrb[0].mxu0 %v1327
  %v1363 = vpop.f32.mrb[0].mxu0
  %v1364 = vadd.f32 0.0, %v1363
  %v1365 = vpop.f32.mrb[0].mxu0
  %v1366 = vpop.f32.mrb[0].mxu0
  %v1367 = vpop.f32.mrb[0].mxu0
  %1368 = vdwg.mxu0
  %v1377 = vunpack.c.l.b16 %v721
  %v1378 = vunpack.c.l.b16 %v722
  %v1379 = vunpack.c.l.b16 %v723
  %v1380 = vunpack.c.l.b16 %v724
  %v1381 = vunpack.c.l.b16 %v725
  %v1382 = vunpack.c.l.b16 %v726
  %v1383 = vunpack.c.l.b16 %v727
  %v1384 = vunpack.c.l.b16 %v728
  %v1385 = vpack.c.b16 %v1378, %v1377
  %v1386 = vpack.c.b16 %v1380, %v1379
  %v1387 = vpack.c.b16 %v1382, %v1381
  %v1388 = vpack.c.b16 %v1384, %v1383
  %v1394 = vsel %vm316, %v643, 0
  %1396 = vmatprep.subr.bf16.mxu0 0
  %1397 = vmatpush1.bf16.msra.mxu0 %v1385
  %1398 = vmatprep.subr.bf16.mxu0 0
  %1399 = vmatpush1.bf16.msra.mxu0 %v1386
  %1400 = vmatprep.subr.bf16.mxu0 0
  %1401 = vmatpush1.bf16.msra.mxu0 %v1387
  %1402 = vmatprep.subr.bf16.mxu0 0
  %1403 = vmatpush1.bf16.msra.mxu0 %v1388
  %1404 = vmatprep.subr.bf16.mxu0 0
  %1405 = vmatpush1.bf16.msra.mxu0 0
  %1406 = vmatprep.subr.bf16.mxu0 0
  %1407 = vmatpush1.bf16.msra.mxu0 0
  %1408 = vmatprep.subr.bf16.mxu0 0
  %1409 = vmatpush1.bf16.msra.mxu0 0
  %1410 = vmatprep.subr.bf16.mxu0 0
  %1411 = vmatpush1.bf16.msra.mxu0 0
  %1412 = vmatprep.subr.bf16.mxu0 0
  %1413 = vmatpush1.bf16.msra.mxu0 0
  %1414 = vmatprep.subr.bf16.mxu0 0
  %1415 = vmatpush1.bf16.msra.mxu0 0
  %1416 = vmatprep.subr.bf16.mxu0 0
  %1417 = vmatpush1.bf16.msra.mxu0 0
  %1418 = vmatprep.subr.bf16.mxu0 0
  %1419 = vmatpush1.bf16.msra.mxu0 0
  %1420 = vmatprep.subr.bf16.mxu0 0
  %1421 = vmatpush1.bf16.msra.mxu0 0
  %1422 = vmatprep.subr.bf16.mxu0 0
  %1423 = vmatpush1.bf16.msra.mxu0 0
  %1424 = vmatprep.subr.bf16.mxu0 0
  %1425 = vmatpush1.bf16.msra.mxu0 0
  %1426 = vmatprep.subr.bf16.mxu0 0
  %1427 = vmatpush1.bf16.msra.mxu0 0
  %1428 = vmatprep.mubr.bf16.mxu0 0
  %1429 = vmatmul.mubr.bf16.gmra.mrb[0].mxu0 %v1394
  %v1430 = vpop.f32.mrb[0].mxu0
  %v1431 = vadd.f32 0.0, %v1430
  %v1432 = vpop.f32.mrb[0].mxu0
  %v1433 = vpop.f32.mrb[0].mxu0
  %v1434 = vpop.f32.mrb[0].mxu0
  %1435 = vdwg.mxu0
  %v1444 = vunpack.c.l.b16 %v729
  %v1445 = vunpack.c.l.b16 %v730
  %v1446 = vunpack.c.l.b16 %v731
  %v1447 = vunpack.c.l.b16 %v732
  %v1448 = vunpack.c.l.b16 %v733
  %v1449 = vunpack.c.l.b16 %v734
  %v1450 = vunpack.c.l.b16 %v735
  %v1451 = vunpack.c.l.b16 %v736
  %v1452 = vpack.c.b16 %v1445, %v1444
  %v1453 = vpack.c.b16 %v1447, %v1446
  %v1454 = vpack.c.b16 %v1449, %v1448
  %v1455 = vpack.c.b16 %v1451, %v1450
  %v1461 = vsel %vm316, %v644, 0
  %1463 = vmatprep.subr.bf16.mxu0 0
  %1464 = vmatpush1.bf16.msra.mxu0 %v1452
  %1465 = vmatprep.subr.bf16.mxu0 0
  %1466 = vmatpush1.bf16.msra.mxu0 %v1453
  %1467 = vmatprep.subr.bf16.mxu0 0
  %1468 = vmatpush1.bf16.msra.mxu0 %v1454
  %1469 = vmatprep.subr.bf16.mxu0 0
  %1470 = vmatpush1.bf16.msra.mxu0 %v1455
  %1471 = vmatprep.subr.bf16.mxu0 0
  %1472 = vmatpush1.bf16.msra.mxu0 0
  %1473 = vmatprep.subr.bf16.mxu0 0
  %1474 = vmatpush1.bf16.msra.mxu0 0
  %1475 = vmatprep.subr.bf16.mxu0 0
  %1476 = vmatpush1.bf16.msra.mxu0 0
  %1477 = vmatprep.subr.bf16.mxu0 0
  %1478 = vmatpush1.bf16.msra.mxu0 0
  %1479 = vmatprep.subr.bf16.mxu0 0
  %1480 = vmatpush1.bf16.msra.mxu0 0
  %1481 = vmatprep.subr.bf16.mxu0 0
  %1482 = vmatpush1.bf16.msra.mxu0 0
  %1483 = vmatprep.subr.bf16.mxu0 0
  %1484 = vmatpush1.bf16.msra.mxu0 0
  %1485 = vmatprep.subr.bf16.mxu0 0
  %1486 = vmatpush1.bf16.msra.mxu0 0
  %1487 = vmatprep.subr.bf16.mxu0 0
  %1488 = vmatpush1.bf16.msra.mxu0 0
  %1489 = vmatprep.subr.bf16.mxu0 0
  %1490 = vmatpush1.bf16.msra.mxu0 0
  %1491 = vmatprep.subr.bf16.mxu0 0
  %1492 = vmatpush1.bf16.msra.mxu0 0
  %1493 = vmatprep.subr.bf16.mxu0 0
  %1494 = vmatpush1.bf16.msra.mxu0 0
  %1495 = vmatprep.mubr.bf16.mxu0 0
  %1496 = vmatmul.mubr.bf16.gmra.mrb[0].mxu0 %v1461
  %v1497 = vpop.f32.mrb[0].mxu0
  %v1498 = vadd.f32 0.0, %v1497
  %v1499 = vpop.f32.mrb[0].mxu0
  %v1500 = vpop.f32.mrb[0].mxu0
  %v1501 = vpop.f32.mrb[0].mxu0
  %1502 = vdwg.mxu0
  %v1511 = vunpack.c.l.b16 %v737
  %v1512 = vunpack.c.l.b16 %v738
  %v1513 = vunpack.c.l.b16 %v739
  %v1514 = vunpack.c.l.b16 %v740
  %v1515 = vunpack.c.l.b16 %v741
  %v1516 = vunpack.c.l.b16 %v742
  %v1517 = vunpack.c.l.b16 %v743
  %v1518 = vunpack.c.l.b16 %v744
  %v1519 = vpack.c.b16 %v1512, %v1511
  %v1520 = vpack.c.b16 %v1514, %v1513
  %v1521 = vpack.c.b16 %v1516, %v1515
  %v1522 = vpack.c.b16 %v1518, %v1517
  %v1528 = vsel %vm316, %v645, 0
  %1530 = vmatprep.subr.bf16.mxu0 0
  %1531 = vmatpush1.bf16.msra.mxu0 %v1519
  %1532 = vmatprep.subr.bf16.mxu0 0
  %1533 = vmatpush1.bf16.msra.mxu0 %v1520
  %1534 = vmatprep.subr.bf16.mxu0 0
  %1535 = vmatpush1.bf16.msra.mxu0 %v1521
  %1536 = vmatprep.subr.bf16.mxu0 0
  %1537 = vmatpush1.bf16.msra.mxu0 %v1522
  %1538 = vmatprep.subr.bf16.mxu0 0
  %1539 = vmatpush1.bf16.msra.mxu0 0
  %1540 = vmatprep.subr.bf16.mxu0 0
  %1541 = vmatpush1.bf16.msra.mxu0 0
  %1542 = vmatprep.subr.bf16.mxu0 0
  %1543 = vmatpush1.bf16.msra.mxu0 0
  %1544 = vmatprep.subr.bf16.mxu0 0
  %1545 = vmatpush1.bf16.msra.mxu0 0
  %1546 = vmatprep.subr.bf16.mxu0 0
  %1547 = vmatpush1.bf16.msra.mxu0 0
  %1548 = vmatprep.subr.bf16.mxu0 0
  %1549 = vmatpush1.bf16.msra.mxu0 0
  %1550 = vmatprep.subr.bf16.mxu0 0
  %1551 = vmatpush1.bf16.msra.mxu0 0
  %1552 = vmatprep.subr.bf16.mxu0 0
  %1553 = vmatpush1.bf16.msra.mxu0 0
  %1554 = vmatprep.subr.bf16.mxu0 0
  %1555 = vmatpush1.bf16.msra.mxu0 0
  %1556 = vmatprep.subr.bf16.mxu0 0
  %1557 = vmatpush1.bf16.msra.mxu0 0
  %1558 = vmatprep.subr.bf16.mxu0 0
  %1559 = vmatpush1.bf16.msra.mxu0 0
  %1560 = vmatprep.subr.bf16.mxu0 0
  %1561 = vmatpush1.bf16.msra.mxu0 0
  %1562 = vmatprep.mubr.bf16.mxu0 0
  %1563 = vmatmul.mubr.bf16.gmra.mrb[0].mxu0 %v1528
  %v1564 = vpop.f32.mrb[0].mxu0
  %v1565 = vadd.f32 0.0, %v1564
  %v1566 = vpop.f32.mrb[0].mxu0
  %v1567 = vpop.f32.mrb[0].mxu0
  %v1568 = vpop.f32.mrb[0].mxu0
  %1569 = vdwg.mxu0
  %v1578 = vunpack.c.l.b16 %v745
  %v1579 = vunpack.c.l.b16 %v746
  %v1580 = vunpack.c.l.b16 %v747
  %v1581 = vunpack.c.l.b16 %v748
  %v1582 = vunpack.c.l.b16 %v749
  %v1583 = vunpack.c.l.b16 %v750
  %v1584 = vunpack.c.l.b16 %v751
  %v1585 = vunpack.c.l.b16 %v752
  %v1586 = vpack.c.b16 %v1579, %v1578
  %v1587 = vpack.c.b16 %v1581, %v1580
  %v1588 = vpack.c.b16 %v1583, %v1582
  %v1589 = vpack.c.b16 %v1585, %v1584
  %v1595 = vsel %vm316, %v646, 0
  %1597 = vmatprep.subr.bf16.mxu0 0
  %1598 = vmatpush1.bf16.msra.mxu0 %v1586
  %1599 = vmatprep.subr.bf16.mxu0 0
  %1600 = vmatpush1.bf16.msra.mxu0 %v1587
  %1601 = vmatprep.subr.bf16.mxu0 0
  %1602 = vmatpush1.bf16.msra.mxu0 %v1588
  %1603 = vmatprep.subr.bf16.mxu0 0
  %1604 = vmatpush1.bf16.msra.mxu0 %v1589
  %1605 = vmatprep.subr.bf16.mxu0 0
  %1606 = vmatpush1.bf16.msra.mxu0 0
  %1607 = vmatprep.subr.bf16.mxu0 0
  %1608 = vmatpush1.bf16.msra.mxu0 0
  %1609 = vmatprep.subr.bf16.mxu0 0
  %1610 = vmatpush1.bf16.msra.mxu0 0
  %1611 = vmatprep.subr.bf16.mxu0 0
  %1612 = vmatpush1.bf16.msra.mxu0 0
  %1613 = vmatprep.subr.bf16.mxu0 0
  %1614 = vmatpush1.bf16.msra.mxu0 0
  %1615 = vmatprep.subr.bf16.mxu0 0
  %1616 = vmatpush1.bf16.msra.mxu0 0
  %1617 = vmatprep.subr.bf16.mxu0 0
  %1618 = vmatpush1.bf16.msra.mxu0 0
  %1619 = vmatprep.subr.bf16.mxu0 0
  %1620 = vmatpush1.bf16.msra.mxu0 0
  %1621 = vmatprep.subr.bf16.mxu0 0
  %1622 = vmatpush1.bf16.msra.mxu0 0
  %1623 = vmatprep.subr.bf16.mxu0 0
  %1624 = vmatpush1.bf16.msra.mxu0 0
  %1625 = vmatprep.subr.bf16.mxu0 0
  %1626 = vmatpush1.bf16.msra.mxu0 0
  %1627 = vmatprep.subr.bf16.mxu0 0
  %1628 = vmatpush1.bf16.msra.mxu0 0
  %1629 = vmatprep.mubr.bf16.mxu0 0
  %1630 = vmatmul.mubr.bf16.gmra.mrb[0].mxu0 %v1595
  %v1631 = vpop.f32.mrb[0].mxu0
  %v1632 = vadd.f32 0.0, %v1631
  %v1633 = vpop.f32.mrb[0].mxu0
  %v1634 = vpop.f32.mrb[0].mxu0
  %v1635 = vpop.f32.mrb[0].mxu0
  %1636 = vdwg.mxu0
  %v1645 = vunpack.c.l.b16 %v753
  %v1646 = vunpack.c.l.b16 %v754
  %v1647 = vunpack.c.l.b16 %v755
  %v1648 = vunpack.c.l.b16 %v756
  %v1649 = vunpack.c.l.b16 %v757
  %v1650 = vunpack.c.l.b16 %v758
  %v1651 = vunpack.c.l.b16 %v759
  %v1652 = vunpack.c.l.b16 %v760
  %v1653 = vpack.c.b16 %v1646, %v1645
  %v1654 = vpack.c.b16 %v1648, %v1647
  %v1655 = vpack.c.b16 %v1650, %v1649
  %v1656 = vpack.c.b16 %v1652, %v1651
  %v1662 = vsel %vm316, %v647, 0
  %1664 = vmatprep.subr.bf16.mxu0 0
  %1665 = vmatpush1.bf16.msra.mxu0 %v1653
  %1666 = vmatprep.subr.bf16.mxu0 0
  %1667 = vmatpush1.bf16.msra.mxu0 %v1654
  %1668 = vmatprep.subr.bf16.mxu0 0
  %1669 = vmatpush1.bf16.msra.mxu0 %v1655
  %1670 = vmatprep.subr.bf16.mxu0 0
  %1671 = vmatpush1.bf16.msra.mxu0 %v1656
  %1672 = vmatprep.subr.bf16.mxu0 0
  %1673 = vmatpush1.bf16.msra.mxu0 0
  %1674 = vmatprep.subr.bf16.mxu0 0
  %1675 = vmatpush1.bf16.msra.mxu0 0
  %1676 = vmatprep.subr.bf16.mxu0 0
  %1677 = vmatpush1.bf16.msra.mxu0 0
  %1678 = vmatprep.subr.bf16.mxu0 0
  %1679 = vmatpush1.bf16.msra.mxu0 0
  %1680 = vmatprep.subr.bf16.mxu0 0
  %1681 = vmatpush1.bf16.msra.mxu0 0
  %1682 = vmatprep.subr.bf16.mxu0 0
  %1683 = vmatpush1.bf16.msra.mxu0 0
  %1684 = vmatprep.subr.bf16.mxu0 0
  %1685 = vmatpush1.bf16.msra.mxu0 0
  %1686 = vmatprep.subr.bf16.mxu0 0
  %1687 = vmatpush1.bf16.msra.mxu0 0
  %1688 = vmatprep.subr.bf16.mxu0 0
  %1689 = vmatpush1.bf16.msra.mxu0 0
  %1690 = vmatprep.subr.bf16.mxu0 0
  %1691 = vmatpush1.bf16.msra.mxu0 0
  %1692 = vmatprep.subr.bf16.mxu0 0
  %1693 = vmatpush1.bf16.msra.mxu0 0
  %1694 = vmatprep.subr.bf16.mxu0 0
  %1695 = vmatpush1.bf16.msra.mxu0 0
  %1696 = vmatprep.mubr.bf16.mxu0 0
  %1697 = vmatmul.mubr.bf16.gmra.mrb[0].mxu0 %v1662
  %v1698 = vpop.f32.mrb[0].mxu0
  %v1699 = vadd.f32 0.0, %v1698
  %v1700 = vpop.f32.mrb[0].mxu0
  %v1701 = vpop.f32.mrb[0].mxu0
  %v1702 = vpop.f32.mrb[0].mxu0
  %1703 = vdwg.mxu0
  %v1712 = vunpack.c.l.b16 %v761
  %v1713 = vunpack.c.l.b16 %v762
  %v1714 = vunpack.c.l.b16 %v763
  %v1715 = vunpack.c.l.b16 %v764
  %v1716 = vunpack.c.l.b16 %v765
  %v1717 = vunpack.c.l.b16 %v766
  %v1718 = vunpack.c.l.b16 %v767
  %v1719 = vunpack.c.l.b16 %v768
  %v1720 = vpack.c.b16 %v1713, %v1712
  %v1721 = vpack.c.b16 %v1715, %v1714
  %v1722 = vpack.c.b16 %v1717, %v1716
  %v1723 = vpack.c.b16 %v1719, %v1718
  %v1729 = vsel %vm316, %v648, 0
  %1731 = vmatprep.subr.bf16.mxu0 0
  %1732 = vmatpush1.bf16.msra.mxu0 %v1720
  %1733 = vmatprep.subr.bf16.mxu0 0
  %1734 = vmatpush1.bf16.msra.mxu0 %v1721
  %1735 = vmatprep.subr.bf16.mxu0 0
  %1736 = vmatpush1.bf16.msra.mxu0 %v1722
  %1737 = vmatprep.subr.bf16.mxu0 0
  %1738 = vmatpush1.bf16.msra.mxu0 %v1723
  %1739 = vmatprep.subr.bf16.mxu0 0
  %1740 = vmatpush1.bf16.msra.mxu0 0
  %1741 = vmatprep.subr.bf16.mxu0 0
  %1742 = vmatpush1.bf16.msra.mxu0 0
  %1743 = vmatprep.subr.bf16.mxu0 0
  %1744 = vmatpush1.bf16.msra.mxu0 0
  %1745 = vmatprep.subr.bf16.mxu0 0
  %1746 = vmatpush1.bf16.msra.mxu0 0
  %1747 = vmatprep.subr.bf16.mxu0 0
  %1748 = vmatpush1.bf16.msra.mxu0 0
  %1749 = vmatprep.subr.bf16.mxu0 0
  %1750 = vmatpush1.bf16.msra.mxu0 0
  %1751 = vmatprep.subr.bf16.mxu0 0
  %1752 = vmatpush1.bf16.msra.mxu0 0
  %1753 = vmatprep.subr.bf16.mxu0 0
  %1754 = vmatpush1.bf16.msra.mxu0 0
  %1755 = vmatprep.subr.bf16.mxu0 0
  %1756 = vmatpush1.bf16.msra.mxu0 0
  %1757 = vmatprep.subr.bf16.mxu0 0
  %1758 = vmatpush1.bf16.msra.mxu0 0
  %1759 = vmatprep.subr.bf16.mxu0 0
  %1760 = vmatpush1.bf16.msra.mxu0 0
  %1761 = vmatprep.subr.bf16.mxu0 0
  %1762 = vmatpush1.bf16.msra.mxu0 0
  %1763 = vmatprep.mubr.bf16.mxu0 0
  %1764 = vmatmul.mubr.bf16.gmra.mrb[0].mxu0 %v1729
  %v1765 = vpop.f32.mrb[0].mxu0
  %v1766 = vadd.f32 0.0, %v1765
  %v1767 = vpop.f32.mrb[0].mxu0
  %v1768 = vpop.f32.mrb[0].mxu0
  %v1769 = vpop.f32.mrb[0].mxu0
  %1770 = vdwg.mxu0
  %v1779 = vunpack.c.l.b16 %v769
  %v1780 = vunpack.c.l.b16 %v770
  %v1781 = vunpack.c.l.b16 %v771
  %v1782 = vunpack.c.l.b16 %v772
  %v1783 = vunpack.c.l.b16 %v773
  %v1784 = vunpack.c.l.b16 %v774
  %v1785 = vunpack.c.l.b16 %v775
  %v1786 = vunpack.c.l.b16 %v776
  %v1787 = vpack.c.b16 %v1780, %v1779
  %v1788 = vpack.c.b16 %v1782, %v1781
  %v1789 = vpack.c.b16 %v1784, %v1783
  %v1790 = vpack.c.b16 %v1786, %v1785
  %v1796 = vsel %vm316, %v649, 0
  %1798 = vmatprep.subr.bf16.mxu0 0
  %1799 = vmatpush1.bf16.msra.mxu0 %v1787
  %1800 = vmatprep.subr.bf16.mxu0 0
  %1801 = vmatpush1.bf16.msra.mxu0 %v1788
  %1802 = vmatprep.subr.bf16.mxu0 0
  %1803 = vmatpush1.bf16.msra.mxu0 %v1789
  %1804 = vmatprep.subr.bf16.mxu0 0
  %1805 = vmatpush1.bf16.msra.mxu0 %v1790
  %1806 = vmatprep.subr.bf16.mxu0 0
  %1807 = vmatpush1.bf16.msra.mxu0 0
  %1808 = vmatprep.subr.bf16.mxu0 0
  %1809 = vmatpush1.bf16.msra.mxu0 0
  %1810 = vmatprep.subr.bf16.mxu0 0
  %1811 = vmatpush1.bf16.msra.mxu0 0
  %1812 = vmatprep.subr.bf16.mxu0 0
  %1813 = vmatpush1.bf16.msra.mxu0 0
  %1814 = vmatprep.subr.bf16.mxu0 0
  %1815 = vmatpush1.bf16.msra.mxu0 0
  %1816 = vmatprep.subr.bf16.mxu0 0
  %1817 = vmatpush1.bf16.msra.mxu0 0
  %1818 = vmatprep.subr.bf16.mxu0 0
  %1819 = vmatpush1.bf16.msra.mxu0 0
  %1820 = vmatprep.subr.bf16.mxu0 0
  %1821 = vmatpush1.bf16.msra.mxu0 0
  %1822 = vmatprep.subr.bf16.mxu0 0
  %1823 = vmatpush1.bf16.msra.mxu0 0
  %1824 = vmatprep.subr.bf16.mxu0 0
  %1825 = vmatpush1.bf16.msra.mxu0 0
  %1826 = vmatprep.subr.bf16.mxu0 0
  %1827 = vmatpush1.bf16.msra.mxu0 0
  %1828 = vmatprep.subr.bf16.mxu0 0
  %1829 = vmatpush1.bf16.msra.mxu0 0
  %1830 = vmatprep.mubr.bf16.mxu0 0
  %1831 = vmatmul.mubr.bf16.gmra.mrb[0].mxu0 %v1796
  %v1832 = vpop.f32.mrb[0].mxu0
  %v1833 = vadd.f32 0.0, %v1832
  %v1834 = vpop.f32.mrb[0].mxu0
  %v1835 = vpop.f32.mrb[0].mxu0
  %v1836 = vpop.f32.mrb[0].mxu0
  %1837 = vdwg.mxu0
  %v1846 = vunpack.c.l.b16 %v777
  %v1847 = vunpack.c.l.b16 %v778
  %v1848 = vunpack.c.l.b16 %v779
  %v1849 = vunpack.c.l.b16 %v780
  %v1850 = vunpack.c.l.b16 %v781
  %v1851 = vunpack.c.l.b16 %v782
  %v1852 = vunpack.c.l.b16 %v783
  %v1853 = vunpack.c.l.b16 %v784
  %v1854 = vpack.c.b16 %v1847, %v1846
  %v1855 = vpack.c.b16 %v1849, %v1848
  %v1856 = vpack.c.b16 %v1851, %v1850
  %v1857 = vpack.c.b16 %v1853, %v1852
  %v1863 = vsel %vm316, %v650, 0
  %1865 = vmatprep.subr.bf16.mxu0 0
  %1866 = vmatpush1.bf16.msra.mxu0 %v1854
  %1867 = vmatprep.subr.bf16.mxu0 0
  %1868 = vmatpush1.bf16.msra.mxu0 %v1855
  %1869 = vmatprep.subr.bf16.mxu0 0
  %1870 = vmatpush1.bf16.msra.mxu0 %v1856
  %1871 = vmatprep.subr.bf16.mxu0 0
  %1872 = vmatpush1.bf16.msra.mxu0 %v1857
  %1873 = vmatprep.subr.bf16.mxu0 0
  %1874 = vmatpush1.bf16.msra.mxu0 0
  %1875 = vmatprep.subr.bf16.mxu0 0
  %1876 = vmatpush1.bf16.msra.mxu0 0
  %1877 = vmatprep.subr.bf16.mxu0 0
  %1878 = vmatpush1.bf16.msra.mxu0 0
  %1879 = vmatprep.subr.bf16.mxu0 0
  %1880 = vmatpush1.bf16.msra.mxu0 0
  %1881 = vmatprep.subr.bf16.mxu0 0
  %1882 = vmatpush1.bf16.msra.mxu0 0
  %1883 = vmatprep.subr.bf16.mxu0 0
  %1884 = vmatpush1.bf16.msra.mxu0 0
  %1885 = vmatprep.subr.bf16.mxu0 0
  %1886 = vmatpush1.bf16.msra.mxu0 0
  %1887 = vmatprep.subr.bf16.mxu0 0
  %1888 = vmatpush1.bf16.msra.mxu0 0
  %1889 = vmatprep.subr.bf16.mxu0 0
  %1890 = vmatpush1.bf16.msra.mxu0 0
  %1891 = vmatprep.subr.bf16.mxu0 0
  %1892 = vmatpush1.bf16.msra.mxu0 0
  %1893 = vmatprep.subr.bf16.mxu0 0
  %1894 = vmatpush1.bf16.msra.mxu0 0
  %1895 = vmatprep.subr.bf16.mxu0 0
  %1896 = vmatpush1.bf16.msra.mxu0 0
  %1897 = vmatprep.mubr.bf16.mxu0 0
  %1898 = vmatmul.mubr.bf16.gmra.mrb[0].mxu0 %v1863
  %v1899 = vpop.f32.mrb[0].mxu0
  %v1900 = vadd.f32 0.0, %v1899
  %v1901 = vpop.f32.mrb[0].mxu0
  %v1902 = vpop.f32.mrb[0].mxu0
  %v1903 = vpop.f32.mrb[0].mxu0
  %1904 = vdwg.mxu0
  %v1913 = vunpack.c.l.b16 %v785
  %v1914 = vunpack.c.l.b16 %v786
  %v1915 = vunpack.c.l.b16 %v787
  %v1916 = vunpack.c.l.b16 %v788
  %v1917 = vunpack.c.l.b16 %v789
  %v1918 = vunpack.c.l.b16 %v790
  %v1919 = vunpack.c.l.b16 %v791
  %v1920 = vunpack.c.l.b16 %v792
  %v1921 = vpack.c.b16 %v1914, %v1913
  %v1922 = vpack.c.b16 %v1916, %v1915
  %v1923 = vpack.c.b16 %v1918, %v1917
  %v1924 = vpack.c.b16 %v1920, %v1919
  %v1930 = vsel %vm316, %v651, 0
  %1932 = vmatprep.subr.bf16.mxu0 0
  %1933 = vmatpush1.bf16.msra.mxu0 %v1921
  %1934 = vmatprep.subr.bf16.mxu0 0
  %1935 = vmatpush1.bf16.msra.mxu0 %v1922
  %1936 = vmatprep.subr.bf16.mxu0 0
  %1937 = vmatpush1.bf16.msra.mxu0 %v1923
  %1938 = vmatprep.subr.bf16.mxu0 0
  %1939 = vmatpush1.bf16.msra.mxu0 %v1924
  %1940 = vmatprep.subr.bf16.mxu0 0
  %1941 = vmatpush1.bf16.msra.mxu0 0
  %1942 = vmatprep.subr.bf16.mxu0 0
  %1943 = vmatpush1.bf16.msra.mxu0 0
  %1944 = vmatprep.subr.bf16.mxu0 0
  %1945 = vmatpush1.bf16.msra.mxu0 0
  %1946 = vmatprep.subr.bf16.mxu0 0
  %1947 = vmatpush1.bf16.msra.mxu0 0
  %1948 = vmatprep.subr.bf16.mxu0 0
  %1949 = vmatpush1.bf16.msra.mxu0 0
  %1950 = vmatprep.subr.bf16.mxu0 0
  %1951 = vmatpush1.bf16.msra.mxu0 0
  %1952 = vmatprep.subr.bf16.mxu0 0
  %1953 = vmatpush1.bf16.msra.mxu0 0
  %1954 = vmatprep.subr.bf16.mxu0 0
  %1955 = vmatpush1.bf16.msra.mxu0 0
  %1956 = vmatprep.subr.bf16.mxu0 0
  %1957 = vmatpush1.bf16.msra.mxu0 0
  %1958 = vmatprep.subr.bf16.mxu0 0
  %1959 = vmatpush1.bf16.msra.mxu0 0
  %1960 = vmatprep.subr.bf16.mxu0 0
  %1961 = vmatpush1.bf16.msra.mxu0 0
  %1962 = vmatprep.subr.bf16.mxu0 0
  %1963 = vmatpush1.bf16.msra.mxu0 0
  %1964 = vmatprep.mubr.bf16.mxu0 0
  %1965 = vmatmul.mubr.bf16.gmra.mrb[0].mxu0 %v1930
  %v1966 = vpop.f32.mrb[0].mxu0
  %v1967 = vadd.f32 0.0, %v1966
  %v1968 = vpop.f32.mrb[0].mxu0
  %v1969 = vpop.f32.mrb[0].mxu0
  %v1970 = vpop.f32.mrb[0].mxu0
  %1971 = vdwg.mxu0
  %v1980 = vunpack.c.l.b16 %v793
  %v1981 = vunpack.c.l.b16 %v794
  %v1982 = vunpack.c.l.b16 %v795
  %v1983 = vunpack.c.l.b16 %v796
  %v1984 = vunpack.c.l.b16 %v797
  %v1985 = vunpack.c.l.b16 %v798
  %v1986 = vunpack.c.l.b16 %v799
  %v1987 = vunpack.c.l.b16 %v800
  %v1988 = vpack.c.b16 %v1981, %v1980
  %v1989 = vpack.c.b16 %v1983, %v1982
  %v1990 = vpack.c.b16 %v1985, %v1984
  %v1991 = vpack.c.b16 %v1987, %v1986
  %v1997 = vsel %vm316, %v652, 0
  %1999 = vmatprep.subr.bf16.mxu0 0
  %2000 = vmatpush1.bf16.msra.mxu0 %v1988
  %2001 = vmatprep.subr.bf16.mxu0 0
  %2002 = vmatpush1.bf16.msra.mxu0 %v1989
  %2003 = vmatprep.subr.bf16.mxu0 0
  %2004 = vmatpush1.bf16.msra.mxu0 %v1990
  %2005 = vmatprep.subr.bf16.mxu0 0
  %2006 = vmatpush1.bf16.msra.mxu0 %v1991
  %2007 = vmatprep.subr.bf16.mxu0 0
  %2008 = vmatpush1.bf16.msra.mxu0 0
  %2009 = vmatprep.subr.bf16.mxu0 0
  %2010 = vmatpush1.bf16.msra.mxu0 0
  %2011 = vmatprep.subr.bf16.mxu0 0
  %2012 = vmatpush1.bf16.msra.mxu0 0
  %2013 = vmatprep.subr.bf16.mxu0 0
  %2014 = vmatpush1.bf16.msra.mxu0 0
  %2015 = vmatprep.subr.bf16.mxu0 0
  %2016 = vmatpush1.bf16.msra.mxu0 0
  %2017 = vmatprep.subr.bf16.mxu0 0
  %2018 = vmatpush1.bf16.msra.mxu0 0
  %2019 = vmatprep.subr.bf16.mxu0 0
  %2020 = vmatpush1.bf16.msra.mxu0 0
  %2021 = vmatprep.subr.bf16.mxu0 0
  %2022 = vmatpush1.bf16.msra.mxu0 0
  %2023 = vmatprep.subr.bf16.mxu0 0
  %2024 = vmatpush1.bf16.msra.mxu0 0
  %2025 = vmatprep.subr.bf16.mxu0 0
  %2026 = vmatpush1.bf16.msra.mxu0 0
  %2027 = vmatprep.subr.bf16.mxu0 0
  %2028 = vmatpush1.bf16.msra.mxu0 0
  %2029 = vmatprep.subr.bf16.mxu0 0
  %2030 = vmatpush1.bf16.msra.mxu0 0
  %2031 = vmatprep.mubr.bf16.mxu0 0
  %2032 = vmatmul.mubr.bf16.gmra.mrb[0].mxu0 %v1997
  %v2033 = vpop.f32.mrb[0].mxu0
  %v2034 = vadd.f32 0.0, %v2033
  %v2035 = vpop.f32.mrb[0].mxu0
  %v2036 = vpop.f32.mrb[0].mxu0
  %v2037 = vpop.f32.mrb[0].mxu0
  %2038 = vdwg.mxu0
  %v2047 = vunpack.c.l.b16 %v801
  %v2048 = vunpack.c.l.b16 %v802
  %v2049 = vunpack.c.l.b16 %v803
  %v2050 = vunpack.c.l.b16 %v804
  %v2051 = vunpack.c.l.b16 %v805
  %v2052 = vunpack.c.l.b16 %v806
  %v2053 = vunpack.c.l.b16 %v807
  %v2054 = vunpack.c.l.b16 %v808
  %v2055 = vpack.c.b16 %v2048, %v2047
  %v2056 = vpack.c.b16 %v2050, %v2049
  %v2057 = vpack.c.b16 %v2052, %v2051
  %v2058 = vpack.c.b16 %v2054, %v2053
  %v2064 = vsel %vm316, %v653, 0
  %2066 = vmatprep.subr.bf16.mxu0 0
  %2067 = vmatpush1.bf16.msra.mxu0 %v2055
  %2068 = vmatprep.subr.bf16.mxu0 0
  %2069 = vmatpush1.bf16.msra.mxu0 %v2056
  %2070 = vmatprep.subr.bf16.mxu0 0
  %2071 = vmatpush1.bf16.msra.mxu0 %v2057
  %2072 = vmatprep.subr.bf16.mxu0 0
  %2073 = vmatpush1.bf16.msra.mxu0 %v2058
  %2074 = vmatprep.subr.bf16.mxu0 0
  %2075 = vmatpush1.bf16.msra.mxu0 0
  %2076 = vmatprep.subr.bf16.mxu0 0
  %2077 = vmatpush1.bf16.msra.mxu0 0
  %2078 = vmatprep.subr.bf16.mxu0 0
  %2079 = vmatpush1.bf16.msra.mxu0 0
  %2080 = vmatprep.subr.bf16.mxu0 0
  %2081 = vmatpush1.bf16.msra.mxu0 0
  %2082 = vmatprep.subr.bf16.mxu0 0
  %2083 = vmatpush1.bf16.msra.mxu0 0
  %2084 = vmatprep.subr.bf16.mxu0 0
  %2085 = vmatpush1.bf16.msra.mxu0 0
  %2086 = vmatprep.subr.bf16.mxu0 0
  %2087 = vmatpush1.bf16.msra.mxu0 0
  %2088 = vmatprep.subr.bf16.mxu0 0
  %2089 = vmatpush1.bf16.msra.mxu0 0
  %2090 = vmatprep.subr.bf16.mxu0 0
  %2091 = vmatpush1.bf16.msra.mxu0 0
  %2092 = vmatprep.subr.bf16.mxu0 0
  %2093 = vmatpush1.bf16.msra.mxu0 0
  %2094 = vmatprep.subr.bf16.mxu0 0
  %2095 = vmatpush1.bf16.msra.mxu0 0
  %2096 = vmatprep.subr.bf16.mxu0 0
  %2097 = vmatpush1.bf16.msra.mxu0 0
  %2098 = vmatprep.mubr.bf16.mxu0 0
  %2099 = vmatmul.mubr.bf16.gmra.mrb[0].mxu0 %v2064
  %v2100 = vpop.f32.mrb[0].mxu0
  %v2101 = vadd.f32 0.0, %v2100
  %v2102 = vpop.f32.mrb[0].mxu0
  %v2103 = vpop.f32.mrb[0].mxu0
  %v2104 = vpop.f32.mrb[0].mxu0
  %2105 = vdwg.mxu0
  %v2114 = vunpack.c.l.b16 %v809
  %v2115 = vunpack.c.l.b16 %v810
  %v2116 = vunpack.c.l.b16 %v811
  %v2117 = vunpack.c.l.b16 %v812
  %v2118 = vunpack.c.l.b16 %v813
  %v2119 = vunpack.c.l.b16 %v814
  %v2120 = vunpack.c.l.b16 %v815
  %v2121 = vunpack.c.l.b16 %v816
  %v2122 = vpack.c.b16 %v2115, %v2114
  %v2123 = vpack.c.b16 %v2117, %v2116
  %v2124 = vpack.c.b16 %v2119, %v2118
  %v2125 = vpack.c.b16 %v2121, %v2120
  %v2131 = vsel %vm316, %v654, 0
  %2133 = vmatprep.subr.bf16.mxu0 0
  %2134 = vmatpush1.bf16.msra.mxu0 %v2122
  %2135 = vmatprep.subr.bf16.mxu0 0
  %2136 = vmatpush1.bf16.msra.mxu0 %v2123
  %2137 = vmatprep.subr.bf16.mxu0 0
  %2138 = vmatpush1.bf16.msra.mxu0 %v2124
  %2139 = vmatprep.subr.bf16.mxu0 0
  %2140 = vmatpush1.bf16.msra.mxu0 %v2125
  %2141 = vmatprep.subr.bf16.mxu0 0
  %2142 = vmatpush1.bf16.msra.mxu0 0
  %2143 = vmatprep.subr.bf16.mxu0 0
  %2144 = vmatpush1.bf16.msra.mxu0 0
  %2145 = vmatprep.subr.bf16.mxu0 0
  %2146 = vmatpush1.bf16.msra.mxu0 0
  %2147 = vmatprep.subr.bf16.mxu0 0
  %2148 = vmatpush1.bf16.msra.mxu0 0
  %2149 = vmatprep.subr.bf16.mxu0 0
  %2150 = vmatpush1.bf16.msra.mxu0 0
  %2151 = vmatprep.subr.bf16.mxu0 0
  %2152 = vmatpush1.bf16.msra.mxu0 0
  %2153 = vmatprep.subr.bf16.mxu0 0
  %2154 = vmatpush1.bf16.msra.mxu0 0
  %2155 = vmatprep.subr.bf16.mxu0 0
  %2156 = vmatpush1.bf16.msra.mxu0 0
  %2157 = vmatprep.subr.bf16.mxu0 0
  %2158 = vmatpush1.bf16.msra.mxu0 0
  %2159 = vmatprep.subr.bf16.mxu0 0
  %2160 = vmatpush1.bf16.msra.mxu0 0
  %2161 = vmatprep.subr.bf16.mxu0 0
  %2162 = vmatpush1.bf16.msra.mxu0 0
  %2163 = vmatprep.subr.bf16.mxu0 0
  %2164 = vmatpush1.bf16.msra.mxu0 0
  %2165 = vmatprep.mubr.bf16.mxu0 0
  %2166 = vmatmul.mubr.bf16.gmra.mrb[0].mxu0 %v2131
  %v2167 = vpop.f32.mrb[0].mxu0
  %v2168 = vadd.f32 0.0, %v2167
  %v2169 = vpop.f32.mrb[0].mxu0
  %v2170 = vpop.f32.mrb[0].mxu0
  %v2171 = vpop.f32.mrb[0].mxu0
  %2172 = vdwg.mxu0
  %v2181 = vunpack.c.l.b16 %v817
  %v2182 = vunpack.c.l.b16 %v818
  %v2183 = vunpack.c.l.b16 %v819
  %v2184 = vunpack.c.l.b16 %v820
  %v2185 = vunpack.c.l.b16 %v821
  %v2186 = vunpack.c.l.b16 %v822
  %v2187 = vunpack.c.l.b16 %v823
  %v2188 = vunpack.c.l.b16 %v824
  %v2189 = vpack.c.b16 %v2182, %v2181
  %v2190 = vpack.c.b16 %v2184, %v2183
  %v2191 = vpack.c.b16 %v2186, %v2185
  %v2192 = vpack.c.b16 %v2188, %v2187
  %v2198 = vsel %vm316, %v655, 0
  %2200 = vmatprep.subr.bf16.mxu0 0
  %2201 = vmatpush1.bf16.msra.mxu0 %v2189
  %2202 = vmatprep.subr.bf16.mxu0 0
  %2203 = vmatpush1.bf16.msra.mxu0 %v2190
  %2204 = vmatprep.subr.bf16.mxu0 0
  %2205 = vmatpush1.bf16.msra.mxu0 %v2191
  %2206 = vmatprep.subr.bf16.mxu0 0
  %2207 = vmatpush1.bf16.msra.mxu0 %v2192
  %2208 = vmatprep.subr.bf16.mxu0 0
  %2209 = vmatpush1.bf16.msra.mxu0 0
  %2210 = vmatprep.subr.bf16.mxu0 0
  %2211 = vmatpush1.bf16.msra.mxu0 0
  %2212 = vmatprep.subr.bf16.mxu0 0
  %2213 = vmatpush1.bf16.msra.mxu0 0
  %2214 = vmatprep.subr.bf16.mxu0 0
  %2215 = vmatpush1.bf16.msra.mxu0 0
  %2216 = vmatprep.subr.bf16.mxu0 0
  %2217 = vmatpush1.bf16.msra.mxu0 0
  %2218 = vmatprep.subr.bf16.mxu0 0
  %2219 = vmatpush1.bf16.msra.mxu0 0
  %2220 = vmatprep.subr.bf16.mxu0 0
  %2221 = vmatpush1.bf16.msra.mxu0 0
  %2222 = vmatprep.subr.bf16.mxu0 0
  %2223 = vmatpush1.bf16.msra.mxu0 0
  %2224 = vmatprep.subr.bf16.mxu0 0
  %2225 = vmatpush1.bf16.msra.mxu0 0
  %2226 = vmatprep.subr.bf16.mxu0 0
  %2227 = vmatpush1.bf16.msra.mxu0 0
  %2228 = vmatprep.subr.bf16.mxu0 0
  %2229 = vmatpush1.bf16.msra.mxu0 0
  %2230 = vmatprep.subr.bf16.mxu0 0
  %2231 = vmatpush1.bf16.msra.mxu0 0
  %2232 = vmatprep.mubr.bf16.mxu0 0
  %2233 = vmatmul.mubr.bf16.gmra.mrb[0].mxu0 %v2198
  %v2234 = vpop.f32.mrb[0].mxu0
  %v2235 = vadd.f32 0.0, %v2234
  %v2236 = vpop.f32.mrb[0].mxu0
  %v2237 = vpop.f32.mrb[0].mxu0
  %v2238 = vpop.f32.mrb[0].mxu0
  %2239 = vdwg.mxu0
  %v2248 = vunpack.c.l.b16 %v825
  %v2249 = vunpack.c.l.b16 %v826
  %v2250 = vunpack.c.l.b16 %v827
  %v2251 = vunpack.c.l.b16 %v828
  %v2252 = vunpack.c.l.b16 %v829
  %v2253 = vunpack.c.l.b16 %v830
  %v2254 = vunpack.c.l.b16 %v831
  %v2255 = vunpack.c.l.b16 %v832
  %v2256 = vpack.c.b16 %v2249, %v2248
  %v2257 = vpack.c.b16 %v2251, %v2250
  %v2258 = vpack.c.b16 %v2253, %v2252
  %v2259 = vpack.c.b16 %v2255, %v2254
  %v2265 = vsel %vm316, %v656, 0
  %2267 = vmatprep.subr.bf16.mxu0 0
  %2268 = vmatpush1.bf16.msra.mxu0 %v2256
  %2269 = vmatprep.subr.bf16.mxu0 0
  %2270 = vmatpush1.bf16.msra.mxu0 %v2257
  %2271 = vmatprep.subr.bf16.mxu0 0
  %2272 = vmatpush1.bf16.msra.mxu0 %v2258
  %2273 = vmatprep.subr.bf16.mxu0 0
  %2274 = vmatpush1.bf16.msra.mxu0 %v2259
  %2275 = vmatprep.subr.bf16.mxu0 0
  %2276 = vmatpush1.bf16.msra.mxu0 0
  %2277 = vmatprep.subr.bf16.mxu0 0
  %2278 = vmatpush1.bf16.msra.mxu0 0
  %2279 = vmatprep.subr.bf16.mxu0 0
  %2280 = vmatpush1.bf16.msra.mxu0 0
  %2281 = vmatprep.subr.bf16.mxu0 0
  %2282 = vmatpush1.bf16.msra.mxu0 0
  %2283 = vmatprep.subr.bf16.mxu0 0
  %2284 = vmatpush1.bf16.msra.mxu0 0
  %2285 = vmatprep.subr.bf16.mxu0 0
  %2286 = vmatpush1.bf16.msra.mxu0 0
  %2287 = vmatprep.subr.bf16.mxu0 0
  %2288 = vmatpush1.bf16.msra.mxu0 0
  %2289 = vmatprep.subr.bf16.mxu0 0
  %2290 = vmatpush1.bf16.msra.mxu0 0
  %2291 = vmatprep.subr.bf16.mxu0 0
  %2292 = vmatpush1.bf16.msra.mxu0 0
  %2293 = vmatprep.subr.bf16.mxu0 0
  %2294 = vmatpush1.bf16.msra.mxu0 0
  %2295 = vmatprep.subr.bf16.mxu0 0
  %2296 = vmatpush1.bf16.msra.mxu0 0
  %2297 = vmatprep.subr.bf16.mxu0 0
  %2298 = vmatpush1.bf16.msra.mxu0 0
  %2299 = vmatprep.mubr.bf16.mxu0 0
  %2300 = vmatmul.mubr.bf16.gmra.mrb[0].mxu0 %v2265
  %v2301 = vpop.f32.mrb[0].mxu0
  %v2302 = vadd.f32 0.0, %v2301
  %v2303 = vpop.f32.mrb[0].mxu0
  %v2304 = vpop.f32.mrb[0].mxu0
  %v2305 = vpop.f32.mrb[0].mxu0
  %2306 = vdwg.mxu0
  %v2307 = vld [vmem:[%s5] sm:$0xff]
  %v2308 = vld [vmem:[%s5 + $0x8] sm:$0xff]
  %v2309 = vld [vmem:[%s5 + $0x10] sm:$0xff]
  %v2310 = vld [vmem:[%s5 + $0x18] sm:$0xff]
  %v2311 = vld [vmem:[%s5 + $0x20] sm:$0xff]
  %v2312 = vld [vmem:[%s5 + $0x28] sm:$0xff]
  %v2313 = vld [vmem:[%s5 + $0x30] sm:$0xff]
  %v2314 = vld [vmem:[%s5 + $0x38] sm:$0xff]
  %v2315 = vld [vmem:[%s5 + $0x40] sm:$0xff]
  %v2316 = vld [vmem:[%s5 + $0x48] sm:$0xff]
  %v2317 = vld [vmem:[%s5 + $0x50] sm:$0xff]
  %v2318 = vld [vmem:[%s5 + $0x58] sm:$0xff]
  %v2319 = vld [vmem:[%s5 + $0x60] sm:$0xff]
  %v2320 = vld [vmem:[%s5 + $0x68] sm:$0xff]
  %v2321 = vld [vmem:[%s5 + $0x70] sm:$0xff]
  %v2322 = vld [vmem:[%s5 + $0x78] sm:$0xff]
  %v2323 = vld [vmem:[%s4] sm:$0xff]
  %v2324 = vld [vmem:[%s4 + $0x8] sm:$0xff]
  %v2325 = vld [vmem:[%s4 + $0x10] sm:$0xff]
  %v2326 = vld [vmem:[%s4 + $0x18] sm:$0xff]
  %v2327 = vld [vmem:[%s4 + $0x20] sm:$0xff]
  %v2328 = vld [vmem:[%s4 + $0x28] sm:$0xff]
  %v2329 = vld [vmem:[%s4 + $0x30] sm:$0xff]
  %v2330 = vld [vmem:[%s4 + $0x38] sm:$0xff]
  %v2331 = vld [vmem:[%s4 + $0x40] sm:$0xff]
  %v2332 = vld [vmem:[%s4 + $0x48] sm:$0xff]
  %v2333 = vld [vmem:[%s4 + $0x50] sm:$0xff]
  %v2334 = vld [vmem:[%s4 + $0x58] sm:$0xff]
  %v2335 = vld [vmem:[%s4 + $0x60] sm:$0xff]
  %v2336 = vld [vmem:[%s4 + $0x68] sm:$0xff]
  %v2337 = vld [vmem:[%s4 + $0x70] sm:$0xff]
  %v2338 = vld [vmem:[%s4 + $0x78] sm:$0xff]
  %v2339 = vld [vmem:[%s4 + $0x80] sm:$0xff]
  %v2340 = vld [vmem:[%s4 + $0x88] sm:$0xff]
  %v2341 = vld [vmem:[%s4 + $0x90] sm:$0xff]
  %v2342 = vld [vmem:[%s4 + $0x98] sm:$0xff]
  %v2343 = vld [vmem:[%s4 + $0xa0] sm:$0xff]
  %v2344 = vld [vmem:[%s4 + $0xa8] sm:$0xff]
  %v2345 = vld [vmem:[%s4 + $0xb0] sm:$0xff]
  %v2346 = vld [vmem:[%s4 + $0xb8] sm:$0xff]
  %v2347 = vld [vmem:[%s4 + $0xc0] sm:$0xff]
  %v2348 = vld [vmem:[%s4 + $0xc8] sm:$0xff]
  %v2349 = vld [vmem:[%s4 + $0xd0] sm:$0xff]
  %v2350 = vld [vmem:[%s4 + $0xd8] sm:$0xff]
  %v2351 = vld [vmem:[%s4 + $0xe0] sm:$0xff]
  %v2352 = vld [vmem:[%s4 + $0xe8] sm:$0xff]
  %v2353 = vld [vmem:[%s4 + $0xf0] sm:$0xff]
  %v2354 = vld [vmem:[%s4 + $0xf8] sm:$0xff]
  %vm2355 = vcmask 392192
  %v2357 = vsel %vm2355, %v2324, 0
  %v2360 = vsel %vm2355, %v2326, 0
  %v2363 = vsel %vm2355, %v2328, 0
  %v2366 = vsel %vm2355, %v2330, 0
  %v2369 = vsel %vm2355, %v2332, 0
  %v2372 = vsel %vm2355, %v2334, 0
  %v2375 = vsel %vm2355, %v2336, 0
  %v2378 = vsel %vm2355, %v2338, 0
  %v2381 = vsel %vm2355, %v2340, 0
  %v2384 = vsel %vm2355, %v2342, 0
  %v2387 = vsel %vm2355, %v2344, 0
  %v2390 = vsel %vm2355, %v2346, 0
  %v2393 = vsel %vm2355, %v2348, 0
  %v2396 = vsel %vm2355, %v2350, 0
  %v2399 = vsel %vm2355, %v2352, 0
  %v2402 = vsel %vm2355, %v2354, 0
  %2404 = vmatprep.subr.mxu0 0.0
  %2405 = vmatpush1.msra.mxu0 %v895
  %2406 = vmatprep.subr.mxu0 0.0
  %2407 = vmatpush1.msra.mxu0 %v962
  %2408 = vmatprep.subr.mxu0 0.0
  %2409 = vmatpush1.msra.mxu0 %v1029
  %2410 = vmatprep.subr.mxu0 0.0
  %2411 = vmatpush1.msra.mxu0 %v1096
  %2412 = vmatprep.subr.mxu0 0.0
  %2413 = vmatpush1.msra.mxu0 %v1163
  %2414 = vmatprep.subr.mxu0 0.0
  %2415 = vmatpush1.msra.mxu0 %v1230
  %2416 = vmatprep.subr.mxu0 0.0
  %2417 = vmatpush1.msra.mxu0 %v1297
  %2418 = vmatprep.subr.mxu0 0.0
  %2419 = vmatpush1.msra.mxu0 %v1364
  %2420 = vmatprep.subr.mxu0 0.0
  %2421 = vmatpush1.msra.mxu0 %v1431
  %2422 = vmatprep.subr.mxu0 0.0
  %2423 = vmatpush1.msra.mxu0 %v1498
  %2424 = vmatprep.subr.mxu0 0.0
  %2425 = vmatpush1.msra.mxu0 %v1565
  %2426 = vmatprep.subr.mxu0 0.0
  %2427 = vmatpush1.msra.mxu0 %v1632
  %2428 = vmatprep.subr.mxu0 0.0
  %2429 = vmatpush1.msra.mxu0 %v1699
  %2430 = vmatprep.subr.mxu0 0.0
  %2431 = vmatpush1.msra.mxu0 %v1766
  %2432 = vmatprep.subr.mxu0 0.0
  %2433 = vmatpush1.msra.mxu0 %v1833
  %2434 = vmatprep.subr.mxu0 0.0
  %2435 = vmatpush1.msra.mxu0 %v1900
  %2436 = vmatprep.subr.mxu0 0.0
  %2437 = vmatpush1.msra.mxu0 %v1967
  %2438 = vmatprep.subr.mxu0 0.0
  %2439 = vmatpush1.msra.mxu0 %v2034
  %2440 = vmatprep.subr.mxu0 0.0
  %2441 = vmatpush1.msra.mxu0 %v2101
  %2442 = vmatprep.subr.mxu0 0.0
  %2443 = vmatpush1.msra.mxu0 %v2168
  %2444 = vmatprep.subr.mxu0 0.0
  %2445 = vmatpush1.msra.mxu0 %v2235
  %2446 = vmatprep.subr.mxu0 0.0
  %2447 = vmatpush1.msra.mxu0 %v2302
  %2448 = vmatprep.subr.mxu0 0.0
  %2449 = vmatpush1.msra.mxu0 0.0
  %2450 = vmatprep.subr.mxu0 0.0
  %2451 = vmatpush1.msra.mxu0 0.0
  %2452 = vmatprep.subr.mxu0 0.0
  %2453 = vmatpush1.msra.mxu0 0.0
  %2454 = vmatprep.subr.mxu0 0.0
  %2455 = vmatpush1.msra.mxu0 0.0
  %2456 = vmatprep.subr.mxu0 0.0
  %2457 = vmatpush1.msra.mxu0 0.0
  %2458 = vmatprep.subr.mxu0 0.0
  %2459 = vmatpush1.msra.mxu0 0.0
  %2460 = vmatprep.subr.mxu0 0.0
  %2461 = vmatpush1.msra.mxu0 0.0
  %2462 = vmatprep.subr.mxu0 0.0
  %2463 = vmatpush1.msra.mxu0 0.0
  %2464 = vmatprep.subr.mxu0 0.0
  %2465 = vmatpush1.msra.mxu0 0.0
  %2466 = vmatprep.subr.mxu0 0.0
  %2467 = vmatpush1.msra.mxu0 0.0
  %2468 = vmatprep.mubr.f32.mxu0 %v2357
  %2469 = vmatmul.mubr.f32.gmra.mrb[0].mxu0 %v2323
  %v2470 = vpop.f32.mrb[0].mxu0
  %v2471 = vadd.f32 0.0, %v2470
  %v2472 = vpop.f32.mrb[0].mxu0
  %2473 = vmatprep.mubr.f32.mxu0 %v2360
  %2474 = vmatmul.mubr.f32.gmra.mrb[0].mxu0 %v2325
  %v2475 = vpop.f32.mrb[0].mxu0
  %v2476 = vadd.f32 0.0, %v2475
  %v2477 = vpop.f32.mrb[0].mxu0
  %2478 = vmatprep.mubr.f32.mxu0 %v2363
  %2479 = vmatmul.mubr.f32.gmra.mrb[0].mxu0 %v2327
  %v2480 = vpop.f32.mrb[0].mxu0
  %v2481 = vadd.f32 0.0, %v2480
  %v2482 = vpop.f32.mrb[0].mxu0
  %2483 = vmatprep.mubr.f32.mxu0 %v2366
  %2484 = vmatmul.mubr.f32.gmra.mrb[0].mxu0 %v2329
  %v2485 = vpop.f32.mrb[0].mxu0
  %v2486 = vadd.f32 0.0, %v2485
  %v2487 = vpop.f32.mrb[0].mxu0
  %2488 = vmatprep.mubr.f32.mxu0 %v2369
  %2489 = vmatmul.mubr.f32.gmra.mrb[0].mxu0 %v2331
  %v2490 = vpop.f32.mrb[0].mxu0
  %v2491 = vadd.f32 0.0, %v2490
  %v2492 = vpop.f32.mrb[0].mxu0
  %2493 = vmatprep.mubr.f32.mxu0 %v2372
  %2494 = vmatmul.mubr.f32.gmra.mrb[0].mxu0 %v2333
  %v2495 = vpop.f32.mrb[0].mxu0
  %v2496 = vadd.f32 0.0, %v2495
  %v2497 = vpop.f32.mrb[0].mxu0
  %2498 = vmatprep.mubr.f32.mxu0 %v2375
  %2499 = vmatmul.mubr.f32.gmra.mrb[0].mxu0 %v2335
  %v2500 = vpop.f32.mrb[0].mxu0
  %v2501 = vadd.f32 0.0, %v2500
  %v2502 = vpop.f32.mrb[0].mxu0
  %2503 = vmatprep.mubr.f32.mxu0 %v2378
  %2504 = vmatmul.mubr.f32.gmra.mrb[0].mxu0 %v2337
  %v2505 = vpop.f32.mrb[0].mxu0
  %v2506 = vadd.f32 0.0, %v2505
  %v2507 = vpop.f32.mrb[0].mxu0
  %2508 = vmatprep.mubr.f32.mxu0 %v2381
  %2509 = vmatmul.mubr.f32.gmra.mrb[0].mxu0 %v2339
  %v2510 = vpop.f32.mrb[0].mxu0
  %v2511 = vadd.f32 0.0, %v2510
  %v2512 = vpop.f32.mrb[0].mxu0
  %2513 = vmatprep.mubr.f32.mxu0 %v2384
  %2514 = vmatmul.mubr.f32.gmra.mrb[0].mxu0 %v2341
  %v2515 = vpop.f32.mrb[0].mxu0
  %v2516 = vadd.f32 0.0, %v2515
  %v2517 = vpop.f32.mrb[0].mxu0
  %2518 = vmatprep.mubr.f32.mxu0 %v2387
  %2519 = vmatmul.mubr.f32.gmra.mrb[0].mxu0 %v2343
  %v2520 = vpop.f32.mrb[0].mxu0
  %v2521 = vadd.f32 0.0, %v2520
  %v2522 = vpop.f32.mrb[0].mxu0
  %2523 = vmatprep.mubr.f32.mxu0 %v2390
  %2524 = vmatmul.mubr.f32.gmra.mrb[0].mxu0 %v2345
  %v2525 = vpop.f32.mrb[0].mxu0
  %v2526 = vadd.f32 0.0, %v2525
  %v2527 = vpop.f32.mrb[0].mxu0
  %2528 = vmatprep.mubr.f32.mxu0 %v2393
  %2529 = vmatmul.mubr.f32.gmra.mrb[0].mxu0 %v2347
  %v2530 = vpop.f32.mrb[0].mxu0
  %v2531 = vadd.f32 0.0, %v2530
  %v2532 = vpop.f32.mrb[0].mxu0
  %2533 = vmatprep.mubr.f32.mxu0 %v2396
  %2534 = vmatmul.mubr.f32.gmra.mrb[0].mxu0 %v2349
  %v2535 = vpop.f32.mrb[0].mxu0
  %v2536 = vadd.f32 0.0, %v2535
  %v2537 = vpop.f32.mrb[0].mxu0
  %2538 = vmatprep.mubr.f32.mxu0 %v2399
  %2539 = vmatmul.mubr.f32.gmra.mrb[0].mxu0 %v2351
  %v2540 = vpop.f32.mrb[0].mxu0
  %v2541 = vadd.f32 0.0, %v2540
  %v2542 = vpop.f32.mrb[0].mxu0
  %2543 = vmatprep.mubr.f32.mxu0 %v2402
  %2544 = vmatmul.mubr.f32.gmra.mrb[0].mxu0 %v2353
  %v2545 = vpop.f32.mrb[0].mxu0
  %v2546 = vadd.f32 0.0, %v2545
  %v2547 = vpop.f32.mrb[0].mxu0
  %2548 = vdwg.mxu0
  %2549 = vmatprep.subr.mxu0 0.0
  %2550 = vmatpush1.msra.mxu0 %v191
  %2551 = vmatprep.subr.mxu0 0.0
  %2552 = vmatpush1.msra.mxu0 %v196
  %2553 = vmatprep.subr.mxu0 0.0
  %2554 = vmatpush1.msra.mxu0 %v201
  %2555 = vmatprep.subr.mxu0 0.0
  %2556 = vmatpush1.msra.mxu0 %v206
  %2557 = vmatprep.subr.mxu0 0.0
  %2558 = vmatpush1.msra.mxu0 %v211
  %2559 = vmatprep.subr.mxu0 0.0
  %2560 = vmatpush1.msra.mxu0 %v216
  %2561 = vmatprep.subr.mxu0 0.0
  %2562 = vmatpush1.msra.mxu0 %v221
  %2563 = vmatprep.subr.mxu0 0.0
  %2564 = vmatpush1.msra.mxu0 %v226
  %2565 = vmatprep.subr.mxu0 0.0
  %2566 = vmatpush1.msra.mxu0 %v231
  %2567 = vmatprep.subr.mxu0 0.0
  %2568 = vmatpush1.msra.mxu0 %v236
  %2569 = vmatprep.subr.mxu0 0.0
  %2570 = vmatpush1.msra.mxu0 %v241
  %2571 = vmatprep.subr.mxu0 0.0
  %2572 = vmatpush1.msra.mxu0 %v246
  %2573 = vmatprep.subr.mxu0 0.0
  %2574 = vmatpush1.msra.mxu0 %v251
  %2575 = vmatprep.subr.mxu0 0.0
  %2576 = vmatpush1.msra.mxu0 %v256
  %2577 = vmatprep.subr.mxu0 0.0
  %2578 = vmatpush1.msra.mxu0 %v261
  %2579 = vmatprep.subr.mxu0 0.0
  %2580 = vmatpush1.msra.mxu0 %v266
  %2581 = vmatprep.subr.mxu0 0.0
  %2582 = vmatpush1.msra.mxu0 0.0
  %2583 = vmatprep.subr.mxu0 0.0
  %2584 = vmatpush1.msra.mxu0 0.0
  %2585 = vmatprep.subr.mxu0 0.0
  %2586 = vmatpush1.msra.mxu0 0.0
  %2587 = vmatprep.subr.mxu0 0.0
  %2588 = vmatpush1.msra.mxu0 0.0
  %2589 = vmatprep.subr.mxu0 0.0
  %2590 = vmatpush1.msra.mxu0 0.0
  %2591 = vmatprep.subr.mxu0 0.0
  %2592 = vmatpush1.msra.mxu0 0.0
  %2593 = vmatprep.subr.mxu0 0.0
  %2594 = vmatpush1.msra.mxu0 0.0
  %2595 = vmatprep.subr.mxu0 0.0
  %2596 = vmatpush1.msra.mxu0 0.0
  %2597 = vmatprep.subr.mxu0 0.0
  %2598 = vmatpush1.msra.mxu0 0.0
  %2599 = vmatprep.subr.mxu0 0.0
  %2600 = vmatpush1.msra.mxu0 0.0
  %2601 = vmatprep.subr.mxu0 0.0
  %2602 = vmatpush1.msra.mxu0 0.0
  %2603 = vmatprep.subr.mxu0 0.0
  %2604 = vmatpush1.msra.mxu0 0.0
  %2605 = vmatprep.subr.mxu0 0.0
  %2606 = vmatpush1.msra.mxu0 0.0
  %2607 = vmatprep.subr.mxu0 0.0
  %2608 = vmatpush1.msra.mxu0 0.0
  %2609 = vmatprep.subr.mxu0 0.0
  %2610 = vmatpush1.msra.mxu0 0.0
  %2611 = vmatprep.subr.mxu0 0.0
  %2612 = vmatpush1.msra.mxu0 0.0
  %2613 = vmatprep.mubr.f32.mxu0 0.0
  %2614 = vmatmul.mubr.f32.gmra.mrb[0].mxu0 %v2307
  %v2615 = vpop.f32.mrb[0].mxu0
  %v2616 = vadd.f32 %v2471, %v2615
  %v2617 = vpop.f32.mrb[0].mxu0
  %2618 = vmatprep.mubr.f32.mxu0 0.0
  %2619 = vmatmul.mubr.f32.gmra.mrb[0].mxu0 %v2308
  %v2620 = vpop.f32.mrb[0].mxu0
  %v2621 = vadd.f32 %v2476, %v2620
  %v2622 = vpop.f32.mrb[0].mxu0
  %2623 = vmatprep.mubr.f32.mxu0 0.0
  %2624 = vmatmul.mubr.f32.gmra.mrb[0].mxu0 %v2309
  %v2625 = vpop.f32.mrb[0].mxu0
  %v2626 = vadd.f32 %v2481, %v2625
  %v2627 = vpop.f32.mrb[0].mxu0
  %2628 = vmatprep.mubr.f32.mxu0 0.0
  %2629 = vmatmul.mubr.f32.gmra.mrb[0].mxu0 %v2310
  %v2630 = vpop.f32.mrb[0].mxu0
  %v2631 = vadd.f32 %v2486, %v2630
  %v2632 = vpop.f32.mrb[0].mxu0
  %2633 = vmatprep.mubr.f32.mxu0 0.0
  %2634 = vmatmul.mubr.f32.gmra.mrb[0].mxu0 %v2311
  %v2635 = vpop.f32.mrb[0].mxu0
  %v2636 = vadd.f32 %v2491, %v2635
  %v2637 = vpop.f32.mrb[0].mxu0
  %2638 = vmatprep.mubr.f32.mxu0 0.0
  %2639 = vmatmul.mubr.f32.gmra.mrb[0].mxu0 %v2312
  %v2640 = vpop.f32.mrb[0].mxu0
  %v2641 = vadd.f32 %v2496, %v2640
  %v2642 = vpop.f32.mrb[0].mxu0
  %2643 = vmatprep.mubr.f32.mxu0 0.0
  %2644 = vmatmul.mubr.f32.gmra.mrb[0].mxu0 %v2313
  %v2645 = vpop.f32.mrb[0].mxu0
  %v2646 = vadd.f32 %v2501, %v2645
  %v2647 = vpop.f32.mrb[0].mxu0
  %2648 = vmatprep.mubr.f32.mxu0 0.0
  %2649 = vmatmul.mubr.f32.gmra.mrb[0].mxu0 %v2314
  %v2650 = vpop.f32.mrb[0].mxu0
  %v2651 = vadd.f32 %v2506, %v2650
  %v2652 = vpop.f32.mrb[0].mxu0
  %2653 = vmatprep.mubr.f32.mxu0 0.0
  %2654 = vmatmul.mubr.f32.gmra.mrb[0].mxu0 %v2315
  %v2655 = vpop.f32.mrb[0].mxu0
  %v2656 = vadd.f32 %v2511, %v2655
  %v2657 = vpop.f32.mrb[0].mxu0
  %2658 = vmatprep.mubr.f32.mxu0 0.0
  %2659 = vmatmul.mubr.f32.gmra.mrb[0].mxu0 %v2316
  %v2660 = vpop.f32.mrb[0].mxu0
  %v2661 = vadd.f32 %v2516, %v2660
  %v2662 = vpop.f32.mrb[0].mxu0
  %2663 = vmatprep.mubr.f32.mxu0 0.0
  %2664 = vmatmul.mubr.f32.gmra.mrb[0].mxu0 %v2317
  %v2665 = vpop.f32.mrb[0].mxu0
  %v2666 = vadd.f32 %v2521, %v2665
  %v2667 = vpop.f32.mrb[0].mxu0
  %2668 = vmatprep.mubr.f32.mxu0 0.0
  %2669 = vmatmul.mubr.f32.gmra.mrb[0].mxu0 %v2318
  %v2670 = vpop.f32.mrb[0].mxu0
  %v2671 = vadd.f32 %v2526, %v2670
  %v2672 = vpop.f32.mrb[0].mxu0
  %2673 = vmatprep.mubr.f32.mxu0 0.0
  %2674 = vmatmul.mubr.f32.gmra.mrb[0].mxu0 %v2319
  %v2675 = vpop.f32.mrb[0].mxu0
  %v2676 = vadd.f32 %v2531, %v2675
  %v2677 = vpop.f32.mrb[0].mxu0
  %2678 = vmatprep.mubr.f32.mxu0 0.0
  %2679 = vmatmul.mubr.f32.gmra.mrb[0].mxu0 %v2320
  %v2680 = vpop.f32.mrb[0].mxu0
  %v2681 = vadd.f32 %v2536, %v2680
  %v2682 = vpop.f32.mrb[0].mxu0
  %2683 = vmatprep.mubr.f32.mxu0 0.0
  %2684 = vmatmul.mubr.f32.gmra.mrb[0].mxu0 %v2321
  %v2685 = vpop.f32.mrb[0].mxu0
  %v2686 = vadd.f32 %v2541, %v2685
  %v2687 = vpop.f32.mrb[0].mxu0
  %2688 = vmatprep.mubr.f32.mxu0 0.0
  %2689 = vmatmul.mubr.f32.gmra.mrb[0].mxu0 %v2322
  %v2690 = vpop.f32.mrb[0].mxu0
  %v2691 = vadd.f32 %v2546, %v2690
  %v2692 = vpop.f32.mrb[0].mxu0
  %2693 = vdwg.mxu0
  %v2694 = vadd.f32 %v2616, %v376
  %v2695 = vadd.f32 %v2621, %v379
  %v2696 = vadd.f32 %v2626, %v384
  %v2697 = vadd.f32 %v2631, %v387
  %v2698 = vadd.f32 %v2636, %v392
  %v2699 = vadd.f32 %v2641, %v395
  %v2700 = vadd.f32 %v2646, %v400
  %v2701 = vadd.f32 %v2651, %v403
  %v2702 = vadd.f32 %v2656, %v408
  %v2703 = vadd.f32 %v2661, %v411
  %v2704 = vadd.f32 %v2666, %v416
  %v2705 = vadd.f32 %v2671, %v419
  %v2706 = vadd.f32 %v2676, %v424
  %v2707 = vadd.f32 %v2681, %v427
  %v2708 = vadd.f32 %v2686, %v432
  %v2709 = vadd.f32 %v2691, %v435
  %v2710 = vmul.f32 %v2694, 0.5
  %v2711 = vmul.f32 %v2695, 0.5
  %v2712 = vmul.f32 %v2696, 0.5
  %v2713 = vmul.f32 %v2697, 0.5
  %v2714 = vmul.f32 %v2698, 0.5
  %v2715 = vmul.f32 %v2699, 0.5
  %v2716 = vmul.f32 %v2700, 0.5
  %v2717 = vmul.f32 %v2701, 0.5
  %v2718 = vmul.f32 %v2702, 0.5
  %v2719 = vmul.f32 %v2703, 0.5
  %v2720 = vmul.f32 %v2704, 0.5
  %v2721 = vmul.f32 %v2705, 0.5
  %v2722 = vmul.f32 %v2706, 0.5
  %v2723 = vmul.f32 %v2707, 0.5
  %v2724 = vmul.f32 %v2708, 0.5
  %v2725 = vmul.f32 %v2709, 0.5
  %v2726 = vmul.f32 %v2694, 0.044715
  %v2727 = vmul.f32 %v2695, 0.044715
  %v2728 = vmul.f32 %v2696, 0.044715
  %v2729 = vmul.f32 %v2697, 0.044715
  %v2730 = vmul.f32 %v2698, 0.044715
  %v2731 = vmul.f32 %v2699, 0.044715
  %v2732 = vmul.f32 %v2700, 0.044715
  %v2733 = vmul.f32 %v2701, 0.044715
  %v2734 = vmul.f32 %v2702, 0.044715
  %v2735 = vmul.f32 %v2703, 0.044715
  %v2736 = vmul.f32 %v2704, 0.044715
  %v2737 = vmul.f32 %v2705, 0.044715
  %v2738 = vmul.f32 %v2706, 0.044715
  %v2739 = vmul.f32 %v2707, 0.044715
  %v2740 = vmul.f32 %v2708, 0.044715
  %v2741 = vmul.f32 %v2709, 0.044715
  %v2742 = vmul.f32 %v2726, %v2694
  %v2743 = vmul.f32 %v2727, %v2695
  %v2744 = vmul.f32 %v2728, %v2696
  %v2745 = vmul.f32 %v2729, %v2697
  %v2746 = vmul.f32 %v2730, %v2698
  %v2747 = vmul.f32 %v2731, %v2699
  %v2748 = vmul.f32 %v2732, %v2700
  %v2749 = vmul.f32 %v2733, %v2701
  %v2750 = vmul.f32 %v2734, %v2702
  %v2751 = vmul.f32 %v2735, %v2703
  %v2752 = vmul.f32 %v2736, %v2704
  %v2753 = vmul.f32 %v2737, %v2705
  %v2754 = vmul.f32 %v2738, %v2706
  %v2755 = vmul.f32 %v2739, %v2707
  %v2756 = vmul.f32 %v2740, %v2708
  %v2757 = vmul.f32 %v2741, %v2709
  %v2758 = vmul.f32 %v2742, %v2694
  %v2759 = vmul.f32 %v2743, %v2695
  %v2760 = vmul.f32 %v2744, %v2696
  %v2761 = vmul.f32 %v2745, %v2697
  %v2762 = vmul.f32 %v2746, %v2698
  %v2763 = vmul.f32 %v2747, %v2699
  %v2764 = vmul.f32 %v2748, %v2700
  %v2765 = vmul.f32 %v2749, %v2701
  %v2766 = vmul.f32 %v2750, %v2702
  %v2767 = vmul.f32 %v2751, %v2703
  %v2768 = vmul.f32 %v2752, %v2704
  %v2769 = vmul.f32 %v2753, %v2705
  %v2770 = vmul.f32 %v2754, %v2706
  %v2771 = vmul.f32 %v2755, %v2707
  %v2772 = vmul.f32 %v2756, %v2708
  %v2773 = vmul.f32 %v2757, %v2709
  %v2774 = vadd.f32 %v2694, %v2758
  %v2775 = vadd.f32 %v2695, %v2759
  %v2776 = vadd.f32 %v2696, %v2760
  %v2777 = vadd.f32 %v2697, %v2761
  %v2778 = vadd.f32 %v2698, %v2762
  %v2779 = vadd.f32 %v2699, %v2763
  %v2780 = vadd.f32 %v2700, %v2764
  %v2781 = vadd.f32 %v2701, %v2765
  %v2782 = vadd.f32 %v2702, %v2766
  %v2783 = vadd.f32 %v2703, %v2767
  %v2784 = vadd.f32 %v2704, %v2768
  %v2785 = vadd.f32 %v2705, %v2769
  %v2786 = vadd.f32 %v2706, %v2770
  %v2787 = vadd.f32 %v2707, %v2771
  %v2788 = vadd.f32 %v2708, %v2772
  %v2789 = vadd.f32 %v2709, %v2773
  %v2790 = vmul.f32 %v2774, 0.7978846
  %v2791 = vmul.f32 %v2775, 0.7978846
  %v2792 = vmul.f32 %v2776, 0.7978846
  %v2793 = vmul.f32 %v2777, 0.7978846
  %v2794 = vmul.f32 %v2778, 0.7978846
  %v2795 = vmul.f32 %v2779, 0.7978846
  %v2796 = vmul.f32 %v2780, 0.7978846
  %v2797 = vmul.f32 %v2781, 0.7978846
  %v2798 = vmul.f32 %v2782, 0.7978846
  %v2799 = vmul.f32 %v2783, 0.7978846
  %v2800 = vmul.f32 %v2784, 0.7978846
  %v2801 = vmul.f32 %v2785, 0.7978846
  %v2802 = vmul.f32 %v2786, 0.7978846
  %v2803 = vmul.f32 %v2787, 0.7978846
  %v2804 = vmul.f32 %v2788, 0.7978846
  %v2805 = vmul.f32 %v2789, 0.7978846
  %v2806 = vtanh.pop %v2790
  %v2807 = vtanh.pop %v2791
  %v2808 = vtanh.pop %v2792
  %v2809 = vtanh.pop %v2793
  %v2810 = vtanh.pop %v2794
  %v2811 = vtanh.pop %v2795
  %v2812 = vtanh.pop %v2796
  %v2813 = vtanh.pop %v2797
  %v2814 = vtanh.pop %v2798
  %v2815 = vtanh.pop %v2799
  %v2816 = vtanh.pop %v2800
  %v2817 = vtanh.pop %v2801
  %v2818 = vtanh.pop %v2802
  %v2819 = vtanh.pop %v2803
  %v2820 = vtanh.pop %v2804
  %v2821 = vtanh.pop %v2805
  %v2822 = vadd.f32 %v2806, 1.0
  %v2823 = vadd.f32 %v2807, 1.0
  %v2824 = vadd.f32 %v2808, 1.0
  %v2825 = vadd.f32 %v2809, 1.0
  %v2826 = vadd.f32 %v2810, 1.0
  %v2827 = vadd.f32 %v2811, 1.0
  %v2828 = vadd.f32 %v2812, 1.0
  %v2829 = vadd.f32 %v2813, 1.0
  %v2830 = vadd.f32 %v2814, 1.0
  %v2831 = vadd.f32 %v2815, 1.0
  %v2832 = vadd.f32 %v2816, 1.0
  %v2833 = vadd.f32 %v2817, 1.0
  %v2834 = vadd.f32 %v2818, 1.0
  %v2835 = vadd.f32 %v2819, 1.0
  %v2836 = vadd.f32 %v2820, 1.0
  %v2837 = vadd.f32 %v2821, 1.0
  %v2838 = vmul.f32 %v2710, %v2822
  %v2839 = vmul.f32 %v2711, %v2823
  %v2840 = vmul.f32 %v2712, %v2824
  %v2841 = vmul.f32 %v2713, %v2825
  %v2842 = vmul.f32 %v2714, %v2826
  %v2843 = vmul.f32 %v2715, %v2827
  %v2844 = vmul.f32 %v2716, %v2828
  %v2845 = vmul.f32 %v2717, %v2829
  %v2846 = vmul.f32 %v2718, %v2830
  %v2847 = vmul.f32 %v2719, %v2831
  %v2848 = vmul.f32 %v2720, %v2832
  %v2849 = vmul.f32 %v2721, %v2833
  %v2850 = vmul.f32 %v2722, %v2834
  %v2851 = vmul.f32 %v2723, %v2835
  %v2852 = vmul.f32 %v2724, %v2836
  %v2853 = vmul.f32 %v2725, %v2837
  %v2854 = vpack.c.bf16 %v2839, %v2838
  %v2855 = vpack.c.bf16 %v2841, %v2840
  %v2856 = vpack.c.bf16 %v2843, %v2842
  %v2857 = vpack.c.bf16 %v2845, %v2844
  %v2858 = vpack.c.bf16 %v2847, %v2846
  %v2859 = vpack.c.bf16 %v2849, %v2848
  %v2860 = vpack.c.bf16 %v2851, %v2850
  %v2861 = vpack.c.bf16 %v2853, %v2852
  %s2862 = scalar_lea.vmem %s7, 32
  %v2863 = vld [vmem:[%s2862] sm:$0xf]
  %v2864 = vld [vmem:[%s2862 + $0x4] sm:$0xf]
  %v2865 = vld [vmem:[%s2862 + $0x8] sm:$0xf]
  %v2866 = vld [vmem:[%s2862 + $0xc] sm:$0xf]
  %v2867 = vld [vmem:[%s2862 + $0x10] sm:$0xf]
  %v2868 = vld [vmem:[%s2862 + $0x14] sm:$0xf]
  %v2869 = vld [vmem:[%s2862 + $0x18] sm:$0xf]
  %v2870 = vld [vmem:[%s2862 + $0x1c] sm:$0xf]
  %s2871 = scalar_lea.vmem %s8, 1
  %v2872 = vld [vmem:[%s2871] sm:$0x1]
  %v2874 = vlaneseq
  %v2875 = vshrl.u32 %v2874, 7
  %v2876 = vsub.s32 0, %v2875
  %v2877 = vrot.slane %v2872, %v2876
  %v2887 = vunpack.c.l.b16 %v2863
  %v2888 = vunpack.c.l.b16 %v2864
  %v2889 = vunpack.c.l.b16 %v2865
  %v2890 = vunpack.c.l.b16 %v2866
  %v2891 = vunpack.c.l.b16 %v2867
  %v2892 = vunpack.c.l.b16 %v2868
  %v2893 = vunpack.c.l.b16 %v2869
  %v2894 = vunpack.c.l.b16 %v2870
  %v2895 = vpack.c.b16 %v2888, %v2887
  %v2896 = vpack.c.b16 %v2890, %v2889
  %v2897 = vpack.c.b16 %v2892, %v2891
  %v2898 = vpack.c.b16 %v2894, %v2893
  %v2904 = vsel %vm316, %v2854, 0
  %v2907 = vsel %vm316, %v2855, 0
  %v2910 = vsel %vm316, %v2856, 0
  %v2913 = vsel %vm316, %v2857, 0
  %v2916 = vsel %vm316, %v2858, 0
  %v2919 = vsel %vm316, %v2859, 0
  %v2922 = vsel %vm316, %v2860, 0
  %v2925 = vsel %vm316, %v2861, 0
  %2927 = vmatprep.subr.bf16.mxu0 0
  %2928 = vmatpush1.bf16.msra.mxu0 %v2895
  %2929 = vmatprep.subr.bf16.mxu0 0
  %2930 = vmatpush1.bf16.msra.mxu0 %v2896
  %2931 = vmatprep.subr.bf16.mxu0 0
  %2932 = vmatpush1.bf16.msra.mxu0 %v2897
  %2933 = vmatprep.subr.bf16.mxu0 0
  %2934 = vmatpush1.bf16.msra.mxu0 %v2898
  %2935 = vmatprep.subr.bf16.mxu0 0
  %2936 = vmatpush1.bf16.msra.mxu0 0
  %2937 = vmatprep.subr.bf16.mxu0 0
  %2938 = vmatpush1.bf16.msra.mxu0 0
  %2939 = vmatprep.subr.bf16.mxu0 0
  %2940 = vmatpush1.bf16.msra.mxu0 0
  %2941 = vmatprep.subr.bf16.mxu0 0
  %2942 = vmatpush1.bf16.msra.mxu0 0
  %2943 = vmatprep.subr.bf16.mxu0 0
  %2944 = vmatpush1.bf16.msra.mxu0 0
  %2945 = vmatprep.subr.bf16.mxu0 0
  %2946 = vmatpush1.bf16.msra.mxu0 0
  %2947 = vmatprep.subr.bf16.mxu0 0
  %2948 = vmatpush1.bf16.msra.mxu0 0
  %2949 = vmatprep.subr.bf16.mxu0 0
  %2950 = vmatpush1.bf16.msra.mxu0 0
  %2951 = vmatprep.subr.bf16.mxu0 0
  %2952 = vmatpush1.bf16.msra.mxu0 0
  %2953 = vmatprep.subr.bf16.mxu0 0
  %2954 = vmatpush1.bf16.msra.mxu0 0
  %2955 = vmatprep.subr.bf16.mxu0 0
  %2956 = vmatpush1.bf16.msra.mxu0 0
  %2957 = vmatprep.subr.bf16.mxu0 0
  %2958 = vmatpush1.bf16.msra.mxu0 0
  %2959 = vmatprep.mubr.bf16.mxu0 0
  %2960 = vmatmul.mubr.bf16.gmra.mrb[0].mxu0 %v2904
  %v2961 = vpop.f32.mrb[0].mxu0
  %v2962 = vadd.f32 %v2877, %v2961
  %v2963 = vpop.f32.mrb[0].mxu0
  %v2964 = vpop.f32.mrb[0].mxu0
  %v2965 = vadd.f32 %v2877, %v2964
  %v2966 = vpop.f32.mrb[0].mxu0
  %2967 = vmatprep.mubr.bf16.mxu0 0
  %2968 = vmatmul.mubr.bf16.gmra.mrb[0].mxu0 %v2907
  %v2969 = vpop.f32.mrb[0].mxu0
  %v2970 = vadd.f32 %v2877, %v2969
  %v2971 = vpop.f32.mrb[0].mxu0
  %v2972 = vpop.f32.mrb[0].mxu0
  %v2973 = vadd.f32 %v2877, %v2972
  %v2974 = vpop.f32.mrb[0].mxu0
  %2975 = vmatprep.mubr.bf16.mxu0 0
  %2976 = vmatmul.mubr.bf16.gmra.mrb[0].mxu0 %v2910
  %v2977 = vpop.f32.mrb[0].mxu0
  %v2978 = vadd.f32 %v2877, %v2977
  %v2979 = vpop.f32.mrb[0].mxu0
  %v2980 = vpop.f32.mrb[0].mxu0
  %v2981 = vadd.f32 %v2877, %v2980
  %v2982 = vpop.f32.mrb[0].mxu0
  %2983 = vmatprep.mubr.bf16.mxu0 0
  %2984 = vmatmul.mubr.bf16.gmra.mrb[0].mxu0 %v2913
  %v2985 = vpop.f32.mrb[0].mxu0
  %v2986 = vadd.f32 %v2877, %v2985
  %v2987 = vpop.f32.mrb[0].mxu0
  %v2988 = vpop.f32.mrb[0].mxu0
  %v2989 = vadd.f32 %v2877, %v2988
  %v2990 = vpop.f32.mrb[0].mxu0
  %2991 = vmatprep.mubr.bf16.mxu0 0
  %2992 = vmatmul.mubr.bf16.gmra.mrb[0].mxu0 %v2916
  %v2993 = vpop.f32.mrb[0].mxu0
  %v2994 = vadd.f32 %v2877, %v2993
  %v2995 = vpop.f32.mrb[0].mxu0
  %v2996 = vpop.f32.mrb[0].mxu0
  %v2997 = vadd.f32 %v2877, %v2996
  %v2998 = vpop.f32.mrb[0].mxu0
  %2999 = vmatprep.mubr.bf16.mxu0 0
  %3000 = vmatmul.mubr.bf16.gmra.mrb[0].mxu0 %v2919
  %v3001 = vpop.f32.mrb[0].mxu0
  %v3002 = vadd.f32 %v2877, %v3001
  %v3003 = vpop.f32.mrb[0].mxu0
  %v3004 = vpop.f32.mrb[0].mxu0
  %v3005 = vadd.f32 %v2877, %v3004
  %v3006 = vpop.f32.mrb[0].mxu0
  %3007 = vmatprep.mubr.bf16.mxu0 0
  %3008 = vmatmul.mubr.bf16.gmra.mrb[0].mxu0 %v2922
  %v3009 = vpop.f32.mrb[0].mxu0
  %v3010 = vadd.f32 %v2877, %v3009
  %v3011 = vpop.f32.mrb[0].mxu0
  %v3012 = vpop.f32.mrb[0].mxu0
  %v3013 = vadd.f32 %v2877, %v3012
  %v3014 = vpop.f32.mrb[0].mxu0
  %3015 = vmatprep.mubr.bf16.mxu0 0
  %3016 = vmatmul.mubr.bf16.gmra.mrb[0].mxu0 %v2925
  %v3017 = vpop.f32.mrb[0].mxu0
  %v3018 = vadd.f32 %v2877, %v3017
  %v3019 = vpop.f32.mrb[0].mxu0
  %v3020 = vpop.f32.mrb[0].mxu0
  %v3021 = vadd.f32 %v2877, %v3020
  %v3022 = vpop.f32.mrb[0].mxu0
  %3023 = vdwg.mxu0
  %v3024 = vld [vmem:[%s3] sm:$0xff]
  %v3025 = vld [vmem:[%s3 + $0x8] sm:$0xff]
  %v3026 = vld [vmem:[%s3 + $0x10] sm:$0xff]
  %v3027 = vld [vmem:[%s3 + $0x18] sm:$0xff]
  %v3028 = vld [vmem:[%s3 + $0x20] sm:$0xff]
  %v3029 = vld [vmem:[%s3 + $0x28] sm:$0xff]
  %v3030 = vld [vmem:[%s3 + $0x30] sm:$0xff]
  %v3031 = vld [vmem:[%s3 + $0x38] sm:$0xff]
  %v3032 = vld [vmem:[%s3 + $0x40] sm:$0xff]
  %v3033 = vld [vmem:[%s3 + $0x48] sm:$0xff]
  %v3034 = vld [vmem:[%s3 + $0x50] sm:$0xff]
  %v3035 = vld [vmem:[%s3 + $0x58] sm:$0xff]
  %v3036 = vld [vmem:[%s3 + $0x60] sm:$0xff]
  %v3037 = vld [vmem:[%s3 + $0x68] sm:$0xff]
  %v3038 = vld [vmem:[%s3 + $0x70] sm:$0xff]
  %v3039 = vld [vmem:[%s3 + $0x78] sm:$0xff]
  %v3040 = vld [vmem:[%s3 + $0x80] sm:$0xff]
  %v3041 = vld [vmem:[%s3 + $0x88] sm:$0xff]
  %v3042 = vld [vmem:[%s3 + $0x90] sm:$0xff]
  %v3043 = vld [vmem:[%s3 + $0x98] sm:$0xff]
  %v3044 = vld [vmem:[%s3 + $0xa0] sm:$0xff]
  %v3045 = vld [vmem:[%s3 + $0xa8] sm:$0xff]
  %3046 = vmatprep.subr.mxu0 0.0
  %3047 = vmatpush1.msra.mxu0 %v2838
  %3048 = vmatprep.subr.mxu0 0.0
  %3049 = vmatpush1.msra.mxu0 %v2839
  %3050 = vmatprep.subr.mxu0 0.0
  %3051 = vmatpush1.msra.mxu0 %v2840
  %3052 = vmatprep.subr.mxu0 0.0
  %3053 = vmatpush1.msra.mxu0 %v2841
  %3054 = vmatprep.subr.mxu0 0.0
  %3055 = vmatpush1.msra.mxu0 %v2842
  %3056 = vmatprep.subr.mxu0 0.0
  %3057 = vmatpush1.msra.mxu0 %v2843
  %3058 = vmatprep.subr.mxu0 0.0
  %3059 = vmatpush1.msra.mxu0 %v2844
  %3060 = vmatprep.subr.mxu0 0.0
  %3061 = vmatpush1.msra.mxu0 %v2845
  %3062 = vmatprep.subr.mxu0 0.0
  %3063 = vmatpush1.msra.mxu0 %v2846
  %3064 = vmatprep.subr.mxu0 0.0
  %3065 = vmatpush1.msra.mxu0 %v2847
  %3066 = vmatprep.subr.mxu0 0.0
  %3067 = vmatpush1.msra.mxu0 %v2848
  %3068 = vmatprep.subr.mxu0 0.0
  %3069 = vmatpush1.msra.mxu0 %v2849
  %3070 = vmatprep.subr.mxu0 0.0
  %3071 = vmatpush1.msra.mxu0 %v2850
  %3072 = vmatprep.subr.mxu0 0.0
  %3073 = vmatpush1.msra.mxu0 %v2851
  %3074 = vmatprep.subr.mxu0 0.0
  %3075 = vmatpush1.msra.mxu0 %v2852
  %3076 = vmatprep.subr.mxu0 0.0
  %3077 = vmatpush1.msra.mxu0 %v2853
  %3078 = vmatprep.subr.mxu0 0.0
  %3079 = vmatpush1.msra.mxu0 0.0
  %3080 = vmatprep.subr.mxu0 0.0
  %3081 = vmatpush1.msra.mxu0 0.0
  %3082 = vmatprep.subr.mxu0 0.0
  %3083 = vmatpush1.msra.mxu0 0.0
  %3084 = vmatprep.subr.mxu0 0.0
  %3085 = vmatpush1.msra.mxu0 0.0
  %3086 = vmatprep.subr.mxu0 0.0
  %3087 = vmatpush1.msra.mxu0 0.0
  %3088 = vmatprep.subr.mxu0 0.0
  %3089 = vmatpush1.msra.mxu0 0.0
  %3090 = vmatprep.subr.mxu0 0.0
  %3091 = vmatpush1.msra.mxu0 0.0
  %3092 = vmatprep.subr.mxu0 0.0
  %3093 = vmatpush1.msra.mxu0 0.0
  %3094 = vmatprep.subr.mxu0 0.0
  %3095 = vmatpush1.msra.mxu0 0.0
  %3096 = vmatprep.subr.mxu0 0.0
  %3097 = vmatpush1.msra.mxu0 0.0
  %3098 = vmatprep.subr.mxu0 0.0
  %3099 = vmatpush1.msra.mxu0 0.0
  %3100 = vmatprep.subr.mxu0 0.0
  %3101 = vmatpush1.msra.mxu0 0.0
  %3102 = vmatprep.subr.mxu0 0.0
  %3103 = vmatpush1.msra.mxu0 0.0
  %3104 = vmatprep.subr.mxu0 0.0
  %3105 = vmatpush1.msra.mxu0 0.0
  %3106 = vmatprep.subr.mxu0 0.0
  %3107 = vmatpush1.msra.mxu0 0.0
  %3108 = vmatprep.subr.mxu0 0.0
  %3109 = vmatpush1.msra.mxu0 0.0
  %3110 = vmatprep.mubr.f32.mxu0 0.0
  %3111 = vmatmul.mubr.f32.gmra.mrb[0].mxu0 %v3024
  %v3112 = vpop.f32.mrb[0].mxu0
  %v3113 = vadd.f32 0.0, %v3112
  %v3114 = vpop.f32.mrb[0].mxu0
  %3115 = vmatprep.mubr.f32.mxu0 0.0
  %3116 = vmatmul.mubr.f32.gmra.mrb[0].mxu0 %v3025
  %v3117 = vpop.f32.mrb[0].mxu0
  %v3118 = vadd.f32 0.0, %v3117
  %v3119 = vpop.f32.mrb[0].mxu0
  %3120 = vmatprep.mubr.f32.mxu0 0.0
  %3121 = vmatmul.mubr.f32.gmra.mrb[0].mxu0 %v3026
  %v3122 = vpop.f32.mrb[0].mxu0
  %v3123 = vadd.f32 0.0, %v3122
  %v3124 = vpop.f32.mrb[0].mxu0
  %3125 = vmatprep.mubr.f32.mxu0 0.0
  %3126 = vmatmul.mubr.f32.gmra.mrb[0].mxu0 %v3027
  %v3127 = vpop.f32.mrb[0].mxu0
  %v3128 = vadd.f32 0.0, %v3127
  %v3129 = vpop.f32.mrb[0].mxu0
  %3130 = vmatprep.mubr.f32.mxu0 0.0
  %3131 = vmatmul.mubr.f32.gmra.mrb[0].mxu0 %v3028
  %v3132 = vpop.f32.mrb[0].mxu0
  %v3133 = vadd.f32 0.0, %v3132
  %v3134 = vpop.f32.mrb[0].mxu0
  %3135 = vmatprep.mubr.f32.mxu0 0.0
  %3136 = vmatmul.mubr.f32.gmra.mrb[0].mxu0 %v3029
  %v3137 = vpop.f32.mrb[0].mxu0
  %v3138 = vadd.f32 0.0, %v3137
  %v3139 = vpop.f32.mrb[0].mxu0
  %3140 = vmatprep.mubr.f32.mxu0 0.0
  %3141 = vmatmul.mubr.f32.gmra.mrb[0].mxu0 %v3030
  %v3142 = vpop.f32.mrb[0].mxu0
  %v3143 = vadd.f32 0.0, %v3142
  %v3144 = vpop.f32.mrb[0].mxu0
  %3145 = vmatprep.mubr.f32.mxu0 0.0
  %3146 = vmatmul.mubr.f32.gmra.mrb[0].mxu0 %v3031
  %v3147 = vpop.f32.mrb[0].mxu0
  %v3148 = vadd.f32 0.0, %v3147
  %v3149 = vpop.f32.mrb[0].mxu0
  %3150 = vmatprep.mubr.f32.mxu0 0.0
  %3151 = vmatmul.mubr.f32.gmra.mrb[0].mxu0 %v3032
  %v3152 = vpop.f32.mrb[0].mxu0
  %v3153 = vadd.f32 0.0, %v3152
  %v3154 = vpop.f32.mrb[0].mxu0
  %3155 = vmatprep.mubr.f32.mxu0 0.0
  %3156 = vmatmul.mubr.f32.gmra.mrb[0].mxu0 %v3033
  %v3157 = vpop.f32.mrb[0].mxu0
  %v3158 = vadd.f32 0.0, %v3157
  %v3159 = vpop.f32.mrb[0].mxu0
  %3160 = vmatprep.mubr.f32.mxu0 0.0
  %3161 = vmatmul.mubr.f32.gmra.mrb[0].mxu0 %v3034
  %v3162 = vpop.f32.mrb[0].mxu0
  %v3163 = vadd.f32 0.0, %v3162
  %v3164 = vpop.f32.mrb[0].mxu0
  %3165 = vmatprep.mubr.f32.mxu0 0.0
  %3166 = vmatmul.mubr.f32.gmra.mrb[0].mxu0 %v3035
  %v3167 = vpop.f32.mrb[0].mxu0
  %v3168 = vadd.f32 0.0, %v3167
  %v3169 = vpop.f32.mrb[0].mxu0
  %3170 = vmatprep.mubr.f32.mxu0 0.0
  %3171 = vmatmul.mubr.f32.gmra.mrb[0].mxu0 %v3036
  %v3172 = vpop.f32.mrb[0].mxu0
  %v3173 = vadd.f32 0.0, %v3172
  %v3174 = vpop.f32.mrb[0].mxu0
  %3175 = vmatprep.mubr.f32.mxu0 0.0
  %3176 = vmatmul.mubr.f32.gmra.mrb[0].mxu0 %v3037
  %v3177 = vpop.f32.mrb[0].mxu0
  %v3178 = vadd.f32 0.0, %v3177
  %v3179 = vpop.f32.mrb[0].mxu0
  %3180 = vmatprep.mubr.f32.mxu0 0.0
  %3181 = vmatmul.mubr.f32.gmra.mrb[0].mxu0 %v3038
  %v3182 = vpop.f32.mrb[0].mxu0
  %v3183 = vadd.f32 0.0, %v3182
  %v3184 = vpop.f32.mrb[0].mxu0
  %3185 = vmatprep.mubr.f32.mxu0 0.0
  %3186 = vmatmul.mubr.f32.gmra.mrb[0].mxu0 %v3039
  %v3187 = vpop.f32.mrb[0].mxu0
  %v3188 = vadd.f32 0.0, %v3187
  %v3189 = vpop.f32.mrb[0].mxu0
  %3190 = vmatprep.mubr.f32.mxu0 0.0
  %3191 = vmatmul.mubr.f32.gmra.mrb[0].mxu0 %v3040
  %v3192 = vpop.f32.mrb[0].mxu0
  %v3193 = vadd.f32 0.0, %v3192
  %v3194 = vpop.f32.mrb[0].mxu0
  %3195 = vmatprep.mubr.f32.mxu0 0.0
  %3196 = vmatmul.mubr.f32.gmra.mrb[0].mxu0 %v3041
  %v3197 = vpop.f32.mrb[0].mxu0
  %v3198 = vadd.f32 0.0, %v3197
  %v3199 = vpop.f32.mrb[0].mxu0
  %3200 = vmatprep.mubr.f32.mxu0 0.0
  %3201 = vmatmul.mubr.f32.gmra.mrb[0].mxu0 %v3042
  %v3202 = vpop.f32.mrb[0].mxu0
  %v3203 = vadd.f32 0.0, %v3202
  %v3204 = vpop.f32.mrb[0].mxu0
  %3205 = vmatprep.mubr.f32.mxu0 0.0
  %3206 = vmatmul.mubr.f32.gmra.mrb[0].mxu0 %v3043
  %v3207 = vpop.f32.mrb[0].mxu0
  %v3208 = vadd.f32 0.0, %v3207
  %v3209 = vpop.f32.mrb[0].mxu0
  %3210 = vmatprep.mubr.f32.mxu0 0.0
  %3211 = vmatmul.mubr.f32.gmra.mrb[0].mxu0 %v3044
  %v3212 = vpop.f32.mrb[0].mxu0
  %v3213 = vadd.f32 0.0, %v3212
  %v3214 = vpop.f32.mrb[0].mxu0
  %3215 = vmatprep.mubr.f32.mxu0 0.0
  %3216 = vmatmul.mubr.f32.gmra.mrb[0].mxu0 %v3045
  %v3217 = vpop.f32.mrb[0].mxu0
  %v3218 = vadd.f32 0.0, %v3217
  %v3219 = vpop.f32.mrb[0].mxu0
  %3220 = vdwg.mxu0
  %v3221 = vpack.c.bf16 %v3113, %v3113
  %v3222 = vpack.c.bf16 %v3118, %v3118
  %v3223 = vpack.c.bf16 %v3123, %v3123
  %v3224 = vpack.c.bf16 %v3128, %v3128
  %v3225 = vpack.c.bf16 %v3133, %v3133
  %v3226 = vpack.c.bf16 %v3138, %v3138
  %v3227 = vpack.c.bf16 %v3143, %v3143
  %v3228 = vpack.c.bf16 %v3148, %v3148
  %v3229 = vpack.c.bf16 %v3153, %v3153
  %v3230 = vpack.c.bf16 %v3158, %v3158
  %v3231 = vpack.c.bf16 %v3163, %v3163
  %v3232 = vpack.c.bf16 %v3168, %v3168
  %v3233 = vpack.c.bf16 %v3173, %v3173
  %v3234 = vpack.c.bf16 %v3178, %v3178
  %v3235 = vpack.c.bf16 %v3183, %v3183
  %v3236 = vpack.c.bf16 %v3188, %v3188
  %v3237 = vpack.c.bf16 %v3193, %v3193
  %v3238 = vpack.c.bf16 %v3198, %v3198
  %v3239 = vpack.c.bf16 %v3203, %v3203
  %v3240 = vpack.c.bf16 %v3208, %v3208
  %v3241 = vpack.c.bf16 %v3213, %v3213
  %v3242 = vpack.c.bf16 %v3218, %v3218
  %s3243 = scalar_lea.vmem %s6, 704
  %v3244 = vld [vmem:[%s3243] sm:$0xf]
  %v3245 = vld [vmem:[%s3243 + $0x4] sm:$0xf]
  %v3246 = vld [vmem:[%s3243 + $0x8] sm:$0xf]
  %v3247 = vld [vmem:[%s3243 + $0xc] sm:$0xf]
  %v3248 = vld [vmem:[%s3243 + $0x10] sm:$0xf]
  %v3249 = vld [vmem:[%s3243 + $0x14] sm:$0xf]
  %v3250 = vld [vmem:[%s3243 + $0x18] sm:$0xf]
  %v3251 = vld [vmem:[%s3243 + $0x1c] sm:$0xf]
  %v3252 = vld [vmem:[%s3243 + $0x20] sm:$0xf]
  %v3253 = vld [vmem:[%s3243 + $0x24] sm:$0xf]
  %v3254 = vld [vmem:[%s3243 + $0x28] sm:$0xf]
  %v3255 = vld [vmem:[%s3243 + $0x2c] sm:$0xf]
  %v3256 = vld [vmem:[%s3243 + $0x30] sm:$0xf]
  %v3257 = vld [vmem:[%s3243 + $0x34] sm:$0xf]
  %v3258 = vld [vmem:[%s3243 + $0x38] sm:$0xf]
  %v3259 = vld [vmem:[%s3243 + $0x3c] sm:$0xf]
  %v3260 = vld [vmem:[%s3243 + $0x40] sm:$0xf]
  %v3261 = vld [vmem:[%s3243 + $0x44] sm:$0xf]
  %v3262 = vld [vmem:[%s3243 + $0x48] sm:$0xf]
  %v3263 = vld [vmem:[%s3243 + $0x4c] sm:$0xf]
  %v3264 = vld [vmem:[%s3243 + $0x50] sm:$0xf]
  %v3265 = vld [vmem:[%s3243 + $0x54] sm:$0xf]
  %v3266 = vld [vmem:[%s3243 + $0x58] sm:$0xf]
  %v3267 = vld [vmem:[%s3243 + $0x5c] sm:$0xf]
  %v3268 = vld [vmem:[%s3243 + $0x60] sm:$0xf]
  %v3269 = vld [vmem:[%s3243 + $0x64] sm:$0xf]
  %v3270 = vld [vmem:[%s3243 + $0x68] sm:$0xf]
  %v3271 = vld [vmem:[%s3243 + $0x6c] sm:$0xf]
  %v3272 = vld [vmem:[%s3243 + $0x70] sm:$0xf]
  %v3273 = vld [vmem:[%s3243 + $0x74] sm:$0xf]
  %v3274 = vld [vmem:[%s3243 + $0x78] sm:$0xf]
  %v3275 = vld [vmem:[%s3243 + $0x7c] sm:$0xf]
  %v3276 = vld [vmem:[%s3243 + $0x80] sm:$0xf]
  %v3277 = vld [vmem:[%s3243 + $0x84] sm:$0xf]
  %v3278 = vld [vmem:[%s3243 + $0x88] sm:$0xf]
  %v3279 = vld [vmem:[%s3243 + $0x8c] sm:$0xf]
  %v3280 = vld [vmem:[%s3243 + $0x90] sm:$0xf]
  %v3281 = vld [vmem:[%s3243 + $0x94] sm:$0xf]
  %v3282 = vld [vmem:[%s3243 + $0x98] sm:$0xf]
  %v3283 = vld [vmem:[%s3243 + $0x9c] sm:$0xf]
  %v3284 = vld [vmem:[%s3243 + $0xa0] sm:$0xf]
  %v3285 = vld [vmem:[%s3243 + $0xa4] sm:$0xf]
  %v3286 = vld [vmem:[%s3243 + $0xa8] sm:$0xf]
  %v3287 = vld [vmem:[%s3243 + $0xac] sm:$0xf]
  %v3288 = vld [vmem:[%s3243 + $0xb0] sm:$0xf]
  %v3289 = vld [vmem:[%s3243 + $0xb4] sm:$0xf]
  %v3290 = vld [vmem:[%s3243 + $0xb8] sm:$0xf]
  %v3291 = vld [vmem:[%s3243 + $0xbc] sm:$0xf]
  %v3292 = vld [vmem:[%s3243 + $0xc0] sm:$0xf]
  %v3293 = vld [vmem:[%s3243 + $0xc4] sm:$0xf]
  %v3294 = vld [vmem:[%s3243 + $0xc8] sm:$0xf]
  %v3295 = vld [vmem:[%s3243 + $0xcc] sm:$0xf]
  %v3296 = vld [vmem:[%s3243 + $0xd0] sm:$0xf]
  %v3297 = vld [vmem:[%s3243 + $0xd4] sm:$0xf]
  %v3298 = vld [vmem:[%s3243 + $0xd8] sm:$0xf]
  %v3299 = vld [vmem:[%s3243 + $0xdc] sm:$0xf]
  %v3300 = vld [vmem:[%s3243 + $0xe0] sm:$0xf]
  %v3301 = vld [vmem:[%s3243 + $0xe4] sm:$0xf]
  %v3302 = vld [vmem:[%s3243 + $0xe8] sm:$0xf]
  %v3303 = vld [vmem:[%s3243 + $0xec] sm:$0xf]
  %v3304 = vld [vmem:[%s3243 + $0xf0] sm:$0xf]
  %v3305 = vld [vmem:[%s3243 + $0xf4] sm:$0xf]
  %v3306 = vld [vmem:[%s3243 + $0xf8] sm:$0xf]
  %v3307 = vld [vmem:[%s3243 + $0xfc] sm:$0xf]
  %v3308 = vld [vmem:[%s3243 + $0x100] sm:$0xf]
  %v3309 = vld [vmem:[%s3243 + $0x104] sm:$0xf]
  %v3310 = vld [vmem:[%s3243 + $0x108] sm:$0xf]
  %v3311 = vld [vmem:[%s3243 + $0x10c] sm:$0xf]
  %v3312 = vld [vmem:[%s3243 + $0x110] sm:$0xf]
  %v3313 = vld [vmem:[%s3243 + $0x114] sm:$0xf]
  %v3314 = vld [vmem:[%s3243 + $0x118] sm:$0xf]
  %v3315 = vld [vmem:[%s3243 + $0x11c] sm:$0xf]
  %v3316 = vld [vmem:[%s3243 + $0x120] sm:$0xf]
  %v3317 = vld [vmem:[%s3243 + $0x124] sm:$0xf]
  %v3318 = vld [vmem:[%s3243 + $0x128] sm:$0xf]
  %v3319 = vld [vmem:[%s3243 + $0x12c] sm:$0xf]
  %v3320 = vld [vmem:[%s3243 + $0x130] sm:$0xf]
  %v3321 = vld [vmem:[%s3243 + $0x134] sm:$0xf]
  %v3322 = vld [vmem:[%s3243 + $0x138] sm:$0xf]
  %v3323 = vld [vmem:[%s3243 + $0x13c] sm:$0xf]
  %v3324 = vld [vmem:[%s3243 + $0x140] sm:$0xf]
  %v3325 = vld [vmem:[%s3243 + $0x144] sm:$0xf]
  %v3326 = vld [vmem:[%s3243 + $0x148] sm:$0xf]
  %v3327 = vld [vmem:[%s3243 + $0x14c] sm:$0xf]
  %v3328 = vld [vmem:[%s3243 + $0x150] sm:$0xf]
  %v3329 = vld [vmem:[%s3243 + $0x154] sm:$0xf]
  %v3330 = vld [vmem:[%s3243 + $0x158] sm:$0xf]
  %v3331 = vld [vmem:[%s3243 + $0x15c] sm:$0xf]
  %v3332 = vld [vmem:[%s3243 + $0x160] sm:$0xf]
  %v3333 = vld [vmem:[%s3243 + $0x164] sm:$0xf]
  %v3334 = vld [vmem:[%s3243 + $0x168] sm:$0xf]
  %v3335 = vld [vmem:[%s3243 + $0x16c] sm:$0xf]
  %v3336 = vld [vmem:[%s3243 + $0x170] sm:$0xf]
  %v3337 = vld [vmem:[%s3243 + $0x174] sm:$0xf]
  %v3338 = vld [vmem:[%s3243 + $0x178] sm:$0xf]
  %v3339 = vld [vmem:[%s3243 + $0x17c] sm:$0xf]
  %v3340 = vld [vmem:[%s3243 + $0x180] sm:$0xf]
  %v3341 = vld [vmem:[%s3243 + $0x184] sm:$0xf]
  %v3342 = vld [vmem:[%s3243 + $0x188] sm:$0xf]
  %v3343 = vld [vmem:[%s3243 + $0x18c] sm:$0xf]
  %v3344 = vld [vmem:[%s3243 + $0x190] sm:$0xf]
  %v3345 = vld [vmem:[%s3243 + $0x194] sm:$0xf]
  %v3346 = vld [vmem:[%s3243 + $0x198] sm:$0xf]
  %v3347 = vld [vmem:[%s3243 + $0x19c] sm:$0xf]
  %v3348 = vld [vmem:[%s3243 + $0x1a0] sm:$0xf]
  %v3349 = vld [vmem:[%s3243 + $0x1a4] sm:$0xf]
  %v3350 = vld [vmem:[%s3243 + $0x1a8] sm:$0xf]
  %v3351 = vld [vmem:[%s3243 + $0x1ac] sm:$0xf]
  %v3352 = vld [vmem:[%s3243 + $0x1b0] sm:$0xf]
  %v3353 = vld [vmem:[%s3243 + $0x1b4] sm:$0xf]
  %v3354 = vld [vmem:[%s3243 + $0x1b8] sm:$0xf]
  %v3355 = vld [vmem:[%s3243 + $0x1bc] sm:$0xf]
  %v3356 = vld [vmem:[%s3243 + $0x1c0] sm:$0xf]
  %v3357 = vld [vmem:[%s3243 + $0x1c4] sm:$0xf]
  %v3358 = vld [vmem:[%s3243 + $0x1c8] sm:$0xf]
  %v3359 = vld [vmem:[%s3243 + $0x1cc] sm:$0xf]
  %v3360 = vld [vmem:[%s3243 + $0x1d0] sm:$0xf]
  %v3361 = vld [vmem:[%s3243 + $0x1d4] sm:$0xf]
  %v3362 = vld [vmem:[%s3243 + $0x1d8] sm:$0xf]
  %v3363 = vld [vmem:[%s3243 + $0x1dc] sm:$0xf]
  %v3364 = vld [vmem:[%s3243 + $0x1e0] sm:$0xf]
  %v3365 = vld [vmem:[%s3243 + $0x1e4] sm:$0xf]
  %v3366 = vld [vmem:[%s3243 + $0x1e8] sm:$0xf]
  %v3367 = vld [vmem:[%s3243 + $0x1ec] sm:$0xf]
  %v3368 = vld [vmem:[%s3243 + $0x1f0] sm:$0xf]
  %v3369 = vld [vmem:[%s3243 + $0x1f4] sm:$0xf]
  %v3370 = vld [vmem:[%s3243 + $0x1f8] sm:$0xf]
  %v3371 = vld [vmem:[%s3243 + $0x1fc] sm:$0xf]
  %v3372 = vld [vmem:[%s3243 + $0x200] sm:$0xf]
  %v3373 = vld [vmem:[%s3243 + $0x204] sm:$0xf]
  %v3374 = vld [vmem:[%s3243 + $0x208] sm:$0xf]
  %v3375 = vld [vmem:[%s3243 + $0x20c] sm:$0xf]
  %v3376 = vld [vmem:[%s3243 + $0x210] sm:$0xf]
  %v3377 = vld [vmem:[%s3243 + $0x214] sm:$0xf]
  %v3378 = vld [vmem:[%s3243 + $0x218] sm:$0xf]
  %v3379 = vld [vmem:[%s3243 + $0x21c] sm:$0xf]
  %v3380 = vld [vmem:[%s3243 + $0x220] sm:$0xf]
  %v3381 = vld [vmem:[%s3243 + $0x224] sm:$0xf]
  %v3382 = vld [vmem:[%s3243 + $0x228] sm:$0xf]
  %v3383 = vld [vmem:[%s3243 + $0x22c] sm:$0xf]
  %v3384 = vld [vmem:[%s3243 + $0x230] sm:$0xf]
  %v3385 = vld [vmem:[%s3243 + $0x234] sm:$0xf]
  %v3386 = vld [vmem:[%s3243 + $0x238] sm:$0xf]
  %v3387 = vld [vmem:[%s3243 + $0x23c] sm:$0xf]
  %v3388 = vld [vmem:[%s3243 + $0x240] sm:$0xf]
  %v3389 = vld [vmem:[%s3243 + $0x244] sm:$0xf]
  %v3390 = vld [vmem:[%s3243 + $0x248] sm:$0xf]
  %v3391 = vld [vmem:[%s3243 + $0x24c] sm:$0xf]
  %v3392 = vld [vmem:[%s3243 + $0x250] sm:$0xf]
  %v3393 = vld [vmem:[%s3243 + $0x254] sm:$0xf]
  %v3394 = vld [vmem:[%s3243 + $0x258] sm:$0xf]
  %v3395 = vld [vmem:[%s3243 + $0x25c] sm:$0xf]
  %v3396 = vld [vmem:[%s3243 + $0x260] sm:$0xf]
  %v3397 = vld [vmem:[%s3243 + $0x264] sm:$0xf]
  %v3398 = vld [vmem:[%s3243 + $0x268] sm:$0xf]
  %v3399 = vld [vmem:[%s3243 + $0x26c] sm:$0xf]
  %v3400 = vld [vmem:[%s3243 + $0x270] sm:$0xf]
  %v3401 = vld [vmem:[%s3243 + $0x274] sm:$0xf]
  %v3402 = vld [vmem:[%s3243 + $0x278] sm:$0xf]
  %v3403 = vld [vmem:[%s3243 + $0x27c] sm:$0xf]
  %v3404 = vld [vmem:[%s3243 + $0x280] sm:$0xf]
  %v3405 = vld [vmem:[%s3243 + $0x284] sm:$0xf]
  %v3406 = vld [vmem:[%s3243 + $0x288] sm:$0xf]
  %v3407 = vld [vmem:[%s3243 + $0x28c] sm:$0xf]
  %v3408 = vld [vmem:[%s3243 + $0x290] sm:$0xf]
  %v3409 = vld [vmem:[%s3243 + $0x294] sm:$0xf]
  %v3410 = vld [vmem:[%s3243 + $0x298] sm:$0xf]
  %v3411 = vld [vmem:[%s3243 + $0x29c] sm:$0xf]
  %v3412 = vld [vmem:[%s3243 + $0x2a0] sm:$0xf]
  %v3413 = vld [vmem:[%s3243 + $0x2a4] sm:$0xf]
  %v3414 = vld [vmem:[%s3243 + $0x2a8] sm:$0xf]
  %v3415 = vld [vmem:[%s3243 + $0x2ac] sm:$0xf]
  %v3416 = vld [vmem:[%s3243 + $0x2b0] sm:$0xf]
  %v3417 = vld [vmem:[%s3243 + $0x2b4] sm:$0xf]
  %v3418 = vld [vmem:[%s3243 + $0x2b8] sm:$0xf]
  %v3419 = vld [vmem:[%s3243 + $0x2bc] sm:$0xf]
  %v3428 = vunpack.c.l.b16 %v3244
  %v3429 = vunpack.c.l.b16 %v3245
  %v3430 = vunpack.c.l.b16 %v3246
  %v3431 = vunpack.c.l.b16 %v3247
  %v3432 = vunpack.c.l.b16 %v3248
  %v3433 = vunpack.c.l.b16 %v3249
  %v3434 = vunpack.c.l.b16 %v3250
  %v3435 = vunpack.c.l.b16 %v3251
  %v3436 = vpack.c.b16 %v3429, %v3428
  %v3437 = vpack.c.b16 %v3431, %v3430
  %v3438 = vpack.c.b16 %v3433, %v3432
  %v3439 = vpack.c.b16 %v3435, %v3434
  %v3445 = vsel %vm316, %v3221, 0
  %3447 = vmatprep.subr.bf16.mxu0 0
  %3448 = vmatpush1.bf16.msra.mxu0 %v3436
  %3449 = vmatprep.subr.bf16.mxu0 0
  %3450 = vmatpush1.bf16.msra.mxu0 %v3437
  %3451 = vmatprep.subr.bf16.mxu0 0
  %3452 = vmatpush1.bf16.msra.mxu0 %v3438
  %3453 = vmatprep.subr.bf16.mxu0 0
  %3454 = vmatpush1.bf16.msra.mxu0 %v3439
  %3455 = vmatprep.subr.bf16.mxu0 0
  %3456 = vmatpush1.bf16.msra.mxu0 0
  %3457 = vmatprep.subr.bf16.mxu0 0
  %3458 = vmatpush1.bf16.msra.mxu0 0
  %3459 = vmatprep.subr.bf16.mxu0 0
  %3460 = vmatpush1.bf16.msra.mxu0 0
  %3461 = vmatprep.subr.bf16.mxu0 0
  %3462 = vmatpush1.bf16.msra.mxu0 0
  %3463 = vmatprep.subr.bf16.mxu0 0
  %3464 = vmatpush1.bf16.msra.mxu0 0
  %3465 = vmatprep.subr.bf16.mxu0 0
  %3466 = vmatpush1.bf16.msra.mxu0 0
  %3467 = vmatprep.subr.bf16.mxu0 0
  %3468 = vmatpush1.bf16.msra.mxu0 0
  %3469 = vmatprep.subr.bf16.mxu0 0
  %3470 = vmatpush1.bf16.msra.mxu0 0
  %3471 = vmatprep.subr.bf16.mxu0 0
  %3472 = vmatpush1.bf16.msra.mxu0 0
  %3473 = vmatprep.subr.bf16.mxu0 0
  %3474 = vmatpush1.bf16.msra.mxu0 0
  %3475 = vmatprep.subr.bf16.mxu0 0
  %3476 = vmatpush1.bf16.msra.mxu0 0
  %3477 = vmatprep.subr.bf16.mxu0 0
  %3478 = vmatpush1.bf16.msra.mxu0 0
  %3479 = vmatprep.mubr.bf16.mxu0 0
  %3480 = vmatmul.mubr.bf16.gmra.mrb[0].mxu0 %v3445
  %v3481 = vpop.f32.mrb[0].mxu0
  %v3482 = vadd.f32 0.0, %v3481
  %v3483 = vpop.f32.mrb[0].mxu0
  %v3484 = vpop.f32.mrb[0].mxu0
  %v3485 = vpop.f32.mrb[0].mxu0
  %3486 = vdwg.mxu0
  %v3495 = vunpack.c.l.b16 %v3252
  %v3496 = vunpack.c.l.b16 %v3253
  %v3497 = vunpack.c.l.b16 %v3254
  %v3498 = vunpack.c.l.b16 %v3255
  %v3499 = vunpack.c.l.b16 %v3256
  %v3500 = vunpack.c.l.b16 %v3257
  %v3501 = vunpack.c.l.b16 %v3258
  %v3502 = vunpack.c.l.b16 %v3259
  %v3503 = vpack.c.b16 %v3496, %v3495
  %v3504 = vpack.c.b16 %v3498, %v3497
  %v3505 = vpack.c.b16 %v3500, %v3499
  %v3506 = vpack.c.b16 %v3502, %v3501
  %v3512 = vsel %vm316, %v3222, 0
  %3514 = vmatprep.subr.bf16.mxu0 0
  %3515 = vmatpush1.bf16.msra.mxu0 %v3503
  %3516 = vmatprep.subr.bf16.mxu0 0
  %3517 = vmatpush1.bf16.msra.mxu0 %v3504
  %3518 = vmatprep.subr.bf16.mxu0 0
  %3519 = vmatpush1.bf16.msra.mxu0 %v3505
  %3520 = vmatprep.subr.bf16.mxu0 0
  %3521 = vmatpush1.bf16.msra.mxu0 %v3506
  %3522 = vmatprep.subr.bf16.mxu0 0
  %3523 = vmatpush1.bf16.msra.mxu0 0
  %3524 = vmatprep.subr.bf16.mxu0 0
  %3525 = vmatpush1.bf16.msra.mxu0 0
  %3526 = vmatprep.subr.bf16.mxu0 0
  %3527 = vmatpush1.bf16.msra.mxu0 0
  %3528 = vmatprep.subr.bf16.mxu0 0
  %3529 = vmatpush1.bf16.msra.mxu0 0
  %3530 = vmatprep.subr.bf16.mxu0 0
  %3531 = vmatpush1.bf16.msra.mxu0 0
  %3532 = vmatprep.subr.bf16.mxu0 0
  %3533 = vmatpush1.bf16.msra.mxu0 0
  %3534 = vmatprep.subr.bf16.mxu0 0
  %3535 = vmatpush1.bf16.msra.mxu0 0
  %3536 = vmatprep.subr.bf16.mxu0 0
  %3537 = vmatpush1.bf16.msra.mxu0 0
  %3538 = vmatprep.subr.bf16.mxu0 0
  %3539 = vmatpush1.bf16.msra.mxu0 0
  %3540 = vmatprep.subr.bf16.mxu0 0
  %3541 = vmatpush1.bf16.msra.mxu0 0
  %3542 = vmatprep.subr.bf16.mxu0 0
  %3543 = vmatpush1.bf16.msra.mxu0 0
  %3544 = vmatprep.subr.bf16.mxu0 0
  %3545 = vmatpush1.bf16.msra.mxu0 0
  %3546 = vmatprep.mubr.bf16.mxu0 0
  %3547 = vmatmul.mubr.bf16.gmra.mrb[0].mxu0 %v3512
  %v3548 = vpop.f32.mrb[0].mxu0
  %v3549 = vadd.f32 0.0, %v3548
  %v3550 = vpop.f32.mrb[0].mxu0
  %v3551 = vpop.f32.mrb[0].mxu0
  %v3552 = vpop.f32.mrb[0].mxu0
  %3553 = vdwg.mxu0
  %v3562 = vunpack.c.l.b16 %v3260
  %v3563 = vunpack.c.l.b16 %v3261
  %v3564 = vunpack.c.l.b16 %v3262
  %v3565 = vunpack.c.l.b16 %v3263
  %v3566 = vunpack.c.l.b16 %v3264
  %v3567 = vunpack.c.l.b16 %v3265
  %v3568 = vunpack.c.l.b16 %v3266
  %v3569 = vunpack.c.l.b16 %v3267
  %v3570 = vpack.c.b16 %v3563, %v3562
  %v3571 = vpack.c.b16 %v3565, %v3564
  %v3572 = vpack.c.b16 %v3567, %v3566
  %v3573 = vpack.c.b16 %v3569, %v3568
  %v3579 = vsel %vm316, %v3223, 0
  %3581 = vmatprep.subr.bf16.mxu0 0
  %3582 = vmatpush1.bf16.msra.mxu0 %v3570
  %3583 = vmatprep.subr.bf16.mxu0 0
  %3584 = vmatpush1.bf16.msra.mxu0 %v3571
  %3585 = vmatprep.subr.bf16.mxu0 0
  %3586 = vmatpush1.bf16.msra.mxu0 %v3572
  %3587 = vmatprep.subr.bf16.mxu0 0
  %3588 = vmatpush1.bf16.msra.mxu0 %v3573
  %3589 = vmatprep.subr.bf16.mxu0 0
  %3590 = vmatpush1.bf16.msra.mxu0 0
  %3591 = vmatprep.subr.bf16.mxu0 0
  %3592 = vmatpush1.bf16.msra.mxu0 0
  %3593 = vmatprep.subr.bf16.mxu0 0
  %3594 = vmatpush1.bf16.msra.mxu0 0
  %3595 = vmatprep.subr.bf16.mxu0 0
  %3596 = vmatpush1.bf16.msra.mxu0 0
  %3597 = vmatprep.subr.bf16.mxu0 0
  %3598 = vmatpush1.bf16.msra.mxu0 0
  %3599 = vmatprep.subr.bf16.mxu0 0
  %3600 = vmatpush1.bf16.msra.mxu0 0
  %3601 = vmatprep.subr.bf16.mxu0 0
  %3602 = vmatpush1.bf16.msra.mxu0 0
  %3603 = vmatprep.subr.bf16.mxu0 0
  %3604 = vmatpush1.bf16.msra.mxu0 0
  %3605 = vmatprep.subr.bf16.mxu0 0
  %3606 = vmatpush1.bf16.msra.mxu0 0
  %3607 = vmatprep.subr.bf16.mxu0 0
  %3608 = vmatpush1.bf16.msra.mxu0 0
  %3609 = vmatprep.subr.bf16.mxu0 0
  %3610 = vmatpush1.bf16.msra.mxu0 0
  %3611 = vmatprep.subr.bf16.mxu0 0
  %3612 = vmatpush1.bf16.msra.mxu0 0
  %3613 = vmatprep.mubr.bf16.mxu0 0
  %3614 = vmatmul.mubr.bf16.gmra.mrb[0].mxu0 %v3579
  %v3615 = vpop.f32.mrb[0].mxu0
  %v3616 = vadd.f32 0.0, %v3615
  %v3617 = vpop.f32.mrb[0].mxu0
  %v3618 = vpop.f32.mrb[0].mxu0
  %v3619 = vpop.f32.mrb[0].mxu0
  %3620 = vdwg.mxu0
  %v3629 = vunpack.c.l.b16 %v3268
  %v3630 = vunpack.c.l.b16 %v3269
  %v3631 = vunpack.c.l.b16 %v3270
  %v3632 = vunpack.c.l.b16 %v3271
  %v3633 = vunpack.c.l.b16 %v3272
  %v3634 = vunpack.c.l.b16 %v3273
  %v3635 = vunpack.c.l.b16 %v3274
  %v3636 = vunpack.c.l.b16 %v3275
  %v3637 = vpack.c.b16 %v3630, %v3629
  %v3638 = vpack.c.b16 %v3632, %v3631
  %v3639 = vpack.c.b16 %v3634, %v3633
  %v3640 = vpack.c.b16 %v3636, %v3635
  %v3646 = vsel %vm316, %v3224, 0
  %3648 = vmatprep.subr.bf16.mxu0 0
  %3649 = vmatpush1.bf16.msra.mxu0 %v3637
  %3650 = vmatprep.subr.bf16.mxu0 0
  %3651 = vmatpush1.bf16.msra.mxu0 %v3638
  %3652 = vmatprep.subr.bf16.mxu0 0
  %3653 = vmatpush1.bf16.msra.mxu0 %v3639
  %3654 = vmatprep.subr.bf16.mxu0 0
  %3655 = vmatpush1.bf16.msra.mxu0 %v3640
  %3656 = vmatprep.subr.bf16.mxu0 0
  %3657 = vmatpush1.bf16.msra.mxu0 0
  %3658 = vmatprep.subr.bf16.mxu0 0
  %3659 = vmatpush1.bf16.msra.mxu0 0
  %3660 = vmatprep.subr.bf16.mxu0 0
  %3661 = vmatpush1.bf16.msra.mxu0 0
  %3662 = vmatprep.subr.bf16.mxu0 0
  %3663 = vmatpush1.bf16.msra.mxu0 0
  %3664 = vmatprep.subr.bf16.mxu0 0
  %3665 = vmatpush1.bf16.msra.mxu0 0
  %3666 = vmatprep.subr.bf16.mxu0 0
  %3667 = vmatpush1.bf16.msra.mxu0 0
  %3668 = vmatprep.subr.bf16.mxu0 0
  %3669 = vmatpush1.bf16.msra.mxu0 0
  %3670 = vmatprep.subr.bf16.mxu0 0
  %3671 = vmatpush1.bf16.msra.mxu0 0
  %3672 = vmatprep.subr.bf16.mxu0 0
  %3673 = vmatpush1.bf16.msra.mxu0 0
  %3674 = vmatprep.subr.bf16.mxu0 0
  %3675 = vmatpush1.bf16.msra.mxu0 0
  %3676 = vmatprep.subr.bf16.mxu0 0
  %3677 = vmatpush1.bf16.msra.mxu0 0
  %3678 = vmatprep.subr.bf16.mxu0 0
  %3679 = vmatpush1.bf16.msra.mxu0 0
  %3680 = vmatprep.mubr.bf16.mxu0 0
  %3681 = vmatmul.mubr.bf16.gmra.mrb[0].mxu0 %v3646
  %v3682 = vpop.f32.mrb[0].mxu0
  %v3683 = vadd.f32 0.0, %v3682
  %v3684 = vpop.f32.mrb[0].mxu0
  %v3685 = vpop.f32.mrb[0].mxu0
  %v3686 = vpop.f32.mrb[0].mxu0
  %3687 = vdwg.mxu0
  %v3696 = vunpack.c.l.b16 %v3276
  %v3697 = vunpack.c.l.b16 %v3277
  %v3698 = vunpack.c.l.b16 %v3278
  %v3699 = vunpack.c.l.b16 %v3279
  %v3700 = vunpack.c.l.b16 %v3280
  %v3701 = vunpack.c.l.b16 %v3281
  %v3702 = vunpack.c.l.b16 %v3282
  %v3703 = vunpack.c.l.b16 %v3283
  %v3704 = vpack.c.b16 %v3697, %v3696
  %v3705 = vpack.c.b16 %v3699, %v3698
  %v3706 = vpack.c.b16 %v3701, %v3700
  %v3707 = vpack.c.b16 %v3703, %v3702
  %v3713 = vsel %vm316, %v3225, 0
  %3715 = vmatprep.subr.bf16.mxu0 0
  %3716 = vmatpush1.bf16.msra.mxu0 %v3704
  %3717 = vmatprep.subr.bf16.mxu0 0
  %3718 = vmatpush1.bf16.msra.mxu0 %v3705
  %3719 = vmatprep.subr.bf16.mxu0 0
  %3720 = vmatpush1.bf16.msra.mxu0 %v3706
  %3721 = vmatprep.subr.bf16.mxu0 0
  %3722 = vmatpush1.bf16.msra.mxu0 %v3707
  %3723 = vmatprep.subr.bf16.mxu0 0
  %3724 = vmatpush1.bf16.msra.mxu0 0
  %3725 = vmatprep.subr.bf16.mxu0 0
  %3726 = vmatpush1.bf16.msra.mxu0 0
  %3727 = vmatprep.subr.bf16.mxu0 0
  %3728 = vmatpush1.bf16.msra.mxu0 0
  %3729 = vmatprep.subr.bf16.mxu0 0
  %3730 = vmatpush1.bf16.msra.mxu0 0
  %3731 = vmatprep.subr.bf16.mxu0 0
  %3732 = vmatpush1.bf16.msra.mxu0 0
  %3733 = vmatprep.subr.bf16.mxu0 0
  %3734 = vmatpush1.bf16.msra.mxu0 0
  %3735 = vmatprep.subr.bf16.mxu0 0
  %3736 = vmatpush1.bf16.msra.mxu0 0
  %3737 = vmatprep.subr.bf16.mxu0 0
  %3738 = vmatpush1.bf16.msra.mxu0 0
  %3739 = vmatprep.subr.bf16.mxu0 0
  %3740 = vmatpush1.bf16.msra.mxu0 0
  %3741 = vmatprep.subr.bf16.mxu0 0
  %3742 = vmatpush1.bf16.msra.mxu0 0
  %3743 = vmatprep.subr.bf16.mxu0 0
  %3744 = vmatpush1.bf16.msra.mxu0 0
  %3745 = vmatprep.subr.bf16.mxu0 0
  %3746 = vmatpush1.bf16.msra.mxu0 0
  %3747 = vmatprep.mubr.bf16.mxu0 0
  %3748 = vmatmul.mubr.bf16.gmra.mrb[0].mxu0 %v3713
  %v3749 = vpop.f32.mrb[0].mxu0
  %v3750 = vadd.f32 0.0, %v3749
  %v3751 = vpop.f32.mrb[0].mxu0
  %v3752 = vpop.f32.mrb[0].mxu0
  %v3753 = vpop.f32.mrb[0].mxu0
  %3754 = vdwg.mxu0
  %v3763 = vunpack.c.l.b16 %v3284
  %v3764 = vunpack.c.l.b16 %v3285
  %v3765 = vunpack.c.l.b16 %v3286
  %v3766 = vunpack.c.l.b16 %v3287
  %v3767 = vunpack.c.l.b16 %v3288
  %v3768 = vunpack.c.l.b16 %v3289
  %v3769 = vunpack.c.l.b16 %v3290
  %v3770 = vunpack.c.l.b16 %v3291
  %v3771 = vpack.c.b16 %v3764, %v3763
  %v3772 = vpack.c.b16 %v3766, %v3765
  %v3773 = vpack.c.b16 %v3768, %v3767
  %v3774 = vpack.c.b16 %v3770, %v3769
  %v3780 = vsel %vm316, %v3226, 0
  %3782 = vmatprep.subr.bf16.mxu0 0
  %3783 = vmatpush1.bf16.msra.mxu0 %v3771
  %3784 = vmatprep.subr.bf16.mxu0 0
  %3785 = vmatpush1.bf16.msra.mxu0 %v3772
  %3786 = vmatprep.subr.bf16.mxu0 0
  %3787 = vmatpush1.bf16.msra.mxu0 %v3773
  %3788 = vmatprep.subr.bf16.mxu0 0
  %3789 = vmatpush1.bf16.msra.mxu0 %v3774
  %3790 = vmatprep.subr.bf16.mxu0 0
  %3791 = vmatpush1.bf16.msra.mxu0 0
  %3792 = vmatprep.subr.bf16.mxu0 0
  %3793 = vmatpush1.bf16.msra.mxu0 0
  %3794 = vmatprep.subr.bf16.mxu0 0
  %3795 = vmatpush1.bf16.msra.mxu0 0
  %3796 = vmatprep.subr.bf16.mxu0 0
  %3797 = vmatpush1.bf16.msra.mxu0 0
  %3798 = vmatprep.subr.bf16.mxu0 0
  %3799 = vmatpush1.bf16.msra.mxu0 0
  %3800 = vmatprep.subr.bf16.mxu0 0
  %3801 = vmatpush1.bf16.msra.mxu0 0
  %3802 = vmatprep.subr.bf16.mxu0 0
  %3803 = vmatpush1.bf16.msra.mxu0 0
  %3804 = vmatprep.subr.bf16.mxu0 0
  %3805 = vmatpush1.bf16.msra.mxu0 0
  %3806 = vmatprep.subr.bf16.mxu0 0
  %3807 = vmatpush1.bf16.msra.mxu0 0
  %3808 = vmatprep.subr.bf16.mxu0 0
  %3809 = vmatpush1.bf16.msra.mxu0 0
  %3810 = vmatprep.subr.bf16.mxu0 0
  %3811 = vmatpush1.bf16.msra.mxu0 0
  %3812 = vmatprep.subr.bf16.mxu0 0
  %3813 = vmatpush1.bf16.msra.mxu0 0
  %3814 = vmatprep.mubr.bf16.mxu0 0
  %3815 = vmatmul.mubr.bf16.gmra.mrb[0].mxu0 %v3780
  %v3816 = vpop.f32.mrb[0].mxu0
  %v3817 = vadd.f32 0.0, %v3816
  %v3818 = vpop.f32.mrb[0].mxu0
  %v3819 = vpop.f32.mrb[0].mxu0
  %v3820 = vpop.f32.mrb[0].mxu0
  %3821 = vdwg.mxu0
  %v3830 = vunpack.c.l.b16 %v3292
  %v3831 = vunpack.c.l.b16 %v3293
  %v3832 = vunpack.c.l.b16 %v3294
  %v3833 = vunpack.c.l.b16 %v3295
  %v3834 = vunpack.c.l.b16 %v3296
  %v3835 = vunpack.c.l.b16 %v3297
  %v3836 = vunpack.c.l.b16 %v3298
  %v3837 = vunpack.c.l.b16 %v3299
  %v3838 = vpack.c.b16 %v3831, %v3830
  %v3839 = vpack.c.b16 %v3833, %v3832
  %v3840 = vpack.c.b16 %v3835, %v3834
  %v3841 = vpack.c.b16 %v3837, %v3836
  %v3847 = vsel %vm316, %v3227, 0
  %3849 = vmatprep.subr.bf16.mxu0 0
  %3850 = vmatpush1.bf16.msra.mxu0 %v3838
  %3851 = vmatprep.subr.bf16.mxu0 0
  %3852 = vmatpush1.bf16.msra.mxu0 %v3839
  %3853 = vmatprep.subr.bf16.mxu0 0
  %3854 = vmatpush1.bf16.msra.mxu0 %v3840
  %3855 = vmatprep.subr.bf16.mxu0 0
  %3856 = vmatpush1.bf16.msra.mxu0 %v3841
  %3857 = vmatprep.subr.bf16.mxu0 0
  %3858 = vmatpush1.bf16.msra.mxu0 0
  %3859 = vmatprep.subr.bf16.mxu0 0
  %3860 = vmatpush1.bf16.msra.mxu0 0
  %3861 = vmatprep.subr.bf16.mxu0 0
  %3862 = vmatpush1.bf16.msra.mxu0 0
  %3863 = vmatprep.subr.bf16.mxu0 0
  %3864 = vmatpush1.bf16.msra.mxu0 0
  %3865 = vmatprep.subr.bf16.mxu0 0
  %3866 = vmatpush1.bf16.msra.mxu0 0
  %3867 = vmatprep.subr.bf16.mxu0 0
  %3868 = vmatpush1.bf16.msra.mxu0 0
  %3869 = vmatprep.subr.bf16.mxu0 0
  %3870 = vmatpush1.bf16.msra.mxu0 0
  %3871 = vmatprep.subr.bf16.mxu0 0
  %3872 = vmatpush1.bf16.msra.mxu0 0
  %3873 = vmatprep.subr.bf16.mxu0 0
  %3874 = vmatpush1.bf16.msra.mxu0 0
  %3875 = vmatprep.subr.bf16.mxu0 0
  %3876 = vmatpush1.bf16.msra.mxu0 0
  %3877 = vmatprep.subr.bf16.mxu0 0
  %3878 = vmatpush1.bf16.msra.mxu0 0
  %3879 = vmatprep.subr.bf16.mxu0 0
  %3880 = vmatpush1.bf16.msra.mxu0 0
  %3881 = vmatprep.mubr.bf16.mxu0 0
  %3882 = vmatmul.mubr.bf16.gmra.mrb[0].mxu0 %v3847
  %v3883 = vpop.f32.mrb[0].mxu0
  %v3884 = vadd.f32 0.0, %v3883
  %v3885 = vpop.f32.mrb[0].mxu0
  %v3886 = vpop.f32.mrb[0].mxu0
  %v3887 = vpop.f32.mrb[0].mxu0
  %3888 = vdwg.mxu0
  %v3897 = vunpack.c.l.b16 %v3300
  %v3898 = vunpack.c.l.b16 %v3301
  %v3899 = vunpack.c.l.b16 %v3302
  %v3900 = vunpack.c.l.b16 %v3303
  %v3901 = vunpack.c.l.b16 %v3304
  %v3902 = vunpack.c.l.b16 %v3305
  %v3903 = vunpack.c.l.b16 %v3306
  %v3904 = vunpack.c.l.b16 %v3307
  %v3905 = vpack.c.b16 %v3898, %v3897
  %v3906 = vpack.c.b16 %v3900, %v3899
  %v3907 = vpack.c.b16 %v3902, %v3901
  %v3908 = vpack.c.b16 %v3904, %v3903
  %v3914 = vsel %vm316, %v3228, 0
  %3916 = vmatprep.subr.bf16.mxu0 0
  %3917 = vmatpush1.bf16.msra.mxu0 %v3905
  %3918 = vmatprep.subr.bf16.mxu0 0
  %3919 = vmatpush1.bf16.msra.mxu0 %v3906
  %3920 = vmatprep.subr.bf16.mxu0 0
  %3921 = vmatpush1.bf16.msra.mxu0 %v3907
  %3922 = vmatprep.subr.bf16.mxu0 0
  %3923 = vmatpush1.bf16.msra.mxu0 %v3908
  %3924 = vmatprep.subr.bf16.mxu0 0
  %3925 = vmatpush1.bf16.msra.mxu0 0
  %3926 = vmatprep.subr.bf16.mxu0 0
  %3927 = vmatpush1.bf16.msra.mxu0 0
  %3928 = vmatprep.subr.bf16.mxu0 0
  %3929 = vmatpush1.bf16.msra.mxu0 0
  %3930 = vmatprep.subr.bf16.mxu0 0
  %3931 = vmatpush1.bf16.msra.mxu0 0
  %3932 = vmatprep.subr.bf16.mxu0 0
  %3933 = vmatpush1.bf16.msra.mxu0 0
  %3934 = vmatprep.subr.bf16.mxu0 0
  %3935 = vmatpush1.bf16.msra.mxu0 0
  %3936 = vmatprep.subr.bf16.mxu0 0
  %3937 = vmatpush1.bf16.msra.mxu0 0
  %3938 = vmatprep.subr.bf16.mxu0 0
  %3939 = vmatpush1.bf16.msra.mxu0 0
  %3940 = vmatprep.subr.bf16.mxu0 0
  %3941 = vmatpush1.bf16.msra.mxu0 0
  %3942 = vmatprep.subr.bf16.mxu0 0
  %3943 = vmatpush1.bf16.msra.mxu0 0
  %3944 = vmatprep.subr.bf16.mxu0 0
  %3945 = vmatpush1.bf16.msra.mxu0 0
  %3946 = vmatprep.subr.bf16.mxu0 0
  %3947 = vmatpush1.bf16.msra.mxu0 0
  %3948 = vmatprep.mubr.bf16.mxu0 0
  %3949 = vmatmul.mubr.bf16.gmra.mrb[0].mxu0 %v3914
  %v3950 = vpop.f32.mrb[0].mxu0
  %v3951 = vadd.f32 0.0, %v3950
  %v3952 = vpop.f32.mrb[0].mxu0
  %v3953 = vpop.f32.mrb[0].mxu0
  %v3954 = vpop.f32.mrb[0].mxu0
  %3955 = vdwg.mxu0
  %v3964 = vunpack.c.l.b16 %v3308
  %v3965 = vunpack.c.l.b16 %v3309
  %v3966 = vunpack.c.l.b16 %v3310
  %v3967 = vunpack.c.l.b16 %v3311
  %v3968 = vunpack.c.l.b16 %v3312
  %v3969 = vunpack.c.l.b16 %v3313
  %v3970 = vunpack.c.l.b16 %v3314
  %v3971 = vunpack.c.l.b16 %v3315
  %v3972 = vpack.c.b16 %v3965, %v3964
  %v3973 = vpack.c.b16 %v3967, %v3966
  %v3974 = vpack.c.b16 %v3969, %v3968
  %v3975 = vpack.c.b16 %v3971, %v3970
  %v3981 = vsel %vm316, %v3229, 0
  %3983 = vmatprep.subr.bf16.mxu0 0
  %3984 = vmatpush1.bf16.msra.mxu0 %v3972
  %3985 = vmatprep.subr.bf16.mxu0 0
  %3986 = vmatpush1.bf16.msra.mxu0 %v3973
  %3987 = vmatprep.subr.bf16.mxu0 0
  %3988 = vmatpush1.bf16.msra.mxu0 %v3974
  %3989 = vmatprep.subr.bf16.mxu0 0
  %3990 = vmatpush1.bf16.msra.mxu0 %v3975
  %3991 = vmatprep.subr.bf16.mxu0 0
  %3992 = vmatpush1.bf16.msra.mxu0 0
  %3993 = vmatprep.subr.bf16.mxu0 0
  %3994 = vmatpush1.bf16.msra.mxu0 0
  %3995 = vmatprep.subr.bf16.mxu0 0
  %3996 = vmatpush1.bf16.msra.mxu0 0
  %3997 = vmatprep.subr.bf16.mxu0 0
  %3998 = vmatpush1.bf16.msra.mxu0 0
  %3999 = vmatprep.subr.bf16.mxu0 0
  %4000 = vmatpush1.bf16.msra.mxu0 0
  %4001 = vmatprep.subr.bf16.mxu0 0
  %4002 = vmatpush1.bf16.msra.mxu0 0
  %4003 = vmatprep.subr.bf16.mxu0 0
  %4004 = vmatpush1.bf16.msra.mxu0 0
  %4005 = vmatprep.subr.bf16.mxu0 0
  %4006 = vmatpush1.bf16.msra.mxu0 0
  %4007 = vmatprep.subr.bf16.mxu0 0
  %4008 = vmatpush1.bf16.msra.mxu0 0
  %4009 = vmatprep.subr.bf16.mxu0 0
  %4010 = vmatpush1.bf16.msra.mxu0 0
  %4011 = vmatprep.subr.bf16.mxu0 0
  %4012 = vmatpush1.bf16.msra.mxu0 0
  %4013 = vmatprep.subr.bf16.mxu0 0
  %4014 = vmatpush1.bf16.msra.mxu0 0
  %4015 = vmatprep.mubr.bf16.mxu0 0
  %4016 = vmatmul.mubr.bf16.gmra.mrb[0].mxu0 %v3981
  %v4017 = vpop.f32.mrb[0].mxu0
  %v4018 = vadd.f32 0.0, %v4017
  %v4019 = vpop.f32.mrb[0].mxu0
  %v4020 = vpop.f32.mrb[0].mxu0
  %v4021 = vpop.f32.mrb[0].mxu0
  %4022 = vdwg.mxu0
  %v4031 = vunpack.c.l.b16 %v3316
  %v4032 = vunpack.c.l.b16 %v3317
  %v4033 = vunpack.c.l.b16 %v3318
  %v4034 = vunpack.c.l.b16 %v3319
  %v4035 = vunpack.c.l.b16 %v3320
  %v4036 = vunpack.c.l.b16 %v3321
  %v4037 = vunpack.c.l.b16 %v3322
  %v4038 = vunpack.c.l.b16 %v3323
  %v4039 = vpack.c.b16 %v4032, %v4031
  %v4040 = vpack.c.b16 %v4034, %v4033
  %v4041 = vpack.c.b16 %v4036, %v4035
  %v4042 = vpack.c.b16 %v4038, %v4037
  %v4048 = vsel %vm316, %v3230, 0
  %4050 = vmatprep.subr.bf16.mxu0 0
  %4051 = vmatpush1.bf16.msra.mxu0 %v4039
  %4052 = vmatprep.subr.bf16.mxu0 0
  %4053 = vmatpush1.bf16.msra.mxu0 %v4040
  %4054 = vmatprep.subr.bf16.mxu0 0
  %4055 = vmatpush1.bf16.msra.mxu0 %v4041
  %4056 = vmatprep.subr.bf16.mxu0 0
  %4057 = vmatpush1.bf16.msra.mxu0 %v4042
  %4058 = vmatprep.subr.bf16.mxu0 0
  %4059 = vmatpush1.bf16.msra.mxu0 0
  %4060 = vmatprep.subr.bf16.mxu0 0
  %4061 = vmatpush1.bf16.msra.mxu0 0
  %4062 = vmatprep.subr.bf16.mxu0 0
  %4063 = vmatpush1.bf16.msra.mxu0 0
  %4064 = vmatprep.subr.bf16.mxu0 0
  %4065 = vmatpush1.bf16.msra.mxu0 0
  %4066 = vmatprep.subr.bf16.mxu0 0
  %4067 = vmatpush1.bf16.msra.mxu0 0
  %4068 = vmatprep.subr.bf16.mxu0 0
  %4069 = vmatpush1.bf16.msra.mxu0 0
  %4070 = vmatprep.subr.bf16.mxu0 0
  %4071 = vmatpush1.bf16.msra.mxu0 0
  %4072 = vmatprep.subr.bf16.mxu0 0
  %4073 = vmatpush1.bf16.msra.mxu0 0
  %4074 = vmatprep.subr.bf16.mxu0 0
  %4075 = vmatpush1.bf16.msra.mxu0 0
  %4076 = vmatprep.subr.bf16.mxu0 0
  %4077 = vmatpush1.bf16.msra.mxu0 0
  %4078 = vmatprep.subr.bf16.mxu0 0
  %4079 = vmatpush1.bf16.msra.mxu0 0
  %4080 = vmatprep.subr.bf16.mxu0 0
  %4081 = vmatpush1.bf16.msra.mxu0 0
  %4082 = vmatprep.mubr.bf16.mxu0 0
  %4083 = vmatmul.mubr.bf16.gmra.mrb[0].mxu0 %v4048
  %v4084 = vpop.f32.mrb[0].mxu0
  %v4085 = vadd.f32 0.0, %v4084
  %v4086 = vpop.f32.mrb[0].mxu0
  %v4087 = vpop.f32.mrb[0].mxu0
  %v4088 = vpop.f32.mrb[0].mxu0
  %4089 = vdwg.mxu0
  %v4098 = vunpack.c.l.b16 %v3324
  %v4099 = vunpack.c.l.b16 %v3325
  %v4100 = vunpack.c.l.b16 %v3326
  %v4101 = vunpack.c.l.b16 %v3327
  %v4102 = vunpack.c.l.b16 %v3328
  %v4103 = vunpack.c.l.b16 %v3329
  %v4104 = vunpack.c.l.b16 %v3330
  %v4105 = vunpack.c.l.b16 %v3331
  %v4106 = vpack.c.b16 %v4099, %v4098
  %v4107 = vpack.c.b16 %v4101, %v4100
  %v4108 = vpack.c.b16 %v4103, %v4102
  %v4109 = vpack.c.b16 %v4105, %v4104
  %v4115 = vsel %vm316, %v3231, 0
  %4117 = vmatprep.subr.bf16.mxu0 0
  %4118 = vmatpush1.bf16.msra.mxu0 %v4106
  %4119 = vmatprep.subr.bf16.mxu0 0
  %4120 = vmatpush1.bf16.msra.mxu0 %v4107
  %4121 = vmatprep.subr.bf16.mxu0 0
  %4122 = vmatpush1.bf16.msra.mxu0 %v4108
  %4123 = vmatprep.subr.bf16.mxu0 0
  %4124 = vmatpush1.bf16.msra.mxu0 %v4109
  %4125 = vmatprep.subr.bf16.mxu0 0
  %4126 = vmatpush1.bf16.msra.mxu0 0
  %4127 = vmatprep.subr.bf16.mxu0 0
  %4128 = vmatpush1.bf16.msra.mxu0 0
  %4129 = vmatprep.subr.bf16.mxu0 0
  %4130 = vmatpush1.bf16.msra.mxu0 0
  %4131 = vmatprep.subr.bf16.mxu0 0
  %4132 = vmatpush1.bf16.msra.mxu0 0
  %4133 = vmatprep.subr.bf16.mxu0 0
  %4134 = vmatpush1.bf16.msra.mxu0 0
  %4135 = vmatprep.subr.bf16.mxu0 0
  %4136 = vmatpush1.bf16.msra.mxu0 0
  %4137 = vmatprep.subr.bf16.mxu0 0
  %4138 = vmatpush1.bf16.msra.mxu0 0
  %4139 = vmatprep.subr.bf16.mxu0 0
  %4140 = vmatpush1.bf16.msra.mxu0 0
  %4141 = vmatprep.subr.bf16.mxu0 0
  %4142 = vmatpush1.bf16.msra.mxu0 0
  %4143 = vmatprep.subr.bf16.mxu0 0
  %4144 = vmatpush1.bf16.msra.mxu0 0
  %4145 = vmatprep.subr.bf16.mxu0 0
  %4146 = vmatpush1.bf16.msra.mxu0 0
  %4147 = vmatprep.subr.bf16.mxu0 0
  %4148 = vmatpush1.bf16.msra.mxu0 0
  %4149 = vmatprep.mubr.bf16.mxu0 0
  %4150 = vmatmul.mubr.bf16.gmra.mrb[0].mxu0 %v4115
  %v4151 = vpop.f32.mrb[0].mxu0
  %v4152 = vadd.f32 0.0, %v4151
  %v4153 = vpop.f32.mrb[0].mxu0
  %v4154 = vpop.f32.mrb[0].mxu0
  %v4155 = vpop.f32.mrb[0].mxu0
  %4156 = vdwg.mxu0
  %v4165 = vunpack.c.l.b16 %v3332
  %v4166 = vunpack.c.l.b16 %v3333
  %v4167 = vunpack.c.l.b16 %v3334
  %v4168 = vunpack.c.l.b16 %v3335
  %v4169 = vunpack.c.l.b16 %v3336
  %v4170 = vunpack.c.l.b16 %v3337
  %v4171 = vunpack.c.l.b16 %v3338
  %v4172 = vunpack.c.l.b16 %v3339
  %v4173 = vpack.c.b16 %v4166, %v4165
  %v4174 = vpack.c.b16 %v4168, %v4167
  %v4175 = vpack.c.b16 %v4170, %v4169
  %v4176 = vpack.c.b16 %v4172, %v4171
  %v4182 = vsel %vm316, %v3232, 0
  %4184 = vmatprep.subr.bf16.mxu0 0
  %4185 = vmatpush1.bf16.msra.mxu0 %v4173
  %4186 = vmatprep.subr.bf16.mxu0 0
  %4187 = vmatpush1.bf16.msra.mxu0 %v4174
  %4188 = vmatprep.subr.bf16.mxu0 0
  %4189 = vmatpush1.bf16.msra.mxu0 %v4175
  %4190 = vmatprep.subr.bf16.mxu0 0
  %4191 = vmatpush1.bf16.msra.mxu0 %v4176
  %4192 = vmatprep.subr.bf16.mxu0 0
  %4193 = vmatpush1.bf16.msra.mxu0 0
  %4194 = vmatprep.subr.bf16.mxu0 0
  %4195 = vmatpush1.bf16.msra.mxu0 0
  %4196 = vmatprep.subr.bf16.mxu0 0
  %4197 = vmatpush1.bf16.msra.mxu0 0
  %4198 = vmatprep.subr.bf16.mxu0 0
  %4199 = vmatpush1.bf16.msra.mxu0 0
  %4200 = vmatprep.subr.bf16.mxu0 0
  %4201 = vmatpush1.bf16.msra.mxu0 0
  %4202 = vmatprep.subr.bf16.mxu0 0
  %4203 = vmatpush1.bf16.msra.mxu0 0
  %4204 = vmatprep.subr.bf16.mxu0 0
  %4205 = vmatpush1.bf16.msra.mxu0 0
  %4206 = vmatprep.subr.bf16.mxu0 0
  %4207 = vmatpush1.bf16.msra.mxu0 0
  %4208 = vmatprep.subr.bf16.mxu0 0
  %4209 = vmatpush1.bf16.msra.mxu0 0
  %4210 = vmatprep.subr.bf16.mxu0 0
  %4211 = vmatpush1.bf16.msra.mxu0 0
  %4212 = vmatprep.subr.bf16.mxu0 0
  %4213 = vmatpush1.bf16.msra.mxu0 0
  %4214 = vmatprep.subr.bf16.mxu0 0
  %4215 = vmatpush1.bf16.msra.mxu0 0
  %4216 = vmatprep.mubr.bf16.mxu0 0
  %4217 = vmatmul.mubr.bf16.gmra.mrb[0].mxu0 %v4182
  %v4218 = vpop.f32.mrb[0].mxu0
  %v4219 = vadd.f32 0.0, %v4218
  %v4220 = vpop.f32.mrb[0].mxu0
  %v4221 = vpop.f32.mrb[0].mxu0
  %v4222 = vpop.f32.mrb[0].mxu0
  %4223 = vdwg.mxu0
  %v4232 = vunpack.c.l.b16 %v3340
  %v4233 = vunpack.c.l.b16 %v3341
  %v4234 = vunpack.c.l.b16 %v3342
  %v4235 = vunpack.c.l.b16 %v3343
  %v4236 = vunpack.c.l.b16 %v3344
  %v4237 = vunpack.c.l.b16 %v3345
  %v4238 = vunpack.c.l.b16 %v3346
  %v4239 = vunpack.c.l.b16 %v3347
  %v4240 = vpack.c.b16 %v4233, %v4232
  %v4241 = vpack.c.b16 %v4235, %v4234
  %v4242 = vpack.c.b16 %v4237, %v4236
  %v4243 = vpack.c.b16 %v4239, %v4238
  %v4249 = vsel %vm316, %v3233, 0
  %4251 = vmatprep.subr.bf16.mxu0 0
  %4252 = vmatpush1.bf16.msra.mxu0 %v4240
  %4253 = vmatprep.subr.bf16.mxu0 0
  %4254 = vmatpush1.bf16.msra.mxu0 %v4241
  %4255 = vmatprep.subr.bf16.mxu0 0
  %4256 = vmatpush1.bf16.msra.mxu0 %v4242
  %4257 = vmatprep.subr.bf16.mxu0 0
  %4258 = vmatpush1.bf16.msra.mxu0 %v4243
  %4259 = vmatprep.subr.bf16.mxu0 0
  %4260 = vmatpush1.bf16.msra.mxu0 0
  %4261 = vmatprep.subr.bf16.mxu0 0
  %4262 = vmatpush1.bf16.msra.mxu0 0
  %4263 = vmatprep.subr.bf16.mxu0 0
  %4264 = vmatpush1.bf16.msra.mxu0 0
  %4265 = vmatprep.subr.bf16.mxu0 0
  %4266 = vmatpush1.bf16.msra.mxu0 0
  %4267 = vmatprep.subr.bf16.mxu0 0
  %4268 = vmatpush1.bf16.msra.mxu0 0
  %4269 = vmatprep.subr.bf16.mxu0 0
  %4270 = vmatpush1.bf16.msra.mxu0 0
  %4271 = vmatprep.subr.bf16.mxu0 0
  %4272 = vmatpush1.bf16.msra.mxu0 0
  %4273 = vmatprep.subr.bf16.mxu0 0
  %4274 = vmatpush1.bf16.msra.mxu0 0
  %4275 = vmatprep.subr.bf16.mxu0 0
  %4276 = vmatpush1.bf16.msra.mxu0 0
  %4277 = vmatprep.subr.bf16.mxu0 0
  %4278 = vmatpush1.bf16.msra.mxu0 0
  %4279 = vmatprep.subr.bf16.mxu0 0
  %4280 = vmatpush1.bf16.msra.mxu0 0
  %4281 = vmatprep.subr.bf16.mxu0 0
  %4282 = vmatpush1.bf16.msra.mxu0 0
  %4283 = vmatprep.mubr.bf16.mxu0 0
  %4284 = vmatmul.mubr.bf16.gmra.mrb[0].mxu0 %v4249
  %v4285 = vpop.f32.mrb[0].mxu0
  %v4286 = vadd.f32 0.0, %v4285
  %v4287 = vpop.f32.mrb[0].mxu0
  %v4288 = vpop.f32.mrb[0].mxu0
  %v4289 = vpop.f32.mrb[0].mxu0
  %4290 = vdwg.mxu0
  %v4299 = vunpack.c.l.b16 %v3348
  %v4300 = vunpack.c.l.b16 %v3349
  %v4301 = vunpack.c.l.b16 %v3350
  %v4302 = vunpack.c.l.b16 %v3351
  %v4303 = vunpack.c.l.b16 %v3352
  %v4304 = vunpack.c.l.b16 %v3353
  %v4305 = vunpack.c.l.b16 %v3354
  %v4306 = vunpack.c.l.b16 %v3355
  %v4307 = vpack.c.b16 %v4300, %v4299
  %v4308 = vpack.c.b16 %v4302, %v4301
  %v4309 = vpack.c.b16 %v4304, %v4303
  %v4310 = vpack.c.b16 %v4306, %v4305
  %v4316 = vsel %vm316, %v3234, 0
  %4318 = vmatprep.subr.bf16.mxu0 0
  %4319 = vmatpush1.bf16.msra.mxu0 %v4307
  %4320 = vmatprep.subr.bf16.mxu0 0
  %4321 = vmatpush1.bf16.msra.mxu0 %v4308
  %4322 = vmatprep.subr.bf16.mxu0 0
  %4323 = vmatpush1.bf16.msra.mxu0 %v4309
  %4324 = vmatprep.subr.bf16.mxu0 0
  %4325 = vmatpush1.bf16.msra.mxu0 %v4310
  %4326 = vmatprep.subr.bf16.mxu0 0
  %4327 = vmatpush1.bf16.msra.mxu0 0
  %4328 = vmatprep.subr.bf16.mxu0 0
  %4329 = vmatpush1.bf16.msra.mxu0 0
  %4330 = vmatprep.subr.bf16.mxu0 0
  %4331 = vmatpush1.bf16.msra.mxu0 0
  %4332 = vmatprep.subr.bf16.mxu0 0
  %4333 = vmatpush1.bf16.msra.mxu0 0
  %4334 = vmatprep.subr.bf16.mxu0 0
  %4335 = vmatpush1.bf16.msra.mxu0 0
  %4336 = vmatprep.subr.bf16.mxu0 0
  %4337 = vmatpush1.bf16.msra.mxu0 0
  %4338 = vmatprep.subr.bf16.mxu0 0
  %4339 = vmatpush1.bf16.msra.mxu0 0
  %4340 = vmatprep.subr.bf16.mxu0 0
  %4341 = vmatpush1.bf16.msra.mxu0 0
  %4342 = vmatprep.subr.bf16.mxu0 0
  %4343 = vmatpush1.bf16.msra.mxu0 0
  %4344 = vmatprep.subr.bf16.mxu0 0
  %4345 = vmatpush1.bf16.msra.mxu0 0
  %4346 = vmatprep.subr.bf16.mxu0 0
  %4347 = vmatpush1.bf16.msra.mxu0 0
  %4348 = vmatprep.subr.bf16.mxu0 0
  %4349 = vmatpush1.bf16.msra.mxu0 0
  %4350 = vmatprep.mubr.bf16.mxu0 0
  %4351 = vmatmul.mubr.bf16.gmra.mrb[0].mxu0 %v4316
  %v4352 = vpop.f32.mrb[0].mxu0
  %v4353 = vadd.f32 0.0, %v4352
  %v4354 = vpop.f32.mrb[0].mxu0
  %v4355 = vpop.f32.mrb[0].mxu0
  %v4356 = vpop.f32.mrb[0].mxu0
  %4357 = vdwg.mxu0
  %v4366 = vunpack.c.l.b16 %v3356
  %v4367 = vunpack.c.l.b16 %v3357
  %v4368 = vunpack.c.l.b16 %v3358
  %v4369 = vunpack.c.l.b16 %v3359
  %v4370 = vunpack.c.l.b16 %v3360
  %v4371 = vunpack.c.l.b16 %v3361
  %v4372 = vunpack.c.l.b16 %v3362
  %v4373 = vunpack.c.l.b16 %v3363
  %v4374 = vpack.c.b16 %v4367, %v4366
  %v4375 = vpack.c.b16 %v4369, %v4368
  %v4376 = vpack.c.b16 %v4371, %v4370
  %v4377 = vpack.c.b16 %v4373, %v4372
  %v4383 = vsel %vm316, %v3235, 0
  %4385 = vmatprep.subr.bf16.mxu0 0
  %4386 = vmatpush1.bf16.msra.mxu0 %v4374
  %4387 = vmatprep.subr.bf16.mxu0 0
  %4388 = vmatpush1.bf16.msra.mxu0 %v4375
  %4389 = vmatprep.subr.bf16.mxu0 0
  %4390 = vmatpush1.bf16.msra.mxu0 %v4376
  %4391 = vmatprep.subr.bf16.mxu0 0
  %4392 = vmatpush1.bf16.msra.mxu0 %v4377
  %4393 = vmatprep.subr.bf16.mxu0 0
  %4394 = vmatpush1.bf16.msra.mxu0 0
  %4395 = vmatprep.subr.bf16.mxu0 0
  %4396 = vmatpush1.bf16.msra.mxu0 0
  %4397 = vmatprep.subr.bf16.mxu0 0
  %4398 = vmatpush1.bf16.msra.mxu0 0
  %4399 = vmatprep.subr.bf16.mxu0 0
  %4400 = vmatpush1.bf16.msra.mxu0 0
  %4401 = vmatprep.subr.bf16.mxu0 0
  %4402 = vmatpush1.bf16.msra.mxu0 0
  %4403 = vmatprep.subr.bf16.mxu0 0
  %4404 = vmatpush1.bf16.msra.mxu0 0
  %4405 = vmatprep.subr.bf16.mxu0 0
  %4406 = vmatpush1.bf16.msra.mxu0 0
  %4407 = vmatprep.subr.bf16.mxu0 0
  %4408 = vmatpush1.bf16.msra.mxu0 0
  %4409 = vmatprep.subr.bf16.mxu0 0
  %4410 = vmatpush1.bf16.msra.mxu0 0
  %4411 = vmatprep.subr.bf16.mxu0 0
  %4412 = vmatpush1.bf16.msra.mxu0 0
  %4413 = vmatprep.subr.bf16.mxu0 0
  %4414 = vmatpush1.bf16.msra.mxu0 0
  %4415 = vmatprep.subr.bf16.mxu0 0
  %4416 = vmatpush1.bf16.msra.mxu0 0
  %4417 = vmatprep.mubr.bf16.mxu0 0
  %4418 = vmatmul.mubr.bf16.gmra.mrb[0].mxu0 %v4383
  %v4419 = vpop.f32.mrb[0].mxu0
  %v4420 = vadd.f32 0.0, %v4419
  %v4421 = vpop.f32.mrb[0].mxu0
  %v4422 = vpop.f32.mrb[0].mxu0
  %v4423 = vpop.f32.mrb[0].mxu0
  %4424 = vdwg.mxu0
  %v4433 = vunpack.c.l.b16 %v3364
  %v4434 = vunpack.c.l.b16 %v3365
  %v4435 = vunpack.c.l.b16 %v3366
  %v4436 = vunpack.c.l.b16 %v3367
  %v4437 = vunpack.c.l.b16 %v3368
  %v4438 = vunpack.c.l.b16 %v3369
  %v4439 = vunpack.c.l.b16 %v3370
  %v4440 = vunpack.c.l.b16 %v3371
  %v4441 = vpack.c.b16 %v4434, %v4433
  %v4442 = vpack.c.b16 %v4436, %v4435
  %v4443 = vpack.c.b16 %v4438, %v4437
  %v4444 = vpack.c.b16 %v4440, %v4439
  %v4450 = vsel %vm316, %v3236, 0
  %4452 = vmatprep.subr.bf16.mxu0 0
  %4453 = vmatpush1.bf16.msra.mxu0 %v4441
  %4454 = vmatprep.subr.bf16.mxu0 0
  %4455 = vmatpush1.bf16.msra.mxu0 %v4442
  %4456 = vmatprep.subr.bf16.mxu0 0
  %4457 = vmatpush1.bf16.msra.mxu0 %v4443
  %4458 = vmatprep.subr.bf16.mxu0 0
  %4459 = vmatpush1.bf16.msra.mxu0 %v4444
  %4460 = vmatprep.subr.bf16.mxu0 0
  %4461 = vmatpush1.bf16.msra.mxu0 0
  %4462 = vmatprep.subr.bf16.mxu0 0
  %4463 = vmatpush1.bf16.msra.mxu0 0
  %4464 = vmatprep.subr.bf16.mxu0 0
  %4465 = vmatpush1.bf16.msra.mxu0 0
  %4466 = vmatprep.subr.bf16.mxu0 0
  %4467 = vmatpush1.bf16.msra.mxu0 0
  %4468 = vmatprep.subr.bf16.mxu0 0
  %4469 = vmatpush1.bf16.msra.mxu0 0
  %4470 = vmatprep.subr.bf16.mxu0 0
  %4471 = vmatpush1.bf16.msra.mxu0 0
  %4472 = vmatprep.subr.bf16.mxu0 0
  %4473 = vmatpush1.bf16.msra.mxu0 0
  %4474 = vmatprep.subr.bf16.mxu0 0
  %4475 = vmatpush1.bf16.msra.mxu0 0
  %4476 = vmatprep.subr.bf16.mxu0 0
  %4477 = vmatpush1.bf16.msra.mxu0 0
  %4478 = vmatprep.subr.bf16.mxu0 0
  %4479 = vmatpush1.bf16.msra.mxu0 0
  %4480 = vmatprep.subr.bf16.mxu0 0
  %4481 = vmatpush1.bf16.msra.mxu0 0
  %4482 = vmatprep.subr.bf16.mxu0 0
  %4483 = vmatpush1.bf16.msra.mxu0 0
  %4484 = vmatprep.mubr.bf16.mxu0 0
  %4485 = vmatmul.mubr.bf16.gmra.mrb[0].mxu0 %v4450
  %v4486 = vpop.f32.mrb[0].mxu0
  %v4487 = vadd.f32 0.0, %v4486
  %v4488 = vpop.f32.mrb[0].mxu0
  %v4489 = vpop.f32.mrb[0].mxu0
  %v4490 = vpop.f32.mrb[0].mxu0
  %4491 = vdwg.mxu0
  %v4500 = vunpack.c.l.b16 %v3372
  %v4501 = vunpack.c.l.b16 %v3373
  %v4502 = vunpack.c.l.b16 %v3374
  %v4503 = vunpack.c.l.b16 %v3375
  %v4504 = vunpack.c.l.b16 %v3376
  %v4505 = vunpack.c.l.b16 %v3377
  %v4506 = vunpack.c.l.b16 %v3378
  %v4507 = vunpack.c.l.b16 %v3379
  %v4508 = vpack.c.b16 %v4501, %v4500
  %v4509 = vpack.c.b16 %v4503, %v4502
  %v4510 = vpack.c.b16 %v4505, %v4504
  %v4511 = vpack.c.b16 %v4507, %v4506
  %v4517 = vsel %vm316, %v3237, 0
  %4519 = vmatprep.subr.bf16.mxu0 0
  %4520 = vmatpush1.bf16.msra.mxu0 %v4508
  %4521 = vmatprep.subr.bf16.mxu0 0
  %4522 = vmatpush1.bf16.msra.mxu0 %v4509
  %4523 = vmatprep.subr.bf16.mxu0 0
  %4524 = vmatpush1.bf16.msra.mxu0 %v4510
  %4525 = vmatprep.subr.bf16.mxu0 0
  %4526 = vmatpush1.bf16.msra.mxu0 %v4511
  %4527 = vmatprep.subr.bf16.mxu0 0
  %4528 = vmatpush1.bf16.msra.mxu0 0
  %4529 = vmatprep.subr.bf16.mxu0 0
  %4530 = vmatpush1.bf16.msra.mxu0 0
  %4531 = vmatprep.subr.bf16.mxu0 0
  %4532 = vmatpush1.bf16.msra.mxu0 0
  %4533 = vmatprep.subr.bf16.mxu0 0
  %4534 = vmatpush1.bf16.msra.mxu0 0
  %4535 = vmatprep.subr.bf16.mxu0 0
  %4536 = vmatpush1.bf16.msra.mxu0 0
  %4537 = vmatprep.subr.bf16.mxu0 0
  %4538 = vmatpush1.bf16.msra.mxu0 0
  %4539 = vmatprep.subr.bf16.mxu0 0
  %4540 = vmatpush1.bf16.msra.mxu0 0
  %4541 = vmatprep.subr.bf16.mxu0 0
  %4542 = vmatpush1.bf16.msra.mxu0 0
  %4543 = vmatprep.subr.bf16.mxu0 0
  %4544 = vmatpush1.bf16.msra.mxu0 0
  %4545 = vmatprep.subr.bf16.mxu0 0
  %4546 = vmatpush1.bf16.msra.mxu0 0
  %4547 = vmatprep.subr.bf16.mxu0 0
  %4548 = vmatpush1.bf16.msra.mxu0 0
  %4549 = vmatprep.subr.bf16.mxu0 0
  %4550 = vmatpush1.bf16.msra.mxu0 0
  %4551 = vmatprep.mubr.bf16.mxu0 0
  %4552 = vmatmul.mubr.bf16.gmra.mrb[0].mxu0 %v4517
  %v4553 = vpop.f32.mrb[0].mxu0
  %v4554 = vadd.f32 0.0, %v4553
  %v4555 = vpop.f32.mrb[0].mxu0
  %v4556 = vpop.f32.mrb[0].mxu0
  %v4557 = vpop.f32.mrb[0].mxu0
  %4558 = vdwg.mxu0
  %v4567 = vunpack.c.l.b16 %v3380
  %v4568 = vunpack.c.l.b16 %v3381
  %v4569 = vunpack.c.l.b16 %v3382
  %v4570 = vunpack.c.l.b16 %v3383
  %v4571 = vunpack.c.l.b16 %v3384
  %v4572 = vunpack.c.l.b16 %v3385
  %v4573 = vunpack.c.l.b16 %v3386
  %v4574 = vunpack.c.l.b16 %v3387
  %v4575 = vpack.c.b16 %v4568, %v4567
  %v4576 = vpack.c.b16 %v4570, %v4569
  %v4577 = vpack.c.b16 %v4572, %v4571
  %v4578 = vpack.c.b16 %v4574, %v4573
  %v4584 = vsel %vm316, %v3238, 0
  %4586 = vmatprep.subr.bf16.mxu0 0
  %4587 = vmatpush1.bf16.msra.mxu0 %v4575
  %4588 = vmatprep.subr.bf16.mxu0 0
  %4589 = vmatpush1.bf16.msra.mxu0 %v4576
  %4590 = vmatprep.subr.bf16.mxu0 0
  %4591 = vmatpush1.bf16.msra.mxu0 %v4577
  %4592 = vmatprep.subr.bf16.mxu0 0
  %4593 = vmatpush1.bf16.msra.mxu0 %v4578
  %4594 = vmatprep.subr.bf16.mxu0 0
  %4595 = vmatpush1.bf16.msra.mxu0 0
  %4596 = vmatprep.subr.bf16.mxu0 0
  %4597 = vmatpush1.bf16.msra.mxu0 0
  %4598 = vmatprep.subr.bf16.mxu0 0
  %4599 = vmatpush1.bf16.msra.mxu0 0
  %4600 = vmatprep.subr.bf16.mxu0 0
  %4601 = vmatpush1.bf16.msra.mxu0 0
  %4602 = vmatprep.subr.bf16.mxu0 0
  %4603 = vmatpush1.bf16.msra.mxu0 0
  %4604 = vmatprep.subr.bf16.mxu0 0
  %4605 = vmatpush1.bf16.msra.mxu0 0
  %4606 = vmatprep.subr.bf16.mxu0 0
  %4607 = vmatpush1.bf16.msra.mxu0 0
  %4608 = vmatprep.subr.bf16.mxu0 0
  %4609 = vmatpush1.bf16.msra.mxu0 0
  %4610 = vmatprep.subr.bf16.mxu0 0
  %4611 = vmatpush1.bf16.msra.mxu0 0
  %4612 = vmatprep.subr.bf16.mxu0 0
  %4613 = vmatpush1.bf16.msra.mxu0 0
  %4614 = vmatprep.subr.bf16.mxu0 0
  %4615 = vmatpush1.bf16.msra.mxu0 0
  %4616 = vmatprep.subr.bf16.mxu0 0
  %4617 = vmatpush1.bf16.msra.mxu0 0
  %4618 = vmatprep.mubr.bf16.mxu0 0
  %4619 = vmatmul.mubr.bf16.gmra.mrb[0].mxu0 %v4584
  %v4620 = vpop.f32.mrb[0].mxu0
  %v4621 = vadd.f32 0.0, %v4620
  %v4622 = vpop.f32.mrb[0].mxu0
  %v4623 = vpop.f32.mrb[0].mxu0
  %v4624 = vpop.f32.mrb[0].mxu0
  %4625 = vdwg.mxu0
  %v4634 = vunpack.c.l.b16 %v3388
  %v4635 = vunpack.c.l.b16 %v3389
  %v4636 = vunpack.c.l.b16 %v3390
  %v4637 = vunpack.c.l.b16 %v3391
  %v4638 = vunpack.c.l.b16 %v3392
  %v4639 = vunpack.c.l.b16 %v3393
  %v4640 = vunpack.c.l.b16 %v3394
  %v4641 = vunpack.c.l.b16 %v3395
  %v4642 = vpack.c.b16 %v4635, %v4634
  %v4643 = vpack.c.b16 %v4637, %v4636
  %v4644 = vpack.c.b16 %v4639, %v4638
  %v4645 = vpack.c.b16 %v4641, %v4640
  %v4651 = vsel %vm316, %v3239, 0
  %4653 = vmatprep.subr.bf16.mxu0 0
  %4654 = vmatpush1.bf16.msra.mxu0 %v4642
  %4655 = vmatprep.subr.bf16.mxu0 0
  %4656 = vmatpush1.bf16.msra.mxu0 %v4643
  %4657 = vmatprep.subr.bf16.mxu0 0
  %4658 = vmatpush1.bf16.msra.mxu0 %v4644
  %4659 = vmatprep.subr.bf16.mxu0 0
  %4660 = vmatpush1.bf16.msra.mxu0 %v4645
  %4661 = vmatprep.subr.bf16.mxu0 0
  %4662 = vmatpush1.bf16.msra.mxu0 0
  %4663 = vmatprep.subr.bf16.mxu0 0
  %4664 = vmatpush1.bf16.msra.mxu0 0
  %4665 = vmatprep.subr.bf16.mxu0 0
  %4666 = vmatpush1.bf16.msra.mxu0 0
  %4667 = vmatprep.subr.bf16.mxu0 0
  %4668 = vmatpush1.bf16.msra.mxu0 0
  %4669 = vmatprep.subr.bf16.mxu0 0
  %4670 = vmatpush1.bf16.msra.mxu0 0
  %4671 = vmatprep.subr.bf16.mxu0 0
  %4672 = vmatpush1.bf16.msra.mxu0 0
  %4673 = vmatprep.subr.bf16.mxu0 0
  %4674 = vmatpush1.bf16.msra.mxu0 0
  %4675 = vmatprep.subr.bf16.mxu0 0
  %4676 = vmatpush1.bf16.msra.mxu0 0
  %4677 = vmatprep.subr.bf16.mxu0 0
  %4678 = vmatpush1.bf16.msra.mxu0 0
  %4679 = vmatprep.subr.bf16.mxu0 0
  %4680 = vmatpush1.bf16.msra.mxu0 0
  %4681 = vmatprep.subr.bf16.mxu0 0
  %4682 = vmatpush1.bf16.msra.mxu0 0
  %4683 = vmatprep.subr.bf16.mxu0 0
  %4684 = vmatpush1.bf16.msra.mxu0 0
  %4685 = vmatprep.mubr.bf16.mxu0 0
  %4686 = vmatmul.mubr.bf16.gmra.mrb[0].mxu0 %v4651
  %v4687 = vpop.f32.mrb[0].mxu0
  %v4688 = vadd.f32 0.0, %v4687
  %v4689 = vpop.f32.mrb[0].mxu0
  %v4690 = vpop.f32.mrb[0].mxu0
  %v4691 = vpop.f32.mrb[0].mxu0
  %4692 = vdwg.mxu0
  %v4701 = vunpack.c.l.b16 %v3396
  %v4702 = vunpack.c.l.b16 %v3397
  %v4703 = vunpack.c.l.b16 %v3398
  %v4704 = vunpack.c.l.b16 %v3399
  %v4705 = vunpack.c.l.b16 %v3400
  %v4706 = vunpack.c.l.b16 %v3401
  %v4707 = vunpack.c.l.b16 %v3402
  %v4708 = vunpack.c.l.b16 %v3403
  %v4709 = vpack.c.b16 %v4702, %v4701
  %v4710 = vpack.c.b16 %v4704, %v4703
  %v4711 = vpack.c.b16 %v4706, %v4705
  %v4712 = vpack.c.b16 %v4708, %v4707
  %v4718 = vsel %vm316, %v3240, 0
  %4720 = vmatprep.subr.bf16.mxu0 0
  %4721 = vmatpush1.bf16.msra.mxu0 %v4709
  %4722 = vmatprep.subr.bf16.mxu0 0
  %4723 = vmatpush1.bf16.msra.mxu0 %v4710
  %4724 = vmatprep.subr.bf16.mxu0 0
  %4725 = vmatpush1.bf16.msra.mxu0 %v4711
  %4726 = vmatprep.subr.bf16.mxu0 0
  %4727 = vmatpush1.bf16.msra.mxu0 %v4712
  %4728 = vmatprep.subr.bf16.mxu0 0
  %4729 = vmatpush1.bf16.msra.mxu0 0
  %4730 = vmatprep.subr.bf16.mxu0 0
  %4731 = vmatpush1.bf16.msra.mxu0 0
  %4732 = vmatprep.subr.bf16.mxu0 0
  %4733 = vmatpush1.bf16.msra.mxu0 0
  %4734 = vmatprep.subr.bf16.mxu0 0
  %4735 = vmatpush1.bf16.msra.mxu0 0
  %4736 = vmatprep.subr.bf16.mxu0 0
  %4737 = vmatpush1.bf16.msra.mxu0 0
  %4738 = vmatprep.subr.bf16.mxu0 0
  %4739 = vmatpush1.bf16.msra.mxu0 0
  %4740 = vmatprep.subr.bf16.mxu0 0
  %4741 = vmatpush1.bf16.msra.mxu0 0
  %4742 = vmatprep.subr.bf16.mxu0 0
  %4743 = vmatpush1.bf16.msra.mxu0 0
  %4744 = vmatprep.subr.bf16.mxu0 0
  %4745 = vmatpush1.bf16.msra.mxu0 0
  %4746 = vmatprep.subr.bf16.mxu0 0
  %4747 = vmatpush1.bf16.msra.mxu0 0
  %4748 = vmatprep.subr.bf16.mxu0 0
  %4749 = vmatpush1.bf16.msra.mxu0 0
  %4750 = vmatprep.subr.bf16.mxu0 0
  %4751 = vmatpush1.bf16.msra.mxu0 0
  %4752 = vmatprep.mubr.bf16.mxu0 0
  %4753 = vmatmul.mubr.bf16.gmra.mrb[0].mxu0 %v4718
  %v4754 = vpop.f32.mrb[0].mxu0
  %v4755 = vadd.f32 0.0, %v4754
  %v4756 = vpop.f32.mrb[0].mxu0
  %v4757 = vpop.f32.mrb[0].mxu0
  %v4758 = vpop.f32.mrb[0].mxu0
  %4759 = vdwg.mxu0
  %v4768 = vunpack.c.l.b16 %v3404
  %v4769 = vunpack.c.l.b16 %v3405
  %v4770 = vunpack.c.l.b16 %v3406
  %v4771 = vunpack.c.l.b16 %v3407
  %v4772 = vunpack.c.l.b16 %v3408
  %v4773 = vunpack.c.l.b16 %v3409
  %v4774 = vunpack.c.l.b16 %v3410
  %v4775 = vunpack.c.l.b16 %v3411
  %v4776 = vpack.c.b16 %v4769, %v4768
  %v4777 = vpack.c.b16 %v4771, %v4770
  %v4778 = vpack.c.b16 %v4773, %v4772
  %v4779 = vpack.c.b16 %v4775, %v4774
  %v4785 = vsel %vm316, %v3241, 0
  %4787 = vmatprep.subr.bf16.mxu0 0
  %4788 = vmatpush1.bf16.msra.mxu0 %v4776
  %4789 = vmatprep.subr.bf16.mxu0 0
  %4790 = vmatpush1.bf16.msra.mxu0 %v4777
  %4791 = vmatprep.subr.bf16.mxu0 0
  %4792 = vmatpush1.bf16.msra.mxu0 %v4778
  %4793 = vmatprep.subr.bf16.mxu0 0
  %4794 = vmatpush1.bf16.msra.mxu0 %v4779
  %4795 = vmatprep.subr.bf16.mxu0 0
  %4796 = vmatpush1.bf16.msra.mxu0 0
  %4797 = vmatprep.subr.bf16.mxu0 0
  %4798 = vmatpush1.bf16.msra.mxu0 0
  %4799 = vmatprep.subr.bf16.mxu0 0
  %4800 = vmatpush1.bf16.msra.mxu0 0
  %4801 = vmatprep.subr.bf16.mxu0 0
  %4802 = vmatpush1.bf16.msra.mxu0 0
  %4803 = vmatprep.subr.bf16.mxu0 0
  %4804 = vmatpush1.bf16.msra.mxu0 0
  %4805 = vmatprep.subr.bf16.mxu0 0
  %4806 = vmatpush1.bf16.msra.mxu0 0
  %4807 = vmatprep.subr.bf16.mxu0 0
  %4808 = vmatpush1.bf16.msra.mxu0 0
  %4809 = vmatprep.subr.bf16.mxu0 0
  %4810 = vmatpush1.bf16.msra.mxu0 0
  %4811 = vmatprep.subr.bf16.mxu0 0
  %4812 = vmatpush1.bf16.msra.mxu0 0
  %4813 = vmatprep.subr.bf16.mxu0 0
  %4814 = vmatpush1.bf16.msra.mxu0 0
  %4815 = vmatprep.subr.bf16.mxu0 0
  %4816 = vmatpush1.bf16.msra.mxu0 0
  %4817 = vmatprep.subr.bf16.mxu0 0
  %4818 = vmatpush1.bf16.msra.mxu0 0
  %4819 = vmatprep.mubr.bf16.mxu0 0
  %4820 = vmatmul.mubr.bf16.gmra.mrb[0].mxu0 %v4785
  %v4821 = vpop.f32.mrb[0].mxu0
  %v4822 = vadd.f32 0.0, %v4821
  %v4823 = vpop.f32.mrb[0].mxu0
  %v4824 = vpop.f32.mrb[0].mxu0
  %v4825 = vpop.f32.mrb[0].mxu0
  %4826 = vdwg.mxu0
  %v4835 = vunpack.c.l.b16 %v3412
  %v4836 = vunpack.c.l.b16 %v3413
  %v4837 = vunpack.c.l.b16 %v3414
  %v4838 = vunpack.c.l.b16 %v3415
  %v4839 = vunpack.c.l.b16 %v3416
  %v4840 = vunpack.c.l.b16 %v3417
  %v4841 = vunpack.c.l.b16 %v3418
  %v4842 = vunpack.c.l.b16 %v3419
  %v4843 = vpack.c.b16 %v4836, %v4835
  %v4844 = vpack.c.b16 %v4838, %v4837
  %v4845 = vpack.c.b16 %v4840, %v4839
  %v4846 = vpack.c.b16 %v4842, %v4841
  %v4852 = vsel %vm316, %v3242, 0
  %4854 = vmatprep.subr.bf16.mxu0 0
  %4855 = vmatpush1.bf16.msra.mxu0 %v4843
  %4856 = vmatprep.subr.bf16.mxu0 0
  %4857 = vmatpush1.bf16.msra.mxu0 %v4844
  %4858 = vmatprep.subr.bf16.mxu0 0
  %4859 = vmatpush1.bf16.msra.mxu0 %v4845
  %4860 = vmatprep.subr.bf16.mxu0 0
  %4861 = vmatpush1.bf16.msra.mxu0 %v4846
  %4862 = vmatprep.subr.bf16.mxu0 0
  %4863 = vmatpush1.bf16.msra.mxu0 0
  %4864 = vmatprep.subr.bf16.mxu0 0
  %4865 = vmatpush1.bf16.msra.mxu0 0
  %4866 = vmatprep.subr.bf16.mxu0 0
  %4867 = vmatpush1.bf16.msra.mxu0 0
  %4868 = vmatprep.subr.bf16.mxu0 0
  %4869 = vmatpush1.bf16.msra.mxu0 0
  %4870 = vmatprep.subr.bf16.mxu0 0
  %4871 = vmatpush1.bf16.msra.mxu0 0
  %4872 = vmatprep.subr.bf16.mxu0 0
  %4873 = vmatpush1.bf16.msra.mxu0 0
  %4874 = vmatprep.subr.bf16.mxu0 0
  %4875 = vmatpush1.bf16.msra.mxu0 0
  %4876 = vmatprep.subr.bf16.mxu0 0
  %4877 = vmatpush1.bf16.msra.mxu0 0
  %4878 = vmatprep.subr.bf16.mxu0 0
  %4879 = vmatpush1.bf16.msra.mxu0 0
  %4880 = vmatprep.subr.bf16.mxu0 0
  %4881 = vmatpush1.bf16.msra.mxu0 0
  %4882 = vmatprep.subr.bf16.mxu0 0
  %4883 = vmatpush1.bf16.msra.mxu0 0
  %4884 = vmatprep.subr.bf16.mxu0 0
  %4885 = vmatpush1.bf16.msra.mxu0 0
  %4886 = vmatprep.mubr.bf16.mxu0 0
  %4887 = vmatmul.mubr.bf16.gmra.mrb[0].mxu0 %v4852
  %v4888 = vpop.f32.mrb[0].mxu0
  %v4889 = vadd.f32 0.0, %v4888
  %v4890 = vpop.f32.mrb[0].mxu0
  %v4891 = vpop.f32.mrb[0].mxu0
  %v4892 = vpop.f32.mrb[0].mxu0
  %4893 = vdwg.mxu0
  %v4894 = vld [vmem:[%s5] sm:$0xff]
  %v4895 = vld [vmem:[%s5 + $0x8] sm:$0xff]
  %v4896 = vld [vmem:[%s5 + $0x10] sm:$0xff]
  %v4897 = vld [vmem:[%s5 + $0x18] sm:$0xff]
  %v4898 = vld [vmem:[%s5 + $0x20] sm:$0xff]
  %v4899 = vld [vmem:[%s5 + $0x28] sm:$0xff]
  %v4900 = vld [vmem:[%s5 + $0x30] sm:$0xff]
  %v4901 = vld [vmem:[%s5 + $0x38] sm:$0xff]
  %v4902 = vld [vmem:[%s5 + $0x40] sm:$0xff]
  %v4903 = vld [vmem:[%s5 + $0x48] sm:$0xff]
  %v4904 = vld [vmem:[%s5 + $0x50] sm:$0xff]
  %v4905 = vld [vmem:[%s5 + $0x58] sm:$0xff]
  %v4906 = vld [vmem:[%s5 + $0x60] sm:$0xff]
  %v4907 = vld [vmem:[%s5 + $0x68] sm:$0xff]
  %v4908 = vld [vmem:[%s5 + $0x70] sm:$0xff]
  %v4909 = vld [vmem:[%s5 + $0x78] sm:$0xff]
  %v4910 = vld [vmem:[%s4] sm:$0xff]
  %v4911 = vld [vmem:[%s4 + $0x8] sm:$0xff]
  %v4912 = vld [vmem:[%s4 + $0x10] sm:$0xff]
  %v4913 = vld [vmem:[%s4 + $0x18] sm:$0xff]
  %v4914 = vld [vmem:[%s4 + $0x20] sm:$0xff]
  %v4915 = vld [vmem:[%s4 + $0x28] sm:$0xff]
  %v4916 = vld [vmem:[%s4 + $0x30] sm:$0xff]
  %v4917 = vld [vmem:[%s4 + $0x38] sm:$0xff]
  %v4918 = vld [vmem:[%s4 + $0x40] sm:$0xff]
  %v4919 = vld [vmem:[%s4 + $0x48] sm:$0xff]
  %v4920 = vld [vmem:[%s4 + $0x50] sm:$0xff]
  %v4921 = vld [vmem:[%s4 + $0x58] sm:$0xff]
  %v4922 = vld [vmem:[%s4 + $0x60] sm:$0xff]
  %v4923 = vld [vmem:[%s4 + $0x68] sm:$0xff]
  %v4924 = vld [vmem:[%s4 + $0x70] sm:$0xff]
  %v4925 = vld [vmem:[%s4 + $0x78] sm:$0xff]
  %v4926 = vld [vmem:[%s4 + $0x80] sm:$0xff]
  %v4927 = vld [vmem:[%s4 + $0x88] sm:$0xff]
  %v4928 = vld [vmem:[%s4 + $0x90] sm:$0xff]
  %v4929 = vld [vmem:[%s4 + $0x98] sm:$0xff]
  %v4930 = vld [vmem:[%s4 + $0xa0] sm:$0xff]
  %v4931 = vld [vmem:[%s4 + $0xa8] sm:$0xff]
  %v4932 = vld [vmem:[%s4 + $0xb0] sm:$0xff]
  %v4933 = vld [vmem:[%s4 + $0xb8] sm:$0xff]
  %v4934 = vld [vmem:[%s4 + $0xc0] sm:$0xff]
  %v4935 = vld [vmem:[%s4 + $0xc8] sm:$0xff]
  %v4936 = vld [vmem:[%s4 + $0xd0] sm:$0xff]
  %v4937 = vld [vmem:[%s4 + $0xd8] sm:$0xff]
  %v4938 = vld [vmem:[%s4 + $0xe0] sm:$0xff]
  %v4939 = vld [vmem:[%s4 + $0xe8] sm:$0xff]
  %v4940 = vld [vmem:[%s4 + $0xf0] sm:$0xff]
  %v4941 = vld [vmem:[%s4 + $0xf8] sm:$0xff]
  %v4943 = vsel %vm2355, %v4911, 0
  %v4946 = vsel %vm2355, %v4913, 0
  %v4949 = vsel %vm2355, %v4915, 0
  %v4952 = vsel %vm2355, %v4917, 0
  %v4955 = vsel %vm2355, %v4919, 0
  %v4958 = vsel %vm2355, %v4921, 0
  %v4961 = vsel %vm2355, %v4923, 0
  %v4964 = vsel %vm2355, %v4925, 0
  %v4967 = vsel %vm2355, %v4927, 0
  %v4970 = vsel %vm2355, %v4929, 0
  %v4973 = vsel %vm2355, %v4931, 0
  %v4976 = vsel %vm2355, %v4933, 0
  %v4979 = vsel %vm2355, %v4935, 0
  %v4982 = vsel %vm2355, %v4937, 0
  %v4985 = vsel %vm2355, %v4939, 0
  %v4988 = vsel %vm2355, %v4941, 0
  %4990 = vmatprep.subr.mxu0 0.0
  %4991 = vmatpush1.msra.mxu0 %v3482
  %4992 = vmatprep.subr.mxu0 0.0
  %4993 = vmatpush1.msra.mxu0 %v3549
  %4994 = vmatprep.subr.mxu0 0.0
  %4995 = vmatpush1.msra.mxu0 %v3616
  %4996 = vmatprep.subr.mxu0 0.0
  %4997 = vmatpush1.msra.mxu0 %v3683
  %4998 = vmatprep.subr.mxu0 0.0
  %4999 = vmatpush1.msra.mxu0 %v3750
  %5000 = vmatprep.subr.mxu0 0.0
  %5001 = vmatpush1.msra.mxu0 %v3817
  %5002 = vmatprep.subr.mxu0 0.0
  %5003 = vmatpush1.msra.mxu0 %v3884
  %5004 = vmatprep.subr.mxu0 0.0
  %5005 = vmatpush1.msra.mxu0 %v3951
  %5006 = vmatprep.subr.mxu0 0.0
  %5007 = vmatpush1.msra.mxu0 %v4018
  %5008 = vmatprep.subr.mxu0 0.0
  %5009 = vmatpush1.msra.mxu0 %v4085
  %5010 = vmatprep.subr.mxu0 0.0
  %5011 = vmatpush1.msra.mxu0 %v4152
  %5012 = vmatprep.subr.mxu0 0.0
  %5013 = vmatpush1.msra.mxu0 %v4219
  %5014 = vmatprep.subr.mxu0 0.0
  %5015 = vmatpush1.msra.mxu0 %v4286
  %5016 = vmatprep.subr.mxu0 0.0
  %5017 = vmatpush1.msra.mxu0 %v4353
  %5018 = vmatprep.subr.mxu0 0.0
  %5019 = vmatpush1.msra.mxu0 %v4420
  %5020 = vmatprep.subr.mxu0 0.0
  %5021 = vmatpush1.msra.mxu0 %v4487
  %5022 = vmatprep.subr.mxu0 0.0
  %5023 = vmatpush1.msra.mxu0 %v4554
  %5024 = vmatprep.subr.mxu0 0.0
  %5025 = vmatpush1.msra.mxu0 %v4621
  %5026 = vmatprep.subr.mxu0 0.0
  %5027 = vmatpush1.msra.mxu0 %v4688
  %5028 = vmatprep.subr.mxu0 0.0
  %5029 = vmatpush1.msra.mxu0 %v4755
  %5030 = vmatprep.subr.mxu0 0.0
  %5031 = vmatpush1.msra.mxu0 %v4822
  %5032 = vmatprep.subr.mxu0 0.0
  %5033 = vmatpush1.msra.mxu0 %v4889
  %5034 = vmatprep.subr.mxu0 0.0
  %5035 = vmatpush1.msra.mxu0 0.0
  %5036 = vmatprep.subr.mxu0 0.0
  %5037 = vmatpush1.msra.mxu0 0.0
  %5038 = vmatprep.subr.mxu0 0.0
  %5039 = vmatpush1.msra.mxu0 0.0
  %5040 = vmatprep.subr.mxu0 0.0
  %5041 = vmatpush1.msra.mxu0 0.0
  %5042 = vmatprep.subr.mxu0 0.0
  %5043 = vmatpush1.msra.mxu0 0.0
  %5044 = vmatprep.subr.mxu0 0.0
  %5045 = vmatpush1.msra.mxu0 0.0
  %5046 = vmatprep.subr.mxu0 0.0
  %5047 = vmatpush1.msra.mxu0 0.0
  %5048 = vmatprep.subr.mxu0 0.0
  %5049 = vmatpush1.msra.mxu0 0.0
  %5050 = vmatprep.subr.mxu0 0.0
  %5051 = vmatpush1.msra.mxu0 0.0
  %5052 = vmatprep.subr.mxu0 0.0
  %5053 = vmatpush1.msra.mxu0 0.0
  %5054 = vmatprep.mubr.f32.mxu0 %v4943
  %5055 = vmatmul.mubr.f32.gmra.mrb[0].mxu0 %v4910
  %v5056 = vpop.f32.mrb[0].mxu0
  %v5057 = vadd.f32 0.0, %v5056
  %v5058 = vpop.f32.mrb[0].mxu0
  %5059 = vmatprep.mubr.f32.mxu0 %v4946
  %5060 = vmatmul.mubr.f32.gmra.mrb[0].mxu0 %v4912
  %v5061 = vpop.f32.mrb[0].mxu0
  %v5062 = vadd.f32 0.0, %v5061
  %v5063 = vpop.f32.mrb[0].mxu0
  %5064 = vmatprep.mubr.f32.mxu0 %v4949
  %5065 = vmatmul.mubr.f32.gmra.mrb[0].mxu0 %v4914
  %v5066 = vpop.f32.mrb[0].mxu0
  %v5067 = vadd.f32 0.0, %v5066
  %v5068 = vpop.f32.mrb[0].mxu0
  %5069 = vmatprep.mubr.f32.mxu0 %v4952
  %5070 = vmatmul.mubr.f32.gmra.mrb[0].mxu0 %v4916
  %v5071 = vpop.f32.mrb[0].mxu0
  %v5072 = vadd.f32 0.0, %v5071
  %v5073 = vpop.f32.mrb[0].mxu0
  %5074 = vmatprep.mubr.f32.mxu0 %v4955
  %5075 = vmatmul.mubr.f32.gmra.mrb[0].mxu0 %v4918
  %v5076 = vpop.f32.mrb[0].mxu0
  %v5077 = vadd.f32 0.0, %v5076
  %v5078 = vpop.f32.mrb[0].mxu0
  %5079 = vmatprep.mubr.f32.mxu0 %v4958
  %5080 = vmatmul.mubr.f32.gmra.mrb[0].mxu0 %v4920
  %v5081 = vpop.f32.mrb[0].mxu0
  %v5082 = vadd.f32 0.0, %v5081
  %v5083 = vpop.f32.mrb[0].mxu0
  %5084 = vmatprep.mubr.f32.mxu0 %v4961
  %5085 = vmatmul.mubr.f32.gmra.mrb[0].mxu0 %v4922
  %v5086 = vpop.f32.mrb[0].mxu0
  %v5087 = vadd.f32 0.0, %v5086
  %v5088 = vpop.f32.mrb[0].mxu0
  %5089 = vmatprep.mubr.f32.mxu0 %v4964
  %5090 = vmatmul.mubr.f32.gmra.mrb[0].mxu0 %v4924
  %v5091 = vpop.f32.mrb[0].mxu0
  %v5092 = vadd.f32 0.0, %v5091
  %v5093 = vpop.f32.mrb[0].mxu0
  %5094 = vmatprep.mubr.f32.mxu0 %v4967
  %5095 = vmatmul.mubr.f32.gmra.mrb[0].mxu0 %v4926
  %v5096 = vpop.f32.mrb[0].mxu0
  %v5097 = vadd.f32 0.0, %v5096
  %v5098 = vpop.f32.mrb[0].mxu0
  %5099 = vmatprep.mubr.f32.mxu0 %v4970
  %5100 = vmatmul.mubr.f32.gmra.mrb[0].mxu0 %v4928
  %v5101 = vpop.f32.mrb[0].mxu0
  %v5102 = vadd.f32 0.0, %v5101
  %v5103 = vpop.f32.mrb[0].mxu0
  %5104 = vmatprep.mubr.f32.mxu0 %v4973
  %5105 = vmatmul.mubr.f32.gmra.mrb[0].mxu0 %v4930
  %v5106 = vpop.f32.mrb[0].mxu0
  %v5107 = vadd.f32 0.0, %v5106
  %v5108 = vpop.f32.mrb[0].mxu0
  %5109 = vmatprep.mubr.f32.mxu0 %v4976
  %5110 = vmatmul.mubr.f32.gmra.mrb[0].mxu0 %v4932
  %v5111 = vpop.f32.mrb[0].mxu0
  %v5112 = vadd.f32 0.0, %v5111
  %v5113 = vpop.f32.mrb[0].mxu0
  %5114 = vmatprep.mubr.f32.mxu0 %v4979
  %5115 = vmatmul.mubr.f32.gmra.mrb[0].mxu0 %v4934
  %v5116 = vpop.f32.mrb[0].mxu0
  %v5117 = vadd.f32 0.0, %v5116
  %v5118 = vpop.f32.mrb[0].mxu0
  %5119 = vmatprep.mubr.f32.mxu0 %v4982
  %5120 = vmatmul.mubr.f32.gmra.mrb[0].mxu0 %v4936
  %v5121 = vpop.f32.mrb[0].mxu0
  %v5122 = vadd.f32 0.0, %v5121
  %v5123 = vpop.f32.mrb[0].mxu0
  %5124 = vmatprep.mubr.f32.mxu0 %v4985
  %5125 = vmatmul.mubr.f32.gmra.mrb[0].mxu0 %v4938
  %v5126 = vpop.f32.mrb[0].mxu0
  %v5127 = vadd.f32 0.0, %v5126
  %v5128 = vpop.f32.mrb[0].mxu0
  %5129 = vmatprep.mubr.f32.mxu0 %v4988
  %5130 = vmatmul.mubr.f32.gmra.mrb[0].mxu0 %v4940
  %v5131 = vpop.f32.mrb[0].mxu0
  %v5132 = vadd.f32 0.0, %v5131
  %v5133 = vpop.f32.mrb[0].mxu0
  %5134 = vdwg.mxu0
  %5135 = vmatprep.subr.mxu0 0.0
  %5136 = vmatpush1.msra.mxu0 %v2838
  %5137 = vmatprep.subr.mxu0 0.0
  %5138 = vmatpush1.msra.mxu0 %v2839
  %5139 = vmatprep.subr.mxu0 0.0
  %5140 = vmatpush1.msra.mxu0 %v2840
  %5141 = vmatprep.subr.mxu0 0.0
  %5142 = vmatpush1.msra.mxu0 %v2841
  %5143 = vmatprep.subr.mxu0 0.0
  %5144 = vmatpush1.msra.mxu0 %v2842
  %5145 = vmatprep.subr.mxu0 0.0
  %5146 = vmatpush1.msra.mxu0 %v2843
  %5147 = vmatprep.subr.mxu0 0.0
  %5148 = vmatpush1.msra.mxu0 %v2844
  %5149 = vmatprep.subr.mxu0 0.0
  %5150 = vmatpush1.msra.mxu0 %v2845
  %5151 = vmatprep.subr.mxu0 0.0
  %5152 = vmatpush1.msra.mxu0 %v2846
  %5153 = vmatprep.subr.mxu0 0.0
  %5154 = vmatpush1.msra.mxu0 %v2847
  %5155 = vmatprep.subr.mxu0 0.0
  %5156 = vmatpush1.msra.mxu0 %v2848
  %5157 = vmatprep.subr.mxu0 0.0
  %5158 = vmatpush1.msra.mxu0 %v2849
  %5159 = vmatprep.subr.mxu0 0.0
  %5160 = vmatpush1.msra.mxu0 %v2850
  %5161 = vmatprep.subr.mxu0 0.0
  %5162 = vmatpush1.msra.mxu0 %v2851
  %5163 = vmatprep.subr.mxu0 0.0
  %5164 = vmatpush1.msra.mxu0 %v2852
  %5165 = vmatprep.subr.mxu0 0.0
  %5166 = vmatpush1.msra.mxu0 %v2853
  %5167 = vmatprep.subr.mxu0 0.0
  %5168 = vmatpush1.msra.mxu0 0.0
  %5169 = vmatprep.subr.mxu0 0.0
  %5170 = vmatpush1.msra.mxu0 0.0
  %5171 = vmatprep.subr.mxu0 0.0
  %5172 = vmatpush1.msra.mxu0 0.0
  %5173 = vmatprep.subr.mxu0 0.0
  %5174 = vmatpush1.msra.mxu0 0.0
  %5175 = vmatprep.subr.mxu0 0.0
  %5176 = vmatpush1.msra.mxu0 0.0
  %5177 = vmatprep.subr.mxu0 0.0
  %5178 = vmatpush1.msra.mxu0 0.0
  %5179 = vmatprep.subr.mxu0 0.0
  %5180 = vmatpush1.msra.mxu0 0.0
  %5181 = vmatprep.subr.mxu0 0.0
  %5182 = vmatpush1.msra.mxu0 0.0
  %5183 = vmatprep.subr.mxu0 0.0
  %5184 = vmatpush1.msra.mxu0 0.0
  %5185 = vmatprep.subr.mxu0 0.0
  %5186 = vmatpush1.msra.mxu0 0.0
  %5187 = vmatprep.subr.mxu0 0.0
  %5188 = vmatpush1.msra.mxu0 0.0
  %5189 = vmatprep.subr.mxu0 0.0
  %5190 = vmatpush1.msra.mxu0 0.0
  %5191 = vmatprep.subr.mxu0 0.0
  %5192 = vmatpush1.msra.mxu0 0.0
  %5193 = vmatprep.subr.mxu0 0.0
  %5194 = vmatpush1.msra.mxu0 0.0
  %5195 = vmatprep.subr.mxu0 0.0
  %5196 = vmatpush1.msra.mxu0 0.0
  %5197 = vmatprep.subr.mxu0 0.0
  %5198 = vmatpush1.msra.mxu0 0.0
  %5199 = vmatprep.mubr.f32.mxu0 0.0
  %5200 = vmatmul.mubr.f32.gmra.mrb[0].mxu0 %v4894
  %v5201 = vpop.f32.mrb[0].mxu0
  %v5202 = vadd.f32 %v5057, %v5201
  %v5203 = vpop.f32.mrb[0].mxu0
  %5204 = vmatprep.mubr.f32.mxu0 0.0
  %5205 = vmatmul.mubr.f32.gmra.mrb[0].mxu0 %v4895
  %v5206 = vpop.f32.mrb[0].mxu0
  %v5207 = vadd.f32 %v5062, %v5206
  %v5208 = vpop.f32.mrb[0].mxu0
  %5209 = vmatprep.mubr.f32.mxu0 0.0
  %5210 = vmatmul.mubr.f32.gmra.mrb[0].mxu0 %v4896
  %v5211 = vpop.f32.mrb[0].mxu0
  %v5212 = vadd.f32 %v5067, %v5211
  %v5213 = vpop.f32.mrb[0].mxu0
  %5214 = vmatprep.mubr.f32.mxu0 0.0
  %5215 = vmatmul.mubr.f32.gmra.mrb[0].mxu0 %v4897
  %v5216 = vpop.f32.mrb[0].mxu0
  %v5217 = vadd.f32 %v5072, %v5216
  %v5218 = vpop.f32.mrb[0].mxu0
  %5219 = vmatprep.mubr.f32.mxu0 0.0
  %5220 = vmatmul.mubr.f32.gmra.mrb[0].mxu0 %v4898
  %v5221 = vpop.f32.mrb[0].mxu0
  %v5222 = vadd.f32 %v5077, %v5221
  %v5223 = vpop.f32.mrb[0].mxu0
  %5224 = vmatprep.mubr.f32.mxu0 0.0
  %5225 = vmatmul.mubr.f32.gmra.mrb[0].mxu0 %v4899
  %v5226 = vpop.f32.mrb[0].mxu0
  %v5227 = vadd.f32 %v5082, %v5226
  %v5228 = vpop.f32.mrb[0].mxu0
  %5229 = vmatprep.mubr.f32.mxu0 0.0
  %5230 = vmatmul.mubr.f32.gmra.mrb[0].mxu0 %v4900
  %v5231 = vpop.f32.mrb[0].mxu0
  %v5232 = vadd.f32 %v5087, %v5231
  %v5233 = vpop.f32.mrb[0].mxu0
  %5234 = vmatprep.mubr.f32.mxu0 0.0
  %5235 = vmatmul.mubr.f32.gmra.mrb[0].mxu0 %v4901
  %v5236 = vpop.f32.mrb[0].mxu0
  %v5237 = vadd.f32 %v5092, %v5236
  %v5238 = vpop.f32.mrb[0].mxu0
  %5239 = vmatprep.mubr.f32.mxu0 0.0
  %5240 = vmatmul.mubr.f32.gmra.mrb[0].mxu0 %v4902
  %v5241 = vpop.f32.mrb[0].mxu0
  %v5242 = vadd.f32 %v5097, %v5241
  %v5243 = vpop.f32.mrb[0].mxu0
  %5244 = vmatprep.mubr.f32.mxu0 0.0
  %5245 = vmatmul.mubr.f32.gmra.mrb[0].mxu0 %v4903
  %v5246 = vpop.f32.mrb[0].mxu0
  %v5247 = vadd.f32 %v5102, %v5246
  %v5248 = vpop.f32.mrb[0].mxu0
  %5249 = vmatprep.mubr.f32.mxu0 0.0
  %5250 = vmatmul.mubr.f32.gmra.mrb[0].mxu0 %v4904
  %v5251 = vpop.f32.mrb[0].mxu0
  %v5252 = vadd.f32 %v5107, %v5251
  %v5253 = vpop.f32.mrb[0].mxu0
  %5254 = vmatprep.mubr.f32.mxu0 0.0
  %5255 = vmatmul.mubr.f32.gmra.mrb[0].mxu0 %v4905
  %v5256 = vpop.f32.mrb[0].mxu0
  %v5257 = vadd.f32 %v5112, %v5256
  %v5258 = vpop.f32.mrb[0].mxu0
  %5259 = vmatprep.mubr.f32.mxu0 0.0
  %5260 = vmatmul.mubr.f32.gmra.mrb[0].mxu0 %v4906
  %v5261 = vpop.f32.mrb[0].mxu0
  %v5262 = vadd.f32 %v5117, %v5261
  %v5263 = vpop.f32.mrb[0].mxu0
  %5264 = vmatprep.mubr.f32.mxu0 0.0
  %5265 = vmatmul.mubr.f32.gmra.mrb[0].mxu0 %v4907
  %v5266 = vpop.f32.mrb[0].mxu0
  %v5267 = vadd.f32 %v5122, %v5266
  %v5268 = vpop.f32.mrb[0].mxu0
  %5269 = vmatprep.mubr.f32.mxu0 0.0
  %5270 = vmatmul.mubr.f32.gmra.mrb[0].mxu0 %v4908
  %v5271 = vpop.f32.mrb[0].mxu0
  %v5272 = vadd.f32 %v5127, %v5271
  %v5273 = vpop.f32.mrb[0].mxu0
  %5274 = vmatprep.mubr.f32.mxu0 0.0
  %5275 = vmatmul.mubr.f32.gmra.mrb[0].mxu0 %v4909
  %v5276 = vpop.f32.mrb[0].mxu0
  %v5277 = vadd.f32 %v5132, %v5276
  %v5278 = vpop.f32.mrb[0].mxu0
  %5279 = vdwg.mxu0
  %v5280 = vadd.f32 %v5202, %v2962
  %v5281 = vadd.f32 %v5207, %v2965
  %v5282 = vadd.f32 %v5212, %v2970
  %v5283 = vadd.f32 %v5217, %v2973
  %v5284 = vadd.f32 %v5222, %v2978
  %v5285 = vadd.f32 %v5227, %v2981
  %v5286 = vadd.f32 %v5232, %v2986
  %v5287 = vadd.f32 %v5237, %v2989
  %v5288 = vadd.f32 %v5242, %v2994
  %v5289 = vadd.f32 %v5247, %v2997
  %v5290 = vadd.f32 %v5252, %v3002
  %v5291 = vadd.f32 %v5257, %v3005
  %v5292 = vadd.f32 %v5262, %v3010
  %v5293 = vadd.f32 %v5267, %v3013
  %v5294 = vadd.f32 %v5272, %v3018
  %v5295 = vadd.f32 %v5277, %v3021
  %v5296 = vmul.f32 %v5280, 0.5
  %v5297 = vmul.f32 %v5281, 0.5
  %v5298 = vmul.f32 %v5282, 0.5
  %v5299 = vmul.f32 %v5283, 0.5
  %v5300 = vmul.f32 %v5284, 0.5
  %v5301 = vmul.f32 %v5285, 0.5
  %v5302 = vmul.f32 %v5286, 0.5
  %v5303 = vmul.f32 %v5287, 0.5
  %v5304 = vmul.f32 %v5288, 0.5
  %v5305 = vmul.f32 %v5289, 0.5
  %v5306 = vmul.f32 %v5290, 0.5
  %v5307 = vmul.f32 %v5291, 0.5
  %v5308 = vmul.f32 %v5292, 0.5
  %v5309 = vmul.f32 %v5293, 0.5
  %v5310 = vmul.f32 %v5294, 0.5
  %v5311 = vmul.f32 %v5295, 0.5
  %v5312 = vmul.f32 %v5280, 0.044715
  %v5313 = vmul.f32 %v5281, 0.044715
  %v5314 = vmul.f32 %v5282, 0.044715
  %v5315 = vmul.f32 %v5283, 0.044715
  %v5316 = vmul.f32 %v5284, 0.044715
  %v5317 = vmul.f32 %v5285, 0.044715
  %v5318 = vmul.f32 %v5286, 0.044715
  %v5319 = vmul.f32 %v5287, 0.044715
  %v5320 = vmul.f32 %v5288, 0.044715
  %v5321 = vmul.f32 %v5289, 0.044715
  %v5322 = vmul.f32 %v5290, 0.044715
  %v5323 = vmul.f32 %v5291, 0.044715
  %v5324 = vmul.f32 %v5292, 0.044715
  %v5325 = vmul.f32 %v5293, 0.044715
  %v5326 = vmul.f32 %v5294, 0.044715
  %v5327 = vmul.f32 %v5295, 0.044715
  %v5328 = vmul.f32 %v5312, %v5280
  %v5329 = vmul.f32 %v5313, %v5281
  %v5330 = vmul.f32 %v5314, %v5282
  %v5331 = vmul.f32 %v5315, %v5283
  %v5332 = vmul.f32 %v5316, %v5284
  %v5333 = vmul.f32 %v5317, %v5285
  %v5334 = vmul.f32 %v5318, %v5286
  %v5335 = vmul.f32 %v5319, %v5287
  %v5336 = vmul.f32 %v5320, %v5288
  %v5337 = vmul.f32 %v5321, %v5289
  %v5338 = vmul.f32 %v5322, %v5290
  %v5339 = vmul.f32 %v5323, %v5291
  %v5340 = vmul.f32 %v5324, %v5292
  %v5341 = vmul.f32 %v5325, %v5293
  %v5342 = vmul.f32 %v5326, %v5294
  %v5343 = vmul.f32 %v5327, %v5295
  %v5344 = vmul.f32 %v5328, %v5280
  %v5345 = vmul.f32 %v5329, %v5281
  %v5346 = vmul.f32 %v5330, %v5282
  %v5347 = vmul.f32 %v5331, %v5283
  %v5348 = vmul.f32 %v5332, %v5284
  %v5349 = vmul.f32 %v5333, %v5285
  %v5350 = vmul.f32 %v5334, %v5286
  %v5351 = vmul.f32 %v5335, %v5287
  %v5352 = vmul.f32 %v5336, %v5288
  %v5353 = vmul.f32 %v5337, %v5289
  %v5354 = vmul.f32 %v5338, %v5290
  %v5355 = vmul.f32 %v5339, %v5291
  %v5356 = vmul.f32 %v5340, %v5292
  %v5357 = vmul.f32 %v5341, %v5293
  %v5358 = vmul.f32 %v5342, %v5294
  %v5359 = vmul.f32 %v5343, %v5295
  %v5360 = vadd.f32 %v5280, %v5344
  %v5361 = vadd.f32 %v5281, %v5345
  %v5362 = vadd.f32 %v5282, %v5346
  %v5363 = vadd.f32 %v5283, %v5347
  %v5364 = vadd.f32 %v5284, %v5348
  %v5365 = vadd.f32 %v5285, %v5349
  %v5366 = vadd.f32 %v5286, %v5350
  %v5367 = vadd.f32 %v5287, %v5351
  %v5368 = vadd.f32 %v5288, %v5352
  %v5369 = vadd.f32 %v5289, %v5353
  %v5370 = vadd.f32 %v5290, %v5354
  %v5371 = vadd.f32 %v5291, %v5355
  %v5372 = vadd.f32 %v5292, %v5356
  %v5373 = vadd.f32 %v5293, %v5357
  %v5374 = vadd.f32 %v5294, %v5358
  %v5375 = vadd.f32 %v5295, %v5359
  %v5376 = vmul.f32 %v5360, 0.7978846
  %v5377 = vmul.f32 %v5361, 0.7978846
  %v5378 = vmul.f32 %v5362, 0.7978846
  %v5379 = vmul.f32 %v5363, 0.7978846
  %v5380 = vmul.f32 %v5364, 0.7978846
  %v5381 = vmul.f32 %v5365, 0.7978846
  %v5382 = vmul.f32 %v5366, 0.7978846
  %v5383 = vmul.f32 %v5367, 0.7978846
  %v5384 = vmul.f32 %v5368, 0.7978846
  %v5385 = vmul.f32 %v5369, 0.7978846
  %v5386 = vmul.f32 %v5370, 0.7978846
  %v5387 = vmul.f32 %v5371, 0.7978846
  %v5388 = vmul.f32 %v5372, 0.7978846
  %v5389 = vmul.f32 %v5373, 0.7978846
  %v5390 = vmul.f32 %v5374, 0.7978846
  %v5391 = vmul.f32 %v5375, 0.7978846
  %v5392 = vtanh.pop %v5376
  %v5393 = vtanh.pop %v5377
  %v5394 = vtanh.pop %v5378
  %v5395 = vtanh.pop %v5379
  %v5396 = vtanh.pop %v5380
  %v5397 = vtanh.pop %v5381
  %v5398 = vtanh.pop %v5382
  %v5399 = vtanh.pop %v5383
  %v5400 = vtanh.pop %v5384
  %v5401 = vtanh.pop %v5385
  %v5402 = vtanh.pop %v5386
  %v5403 = vtanh.pop %v5387
  %v5404 = vtanh.pop %v5388
  %v5405 = vtanh.pop %v5389
  %v5406 = vtanh.pop %v5390
  %v5407 = vtanh.pop %v5391
  %v5408 = vadd.f32 %v5392, 1.0
  %v5409 = vadd.f32 %v5393, 1.0
  %v5410 = vadd.f32 %v5394, 1.0
  %v5411 = vadd.f32 %v5395, 1.0
  %v5412 = vadd.f32 %v5396, 1.0
  %v5413 = vadd.f32 %v5397, 1.0
  %v5414 = vadd.f32 %v5398, 1.0
  %v5415 = vadd.f32 %v5399, 1.0
  %v5416 = vadd.f32 %v5400, 1.0
  %v5417 = vadd.f32 %v5401, 1.0
  %v5418 = vadd.f32 %v5402, 1.0
  %v5419 = vadd.f32 %v5403, 1.0
  %v5420 = vadd.f32 %v5404, 1.0
  %v5421 = vadd.f32 %v5405, 1.0
  %v5422 = vadd.f32 %v5406, 1.0
  %v5423 = vadd.f32 %v5407, 1.0
  %v5424 = vmul.f32 %v5296, %v5408
  %v5425 = vmul.f32 %v5297, %v5409
  %v5426 = vmul.f32 %v5298, %v5410
  %v5427 = vmul.f32 %v5299, %v5411
  %v5428 = vmul.f32 %v5300, %v5412
  %v5429 = vmul.f32 %v5301, %v5413
  %v5430 = vmul.f32 %v5302, %v5414
  %v5431 = vmul.f32 %v5303, %v5415
  %v5432 = vmul.f32 %v5304, %v5416
  %v5433 = vmul.f32 %v5305, %v5417
  %v5434 = vmul.f32 %v5306, %v5418
  %v5435 = vmul.f32 %v5307, %v5419
  %v5436 = vmul.f32 %v5308, %v5420
  %v5437 = vmul.f32 %v5309, %v5421
  %v5438 = vmul.f32 %v5310, %v5422
  %v5439 = vmul.f32 %v5311, %v5423
  %v5440 = vpack.c.bf16 %v5425, %v5424
  %v5441 = vpack.c.bf16 %v5427, %v5426
  %v5442 = vpack.c.bf16 %v5429, %v5428
  %v5443 = vpack.c.bf16 %v5431, %v5430
  %v5444 = vpack.c.bf16 %v5433, %v5432
  %v5445 = vpack.c.bf16 %v5435, %v5434
  %v5446 = vpack.c.bf16 %v5437, %v5436
  %v5447 = vpack.c.bf16 %v5439, %v5438
  %s5448 = scalar_lea.vmem %s7, 64
  %v5449 = vld [vmem:[%s5448] sm:$0xf]
  %v5450 = vld [vmem:[%s5448 + $0x4] sm:$0xf]
  %v5451 = vld [vmem:[%s5448 + $0x8] sm:$0xf]
  %v5452 = vld [vmem:[%s5448 + $0xc] sm:$0xf]
  %v5453 = vld [vmem:[%s5448 + $0x10] sm:$0xf]
  %v5454 = vld [vmem:[%s5448 + $0x14] sm:$0xf]
  %v5455 = vld [vmem:[%s5448 + $0x18] sm:$0xf]
  %v5456 = vld [vmem:[%s5448 + $0x1c] sm:$0xf]
  %s5457 = scalar_lea.vmem %s8, 2
  %v5458 = vld [vmem:[%s5457] sm:$0x1]
  %v5460 = vlaneseq
  %v5461 = vshrl.u32 %v5460, 7
  %v5462 = vsub.s32 0, %v5461
  %v5463 = vrot.slane %v5458, %v5462
  %v5473 = vunpack.c.l.b16 %v5449
  %v5474 = vunpack.c.l.b16 %v5450
  %v5475 = vunpack.c.l.b16 %v5451
  %v5476 = vunpack.c.l.b16 %v5452
  %v5477 = vunpack.c.l.b16 %v5453
  %v5478 = vunpack.c.l.b16 %v5454
  %v5479 = vunpack.c.l.b16 %v5455
  %v5480 = vunpack.c.l.b16 %v5456
  %v5481 = vpack.c.b16 %v5474, %v5473
  %v5482 = vpack.c.b16 %v5476, %v5475
  %v5483 = vpack.c.b16 %v5478, %v5477
  %v5484 = vpack.c.b16 %v5480, %v5479
  %v5490 = vsel %vm316, %v5440, 0
  %v5493 = vsel %vm316, %v5441, 0
  %v5496 = vsel %vm316, %v5442, 0
  %v5499 = vsel %vm316, %v5443, 0
  %v5502 = vsel %vm316, %v5444, 0
  %v5505 = vsel %vm316, %v5445, 0
  %v5508 = vsel %vm316, %v5446, 0
  %v5511 = vsel %vm316, %v5447, 0
  %5513 = vmatprep.subr.bf16.mxu0 0
  %5514 = vmatpush1.bf16.msra.mxu0 %v5481
  %5515 = vmatprep.subr.bf16.mxu0 0
  %5516 = vmatpush1.bf16.msra.mxu0 %v5482
  %5517 = vmatprep.subr.bf16.mxu0 0
  %5518 = vmatpush1.bf16.msra.mxu0 %v5483
  %5519 = vmatprep.subr.bf16.mxu0 0
  %5520 = vmatpush1.bf16.msra.mxu0 %v5484
  %5521 = vmatprep.subr.bf16.mxu0 0
  %5522 = vmatpush1.bf16.msra.mxu0 0
  %5523 = vmatprep.subr.bf16.mxu0 0
  %5524 = vmatpush1.bf16.msra.mxu0 0
  %5525 = vmatprep.subr.bf16.mxu0 0
  %5526 = vmatpush1.bf16.msra.mxu0 0
  %5527 = vmatprep.subr.bf16.mxu0 0
  %5528 = vmatpush1.bf16.msra.mxu0 0
  %5529 = vmatprep.subr.bf16.mxu0 0
  %5530 = vmatpush1.bf16.msra.mxu0 0
  %5531 = vmatprep.subr.bf16.mxu0 0
  %5532 = vmatpush1.bf16.msra.mxu0 0
  %5533 = vmatprep.subr.bf16.mxu0 0
  %5534 = vmatpush1.bf16.msra.mxu0 0
  %5535 = vmatprep.subr.bf16.mxu0 0
  %5536 = vmatpush1.bf16.msra.mxu0 0
  %5537 = vmatprep.subr.bf16.mxu0 0
  %5538 = vmatpush1.bf16.msra.mxu0 0
  %5539 = vmatprep.subr.bf16.mxu0 0
  %5540 = vmatpush1.bf16.msra.mxu0 0
  %5541 = vmatprep.subr.bf16.mxu0 0
  %5542 = vmatpush1.bf16.msra.mxu0 0
  %5543 = vmatprep.subr.bf16.mxu0 0
  %5544 = vmatpush1.bf16.msra.mxu0 0
  %5545 = vmatprep.mubr.bf16.mxu0 0
  %5546 = vmatmul.mubr.bf16.gmra.mrb[0].mxu0 %v5490
  %v5547 = vpop.f32.mrb[0].mxu0
  %v5548 = vadd.f32 %v5463, %v5547
  %v5549 = vpop.f32.mrb[0].mxu0
  %v5550 = vpop.f32.mrb[0].mxu0
  %v5551 = vadd.f32 %v5463, %v5550
  %v5552 = vpop.f32.mrb[0].mxu0
  %5553 = vmatprep.mubr.bf16.mxu0 0
  %5554 = vmatmul.mubr.bf16.gmra.mrb[0].mxu0 %v5493
  %v5555 = vpop.f32.mrb[0].mxu0
  %v5556 = vadd.f32 %v5463, %v5555
  %v5557 = vpop.f32.mrb[0].mxu0
  %v5558 = vpop.f32.mrb[0].mxu0
  %v5559 = vadd.f32 %v5463, %v5558
  %v5560 = vpop.f32.mrb[0].mxu0
  %5561 = vmatprep.mubr.bf16.mxu0 0
  %5562 = vmatmul.mubr.bf16.gmra.mrb[0].mxu0 %v5496
  %v5563 = vpop.f32.mrb[0].mxu0
  %v5564 = vadd.f32 %v5463, %v5563
  %v5565 = vpop.f32.mrb[0].mxu0
  %v5566 = vpop.f32.mrb[0].mxu0
  %v5567 = vadd.f32 %v5463, %v5566
  %v5568 = vpop.f32.mrb[0].mxu0
  %5569 = vmatprep.mubr.bf16.mxu0 0
  %5570 = vmatmul.mubr.bf16.gmra.mrb[0].mxu0 %v5499
  %v5571 = vpop.f32.mrb[0].mxu0
  %v5572 = vadd.f32 %v5463, %v5571
  %v5573 = vpop.f32.mrb[0].mxu0
  %v5574 = vpop.f32.mrb[0].mxu0
  %v5575 = vadd.f32 %v5463, %v5574
  %v5576 = vpop.f32.mrb[0].mxu0
  %5577 = vmatprep.mubr.bf16.mxu0 0
  %5578 = vmatmul.mubr.bf16.gmra.mrb[0].mxu0 %v5502
  %v5579 = vpop.f32.mrb[0].mxu0
  %v5580 = vadd.f32 %v5463, %v5579
  %v5581 = vpop.f32.mrb[0].mxu0
  %v5582 = vpop.f32.mrb[0].mxu0
  %v5583 = vadd.f32 %v5463, %v5582
  %v5584 = vpop.f32.mrb[0].mxu0
  %5585 = vmatprep.mubr.bf16.mxu0 0
  %5586 = vmatmul.mubr.bf16.gmra.mrb[0].mxu0 %v5505
  %v5587 = vpop.f32.mrb[0].mxu0
  %v5588 = vadd.f32 %v5463, %v5587
  %v5589 = vpop.f32.mrb[0].mxu0
  %v5590 = vpop.f32.mrb[0].mxu0
  %v5591 = vadd.f32 %v5463, %v5590
  %v5592 = vpop.f32.mrb[0].mxu0
  %5593 = vmatprep.mubr.bf16.mxu0 0
  %5594 = vmatmul.mubr.bf16.gmra.mrb[0].mxu0 %v5508
  %v5595 = vpop.f32.mrb[0].mxu0
  %v5596 = vadd.f32 %v5463, %v5595
  %v5597 = vpop.f32.mrb[0].mxu0
  %v5598 = vpop.f32.mrb[0].mxu0
  %v5599 = vadd.f32 %v5463, %v5598
  %v5600 = vpop.f32.mrb[0].mxu0
  %5601 = vmatprep.mubr.bf16.mxu0 0
  %5602 = vmatmul.mubr.bf16.gmra.mrb[0].mxu0 %v5511
  %v5603 = vpop.f32.mrb[0].mxu0
  %v5604 = vadd.f32 %v5463, %v5603
  %v5605 = vpop.f32.mrb[0].mxu0
  %v5606 = vpop.f32.mrb[0].mxu0
  %v5607 = vadd.f32 %v5463, %v5606
  %v5608 = vpop.f32.mrb[0].mxu0
  %5609 = vdwg.mxu0
  %v5610 = vld [vmem:[%s3] sm:$0xff]
  %v5611 = vld [vmem:[%s3 + $0x8] sm:$0xff]
  %v5612 = vld [vmem:[%s3 + $0x10] sm:$0xff]
  %v5613 = vld [vmem:[%s3 + $0x18] sm:$0xff]
  %v5614 = vld [vmem:[%s3 + $0x20] sm:$0xff]
  %v5615 = vld [vmem:[%s3 + $0x28] sm:$0xff]
  %v5616 = vld [vmem:[%s3 + $0x30] sm:$0xff]
  %v5617 = vld [vmem:[%s3 + $0x38] sm:$0xff]
  %v5618 = vld [vmem:[%s3 + $0x40] sm:$0xff]
  %v5619 = vld [vmem:[%s3 + $0x48] sm:$0xff]
  %v5620 = vld [vmem:[%s3 + $0x50] sm:$0xff]
  %v5621 = vld [vmem:[%s3 + $0x58] sm:$0xff]
  %v5622 = vld [vmem:[%s3 + $0x60] sm:$0xff]
  %v5623 = vld [vmem:[%s3 + $0x68] sm:$0xff]
  %v5624 = vld [vmem:[%s3 + $0x70] sm:$0xff]
  %v5625 = vld [vmem:[%s3 + $0x78] sm:$0xff]
  %v5626 = vld [vmem:[%s3 + $0x80] sm:$0xff]
  %v5627 = vld [vmem:[%s3 + $0x88] sm:$0xff]
  %v5628 = vld [vmem:[%s3 + $0x90] sm:$0xff]
  %v5629 = vld [vmem:[%s3 + $0x98] sm:$0xff]
  %v5630 = vld [vmem:[%s3 + $0xa0] sm:$0xff]
  %v5631 = vld [vmem:[%s3 + $0xa8] sm:$0xff]
  %5632 = vmatprep.subr.mxu0 0.0
  %5633 = vmatpush1.msra.mxu0 %v5424
  %5634 = vmatprep.subr.mxu0 0.0
  %5635 = vmatpush1.msra.mxu0 %v5425
  %5636 = vmatprep.subr.mxu0 0.0
  %5637 = vmatpush1.msra.mxu0 %v5426
  %5638 = vmatprep.subr.mxu0 0.0
  %5639 = vmatpush1.msra.mxu0 %v5427
  %5640 = vmatprep.subr.mxu0 0.0
  %5641 = vmatpush1.msra.mxu0 %v5428
  %5642 = vmatprep.subr.mxu0 0.0
  %5643 = vmatpush1.msra.mxu0 %v5429
  %5644 = vmatprep.subr.mxu0 0.0
  %5645 = vmatpush1.msra.mxu0 %v5430
  %5646 = vmatprep.subr.mxu0 0.0
  %5647 = vmatpush1.msra.mxu0 %v5431
  %5648 = vmatprep.subr.mxu0 0.0
  %5649 = vmatpush1.msra.mxu0 %v5432
  %5650 = vmatprep.subr.mxu0 0.0
  %5651 = vmatpush1.msra.mxu0 %v5433
  %5652 = vmatprep.subr.mxu0 0.0
  %5653 = vmatpush1.msra.mxu0 %v5434
  %5654 = vmatprep.subr.mxu0 0.0
  %5655 = vmatpush1.msra.mxu0 %v5435
  %5656 = vmatprep.subr.mxu0 0.0
  %5657 = vmatpush1.msra.mxu0 %v5436
  %5658 = vmatprep.subr.mxu0 0.0
  %5659 = vmatpush1.msra.mxu0 %v5437
  %5660 = vmatprep.subr.mxu0 0.0
  %5661 = vmatpush1.msra.mxu0 %v5438
  %5662 = vmatprep.subr.mxu0 0.0
  %5663 = vmatpush1.msra.mxu0 %v5439
  %5664 = vmatprep.subr.mxu0 0.0
  %5665 = vmatpush1.msra.mxu0 0.0
  %5666 = vmatprep.subr.mxu0 0.0
  %5667 = vmatpush1.msra.mxu0 0.0
  %5668 = vmatprep.subr.mxu0 0.0
  %5669 = vmatpush1.msra.mxu0 0.0
  %5670 = vmatprep.subr.mxu0 0.0
  %5671 = vmatpush1.msra.mxu0 0.0
  %5672 = vmatprep.subr.mxu0 0.0
  %5673 = vmatpush1.msra.mxu0 0.0
  %5674 = vmatprep.subr.mxu0 0.0
  %5675 = vmatpush1.msra.mxu0 0.0
  %5676 = vmatprep.subr.mxu0 0.0
  %5677 = vmatpush1.msra.mxu0 0.0
  %5678 = vmatprep.subr.mxu0 0.0
  %5679 = vmatpush1.msra.mxu0 0.0
  %5680 = vmatprep.subr.mxu0 0.0
  %5681 = vmatpush1.msra.mxu0 0.0
  %5682 = vmatprep.subr.mxu0 0.0
  %5683 = vmatpush1.msra.mxu0 0.0
  %5684 = vmatprep.subr.mxu0 0.0
  %5685 = vmatpush1.msra.mxu0 0.0
  %5686 = vmatprep.subr.mxu0 0.0
  %5687 = vmatpush1.msra.mxu0 0.0
  %5688 = vmatprep.subr.mxu0 0.0
  %5689 = vmatpush1.msra.mxu0 0.0
  %5690 = vmatprep.subr.mxu0 0.0
  %5691 = vmatpush1.msra.mxu0 0.0
  %5692 = vmatprep.subr.mxu0 0.0
  %5693 = vmatpush1.msra.mxu0 0.0
  %5694 = vmatprep.subr.mxu0 0.0
  %5695 = vmatpush1.msra.mxu0 0.0
  %5696 = vmatprep.mubr.f32.mxu0 0.0
  %5697 = vmatmul.mubr.f32.gmra.mrb[0].mxu0 %v5610
  %v5698 = vpop.f32.mrb[0].mxu0
  %v5699 = vadd.f32 0.0, %v5698
  %v5700 = vpop.f32.mrb[0].mxu0
  %5701 = vmatprep.mubr.f32.mxu0 0.0
  %5702 = vmatmul.mubr.f32.gmra.mrb[0].mxu0 %v5611
  %v5703 = vpop.f32.mrb[0].mxu0
  %v5704 = vadd.f32 0.0, %v5703
  %v5705 = vpop.f32.mrb[0].mxu0
  %5706 = vmatprep.mubr.f32.mxu0 0.0
  %5707 = vmatmul.mubr.f32.gmra.mrb[0].mxu0 %v5612
  %v5708 = vpop.f32.mrb[0].mxu0
  %v5709 = vadd.f32 0.0, %v5708
  %v5710 = vpop.f32.mrb[0].mxu0
  %5711 = vmatprep.mubr.f32.mxu0 0.0
  %5712 = vmatmul.mubr.f32.gmra.mrb[0].mxu0 %v5613
  %v5713 = vpop.f32.mrb[0].mxu0
  %v5714 = vadd.f32 0.0, %v5713
  %v5715 = vpop.f32.mrb[0].mxu0
  %5716 = vmatprep.mubr.f32.mxu0 0.0
  %5717 = vmatmul.mubr.f32.gmra.mrb[0].mxu0 %v5614
  %v5718 = vpop.f32.mrb[0].mxu0
  %v5719 = vadd.f32 0.0, %v5718
  %v5720 = vpop.f32.mrb[0].mxu0
  %5721 = vmatprep.mubr.f32.mxu0 0.0
  %5722 = vmatmul.mubr.f32.gmra.mrb[0].mxu0 %v5615
  %v5723 = vpop.f32.mrb[0].mxu0
  %v5724 = vadd.f32 0.0, %v5723
  %v5725 = vpop.f32.mrb[0].mxu0
  %5726 = vmatprep.mubr.f32.mxu0 0.0
  %5727 = vmatmul.mubr.f32.gmra.mrb[0].mxu0 %v5616
  %v5728 = vpop.f32.mrb[0].mxu0
  %v5729 = vadd.f32 0.0, %v5728
  %v5730 = vpop.f32.mrb[0].mxu0
  %5731 = vmatprep.mubr.f32.mxu0 0.0
  %5732 = vmatmul.mubr.f32.gmra.mrb[0].mxu0 %v5617
  %v5733 = vpop.f32.mrb[0].mxu0
  %v5734 = vadd.f32 0.0, %v5733
  %v5735 = vpop.f32.mrb[0].mxu0
  %5736 = vmatprep.mubr.f32.mxu0 0.0
  %5737 = vmatmul.mubr.f32.gmra.mrb[0].mxu0 %v5618
  %v5738 = vpop.f32.mrb[0].mxu0
  %v5739 = vadd.f32 0.0, %v5738
  %v5740 = vpop.f32.mrb[0].mxu0
  %5741 = vmatprep.mubr.f32.mxu0 0.0
  %5742 = vmatmul.mubr.f32.gmra.mrb[0].mxu0 %v5619
  %v5743 = vpop.f32.mrb[0].mxu0
  %v5744 = vadd.f32 0.0, %v5743
  %v5745 = vpop.f32.mrb[0].mxu0
  %5746 = vmatprep.mubr.f32.mxu0 0.0
  %5747 = vmatmul.mubr.f32.gmra.mrb[0].mxu0 %v5620
  %v5748 = vpop.f32.mrb[0].mxu0
  %v5749 = vadd.f32 0.0, %v5748
  %v5750 = vpop.f32.mrb[0].mxu0
  %5751 = vmatprep.mubr.f32.mxu0 0.0
  %5752 = vmatmul.mubr.f32.gmra.mrb[0].mxu0 %v5621
  %v5753 = vpop.f32.mrb[0].mxu0
  %v5754 = vadd.f32 0.0, %v5753
  %v5755 = vpop.f32.mrb[0].mxu0
  %5756 = vmatprep.mubr.f32.mxu0 0.0
  %5757 = vmatmul.mubr.f32.gmra.mrb[0].mxu0 %v5622
  %v5758 = vpop.f32.mrb[0].mxu0
  %v5759 = vadd.f32 0.0, %v5758
  %v5760 = vpop.f32.mrb[0].mxu0
  %5761 = vmatprep.mubr.f32.mxu0 0.0
  %5762 = vmatmul.mubr.f32.gmra.mrb[0].mxu0 %v5623
  %v5763 = vpop.f32.mrb[0].mxu0
  %v5764 = vadd.f32 0.0, %v5763
  %v5765 = vpop.f32.mrb[0].mxu0
  %5766 = vmatprep.mubr.f32.mxu0 0.0
  %5767 = vmatmul.mubr.f32.gmra.mrb[0].mxu0 %v5624
  %v5768 = vpop.f32.mrb[0].mxu0
  %v5769 = vadd.f32 0.0, %v5768
  %v5770 = vpop.f32.mrb[0].mxu0
  %5771 = vmatprep.mubr.f32.mxu0 0.0
  %5772 = vmatmul.mubr.f32.gmra.mrb[0].mxu0 %v5625
  %v5773 = vpop.f32.mrb[0].mxu0
  %v5774 = vadd.f32 0.0, %v5773
  %v5775 = vpop.f32.mrb[0].mxu0
  %5776 = vmatprep.mubr.f32.mxu0 0.0
  %5777 = vmatmul.mubr.f32.gmra.mrb[0].mxu0 %v5626
  %v5778 = vpop.f32.mrb[0].mxu0
  %v5779 = vadd.f32 0.0, %v5778
  %v5780 = vpop.f32.mrb[0].mxu0
  %5781 = vmatprep.mubr.f32.mxu0 0.0
  %5782 = vmatmul.mubr.f32.gmra.mrb[0].mxu0 %v5627
  %v5783 = vpop.f32.mrb[0].mxu0
  %v5784 = vadd.f32 0.0, %v5783
  %v5785 = vpop.f32.mrb[0].mxu0
  %5786 = vmatprep.mubr.f32.mxu0 0.0
  %5787 = vmatmul.mubr.f32.gmra.mrb[0].mxu0 %v5628
  %v5788 = vpop.f32.mrb[0].mxu0
  %v5789 = vadd.f32 0.0, %v5788
  %v5790 = vpop.f32.mrb[0].mxu0
  %5791 = vmatprep.mubr.f32.mxu0 0.0
  %5792 = vmatmul.mubr.f32.gmra.mrb[0].mxu0 %v5629
  %v5793 = vpop.f32.mrb[0].mxu0
  %v5794 = vadd.f32 0.0, %v5793
  %v5795 = vpop.f32.mrb[0].mxu0
  %5796 = vmatprep.mubr.f32.mxu0 0.0
  %5797 = vmatmul.mubr.f32.gmra.mrb[0].mxu0 %v5630
  %v5798 = vpop.f32.mrb[0].mxu0
  %v5799 = vadd.f32 0.0, %v5798
  %v5800 = vpop.f32.mrb[0].mxu0
  %5801 = vmatprep.mubr.f32.mxu0 0.0
  %5802 = vmatmul.mubr.f32.gmra.mrb[0].mxu0 %v5631
  %v5803 = vpop.f32.mrb[0].mxu0
  %v5804 = vadd.f32 0.0, %v5803
  %v5805 = vpop.f32.mrb[0].mxu0
  %5806 = vdwg.mxu0
  %v5807 = vpack.c.bf16 %v5699, %v5699
  %v5808 = vpack.c.bf16 %v5704, %v5704
  %v5809 = vpack.c.bf16 %v5709, %v5709
  %v5810 = vpack.c.bf16 %v5714, %v5714
  %v5811 = vpack.c.bf16 %v5719, %v5719
  %v5812 = vpack.c.bf16 %v5724, %v5724
  %v5813 = vpack.c.bf16 %v5729, %v5729
  %v5814 = vpack.c.bf16 %v5734, %v5734
  %v5815 = vpack.c.bf16 %v5739, %v5739
  %v5816 = vpack.c.bf16 %v5744, %v5744
  %v5817 = vpack.c.bf16 %v5749, %v5749
  %v5818 = vpack.c.bf16 %v5754, %v5754
  %v5819 = vpack.c.bf16 %v5759, %v5759
  %v5820 = vpack.c.bf16 %v5764, %v5764
  %v5821 = vpack.c.bf16 %v5769, %v5769
  %v5822 = vpack.c.bf16 %v5774, %v5774
  %v5823 = vpack.c.bf16 %v5779, %v5779
  %v5824 = vpack.c.bf16 %v5784, %v5784
  %v5825 = vpack.c.bf16 %v5789, %v5789
  %v5826 = vpack.c.bf16 %v5794, %v5794
  %v5827 = vpack.c.bf16 %v5799, %v5799
  %v5828 = vpack.c.bf16 %v5804, %v5804
  %s5829 = scalar_lea.vmem %s6, 1408
  %v5830 = vld [vmem:[%s5829] sm:$0xf]
  %v5831 = vld [vmem:[%s5829 + $0x4] sm:$0xf]
  %v5832 = vld [vmem:[%s5829 + $0x8] sm:$0xf]
  %v5833 = vld [vmem:[%s5829 + $0xc] sm:$0xf]
  %v5834 = vld [vmem:[%s5829 + $0x10] sm:$0xf]
  %v5835 = vld [vmem:[%s5829 + $0x14] sm:$0xf]
  %v5836 = vld [vmem:[%s5829 + $0x18] sm:$0xf]
  %v5837 = vld [vmem:[%s5829 + $0x1c] sm:$0xf]
  %v5838 = vld [vmem:[%s5829 + $0x20] sm:$0xf]
  %v5839 = vld [vmem:[%s5829 + $0x24] sm:$0xf]
  %v5840 = vld [vmem:[%s5829 + $0x28] sm:$0xf]
  %v5841 = vld [vmem:[%s5829 + $0x2c] sm:$0xf]
  %v5842 = vld [vmem:[%s5829 + $0x30] sm:$0xf]
  %v5843 = vld [vmem:[%s5829 + $0x34] sm:$0xf]
  %v5844 = vld [vmem:[%s5829 + $0x38] sm:$0xf]
  %v5845 = vld [vmem:[%s5829 + $0x3c] sm:$0xf]
  %v5846 = vld [vmem:[%s5829 + $0x40] sm:$0xf]
  %v5847 = vld [vmem:[%s5829 + $0x44] sm:$0xf]
  %v5848 = vld [vmem:[%s5829 + $0x48] sm:$0xf]
  %v5849 = vld [vmem:[%s5829 + $0x4c] sm:$0xf]
  %v5850 = vld [vmem:[%s5829 + $0x50] sm:$0xf]
  %v5851 = vld [vmem:[%s5829 + $0x54] sm:$0xf]
  %v5852 = vld [vmem:[%s5829 + $0x58] sm:$0xf]
  %v5853 = vld [vmem:[%s5829 + $0x5c] sm:$0xf]
  %v5854 = vld [vmem:[%s5829 + $0x60] sm:$0xf]
  %v5855 = vld [vmem:[%s5829 + $0x64] sm:$0xf]
  %v5856 = vld [vmem:[%s5829 + $0x68] sm:$0xf]
  %v5857 = vld [vmem:[%s5829 + $0x6c] sm:$0xf]
  %v5858 = vld [vmem:[%s5829 + $0x70] sm:$0xf]
  %v5859 = vld [vmem:[%s5829 + $0x74] sm:$0xf]
  %v5860 = vld [vmem:[%s5829 + $0x78] sm:$0xf]
  %v5861 = vld [vmem:[%s5829 + $0x7c] sm:$0xf]
  %v5862 = vld [vmem:[%s5829 + $0x80] sm:$0xf]
  %v5863 = vld [vmem:[%s5829 + $0x84] sm:$0xf]
  %v5864 = vld [vmem:[%s5829 + $0x88] sm:$0xf]
  %v5865 = vld [vmem:[%s5829 + $0x8c] sm:$0xf]
  %v5866 = vld [vmem:[%s5829 + $0x90] sm:$0xf]
  %v5867 = vld [vmem:[%s5829 + $0x94] sm:$0xf]
  %v5868 = vld [vmem:[%s5829 + $0x98] sm:$0xf]
  %v5869 = vld [vmem:[%s5829 + $0x9c] sm:$0xf]
  %v5870 = vld [vmem:[%s5829 + $0xa0] sm:$0xf]
  %v5871 = vld [vmem:[%s5829 + $0xa4] sm:$0xf]
  %v5872 = vld [vmem:[%s5829 + $0xa8] sm:$0xf]
  %v5873 = vld [vmem:[%s5829 + $0xac] sm:$0xf]
  %v5874 = vld [vmem:[%s5829 + $0xb0] sm:$0xf]
  %v5875 = vld [vmem:[%s5829 + $0xb4] sm:$0xf]
  %v5876 = vld [vmem:[%s5829 + $0xb8] sm:$0xf]
  %v5877 = vld [vmem:[%s5829 + $0xbc] sm:$0xf]
  %v5878 = vld [vmem:[%s5829 + $0xc0] sm:$0xf]
  %v5879 = vld [vmem:[%s5829 + $0xc4] sm:$0xf]
  %v5880 = vld [vmem:[%s5829 + $0xc8] sm:$0xf]
  %v5881 = vld [vmem:[%s5829 + $0xcc] sm:$0xf]
  %v5882 = vld [vmem:[%s5829 + $0xd0] sm:$0xf]
  %v5883 = vld [vmem:[%s5829 + $0xd4] sm:$0xf]
  %v5884 = vld [vmem:[%s5829 + $0xd8] sm:$0xf]
  %v5885 = vld [vmem:[%s5829 + $0xdc] sm:$0xf]
  %v5886 = vld [vmem:[%s5829 + $0xe0] sm:$0xf]
  %v5887 = vld [vmem:[%s5829 + $0xe4] sm:$0xf]
  %v5888 = vld [vmem:[%s5829 + $0xe8] sm:$0xf]
  %v5889 = vld [vmem:[%s5829 + $0xec] sm:$0xf]
  %v5890 = vld [vmem:[%s5829 + $0xf0] sm:$0xf]
  %v5891 = vld [vmem:[%s5829 + $0xf4] sm:$0xf]
  %v5892 = vld [vmem:[%s5829 + $0xf8] sm:$0xf]
  %v5893 = vld [vmem:[%s5829 + $0xfc] sm:$0xf]
  %v5894 = vld [vmem:[%s5829 + $0x100] sm:$0xf]
  %v5895 = vld [vmem:[%s5829 + $0x104] sm:$0xf]
  %v5896 = vld [vmem:[%s5829 + $0x108] sm:$0xf]
  %v5897 = vld [vmem:[%s5829 + $0x10c] sm:$0xf]
  %v5898 = vld [vmem:[%s5829 + $0x110] sm:$0xf]
  %v5899 = vld [vmem:[%s5829 + $0x114] sm:$0xf]
  %v5900 = vld [vmem:[%s5829 + $0x118] sm:$0xf]
  %v5901 = vld [vmem:[%s5829 + $0x11c] sm:$0xf]
  %v5902 = vld [vmem:[%s5829 + $0x120] sm:$0xf]
  %v5903 = vld [vmem:[%s5829 + $0x124] sm:$0xf]
  %v5904 = vld [vmem:[%s5829 + $0x128] sm:$0xf]
  %v5905 = vld [vmem:[%s5829 + $0x12c] sm:$0xf]
  %v5906 = vld [vmem:[%s5829 + $0x130] sm:$0xf]
  %v5907 = vld [vmem:[%s5829 + $0x134] sm:$0xf]
  %v5908 = vld [vmem:[%s5829 + $0x138] sm:$0xf]
  %v5909 = vld [vmem:[%s5829 + $0x13c] sm:$0xf]
  %v5910 = vld [vmem:[%s5829 + $0x140] sm:$0xf]
  %v5911 = vld [vmem:[%s5829 + $0x144] sm:$0xf]
  %v5912 = vld [vmem:[%s5829 + $0x148] sm:$0xf]
  %v5913 = vld [vmem:[%s5829 + $0x14c] sm:$0xf]
  %v5914 = vld [vmem:[%s5829 + $0x150] sm:$0xf]
  %v5915 = vld [vmem:[%s5829 + $0x154] sm:$0xf]
  %v5916 = vld [vmem:[%s5829 + $0x158] sm:$0xf]
  %v5917 = vld [vmem:[%s5829 + $0x15c] sm:$0xf]
  %v5918 = vld [vmem:[%s5829 + $0x160] sm:$0xf]
  %v5919 = vld [vmem:[%s5829 + $0x164] sm:$0xf]
  %v5920 = vld [vmem:[%s5829 + $0x168] sm:$0xf]
  %v5921 = vld [vmem:[%s5829 + $0x16c] sm:$0xf]
  %v5922 = vld [vmem:[%s5829 + $0x170] sm:$0xf]
  %v5923 = vld [vmem:[%s5829 + $0x174] sm:$0xf]
  %v5924 = vld [vmem:[%s5829 + $0x178] sm:$0xf]
  %v5925 = vld [vmem:[%s5829 + $0x17c] sm:$0xf]
  %v5926 = vld [vmem:[%s5829 + $0x180] sm:$0xf]
  %v5927 = vld [vmem:[%s5829 + $0x184] sm:$0xf]
  %v5928 = vld [vmem:[%s5829 + $0x188] sm:$0xf]
  %v5929 = vld [vmem:[%s5829 + $0x18c] sm:$0xf]
  %v5930 = vld [vmem:[%s5829 + $0x190] sm:$0xf]
  %v5931 = vld [vmem:[%s5829 + $0x194] sm:$0xf]
  %v5932 = vld [vmem:[%s5829 + $0x198] sm:$0xf]
  %v5933 = vld [vmem:[%s5829 + $0x19c] sm:$0xf]
  %v5934 = vld [vmem:[%s5829 + $0x1a0] sm:$0xf]
  %v5935 = vld [vmem:[%s5829 + $0x1a4] sm:$0xf]
  %v5936 = vld [vmem:[%s5829 + $0x1a8] sm:$0xf]
  %v5937 = vld [vmem:[%s5829 + $0x1ac] sm:$0xf]
  %v5938 = vld [vmem:[%s5829 + $0x1b0] sm:$0xf]
  %v5939 = vld [vmem:[%s5829 + $0x1b4] sm:$0xf]
  %v5940 = vld [vmem:[%s5829 + $0x1b8] sm:$0xf]
  %v5941 = vld [vmem:[%s5829 + $0x1bc] sm:$0xf]
  %v5942 = vld [vmem:[%s5829 + $0x1c0] sm:$0xf]
  %v5943 = vld [vmem:[%s5829 + $0x1c4] sm:$0xf]
  %v5944 = vld [vmem:[%s5829 + $0x1c8] sm:$0xf]
  %v5945 = vld [vmem:[%s5829 + $0x1cc] sm:$0xf]
  %v5946 = vld [vmem:[%s5829 + $0x1d0] sm:$0xf]
  %v5947 = vld [vmem:[%s5829 + $0x1d4] sm:$0xf]
  %v5948 = vld [vmem:[%s5829 + $0x1d8] sm:$0xf]
  %v5949 = vld [vmem:[%s5829 + $0x1dc] sm:$0xf]
  %v5950 = vld [vmem:[%s5829 + $0x1e0] sm:$0xf]
  %v5951 = vld [vmem:[%s5829 + $0x1e4] sm:$0xf]
  %v5952 = vld [vmem:[%s5829 + $0x1e8] sm:$0xf]
  %v5953 = vld [vmem:[%s5829 + $0x1ec] sm:$0xf]
  %v5954 = vld [vmem:[%s5829 + $0x1f0] sm:$0xf]
  %v5955 = vld [vmem:[%s5829 + $0x1f4] sm:$0xf]
  %v5956 = vld [vmem:[%s5829 + $0x1f8] sm:$0xf]
  %v5957 = vld [vmem:[%s5829 + $0x1fc] sm:$0xf]
  %v5958 = vld [vmem:[%s5829 + $0x200] sm:$0xf]
  %v5959 = vld [vmem:[%s5829 + $0x204] sm:$0xf]
  %v5960 = vld [vmem:[%s5829 + $0x208] sm:$0xf]
  %v5961 = vld [vmem:[%s5829 + $0x20c] sm:$0xf]
  %v5962 = vld [vmem:[%s5829 + $0x210] sm:$0xf]
  %v5963 = vld [vmem:[%s5829 + $0x214] sm:$0xf]
  %v5964 = vld [vmem:[%s5829 + $0x218] sm:$0xf]
  %v5965 = vld [vmem:[%s5829 + $0x21c] sm:$0xf]
  %v5966 = vld [vmem:[%s5829 + $0x220] sm:$0xf]
  %v5967 = vld [vmem:[%s5829 + $0x224] sm:$0xf]
  %v5968 = vld [vmem:[%s5829 + $0x228] sm:$0xf]
  %v5969 = vld [vmem:[%s5829 + $0x22c] sm:$0xf]
  %v5970 = vld [vmem:[%s5829 + $0x230] sm:$0xf]
  %v5971 = vld [vmem:[%s5829 + $0x234] sm:$0xf]
  %v5972 = vld [vmem:[%s5829 + $0x238] sm:$0xf]
  %v5973 = vld [vmem:[%s5829 + $0x23c] sm:$0xf]
  %v5974 = vld [vmem:[%s5829 + $0x240] sm:$0xf]
  %v5975 = vld [vmem:[%s5829 + $0x244] sm:$0xf]
  %v5976 = vld [vmem:[%s5829 + $0x248] sm:$0xf]
  %v5977 = vld [vmem:[%s5829 + $0x24c] sm:$0xf]
  %v5978 = vld [vmem:[%s5829 + $0x250] sm:$0xf]
  %v5979 = vld [vmem:[%s5829 + $0x254] sm:$0xf]
  %v5980 = vld [vmem:[%s5829 + $0x258] sm:$0xf]
  %v5981 = vld [vmem:[%s5829 + $0x25c] sm:$0xf]
  %v5982 = vld [vmem:[%s5829 + $0x260] sm:$0xf]
  %v5983 = vld [vmem:[%s5829 + $0x264] sm:$0xf]
  %v5984 = vld [vmem:[%s5829 + $0x268] sm:$0xf]
  %v5985 = vld [vmem:[%s5829 + $0x26c] sm:$0xf]
  %v5986 = vld [vmem:[%s5829 + $0x270] sm:$0xf]
  %v5987 = vld [vmem:[%s5829 + $0x274] sm:$0xf]
  %v5988 = vld [vmem:[%s5829 + $0x278] sm:$0xf]
  %v5989 = vld [vmem:[%s5829 + $0x27c] sm:$0xf]
  %v5990 = vld [vmem:[%s5829 + $0x280] sm:$0xf]
  %v5991 = vld [vmem:[%s5829 + $0x284] sm:$0xf]
  %v5992 = vld [vmem:[%s5829 + $0x288] sm:$0xf]
  %v5993 = vld [vmem:[%s5829 + $0x28c] sm:$0xf]
  %v5994 = vld [vmem:[%s5829 + $0x290] sm:$0xf]
  %v5995 = vld [vmem:[%s5829 + $0x294] sm:$0xf]
  %v5996 = vld [vmem:[%s5829 + $0x298] sm:$0xf]
  %v5997 = vld [vmem:[%s5829 + $0x29c] sm:$0xf]
  %v5998 = vld [vmem:[%s5829 + $0x2a0] sm:$0xf]
  %v5999 = vld [vmem:[%s5829 + $0x2a4] sm:$0xf]
  %v6000 = vld [vmem:[%s5829 + $0x2a8] sm:$0xf]
  %v6001 = vld [vmem:[%s5829 + $0x2ac] sm:$0xf]
  %v6002 = vld [vmem:[%s5829 + $0x2b0] sm:$0xf]
  %v6003 = vld [vmem:[%s5829 + $0x2b4] sm:$0xf]
  %v6004 = vld [vmem:[%s5829 + $0x2b8] sm:$0xf]
  %v6005 = vld [vmem:[%s5829 + $0x2bc] sm:$0xf]
  %v6014 = vunpack.c.l.b16 %v5830
  %v6015 = vunpack.c.l.b16 %v5831
  %v6016 = vunpack.c.l.b16 %v5832
  %v6017 = vunpack.c.l.b16 %v5833
  %v6018 = vunpack.c.l.b16 %v5834
  %v6019 = vunpack.c.l.b16 %v5835
  %v6020 = vunpack.c.l.b16 %v5836
  %v6021 = vunpack.c.l.b16 %v5837
  %v6022 = vpack.c.b16 %v6015, %v6014
  %v6023 = vpack.c.b16 %v6017, %v6016
  %v6024 = vpack.c.b16 %v6019, %v6018
  %v6025 = vpack.c.b16 %v6021, %v6020
  %v6031 = vsel %vm316, %v5807, 0
  %6033 = vmatprep.subr.bf16.mxu0 0
  %6034 = vmatpush1.bf16.msra.mxu0 %v6022
  %6035 = vmatprep.subr.bf16.mxu0 0
  %6036 = vmatpush1.bf16.msra.mxu0 %v6023
  %6037 = vmatprep.subr.bf16.mxu0 0
  %6038 = vmatpush1.bf16.msra.mxu0 %v6024
  %6039 = vmatprep.subr.bf16.mxu0 0
  %6040 = vmatpush1.bf16.msra.mxu0 %v6025
  %6041 = vmatprep.subr.bf16.mxu0 0
  %6042 = vmatpush1.bf16.msra.mxu0 0
  %6043 = vmatprep.subr.bf16.mxu0 0
  %6044 = vmatpush1.bf16.msra.mxu0 0
  %6045 = vmatprep.subr.bf16.mxu0 0
  %6046 = vmatpush1.bf16.msra.mxu0 0
  %6047 = vmatprep.subr.bf16.mxu0 0
  %6048 = vmatpush1.bf16.msra.mxu0 0
  %6049 = vmatprep.subr.bf16.mxu0 0
  %6050 = vmatpush1.bf16.msra.mxu0 0
  %6051 = vmatprep.subr.bf16.mxu0 0
  %6052 = vmatpush1.bf16.msra.mxu0 0
  %6053 = vmatprep.subr.bf16.mxu0 0
  %6054 = vmatpush1.bf16.msra.mxu0 0
  %6055 = vmatprep.subr.bf16.mxu0 0
  %6056 = vmatpush1.bf16.msra.mxu0 0
  %6057 = vmatprep.subr.bf16.mxu0 0
  %6058 = vmatpush1.bf16.msra.mxu0 0
  %6059 = vmatprep.subr.bf16.mxu0 0
  %6060 = vmatpush1.bf16.msra.mxu0 0
  %6061 = vmatprep.subr.bf16.mxu0 0
  %6062 = vmatpush1.bf16.msra.mxu0 0
  %6063 = vmatprep.subr.bf16.mxu0 0
  %6064 = vmatpush1.bf16.msra.mxu0 0
  %6065 = vmatprep.mubr.bf16.mxu0 0
  %6066 = vmatmul.mubr.bf16.gmra.mrb[0].mxu0 %v6031
  %v6067 = vpop.f32.mrb[0].mxu0
  %v6068 = vadd.f32 0.0, %v6067
  %v6069 = vpop.f32.mrb[0].mxu0
  %v6070 = vpop.f32.mrb[0].mxu0
  %v6071 = vpop.f32.mrb[0].mxu0
  %6072 = vdwg.mxu0
  %v6081 = vunpack.c.l.b16 %v5838
  %v6082 = vunpack.c.l.b16 %v5839
  %v6083 = vunpack.c.l.b16 %v5840
  %v6084 = vunpack.c.l.b16 %v5841
  %v6085 = vunpack.c.l.b16 %v5842
  %v6086 = vunpack.c.l.b16 %v5843
  %v6087 = vunpack.c.l.b16 %v5844
  %v6088 = vunpack.c.l.b16 %v5845
  %v6089 = vpack.c.b16 %v6082, %v6081
  %v6090 = vpack.c.b16 %v6084, %v6083
  %v6091 = vpack.c.b16 %v6086, %v6085
  %v6092 = vpack.c.b16 %v6088, %v6087
  %v6098 = vsel %vm316, %v5808, 0
  %6100 = vmatprep.subr.bf16.mxu0 0
  %6101 = vmatpush1.bf16.msra.mxu0 %v6089
  %6102 = vmatprep.subr.bf16.mxu0 0
  %6103 = vmatpush1.bf16.msra.mxu0 %v6090
  %6104 = vmatprep.subr.bf16.mxu0 0
  %6105 = vmatpush1.bf16.msra.mxu0 %v6091
  %6106 = vmatprep.subr.bf16.mxu0 0
  %6107 = vmatpush1.bf16.msra.mxu0 %v6092
  %6108 = vmatprep.subr.bf16.mxu0 0
  %6109 = vmatpush1.bf16.msra.mxu0 0
  %6110 = vmatprep.subr.bf16.mxu0 0
  %6111 = vmatpush1.bf16.msra.mxu0 0
  %6112 = vmatprep.subr.bf16.mxu0 0
  %6113 = vmatpush1.bf16.msra.mxu0 0
  %6114 = vmatprep.subr.bf16.mxu0 0
  %6115 = vmatpush1.bf16.msra.mxu0 0
  %6116 = vmatprep.subr.bf16.mxu0 0
  %6117 = vmatpush1.bf16.msra.mxu0 0
  %6118 = vmatprep.subr.bf16.mxu0 0
  %6119 = vmatpush1.bf16.msra.mxu0 0
  %6120 = vmatprep.subr.bf16.mxu0 0
  %6121 = vmatpush1.bf16.msra.mxu0 0
  %6122 = vmatprep.subr.bf16.mxu0 0
  %6123 = vmatpush1.bf16.msra.mxu0 0
  %6124 = vmatprep.subr.bf16.mxu0 0
  %6125 = vmatpush1.bf16.msra.mxu0 0
  %6126 = vmatprep.subr.bf16.mxu0 0
  %6127 = vmatpush1.bf16.msra.mxu0 0
  %6128 = vmatprep.subr.bf16.mxu0 0
  %6129 = vmatpush1.bf16.msra.mxu0 0
  %6130 = vmatprep.subr.bf16.mxu0 0
  %6131 = vmatpush1.bf16.msra.mxu0 0
  %6132 = vmatprep.mubr.bf16.mxu0 0
  %6133 = vmatmul.mubr.bf16.gmra.mrb[0].mxu0 %v6098
  %v6134 = vpop.f32.mrb[0].mxu0
  %v6135 = vadd.f32 0.0, %v6134
  %v6136 = vpop.f32.mrb[0].mxu0
  %v6137 = vpop.f32.mrb[0].mxu0
  %v6138 = vpop.f32.mrb[0].mxu0
  %6139 = vdwg.mxu0
  %v6148 = vunpack.c.l.b16 %v5846
  %v6149 = vunpack.c.l.b16 %v5847
  %v6150 = vunpack.c.l.b16 %v5848
  %v6151 = vunpack.c.l.b16 %v5849
  %v6152 = vunpack.c.l.b16 %v5850
  %v6153 = vunpack.c.l.b16 %v5851
  %v6154 = vunpack.c.l.b16 %v5852
  %v6155 = vunpack.c.l.b16 %v5853
  %v6156 = vpack.c.b16 %v6149, %v6148
  %v6157 = vpack.c.b16 %v6151, %v6150
  %v6158 = vpack.c.b16 %v6153, %v6152
  %v6159 = vpack.c.b16 %v6155, %v6154
  %v6165 = vsel %vm316, %v5809, 0
  %6167 = vmatprep.subr.bf16.mxu0 0
  %6168 = vmatpush1.bf16.msra.mxu0 %v6156
  %6169 = vmatprep.subr.bf16.mxu0 0
  %6170 = vmatpush1.bf16.msra.mxu0 %v6157
  %6171 = vmatprep.subr.bf16.mxu0 0
  %6172 = vmatpush1.bf16.msra.mxu0 %v6158
  %6173 = vmatprep.subr.bf16.mxu0 0
  %6174 = vmatpush1.bf16.msra.mxu0 %v6159
  %6175 = vmatprep.subr.bf16.mxu0 0
  %6176 = vmatpush1.bf16.msra.mxu0 0
  %6177 = vmatprep.subr.bf16.mxu0 0
  %6178 = vmatpush1.bf16.msra.mxu0 0
  %6179 = vmatprep.subr.bf16.mxu0 0
  %6180 = vmatpush1.bf16.msra.mxu0 0
  %6181 = vmatprep.subr.bf16.mxu0 0
  %6182 = vmatpush1.bf16.msra.mxu0 0
  %6183 = vmatprep.subr.bf16.mxu0 0
  %6184 = vmatpush1.bf16.msra.mxu0 0
  %6185 = vmatprep.subr.bf16.mxu0 0
  %6186 = vmatpush1.bf16.msra.mxu0 0
  %6187 = vmatprep.subr.bf16.mxu0 0
  %6188 = vmatpush1.bf16.msra.mxu0 0
  %6189 = vmatprep.subr.bf16.mxu0 0
  %6190 = vmatpush1.bf16.msra.mxu0 0
  %6191 = vmatprep.subr.bf16.mxu0 0
  %6192 = vmatpush1.bf16.msra.mxu0 0
  %6193 = vmatprep.subr.bf16.mxu0 0
  %6194 = vmatpush1.bf16.msra.mxu0 0
  %6195 = vmatprep.subr.bf16.mxu0 0
  %6196 = vmatpush1.bf16.msra.mxu0 0
  %6197 = vmatprep.subr.bf16.mxu0 0
  %6198 = vmatpush1.bf16.msra.mxu0 0
  %6199 = vmatprep.mubr.bf16.mxu0 0
  %6200 = vmatmul.mubr.bf16.gmra.mrb[0].mxu0 %v6165
  %v6201 = vpop.f32.mrb[0].mxu0
  %v6202 = vadd.f32 0.0, %v6201
  %v6203 = vpop.f32.mrb[0].mxu0
  %v6204 = vpop.f32.mrb[0].mxu0
  %v6205 = vpop.f32.mrb[0].mxu0
  %6206 = vdwg.mxu0
  %v6215 = vunpack.c.l.b16 %v5854
  %v6216 = vunpack.c.l.b16 %v5855
  %v6217 = vunpack.c.l.b16 %v5856
  %v6218 = vunpack.c.l.b16 %v5857
  %v6219 = vunpack.c.l.b16 %v5858
  %v6220 = vunpack.c.l.b16 %v5859
  %v6221 = vunpack.c.l.b16 %v5860
  %v6222 = vunpack.c.l.b16 %v5861
  %v6223 = vpack.c.b16 %v6216, %v6215
  %v6224 = vpack.c.b16 %v6218, %v6217
  %v6225 = vpack.c.b16 %v6220, %v6219
  %v6226 = vpack.c.b16 %v6222, %v6221
  %v6232 = vsel %vm316, %v5810, 0
  %6234 = vmatprep.subr.bf16.mxu0 0
  %6235 = vmatpush1.bf16.msra.mxu0 %v6223
  %6236 = vmatprep.subr.bf16.mxu0 0
  %6237 = vmatpush1.bf16.msra.mxu0 %v6224
  %6238 = vmatprep.subr.bf16.mxu0 0
  %6239 = vmatpush1.bf16.msra.mxu0 %v6225
  %6240 = vmatprep.subr.bf16.mxu0 0
  %6241 = vmatpush1.bf16.msra.mxu0 %v6226
  %6242 = vmatprep.subr.bf16.mxu0 0
  %6243 = vmatpush1.bf16.msra.mxu0 0
  %6244 = vmatprep.subr.bf16.mxu0 0
  %6245 = vmatpush1.bf16.msra.mxu0 0
  %6246 = vmatprep.subr.bf16.mxu0 0
  %6247 = vmatpush1.bf16.msra.mxu0 0
  %6248 = vmatprep.subr.bf16.mxu0 0
  %6249 = vmatpush1.bf16.msra.mxu0 0
  %6250 = vmatprep.subr.bf16.mxu0 0
  %6251 = vmatpush1.bf16.msra.mxu0 0
  %6252 = vmatprep.subr.bf16.mxu0 0
  %6253 = vmatpush1.bf16.msra.mxu0 0
  %6254 = vmatprep.subr.bf16.mxu0 0
  %6255 = vmatpush1.bf16.msra.mxu0 0
  %6256 = vmatprep.subr.bf16.mxu0 0
  %6257 = vmatpush1.bf16.msra.mxu0 0
  %6258 = vmatprep.subr.bf16.mxu0 0
  %6259 = vmatpush1.bf16.msra.mxu0 0
  %6260 = vmatprep.subr.bf16.mxu0 0
  %6261 = vmatpush1.bf16.msra.mxu0 0
  %6262 = vmatprep.subr.bf16.mxu0 0
  %6263 = vmatpush1.bf16.msra.mxu0 0
  %6264 = vmatprep.subr.bf16.mxu0 0
  %6265 = vmatpush1.bf16.msra.mxu0 0
  %6266 = vmatprep.mubr.bf16.mxu0 0
  %6267 = vmatmul.mubr.bf16.gmra.mrb[0].mxu0 %v6232
  %v6268 = vpop.f32.mrb[0].mxu0
  %v6269 = vadd.f32 0.0, %v6268
  %v6270 = vpop.f32.mrb[0].mxu0
  %v6271 = vpop.f32.mrb[0].mxu0
  %v6272 = vpop.f32.mrb[0].mxu0
  %6273 = vdwg.mxu0
  %v6282 = vunpack.c.l.b16 %v5862
  %v6283 = vunpack.c.l.b16 %v5863
  %v6284 = vunpack.c.l.b16 %v5864
  %v6285 = vunpack.c.l.b16 %v5865
  %v6286 = vunpack.c.l.b16 %v5866
  %v6287 = vunpack.c.l.b16 %v5867
  %v6288 = vunpack.c.l.b16 %v5868
  %v6289 = vunpack.c.l.b16 %v5869
  %v6290 = vpack.c.b16 %v6283, %v6282
  %v6291 = vpack.c.b16 %v6285, %v6284
  %v6292 = vpack.c.b16 %v6287, %v6286
  %v6293 = vpack.c.b16 %v6289, %v6288
  %v6299 = vsel %vm316, %v5811, 0
  %6301 = vmatprep.subr.bf16.mxu0 0
  %6302 = vmatpush1.bf16.msra.mxu0 %v6290
  %6303 = vmatprep.subr.bf16.mxu0 0
  %6304 = vmatpush1.bf16.msra.mxu0 %v6291
  %6305 = vmatprep.subr.bf16.mxu0 0
  %6306 = vmatpush1.bf16.msra.mxu0 %v6292
  %6307 = vmatprep.subr.bf16.mxu0 0
  %6308 = vmatpush1.bf16.msra.mxu0 %v6293
  %6309 = vmatprep.subr.bf16.mxu0 0
  %6310 = vmatpush1.bf16.msra.mxu0 0
  %6311 = vmatprep.subr.bf16.mxu0 0
  %6312 = vmatpush1.bf16.msra.mxu0 0
  %6313 = vmatprep.subr.bf16.mxu0 0
  %6314 = vmatpush1.bf16.msra.mxu0 0
  %6315 = vmatprep.subr.bf16.mxu0 0
  %6316 = vmatpush1.bf16.msra.mxu0 0
  %6317 = vmatprep.subr.bf16.mxu0 0
  %6318 = vmatpush1.bf16.msra.mxu0 0
  %6319 = vmatprep.subr.bf16.mxu0 0
  %6320 = vmatpush1.bf16.msra.mxu0 0
  %6321 = vmatprep.subr.bf16.mxu0 0
  %6322 = vmatpush1.bf16.msra.mxu0 0
  %6323 = vmatprep.subr.bf16.mxu0 0
  %6324 = vmatpush1.bf16.msra.mxu0 0
  %6325 = vmatprep.subr.bf16.mxu0 0
  %6326 = vmatpush1.bf16.msra.mxu0 0
  %6327 = vmatprep.subr.bf16.mxu0 0
  %6328 = vmatpush1.bf16.msra.mxu0 0
  %6329 = vmatprep.subr.bf16.mxu0 0
  %6330 = vmatpush1.bf16.msra.mxu0 0
  %6331 = vmatprep.subr.bf16.mxu0 0
  %6332 = vmatpush1.bf16.msra.mxu0 0
  %6333 = vmatprep.mubr.bf16.mxu0 0
  %6334 = vmatmul.mubr.bf16.gmra.mrb[0].mxu0 %v6299
  %v6335 = vpop.f32.mrb[0].mxu0
  %v6336 = vadd.f32 0.0, %v6335
  %v6337 = vpop.f32.mrb[0].mxu0
  %v6338 = vpop.f32.mrb[0].mxu0
  %v6339 = vpop.f32.mrb[0].mxu0
  %6340 = vdwg.mxu0
  %v6349 = vunpack.c.l.b16 %v5870
  %v6350 = vunpack.c.l.b16 %v5871
  %v6351 = vunpack.c.l.b16 %v5872
  %v6352 = vunpack.c.l.b16 %v5873
  %v6353 = vunpack.c.l.b16 %v5874
  %v6354 = vunpack.c.l.b16 %v5875
  %v6355 = vunpack.c.l.b16 %v5876
  %v6356 = vunpack.c.l.b16 %v5877
  %v6357 = vpack.c.b16 %v6350, %v6349
  %v6358 = vpack.c.b16 %v6352, %v6351
  %v6359 = vpack.c.b16 %v6354, %v6353
  %v6360 = vpack.c.b16 %v6356, %v6355
  %v6366 = vsel %vm316, %v5812, 0
  %6368 = vmatprep.subr.bf16.mxu0 0
  %6369 = vmatpush1.bf16.msra.mxu0 %v6357
  %6370 = vmatprep.subr.bf16.mxu0 0
  %6371 = vmatpush1.bf16.msra.mxu0 %v6358
  %6372 = vmatprep.subr.bf16.mxu0 0
  %6373 = vmatpush1.bf16.msra.mxu0 %v6359
  %6374 = vmatprep.subr.bf16.mxu0 0
  %6375 = vmatpush1.bf16.msra.mxu0 %v6360
  %6376 = vmatprep.subr.bf16.mxu0 0
  %6377 = vmatpush1.bf16.msra.mxu0 0
  %6378 = vmatprep.subr.bf16.mxu0 0
  %6379 = vmatpush1.bf16.msra.mxu0 0
  %6380 = vmatprep.subr.bf16.mxu0 0
  %6381 = vmatpush1.bf16.msra.mxu0 0
  %6382 = vmatprep.subr.bf16.mxu0 0
  %6383 = vmatpush1.bf16.msra.mxu0 0
  %6384 = vmatprep.subr.bf16.mxu0 0
  %6385 = vmatpush1.bf16.msra.mxu0 0
  %6386 = vmatprep.subr.bf16.mxu0 0
  %6387 = vmatpush1.bf16.msra.mxu0 0
  %6388 = vmatprep.subr.bf16.mxu0 0
  %6389 = vmatpush1.bf16.msra.mxu0 0
  %6390 = vmatprep.subr.bf16.mxu0 0
  %6391 = vmatpush1.bf16.msra.mxu0 0
  %6392 = vmatprep.subr.bf16.mxu0 0
  %6393 = vmatpush1.bf16.msra.mxu0 0
  %6394 = vmatprep.subr.bf16.mxu0 0
  %6395 = vmatpush1.bf16.msra.mxu0 0
  %6396 = vmatprep.subr.bf16.mxu0 0
  %6397 = vmatpush1.bf16.msra.mxu0 0
  %6398 = vmatprep.subr.bf16.mxu0 0
  %6399 = vmatpush1.bf16.msra.mxu0 0
  %6400 = vmatprep.mubr.bf16.mxu0 0
  %6401 = vmatmul.mubr.bf16.gmra.mrb[0].mxu0 %v6366
  %v6402 = vpop.f32.mrb[0].mxu0
  %v6403 = vadd.f32 0.0, %v6402
  %v6404 = vpop.f32.mrb[0].mxu0
  %v6405 = vpop.f32.mrb[0].mxu0
  %v6406 = vpop.f32.mrb[0].mxu0
  %6407 = vdwg.mxu0
  %v6416 = vunpack.c.l.b16 %v5878
  %v6417 = vunpack.c.l.b16 %v5879
  %v6418 = vunpack.c.l.b16 %v5880
  %v6419 = vunpack.c.l.b16 %v5881
  %v6420 = vunpack.c.l.b16 %v5882
  %v6421 = vunpack.c.l.b16 %v5883
  %v6422 = vunpack.c.l.b16 %v5884
  %v6423 = vunpack.c.l.b16 %v5885
  %v6424 = vpack.c.b16 %v6417, %v6416
  %v6425 = vpack.c.b16 %v6419, %v6418
  %v6426 = vpack.c.b16 %v6421, %v6420
  %v6427 = vpack.c.b16 %v6423, %v6422
  %v6433 = vsel %vm316, %v5813, 0
  %6435 = vmatprep.subr.bf16.mxu0 0
  %6436 = vmatpush1.bf16.msra.mxu0 %v6424
  %6437 = vmatprep.subr.bf16.mxu0 0
  %6438 = vmatpush1.bf16.msra.mxu0 %v6425
  %6439 = vmatprep.subr.bf16.mxu0 0
  %6440 = vmatpush1.bf16.msra.mxu0 %v6426
  %6441 = vmatprep.subr.bf16.mxu0 0
  %6442 = vmatpush1.bf16.msra.mxu0 %v6427
  %6443 = vmatprep.subr.bf16.mxu0 0
  %6444 = vmatpush1.bf16.msra.mxu0 0
  %6445 = vmatprep.subr.bf16.mxu0 0
  %6446 = vmatpush1.bf16.msra.mxu0 0
  %6447 = vmatprep.subr.bf16.mxu0 0
  %6448 = vmatpush1.bf16.msra.mxu0 0
  %6449 = vmatprep.subr.bf16.mxu0 0
  %6450 = vmatpush1.bf16.msra.mxu0 0
  %6451 = vmatprep.subr.bf16.mxu0 0
  %6452 = vmatpush1.bf16.msra.mxu0 0
  %6453 = vmatprep.subr.bf16.mxu0 0
  %6454 = vmatpush1.bf16.msra.mxu0 0
  %6455 = vmatprep.subr.bf16.mxu0 0
  %6456 = vmatpush1.bf16.msra.mxu0 0
  %6457 = vmatprep.subr.bf16.mxu0 0
  %6458 = vmatpush1.bf16.msra.mxu0 0
  %6459 = vmatprep.subr.bf16.mxu0 0
  %6460 = vmatpush1.bf16.msra.mxu0 0
  %6461 = vmatprep.subr.bf16.mxu0 0
  %6462 = vmatpush1.bf16.msra.mxu0 0
  %6463 = vmatprep.subr.bf16.mxu0 0
  %6464 = vmatpush1.bf16.msra.mxu0 0
  %6465 = vmatprep.subr.bf16.mxu0 0
  %6466 = vmatpush1.bf16.msra.mxu0 0
  %6467 = vmatprep.mubr.bf16.mxu0 0
  %6468 = vmatmul.mubr.bf16.gmra.mrb[0].mxu0 %v6433
  %v6469 = vpop.f32.mrb[0].mxu0
  %v6470 = vadd.f32 0.0, %v6469
  %v6471 = vpop.f32.mrb[0].mxu0
  %v6472 = vpop.f32.mrb[0].mxu0
  %v6473 = vpop.f32.mrb[0].mxu0
  %6474 = vdwg.mxu0
  %v6483 = vunpack.c.l.b16 %v5886
  %v6484 = vunpack.c.l.b16 %v5887
  %v6485 = vunpack.c.l.b16 %v5888
  %v6486 = vunpack.c.l.b16 %v5889
  %v6487 = vunpack.c.l.b16 %v5890
  %v6488 = vunpack.c.l.b16 %v5891
  %v6489 = vunpack.c.l.b16 %v5892
  %v6490 = vunpack.c.l.b16 %v5893
  %v6491 = vpack.c.b16 %v6484, %v6483
  %v6492 = vpack.c.b16 %v6486, %v6485
  %v6493 = vpack.c.b16 %v6488, %v6487
  %v6494 = vpack.c.b16 %v6490, %v6489
  %v6500 = vsel %vm316, %v5814, 0
  %6502 = vmatprep.subr.bf16.mxu0 0
  %6503 = vmatpush1.bf16.msra.mxu0 %v6491
  %6504 = vmatprep.subr.bf16.mxu0 0
  %6505 = vmatpush1.bf16.msra.mxu0 %v6492
  %6506 = vmatprep.subr.bf16.mxu0 0
  %6507 = vmatpush1.bf16.msra.mxu0 %v6493
  %6508 = vmatprep.subr.bf16.mxu0 0
  %6509 = vmatpush1.bf16.msra.mxu0 %v6494
  %6510 = vmatprep.subr.bf16.mxu0 0
  %6511 = vmatpush1.bf16.msra.mxu0 0
  %6512 = vmatprep.subr.bf16.mxu0 0
  %6513 = vmatpush1.bf16.msra.mxu0 0
  %6514 = vmatprep.subr.bf16.mxu0 0
  %6515 = vmatpush1.bf16.msra.mxu0 0
  %6516 = vmatprep.subr.bf16.mxu0 0
  %6517 = vmatpush1.bf16.msra.mxu0 0
  %6518 = vmatprep.subr.bf16.mxu0 0
  %6519 = vmatpush1.bf16.msra.mxu0 0
  %6520 = vmatprep.subr.bf16.mxu0 0
  %6521 = vmatpush1.bf16.msra.mxu0 0
  %6522 = vmatprep.subr.bf16.mxu0 0
  %6523 = vmatpush1.bf16.msra.mxu0 0
  %6524 = vmatprep.subr.bf16.mxu0 0
  %6525 = vmatpush1.bf16.msra.mxu0 0
  %6526 = vmatprep.subr.bf16.mxu0 0
  %6527 = vmatpush1.bf16.msra.mxu0 0
  %6528 = vmatprep.subr.bf16.mxu0 0
  %6529 = vmatpush1.bf16.msra.mxu0 0
  %6530 = vmatprep.subr.bf16.mxu0 0
  %6531 = vmatpush1.bf16.msra.mxu0 0
  %6532 = vmatprep.subr.bf16.mxu0 0
  %6533 = vmatpush1.bf16.msra.mxu0 0
  %6534 = vmatprep.mubr.bf16.mxu0 0
  %6535 = vmatmul.mubr.bf16.gmra.mrb[0].mxu0 %v6500
  %v6536 = vpop.f32.mrb[0].mxu0
  %v6537 = vadd.f32 0.0, %v6536
  %v6538 = vpop.f32.mrb[0].mxu0
  %v6539 = vpop.f32.mrb[0].mxu0
  %v6540 = vpop.f32.mrb[0].mxu0
  %6541 = vdwg.mxu0
  %v6550 = vunpack.c.l.b16 %v5894
  %v6551 = vunpack.c.l.b16 %v5895
  %v6552 = vunpack.c.l.b16 %v5896
  %v6553 = vunpack.c.l.b16 %v5897
  %v6554 = vunpack.c.l.b16 %v5898
  %v6555 = vunpack.c.l.b16 %v5899
  %v6556 = vunpack.c.l.b16 %v5900
  %v6557 = vunpack.c.l.b16 %v5901
  %v6558 = vpack.c.b16 %v6551, %v6550
  %v6559 = vpack.c.b16 %v6553, %v6552
  %v6560 = vpack.c.b16 %v6555, %v6554
  %v6561 = vpack.c.b16 %v6557, %v6556
  %v6567 = vsel %vm316, %v5815, 0
  %6569 = vmatprep.subr.bf16.mxu0 0
  %6570 = vmatpush1.bf16.msra.mxu0 %v6558
  %6571 = vmatprep.subr.bf16.mxu0 0
  %6572 = vmatpush1.bf16.msra.mxu0 %v6559
  %6573 = vmatprep.subr.bf16.mxu0 0
  %6574 = vmatpush1.bf16.msra.mxu0 %v6560
  %6575 = vmatprep.subr.bf16.mxu0 0
  %6576 = vmatpush1.bf16.msra.mxu0 %v6561
  %6577 = vmatprep.subr.bf16.mxu0 0
  %6578 = vmatpush1.bf16.msra.mxu0 0
  %6579 = vmatprep.subr.bf16.mxu0 0
  %6580 = vmatpush1.bf16.msra.mxu0 0
  %6581 = vmatprep.subr.bf16.mxu0 0
  %6582 = vmatpush1.bf16.msra.mxu0 0
  %6583 = vmatprep.subr.bf16.mxu0 0
  %6584 = vmatpush1.bf16.msra.mxu0 0
  %6585 = vmatprep.subr.bf16.mxu0 0
  %6586 = vmatpush1.bf16.msra.mxu0 0
  %6587 = vmatprep.subr.bf16.mxu0 0
  %6588 = vmatpush1.bf16.msra.mxu0 0
  %6589 = vmatprep.subr.bf16.mxu0 0
  %6590 = vmatpush1.bf16.msra.mxu0 0
  %6591 = vmatprep.subr.bf16.mxu0 0
  %6592 = vmatpush1.bf16.msra.mxu0 0
  %6593 = vmatprep.subr.bf16.mxu0 0
  %6594 = vmatpush1.bf16.msra.mxu0 0
  %6595 = vmatprep.subr.bf16.mxu0 0
  %6596 = vmatpush1.bf16.msra.mxu0 0
  %6597 = vmatprep.subr.bf16.mxu0 0
  %6598 = vmatpush1.bf16.msra.mxu0 0
  %6599 = vmatprep.subr.bf16.mxu0 0
  %6600 = vmatpush1.bf16.msra.mxu0 0
  %6601 = vmatprep.mubr.bf16.mxu0 0
  %6602 = vmatmul.mubr.bf16.gmra.mrb[0].mxu0 %v6567
  %v6603 = vpop.f32.mrb[0].mxu0
  %v6604 = vadd.f32 0.0, %v6603
  %v6605 = vpop.f32.mrb[0].mxu0
  %v6606 = vpop.f32.mrb[0].mxu0
  %v6607 = vpop.f32.mrb[0].mxu0
  %6608 = vdwg.mxu0
  %v6617 = vunpack.c.l.b16 %v5902
  %v6618 = vunpack.c.l.b16 %v5903
  %v6619 = vunpack.c.l.b16 %v5904
  %v6620 = vunpack.c.l.b16 %v5905
  %v6621 = vunpack.c.l.b16 %v5906
  %v6622 = vunpack.c.l.b16 %v5907
  %v6623 = vunpack.c.l.b16 %v5908
  %v6624 = vunpack.c.l.b16 %v5909
  %v6625 = vpack.c.b16 %v6618, %v6617
  %v6626 = vpack.c.b16 %v6620, %v6619
  %v6627 = vpack.c.b16 %v6622, %v6621
  %v6628 = vpack.c.b16 %v6624, %v6623
  %v6634 = vsel %vm316, %v5816, 0
  %6636 = vmatprep.subr.bf16.mxu0 0
  %6637 = vmatpush1.bf16.msra.mxu0 %v6625
  %6638 = vmatprep.subr.bf16.mxu0 0
  %6639 = vmatpush1.bf16.msra.mxu0 %v6626
  %6640 = vmatprep.subr.bf16.mxu0 0
  %6641 = vmatpush1.bf16.msra.mxu0 %v6627
  %6642 = vmatprep.subr.bf16.mxu0 0
  %6643 = vmatpush1.bf16.msra.mxu0 %v6628
  %6644 = vmatprep.subr.bf16.mxu0 0
  %6645 = vmatpush1.bf16.msra.mxu0 0
  %6646 = vmatprep.subr.bf16.mxu0 0
  %6647 = vmatpush1.bf16.msra.mxu0 0
  %6648 = vmatprep.subr.bf16.mxu0 0
  %6649 = vmatpush1.bf16.msra.mxu0 0
  %6650 = vmatprep.subr.bf16.mxu0 0
  %6651 = vmatpush1.bf16.msra.mxu0 0
  %6652 = vmatprep.subr.bf16.mxu0 0
  %6653 = vmatpush1.bf16.msra.mxu0 0
  %6654 = vmatprep.subr.bf16.mxu0 0
  %6655 = vmatpush1.bf16.msra.mxu0 0
  %6656 = vmatprep.subr.bf16.mxu0 0
  %6657 = vmatpush1.bf16.msra.mxu0 0
  %6658 = vmatprep.subr.bf16.mxu0 0
  %6659 = vmatpush1.bf16.msra.mxu0 0
  %6660 = vmatprep.subr.bf16.mxu0 0
  %6661 = vmatpush1.bf16.msra.mxu0 0
  %6662 = vmatprep.subr.bf16.mxu0 0
  %6663 = vmatpush1.bf16.msra.mxu0 0
  %6664 = vmatprep.subr.bf16.mxu0 0
  %6665 = vmatpush1.bf16.msra.mxu0 0
  %6666 = vmatprep.subr.bf16.mxu0 0
  %6667 = vmatpush1.bf16.msra.mxu0 0
  %6668 = vmatprep.mubr.bf16.mxu0 0
  %6669 = vmatmul.mubr.bf16.gmra.mrb[0].mxu0 %v6634
  %v6670 = vpop.f32.mrb[0].mxu0
  %v6671 = vadd.f32 0.0, %v6670
  %v6672 = vpop.f32.mrb[0].mxu0
  %v6673 = vpop.f32.mrb[0].mxu0
  %v6674 = vpop.f32.mrb[0].mxu0
  %6675 = vdwg.mxu0
  %v6684 = vunpack.c.l.b16 %v5910
  %v6685 = vunpack.c.l.b16 %v5911
  %v6686 = vunpack.c.l.b16 %v5912
  %v6687 = vunpack.c.l.b16 %v5913
  %v6688 = vunpack.c.l.b16 %v5914
  %v6689 = vunpack.c.l.b16 %v5915
  %v6690 = vunpack.c.l.b16 %v5916
  %v6691 = vunpack.c.l.b16 %v5917
  %v6692 = vpack.c.b16 %v6685, %v6684
  %v6693 = vpack.c.b16 %v6687, %v6686
  %v6694 = vpack.c.b16 %v6689, %v6688
  %v6695 = vpack.c.b16 %v6691, %v6690
  %v6701 = vsel %vm316, %v5817, 0
  %6703 = vmatprep.subr.bf16.mxu0 0
  %6704 = vmatpush1.bf16.msra.mxu0 %v6692
  %6705 = vmatprep.subr.bf16.mxu0 0
  %6706 = vmatpush1.bf16.msra.mxu0 %v6693
  %6707 = vmatprep.subr.bf16.mxu0 0
  %6708 = vmatpush1.bf16.msra.mxu0 %v6694
  %6709 = vmatprep.subr.bf16.mxu0 0
  %6710 = vmatpush1.bf16.msra.mxu0 %v6695
  %6711 = vmatprep.subr.bf16.mxu0 0
  %6712 = vmatpush1.bf16.msra.mxu0 0
  %6713 = vmatprep.subr.bf16.mxu0 0
  %6714 = vmatpush1.bf16.msra.mxu0 0
  %6715 = vmatprep.subr.bf16.mxu0 0
  %6716 = vmatpush1.bf16.msra.mxu0 0
  %6717 = vmatprep.subr.bf16.mxu0 0
  %6718 = vmatpush1.bf16.msra.mxu0 0
  %6719 = vmatprep.subr.bf16.mxu0 0
  %6720 = vmatpush1.bf16.msra.mxu0 0
  %6721 = vmatprep.subr.bf16.mxu0 0
  %6722 = vmatpush1.bf16.msra.mxu0 0
  %6723 = vmatprep.subr.bf16.mxu0 0
  %6724 = vmatpush1.bf16.msra.mxu0 0
  %6725 = vmatprep.subr.bf16.mxu0 0
  %6726 = vmatpush1.bf16.msra.mxu0 0
  %6727 = vmatprep.subr.bf16.mxu0 0
  %6728 = vmatpush1.bf16.msra.mxu0 0
  %6729 = vmatprep.subr.bf16.mxu0 0
  %6730 = vmatpush1.bf16.msra.mxu0 0
  %6731 = vmatprep.subr.bf16.mxu0 0
  %6732 = vmatpush1.bf16.msra.mxu0 0
  %6733 = vmatprep.subr.bf16.mxu0 0
  %6734 = vmatpush1.bf16.msra.mxu0 0
  %6735 = vmatprep.mubr.bf16.mxu0 0
  %6736 = vmatmul.mubr.bf16.gmra.mrb[0].mxu0 %v6701
  %v6737 = vpop.f32.mrb[0].mxu0
  %v6738 = vadd.f32 0.0, %v6737
  %v6739 = vpop.f32.mrb[0].mxu0
  %v6740 = vpop.f32.mrb[0].mxu0
  %v6741 = vpop.f32.mrb[0].mxu0
  %6742 = vdwg.mxu0
  %v6751 = vunpack.c.l.b16 %v5918
  %v6752 = vunpack.c.l.b16 %v5919
  %v6753 = vunpack.c.l.b16 %v5920
  %v6754 = vunpack.c.l.b16 %v5921
  %v6755 = vunpack.c.l.b16 %v5922
  %v6756 = vunpack.c.l.b16 %v5923
  %v6757 = vunpack.c.l.b16 %v5924
  %v6758 = vunpack.c.l.b16 %v5925
  %v6759 = vpack.c.b16 %v6752, %v6751
  %v6760 = vpack.c.b16 %v6754, %v6753
  %v6761 = vpack.c.b16 %v6756, %v6755
  %v6762 = vpack.c.b16 %v6758, %v6757
  %v6768 = vsel %vm316, %v5818, 0
  %6770 = vmatprep.subr.bf16.mxu0 0
  %6771 = vmatpush1.bf16.msra.mxu0 %v6759
  %6772 = vmatprep.subr.bf16.mxu0 0
  %6773 = vmatpush1.bf16.msra.mxu0 %v6760
  %6774 = vmatprep.subr.bf16.mxu0 0
  %6775 = vmatpush1.bf16.msra.mxu0 %v6761
  %6776 = vmatprep.subr.bf16.mxu0 0
  %6777 = vmatpush1.bf16.msra.mxu0 %v6762
  %6778 = vmatprep.subr.bf16.mxu0 0
  %6779 = vmatpush1.bf16.msra.mxu0 0
  %6780 = vmatprep.subr.bf16.mxu0 0
  %6781 = vmatpush1.bf16.msra.mxu0 0
  %6782 = vmatprep.subr.bf16.mxu0 0
  %6783 = vmatpush1.bf16.msra.mxu0 0
  %6784 = vmatprep.subr.bf16.mxu0 0
  %6785 = vmatpush1.bf16.msra.mxu0 0
  %6786 = vmatprep.subr.bf16.mxu0 0
  %6787 = vmatpush1.bf16.msra.mxu0 0
  %6788 = vmatprep.subr.bf16.mxu0 0
  %6789 = vmatpush1.bf16.msra.mxu0 0
  %6790 = vmatprep.subr.bf16.mxu0 0
  %6791 = vmatpush1.bf16.msra.mxu0 0
  %6792 = vmatprep.subr.bf16.mxu0 0
  %6793 = vmatpush1.bf16.msra.mxu0 0
  %6794 = vmatprep.subr.bf16.mxu0 0
  %6795 = vmatpush1.bf16.msra.mxu0 0
  %6796 = vmatprep.subr.bf16.mxu0 0
  %6797 = vmatpush1.bf16.msra.mxu0 0
  %6798 = vmatprep.subr.bf16.mxu0 0
  %6799 = vmatpush1.bf16.msra.mxu0 0
  %6800 = vmatprep.subr.bf16.mxu0 0
  %6801 = vmatpush1.bf16.msra.mxu0 0
  %6802 = vmatprep.mubr.bf16.mxu0 0
  %6803 = vmatmul.mubr.bf16.gmra.mrb[0].mxu0 %v6768
  %v6804 = vpop.f32.mrb[0].mxu0
  %v6805 = vadd.f32 0.0, %v6804
  %v6806 = vpop.f32.mrb[0].mxu0
  %v6807 = vpop.f32.mrb[0].mxu0
  %v6808 = vpop.f32.mrb[0].mxu0
  %6809 = vdwg.mxu0
  %v6818 = vunpack.c.l.b16 %v5926
  %v6819 = vunpack.c.l.b16 %v5927
  %v6820 = vunpack.c.l.b16 %v5928
  %v6821 = vunpack.c.l.b16 %v5929
  %v6822 = vunpack.c.l.b16 %v5930
  %v6823 = vunpack.c.l.b16 %v5931
  %v6824 = vunpack.c.l.b16 %v5932
  %v6825 = vunpack.c.l.b16 %v5933
  %v6826 = vpack.c.b16 %v6819, %v6818
  %v6827 = vpack.c.b16 %v6821, %v6820
  %v6828 = vpack.c.b16 %v6823, %v6822
  %v6829 = vpack.c.b16 %v6825, %v6824
  %v6835 = vsel %vm316, %v5819, 0
  %6837 = vmatprep.subr.bf16.mxu0 0
  %6838 = vmatpush1.bf16.msra.mxu0 %v6826
  %6839 = vmatprep.subr.bf16.mxu0 0
  %6840 = vmatpush1.bf16.msra.mxu0 %v6827
  %6841 = vmatprep.subr.bf16.mxu0 0
  %6842 = vmatpush1.bf16.msra.mxu0 %v6828
  %6843 = vmatprep.subr.bf16.mxu0 0
  %6844 = vmatpush1.bf16.msra.mxu0 %v6829
  %6845 = vmatprep.subr.bf16.mxu0 0
  %6846 = vmatpush1.bf16.msra.mxu0 0
  %6847 = vmatprep.subr.bf16.mxu0 0
  %6848 = vmatpush1.bf16.msra.mxu0 0
  %6849 = vmatprep.subr.bf16.mxu0 0
  %6850 = vmatpush1.bf16.msra.mxu0 0
  %6851 = vmatprep.subr.bf16.mxu0 0
  %6852 = vmatpush1.bf16.msra.mxu0 0
  %6853 = vmatprep.subr.bf16.mxu0 0
  %6854 = vmatpush1.bf16.msra.mxu0 0
  %6855 = vmatprep.subr.bf16.mxu0 0
  %6856 = vmatpush1.bf16.msra.mxu0 0
  %6857 = vmatprep.subr.bf16.mxu0 0
  %6858 = vmatpush1.bf16.msra.mxu0 0
  %6859 = vmatprep.subr.bf16.mxu0 0
  %6860 = vmatpush1.bf16.msra.mxu0 0
  %6861 = vmatprep.subr.bf16.mxu0 0
  %6862 = vmatpush1.bf16.msra.mxu0 0
  %6863 = vmatprep.subr.bf16.mxu0 0
  %6864 = vmatpush1.bf16.msra.mxu0 0
  %6865 = vmatprep.subr.bf16.mxu0 0
  %6866 = vmatpush1.bf16.msra.mxu0 0
  %6867 = vmatprep.subr.bf16.mxu0 0
  %6868 = vmatpush1.bf16.msra.mxu0 0
  %6869 = vmatprep.mubr.bf16.mxu0 0
  %6870 = vmatmul.mubr.bf16.gmra.mrb[0].mxu0 %v6835
  %v6871 = vpop.f32.mrb[0].mxu0
  %v6872 = vadd.f32 0.0, %v6871
  %v6873 = vpop.f32.mrb[0].mxu0
  %v6874 = vpop.f32.mrb[0].mxu0
  %v6875 = vpop.f32.mrb[0].mxu0
  %6876 = vdwg.mxu0
  %v6885 = vunpack.c.l.b16 %v5934
  %v6886 = vunpack.c.l.b16 %v5935
  %v6887 = vunpack.c.l.b16 %v5936
  %v6888 = vunpack.c.l.b16 %v5937
  %v6889 = vunpack.c.l.b16 %v5938
  %v6890 = vunpack.c.l.b16 %v5939
  %v6891 = vunpack.c.l.b16 %v5940
  %v6892 = vunpack.c.l.b16 %v5941
  %v6893 = vpack.c.b16 %v6886, %v6885
  %v6894 = vpack.c.b16 %v6888, %v6887
  %v6895 = vpack.c.b16 %v6890, %v6889
  %v6896 = vpack.c.b16 %v6892, %v6891
  %v6902 = vsel %vm316, %v5820, 0
  %6904 = vmatprep.subr.bf16.mxu0 0
  %6905 = vmatpush1.bf16.msra.mxu0 %v6893
  %6906 = vmatprep.subr.bf16.mxu0 0
  %6907 = vmatpush1.bf16.msra.mxu0 %v6894
  %6908 = vmatprep.subr.bf16.mxu0 0
  %6909 = vmatpush1.bf16.msra.mxu0 %v6895
  %6910 = vmatprep.subr.bf16.mxu0 0
  %6911 = vmatpush1.bf16.msra.mxu0 %v6896
  %6912 = vmatprep.subr.bf16.mxu0 0
  %6913 = vmatpush1.bf16.msra.mxu0 0
  %6914 = vmatprep.subr.bf16.mxu0 0
  %6915 = vmatpush1.bf16.msra.mxu0 0
  %6916 = vmatprep.subr.bf16.mxu0 0
  %6917 = vmatpush1.bf16.msra.mxu0 0
  %6918 = vmatprep.subr.bf16.mxu0 0
  %6919 = vmatpush1.bf16.msra.mxu0 0
  %6920 = vmatprep.subr.bf16.mxu0 0
  %6921 = vmatpush1.bf16.msra.mxu0 0
  %6922 = vmatprep.subr.bf16.mxu0 0
  %6923 = vmatpush1.bf16.msra.mxu0 0
  %6924 = vmatprep.subr.bf16.mxu0 0
  %6925 = vmatpush1.bf16.msra.mxu0 0
  %6926 = vmatprep.subr.bf16.mxu0 0
  %6927 = vmatpush1.bf16.msra.mxu0 0
  %6928 = vmatprep.subr.bf16.mxu0 0
  %6929 = vmatpush1.bf16.msra.mxu0 0
  %6930 = vmatprep.subr.bf16.mxu0 0
  %6931 = vmatpush1.bf16.msra.mxu0 0
  %6932 = vmatprep.subr.bf16.mxu0 0
  %6933 = vmatpush1.bf16.msra.mxu0 0
  %6934 = vmatprep.subr.bf16.mxu0 0
  %6935 = vmatpush1.bf16.msra.mxu0 0
  %6936 = vmatprep.mubr.bf16.mxu0 0
  %6937 = vmatmul.mubr.bf16.gmra.mrb[0].mxu0 %v6902
  %v6938 = vpop.f32.mrb[0].mxu0
  %v6939 = vadd.f32 0.0, %v6938
  %v6940 = vpop.f32.mrb[0].mxu0
  %v6941 = vpop.f32.mrb[0].mxu0
  %v6942 = vpop.f32.mrb[0].mxu0
  %6943 = vdwg.mxu0
  %v6952 = vunpack.c.l.b16 %v5942
  %v6953 = vunpack.c.l.b16 %v5943
  %v6954 = vunpack.c.l.b16 %v5944
  %v6955 = vunpack.c.l.b16 %v5945
  %v6956 = vunpack.c.l.b16 %v5946
  %v6957 = vunpack.c.l.b16 %v5947
  %v6958 = vunpack.c.l.b16 %v5948
  %v6959 = vunpack.c.l.b16 %v5949
  %v6960 = vpack.c.b16 %v6953, %v6952
  %v6961 = vpack.c.b16 %v6955, %v6954
  %v6962 = vpack.c.b16 %v6957, %v6956
  %v6963 = vpack.c.b16 %v6959, %v6958
  %v6969 = vsel %vm316, %v5821, 0
  %6971 = vmatprep.subr.bf16.mxu0 0
  %6972 = vmatpush1.bf16.msra.mxu0 %v6960
  %6973 = vmatprep.subr.bf16.mxu0 0
  %6974 = vmatpush1.bf16.msra.mxu0 %v6961
  %6975 = vmatprep.subr.bf16.mxu0 0
  %6976 = vmatpush1.bf16.msra.mxu0 %v6962
  %6977 = vmatprep.subr.bf16.mxu0 0
  %6978 = vmatpush1.bf16.msra.mxu0 %v6963
  %6979 = vmatprep.subr.bf16.mxu0 0
  %6980 = vmatpush1.bf16.msra.mxu0 0
  %6981 = vmatprep.subr.bf16.mxu0 0
  %6982 = vmatpush1.bf16.msra.mxu0 0
  %6983 = vmatprep.subr.bf16.mxu0 0
  %6984 = vmatpush1.bf16.msra.mxu0 0
  %6985 = vmatprep.subr.bf16.mxu0 0
  %6986 = vmatpush1.bf16.msra.mxu0 0
  %6987 = vmatprep.subr.bf16.mxu0 0
  %6988 = vmatpush1.bf16.msra.mxu0 0
  %6989 = vmatprep.subr.bf16.mxu0 0
  %6990 = vmatpush1.bf16.msra.mxu0 0
  %6991 = vmatprep.subr.bf16.mxu0 0
  %6992 = vmatpush1.bf16.msra.mxu0 0
  %6993 = vmatprep.subr.bf16.mxu0 0
  %6994 = vmatpush1.bf16.msra.mxu0 0
  %6995 = vmatprep.subr.bf16.mxu0 0
  %6996 = vmatpush1.bf16.msra.mxu0 0
  %6997 = vmatprep.subr.bf16.mxu0 0
  %6998 = vmatpush1.bf16.msra.mxu0 0
  %6999 = vmatprep.subr.bf16.mxu0 0
  %7000 = vmatpush1.bf16.msra.mxu0 0
  %7001 = vmatprep.subr.bf16.mxu0 0
  %7002 = vmatpush1.bf16.msra.mxu0 0
  %7003 = vmatprep.mubr.bf16.mxu0 0
  %7004 = vmatmul.mubr.bf16.gmra.mrb[0].mxu0 %v6969
  %v7005 = vpop.f32.mrb[0].mxu0
  %v7006 = vadd.f32 0.0, %v7005
  %v7007 = vpop.f32.mrb[0].mxu0
  %v7008 = vpop.f32.mrb[0].mxu0
  %v7009 = vpop.f32.mrb[0].mxu0
  %7010 = vdwg.mxu0
  %v7019 = vunpack.c.l.b16 %v5950
  %v7020 = vunpack.c.l.b16 %v5951
  %v7021 = vunpack.c.l.b16 %v5952
  %v7022 = vunpack.c.l.b16 %v5953
  %v7023 = vunpack.c.l.b16 %v5954
  %v7024 = vunpack.c.l.b16 %v5955
  %v7025 = vunpack.c.l.b16 %v5956
  %v7026 = vunpack.c.l.b16 %v5957
  %v7027 = vpack.c.b16 %v7020, %v7019
  %v7028 = vpack.c.b16 %v7022, %v7021
  %v7029 = vpack.c.b16 %v7024, %v7023
  %v7030 = vpack.c.b16 %v7026, %v7025
  %v7036 = vsel %vm316, %v5822, 0
  %7038 = vmatprep.subr.bf16.mxu0 0
  %7039 = vmatpush1.bf16.msra.mxu0 %v7027
  %7040 = vmatprep.subr.bf16.mxu0 0
  %7041 = vmatpush1.bf16.msra.mxu0 %v7028
  %7042 = vmatprep.subr.bf16.mxu0 0
  %7043 = vmatpush1.bf16.msra.mxu0 %v7029
  %7044 = vmatprep.subr.bf16.mxu0 0
  %7045 = vmatpush1.bf16.msra.mxu0 %v7030
  %7046 = vmatprep.subr.bf16.mxu0 0
  %7047 = vmatpush1.bf16.msra.mxu0 0
  %7048 = vmatprep.subr.bf16.mxu0 0
  %7049 = vmatpush1.bf16.msra.mxu0 0
  %7050 = vmatprep.subr.bf16.mxu0 0
  %7051 = vmatpush1.bf16.msra.mxu0 0
  %7052 = vmatprep.subr.bf16.mxu0 0
  %7053 = vmatpush1.bf16.msra.mxu0 0
  %7054 = vmatprep.subr.bf16.mxu0 0
  %7055 = vmatpush1.bf16.msra.mxu0 0
  %7056 = vmatprep.subr.bf16.mxu0 0
  %7057 = vmatpush1.bf16.msra.mxu0 0
  %7058 = vmatprep.subr.bf16.mxu0 0
  %7059 = vmatpush1.bf16.msra.mxu0 0
  %7060 = vmatprep.subr.bf16.mxu0 0
  %7061 = vmatpush1.bf16.msra.mxu0 0
  %7062 = vmatprep.subr.bf16.mxu0 0
  %7063 = vmatpush1.bf16.msra.mxu0 0
  %7064 = vmatprep.subr.bf16.mxu0 0
  %7065 = vmatpush1.bf16.msra.mxu0 0
  %7066 = vmatprep.subr.bf16.mxu0 0
  %7067 = vmatpush1.bf16.msra.mxu0 0
  %7068 = vmatprep.subr.bf16.mxu0 0
  %7069 = vmatpush1.bf16.msra.mxu0 0
  %7070 = vmatprep.mubr.bf16.mxu0 0
  %7071 = vmatmul.mubr.bf16.gmra.mrb[0].mxu0 %v7036
  %v7072 = vpop.f32.mrb[0].mxu0
  %v7073 = vadd.f32 0.0, %v7072
  %v7074 = vpop.f32.mrb[0].mxu0
  %v7075 = vpop.f32.mrb[0].mxu0
  %v7076 = vpop.f32.mrb[0].mxu0
  %7077 = vdwg.mxu0
  %v7086 = vunpack.c.l.b16 %v5958
  %v7087 = vunpack.c.l.b16 %v5959
  %v7088 = vunpack.c.l.b16 %v5960
  %v7089 = vunpack.c.l.b16 %v5961
  %v7090 = vunpack.c.l.b16 %v5962
  %v7091 = vunpack.c.l.b16 %v5963
  %v7092 = vunpack.c.l.b16 %v5964
  %v7093 = vunpack.c.l.b16 %v5965
  %v7094 = vpack.c.b16 %v7087, %v7086
  %v7095 = vpack.c.b16 %v7089, %v7088
  %v7096 = vpack.c.b16 %v7091, %v7090
  %v7097 = vpack.c.b16 %v7093, %v7092
  %v7103 = vsel %vm316, %v5823, 0
  %7105 = vmatprep.subr.bf16.mxu0 0
  %7106 = vmatpush1.bf16.msra.mxu0 %v7094
  %7107 = vmatprep.subr.bf16.mxu0 0
  %7108 = vmatpush1.bf16.msra.mxu0 %v7095
  %7109 = vmatprep.subr.bf16.mxu0 0
  %7110 = vmatpush1.bf16.msra.mxu0 %v7096
  %7111 = vmatprep.subr.bf16.mxu0 0
  %7112 = vmatpush1.bf16.msra.mxu0 %v7097
  %7113 = vmatprep.subr.bf16.mxu0 0
  %7114 = vmatpush1.bf16.msra.mxu0 0
  %7115 = vmatprep.subr.bf16.mxu0 0
  %7116 = vmatpush1.bf16.msra.mxu0 0
  %7117 = vmatprep.subr.bf16.mxu0 0
  %7118 = vmatpush1.bf16.msra.mxu0 0
  %7119 = vmatprep.subr.bf16.mxu0 0
  %7120 = vmatpush1.bf16.msra.mxu0 0
  %7121 = vmatprep.subr.bf16.mxu0 0
  %7122 = vmatpush1.bf16.msra.mxu0 0
  %7123 = vmatprep.subr.bf16.mxu0 0
  %7124 = vmatpush1.bf16.msra.mxu0 0
  %7125 = vmatprep.subr.bf16.mxu0 0
  %7126 = vmatpush1.bf16.msra.mxu0 0
  %7127 = vmatprep.subr.bf16.mxu0 0
  %7128 = vmatpush1.bf16.msra.mxu0 0
  %7129 = vmatprep.subr.bf16.mxu0 0
  %7130 = vmatpush1.bf16.msra.mxu0 0
  %7131 = vmatprep.subr.bf16.mxu0 0
  %7132 = vmatpush1.bf16.msra.mxu0 0
  %7133 = vmatprep.subr.bf16.mxu0 0
  %7134 = vmatpush1.bf16.msra.mxu0 0
  %7135 = vmatprep.subr.bf16.mxu0 0
  %7136 = vmatpush1.bf16.msra.mxu0 0
  %7137 = vmatprep.mubr.bf16.mxu0 0
  %7138 = vmatmul.mubr.bf16.gmra.mrb[0].mxu0 %v7103
  %v7139 = vpop.f32.mrb[0].mxu0
  %v7140 = vadd.f32 0.0, %v7139
  %v7141 = vpop.f32.mrb[0].mxu0
  %v7142 = vpop.f32.mrb[0].mxu0
  %v7143 = vpop.f32.mrb[0].mxu0
  %7144 = vdwg.mxu0
  %v7153 = vunpack.c.l.b16 %v5966
  %v7154 = vunpack.c.l.b16 %v5967
  %v7155 = vunpack.c.l.b16 %v5968
  %v7156 = vunpack.c.l.b16 %v5969
  %v7157 = vunpack.c.l.b16 %v5970
  %v7158 = vunpack.c.l.b16 %v5971
  %v7159 = vunpack.c.l.b16 %v5972
  %v7160 = vunpack.c.l.b16 %v5973
  %v7161 = vpack.c.b16 %v7154, %v7153
  %v7162 = vpack.c.b16 %v7156, %v7155
  %v7163 = vpack.c.b16 %v7158, %v7157
  %v7164 = vpack.c.b16 %v7160, %v7159
  %v7170 = vsel %vm316, %v5824, 0
  %7172 = vmatprep.subr.bf16.mxu0 0
  %7173 = vmatpush1.bf16.msra.mxu0 %v7161
  %7174 = vmatprep.subr.bf16.mxu0 0
  %7175 = vmatpush1.bf16.msra.mxu0 %v7162
  %7176 = vmatprep.subr.bf16.mxu0 0
  %7177 = vmatpush1.bf16.msra.mxu0 %v7163
  %7178 = vmatprep.subr.bf16.mxu0 0
  %7179 = vmatpush1.bf16.msra.mxu0 %v7164
  %7180 = vmatprep.subr.bf16.mxu0 0
  %7181 = vmatpush1.bf16.msra.mxu0 0
  %7182 = vmatprep.subr.bf16.mxu0 0
  %7183 = vmatpush1.bf16.msra.mxu0 0
  %7184 = vmatprep.subr.bf16.mxu0 0
  %7185 = vmatpush1.bf16.msra.mxu0 0
  %7186 = vmatprep.subr.bf16.mxu0 0
  %7187 = vmatpush1.bf16.msra.mxu0 0
  %7188 = vmatprep.subr.bf16.mxu0 0
  %7189 = vmatpush1.bf16.msra.mxu0 0
  %7190 = vmatprep.subr.bf16.mxu0 0
  %7191 = vmatpush1.bf16.msra.mxu0 0
  %7192 = vmatprep.subr.bf16.mxu0 0
  %7193 = vmatpush1.bf16.msra.mxu0 0
  %7194 = vmatprep.subr.bf16.mxu0 0
  %7195 = vmatpush1.bf16.msra.mxu0 0
  %7196 = vmatprep.subr.bf16.mxu0 0
  %7197 = vmatpush1.bf16.msra.mxu0 0
  %7198 = vmatprep.subr.bf16.mxu0 0
  %7199 = vmatpush1.bf16.msra.mxu0 0
  %7200 = vmatprep.subr.bf16.mxu0 0
  %7201 = vmatpush1.bf16.msra.mxu0 0
  %7202 = vmatprep.subr.bf16.mxu0 0
  %7203 = vmatpush1.bf16.msra.mxu0 0
  %7204 = vmatprep.mubr.bf16.mxu0 0
  %7205 = vmatmul.mubr.bf16.gmra.mrb[0].mxu0 %v7170
  %v7206 = vpop.f32.mrb[0].mxu0
  %v7207 = vadd.f32 0.0, %v7206
  %v7208 = vpop.f32.mrb[0].mxu0
  %v7209 = vpop.f32.mrb[0].mxu0
  %v7210 = vpop.f32.mrb[0].mxu0
  %7211 = vdwg.mxu0
  %v7220 = vunpack.c.l.b16 %v5974
  %v7221 = vunpack.c.l.b16 %v5975
  %v7222 = vunpack.c.l.b16 %v5976
  %v7223 = vunpack.c.l.b16 %v5977
  %v7224 = vunpack.c.l.b16 %v5978
  %v7225 = vunpack.c.l.b16 %v5979
  %v7226 = vunpack.c.l.b16 %v5980
  %v7227 = vunpack.c.l.b16 %v5981
  %v7228 = vpack.c.b16 %v7221, %v7220
  %v7229 = vpack.c.b16 %v7223, %v7222
  %v7230 = vpack.c.b16 %v7225, %v7224
  %v7231 = vpack.c.b16 %v7227, %v7226
  %v7237 = vsel %vm316, %v5825, 0
  %7239 = vmatprep.subr.bf16.mxu0 0
  %7240 = vmatpush1.bf16.msra.mxu0 %v7228
  %7241 = vmatprep.subr.bf16.mxu0 0
  %7242 = vmatpush1.bf16.msra.mxu0 %v7229
  %7243 = vmatprep.subr.bf16.mxu0 0
  %7244 = vmatpush1.bf16.msra.mxu0 %v7230
  %7245 = vmatprep.subr.bf16.mxu0 0
  %7246 = vmatpush1.bf16.msra.mxu0 %v7231
  %7247 = vmatprep.subr.bf16.mxu0 0
  %7248 = vmatpush1.bf16.msra.mxu0 0
  %7249 = vmatprep.subr.bf16.mxu0 0
  %7250 = vmatpush1.bf16.msra.mxu0 0
  %7251 = vmatprep.subr.bf16.mxu0 0
  %7252 = vmatpush1.bf16.msra.mxu0 0
  %7253 = vmatprep.subr.bf16.mxu0 0
  %7254 = vmatpush1.bf16.msra.mxu0 0
  %7255 = vmatprep.subr.bf16.mxu0 0
  %7256 = vmatpush1.bf16.msra.mxu0 0
  %7257 = vmatprep.subr.bf16.mxu0 0
  %7258 = vmatpush1.bf16.msra.mxu0 0
  %7259 = vmatprep.subr.bf16.mxu0 0
  %7260 = vmatpush1.bf16.msra.mxu0 0
  %7261 = vmatprep.subr.bf16.mxu0 0
  %7262 = vmatpush1.bf16.msra.mxu0 0
  %7263 = vmatprep.subr.bf16.mxu0 0
  %7264 = vmatpush1.bf16.msra.mxu0 0
  %7265 = vmatprep.subr.bf16.mxu0 0
  %7266 = vmatpush1.bf16.msra.mxu0 0
  %7267 = vmatprep.subr.bf16.mxu0 0
  %7268 = vmatpush1.bf16.msra.mxu0 0
  %7269 = vmatprep.subr.bf16.mxu0 0
  %7270 = vmatpush1.bf16.msra.mxu0 0
  %7271 = vmatprep.mubr.bf16.mxu0 0
  %7272 = vmatmul.mubr.bf16.gmra.mrb[0].mxu0 %v7237
  %v7273 = vpop.f32.mrb[0].mxu0
  %v7274 = vadd.f32 0.0, %v7273
  %v7275 = vpop.f32.mrb[0].mxu0
  %v7276 = vpop.f32.mrb[0].mxu0
  %v7277 = vpop.f32.mrb[0].mxu0
  %7278 = vdwg.mxu0
  %v7287 = vunpack.c.l.b16 %v5982
  %v7288 = vunpack.c.l.b16 %v5983
  %v7289 = vunpack.c.l.b16 %v5984
  %v7290 = vunpack.c.l.b16 %v5985
  %v7291 = vunpack.c.l.b16 %v5986
  %v7292 = vunpack.c.l.b16 %v5987
  %v7293 = vunpack.c.l.b16 %v5988
  %v7294 = vunpack.c.l.b16 %v5989
  %v7295 = vpack.c.b16 %v7288, %v7287
  %v7296 = vpack.c.b16 %v7290, %v7289
  %v7297 = vpack.c.b16 %v7292, %v7291
  %v7298 = vpack.c.b16 %v7294, %v7293
  %v7304 = vsel %vm316, %v5826, 0
  %7306 = vmatprep.subr.bf16.mxu0 0
  %7307 = vmatpush1.bf16.msra.mxu0 %v7295
  %7308 = vmatprep.subr.bf16.mxu0 0
  %7309 = vmatpush1.bf16.msra.mxu0 %v7296
  %7310 = vmatprep.subr.bf16.mxu0 0
  %7311 = vmatpush1.bf16.msra.mxu0 %v7297
  %7312 = vmatprep.subr.bf16.mxu0 0
  %7313 = vmatpush1.bf16.msra.mxu0 %v7298
  %7314 = vmatprep.subr.bf16.mxu0 0
  %7315 = vmatpush1.bf16.msra.mxu0 0
  %7316 = vmatprep.subr.bf16.mxu0 0
  %7317 = vmatpush1.bf16.msra.mxu0 0
  %7318 = vmatprep.subr.bf16.mxu0 0
  %7319 = vmatpush1.bf16.msra.mxu0 0
  %7320 = vmatprep.subr.bf16.mxu0 0
  %7321 = vmatpush1.bf16.msra.mxu0 0
  %7322 = vmatprep.subr.bf16.mxu0 0
  %7323 = vmatpush1.bf16.msra.mxu0 0
  %7324 = vmatprep.subr.bf16.mxu0 0
  %7325 = vmatpush1.bf16.msra.mxu0 0
  %7326 = vmatprep.subr.bf16.mxu0 0
  %7327 = vmatpush1.bf16.msra.mxu0 0
  %7328 = vmatprep.subr.bf16.mxu0 0
  %7329 = vmatpush1.bf16.msra.mxu0 0
  %7330 = vmatprep.subr.bf16.mxu0 0
  %7331 = vmatpush1.bf16.msra.mxu0 0
  %7332 = vmatprep.subr.bf16.mxu0 0
  %7333 = vmatpush1.bf16.msra.mxu0 0
  %7334 = vmatprep.subr.bf16.mxu0 0
  %7335 = vmatpush1.bf16.msra.mxu0 0
  %7336 = vmatprep.subr.bf16.mxu0 0
  %7337 = vmatpush1.bf16.msra.mxu0 0
  %7338 = vmatprep.mubr.bf16.mxu0 0
  %7339 = vmatmul.mubr.bf16.gmra.mrb[0].mxu0 %v7304
  %v7340 = vpop.f32.mrb[0].mxu0
  %v7341 = vadd.f32 0.0, %v7340
  %v7342 = vpop.f32.mrb[0].mxu0
  %v7343 = vpop.f32.mrb[0].mxu0
  %v7344 = vpop.f32.mrb[0].mxu0
  %7345 = vdwg.mxu0
  %v7354 = vunpack.c.l.b16 %v5990
  %v7355 = vunpack.c.l.b16 %v5991
  %v7356 = vunpack.c.l.b16 %v5992
  %v7357 = vunpack.c.l.b16 %v5993
  %v7358 = vunpack.c.l.b16 %v5994
  %v7359 = vunpack.c.l.b16 %v5995
  %v7360 = vunpack.c.l.b16 %v5996
  %v7361 = vunpack.c.l.b16 %v5997
  %v7362 = vpack.c.b16 %v7355, %v7354
  %v7363 = vpack.c.b16 %v7357, %v7356
  %v7364 = vpack.c.b16 %v7359, %v7358
  %v7365 = vpack.c.b16 %v7361, %v7360
  %v7371 = vsel %vm316, %v5827, 0
  %7373 = vmatprep.subr.bf16.mxu0 0
  %7374 = vmatpush1.bf16.msra.mxu0 %v7362
  %7375 = vmatprep.subr.bf16.mxu0 0
  %7376 = vmatpush1.bf16.msra.mxu0 %v7363
  %7377 = vmatprep.subr.bf16.mxu0 0
  %7378 = vmatpush1.bf16.msra.mxu0 %v7364
  %7379 = vmatprep.subr.bf16.mxu0 0
  %7380 = vmatpush1.bf16.msra.mxu0 %v7365
  %7381 = vmatprep.subr.bf16.mxu0 0
  %7382 = vmatpush1.bf16.msra.mxu0 0
  %7383 = vmatprep.subr.bf16.mxu0 0
  %7384 = vmatpush1.bf16.msra.mxu0 0
  %7385 = vmatprep.subr.bf16.mxu0 0
  %7386 = vmatpush1.bf16.msra.mxu0 0
  %7387 = vmatprep.subr.bf16.mxu0 0
  %7388 = vmatpush1.bf16.msra.mxu0 0
  %7389 = vmatprep.subr.bf16.mxu0 0
  %7390 = vmatpush1.bf16.msra.mxu0 0
  %7391 = vmatprep.subr.bf16.mxu0 0
  %7392 = vmatpush1.bf16.msra.mxu0 0
  %7393 = vmatprep.subr.bf16.mxu0 0
  %7394 = vmatpush1.bf16.msra.mxu0 0
  %7395 = vmatprep.subr.bf16.mxu0 0
  %7396 = vmatpush1.bf16.msra.mxu0 0
  %7397 = vmatprep.subr.bf16.mxu0 0
  %7398 = vmatpush1.bf16.msra.mxu0 0
  %7399 = vmatprep.subr.bf16.mxu0 0
  %7400 = vmatpush1.bf16.msra.mxu0 0
  %7401 = vmatprep.subr.bf16.mxu0 0
  %7402 = vmatpush1.bf16.msra.mxu0 0
  %7403 = vmatprep.subr.bf16.mxu0 0
  %7404 = vmatpush1.bf16.msra.mxu0 0
  %7405 = vmatprep.mubr.bf16.mxu0 0
  %7406 = vmatmul.mubr.bf16.gmra.mrb[0].mxu0 %v7371
  %v7407 = vpop.f32.mrb[0].mxu0
  %v7408 = vadd.f32 0.0, %v7407
  %v7409 = vpop.f32.mrb[0].mxu0
  %v7410 = vpop.f32.mrb[0].mxu0
  %v7411 = vpop.f32.mrb[0].mxu0
  %7412 = vdwg.mxu0
  %v7421 = vunpack.c.l.b16 %v5998
  %v7422 = vunpack.c.l.b16 %v5999
  %v7423 = vunpack.c.l.b16 %v6000
  %v7424 = vunpack.c.l.b16 %v6001
  %v7425 = vunpack.c.l.b16 %v6002
  %v7426 = vunpack.c.l.b16 %v6003
  %v7427 = vunpack.c.l.b16 %v6004
  %v7428 = vunpack.c.l.b16 %v6005
  %v7429 = vpack.c.b16 %v7422, %v7421
  %v7430 = vpack.c.b16 %v7424, %v7423
  %v7431 = vpack.c.b16 %v7426, %v7425
  %v7432 = vpack.c.b16 %v7428, %v7427
  %v7438 = vsel %vm316, %v5828, 0
  %7440 = vmatprep.subr.bf16.mxu0 0
  %7441 = vmatpush1.bf16.msra.mxu0 %v7429
  %7442 = vmatprep.subr.bf16.mxu0 0
  %7443 = vmatpush1.bf16.msra.mxu0 %v7430
  %7444 = vmatprep.subr.bf16.mxu0 0
  %7445 = vmatpush1.bf16.msra.mxu0 %v7431
  %7446 = vmatprep.subr.bf16.mxu0 0
  %7447 = vmatpush1.bf16.msra.mxu0 %v7432
  %7448 = vmatprep.subr.bf16.mxu0 0
  %7449 = vmatpush1.bf16.msra.mxu0 0
  %7450 = vmatprep.subr.bf16.mxu0 0
  %7451 = vmatpush1.bf16.msra.mxu0 0
  %7452 = vmatprep.subr.bf16.mxu0 0
  %7453 = vmatpush1.bf16.msra.mxu0 0
  %7454 = vmatprep.subr.bf16.mxu0 0
  %7455 = vmatpush1.bf16.msra.mxu0 0
  %7456 = vmatprep.subr.bf16.mxu0 0
  %7457 = vmatpush1.bf16.msra.mxu0 0
  %7458 = vmatprep.subr.bf16.mxu0 0
  %7459 = vmatpush1.bf16.msra.mxu0 0
  %7460 = vmatprep.subr.bf16.mxu0 0
  %7461 = vmatpush1.bf16.msra.mxu0 0
  %7462 = vmatprep.subr.bf16.mxu0 0
  %7463 = vmatpush1.bf16.msra.mxu0 0
  %7464 = vmatprep.subr.bf16.mxu0 0
  %7465 = vmatpush1.bf16.msra.mxu0 0
  %7466 = vmatprep.subr.bf16.mxu0 0
  %7467 = vmatpush1.bf16.msra.mxu0 0
  %7468 = vmatprep.subr.bf16.mxu0 0
  %7469 = vmatpush1.bf16.msra.mxu0 0
  %7470 = vmatprep.subr.bf16.mxu0 0
  %7471 = vmatpush1.bf16.msra.mxu0 0
  %7472 = vmatprep.mubr.bf16.mxu0 0
  %7473 = vmatmul.mubr.bf16.gmra.mrb[0].mxu0 %v7438
  %v7474 = vpop.f32.mrb[0].mxu0
  %v7475 = vadd.f32 0.0, %v7474
  %v7476 = vpop.f32.mrb[0].mxu0
  %v7477 = vpop.f32.mrb[0].mxu0
  %v7478 = vpop.f32.mrb[0].mxu0
  %7479 = vdwg.mxu0
  %v7480 = vld [vmem:[%s5] sm:$0xff]
  %v7481 = vld [vmem:[%s5 + $0x8] sm:$0xff]
  %v7482 = vld [vmem:[%s5 + $0x10] sm:$0xff]
  %v7483 = vld [vmem:[%s5 + $0x18] sm:$0xff]
  %v7484 = vld [vmem:[%s5 + $0x20] sm:$0xff]
  %v7485 = vld [vmem:[%s5 + $0x28] sm:$0xff]
  %v7486 = vld [vmem:[%s5 + $0x30] sm:$0xff]
  %v7487 = vld [vmem:[%s5 + $0x38] sm:$0xff]
  %v7488 = vld [vmem:[%s5 + $0x40] sm:$0xff]
  %v7489 = vld [vmem:[%s5 + $0x48] sm:$0xff]
  %v7490 = vld [vmem:[%s5 + $0x50] sm:$0xff]
  %v7491 = vld [vmem:[%s5 + $0x58] sm:$0xff]
  %v7492 = vld [vmem:[%s5 + $0x60] sm:$0xff]
  %v7493 = vld [vmem:[%s5 + $0x68] sm:$0xff]
  %v7494 = vld [vmem:[%s5 + $0x70] sm:$0xff]
  %v7495 = vld [vmem:[%s5 + $0x78] sm:$0xff]
  %v7496 = vld [vmem:[%s4] sm:$0xff]
  %v7497 = vld [vmem:[%s4 + $0x8] sm:$0xff]
  %v7498 = vld [vmem:[%s4 + $0x10] sm:$0xff]
  %v7499 = vld [vmem:[%s4 + $0x18] sm:$0xff]
  %v7500 = vld [vmem:[%s4 + $0x20] sm:$0xff]
  %v7501 = vld [vmem:[%s4 + $0x28] sm:$0xff]
  %v7502 = vld [vmem:[%s4 + $0x30] sm:$0xff]
  %v7503 = vld [vmem:[%s4 + $0x38] sm:$0xff]
  %v7504 = vld [vmem:[%s4 + $0x40] sm:$0xff]
  %v7505 = vld [vmem:[%s4 + $0x48] sm:$0xff]
  %v7506 = vld [vmem:[%s4 + $0x50] sm:$0xff]
  %v7507 = vld [vmem:[%s4 + $0x58] sm:$0xff]
  %v7508 = vld [vmem:[%s4 + $0x60] sm:$0xff]
  %v7509 = vld [vmem:[%s4 + $0x68] sm:$0xff]
  %v7510 = vld [vmem:[%s4 + $0x70] sm:$0xff]
  %v7511 = vld [vmem:[%s4 + $0x78] sm:$0xff]
  %v7512 = vld [vmem:[%s4 + $0x80] sm:$0xff]
  %v7513 = vld [vmem:[%s4 + $0x88] sm:$0xff]
  %v7514 = vld [vmem:[%s4 + $0x90] sm:$0xff]
  %v7515 = vld [vmem:[%s4 + $0x98] sm:$0xff]
  %v7516 = vld [vmem:[%s4 + $0xa0] sm:$0xff]
  %v7517 = vld [vmem:[%s4 + $0xa8] sm:$0xff]
  %v7518 = vld [vmem:[%s4 + $0xb0] sm:$0xff]
  %v7519 = vld [vmem:[%s4 + $0xb8] sm:$0xff]
  %v7520 = vld [vmem:[%s4 + $0xc0] sm:$0xff]
  %v7521 = vld [vmem:[%s4 + $0xc8] sm:$0xff]
  %v7522 = vld [vmem:[%s4 + $0xd0] sm:$0xff]
  %v7523 = vld [vmem:[%s4 + $0xd8] sm:$0xff]
  %v7524 = vld [vmem:[%s4 + $0xe0] sm:$0xff]
  %v7525 = vld [vmem:[%s4 + $0xe8] sm:$0xff]
  %v7526 = vld [vmem:[%s4 + $0xf0] sm:$0xff]
  %v7527 = vld [vmem:[%s4 + $0xf8] sm:$0xff]
  %v7529 = vsel %vm2355, %v7497, 0
  %v7532 = vsel %vm2355, %v7499, 0
  %v7535 = vsel %vm2355, %v7501, 0
  %v7538 = vsel %vm2355, %v7503, 0
  %v7541 = vsel %vm2355, %v7505, 0
  %v7544 = vsel %vm2355, %v7507, 0
  %v7547 = vsel %vm2355, %v7509, 0
  %v7550 = vsel %vm2355, %v7511, 0
  %v7553 = vsel %vm2355, %v7513, 0
  %v7556 = vsel %vm2355, %v7515, 0
  %v7559 = vsel %vm2355, %v7517, 0
  %v7562 = vsel %vm2355, %v7519, 0
  %v7565 = vsel %vm2355, %v7521, 0
  %v7568 = vsel %vm2355, %v7523, 0
  %v7571 = vsel %vm2355, %v7525, 0
  %v7574 = vsel %vm2355, %v7527, 0
  %7576 = vmatprep.subr.mxu0 0.0
  %7577 = vmatpush1.msra.mxu0 %v6068
  %7578 = vmatprep.subr.mxu0 0.0
  %7579 = vmatpush1.msra.mxu0 %v6135
  %7580 = vmatprep.subr.mxu0 0.0
  %7581 = vmatpush1.msra.mxu0 %v6202
  %7582 = vmatprep.subr.mxu0 0.0
  %7583 = vmatpush1.msra.mxu0 %v6269
  %7584 = vmatprep.subr.mxu0 0.0
  %7585 = vmatpush1.msra.mxu0 %v6336
  %7586 = vmatprep.subr.mxu0 0.0
  %7587 = vmatpush1.msra.mxu0 %v6403
  %7588 = vmatprep.subr.mxu0 0.0
  %7589 = vmatpush1.msra.mxu0 %v6470
  %7590 = vmatprep.subr.mxu0 0.0
  %7591 = vmatpush1.msra.mxu0 %v6537
  %7592 = vmatprep.subr.mxu0 0.0
  %7593 = vmatpush1.msra.mxu0 %v6604
  %7594 = vmatprep.subr.mxu0 0.0
  %7595 = vmatpush1.msra.mxu0 %v6671
  %7596 = vmatprep.subr.mxu0 0.0
  %7597 = vmatpush1.msra.mxu0 %v6738
  %7598 = vmatprep.subr.mxu0 0.0
  %7599 = vmatpush1.msra.mxu0 %v6805
  %7600 = vmatprep.subr.mxu0 0.0
  %7601 = vmatpush1.msra.mxu0 %v6872
  %7602 = vmatprep.subr.mxu0 0.0
  %7603 = vmatpush1.msra.mxu0 %v6939
  %7604 = vmatprep.subr.mxu0 0.0
  %7605 = vmatpush1.msra.mxu0 %v7006
  %7606 = vmatprep.subr.mxu0 0.0
  %7607 = vmatpush1.msra.mxu0 %v7073
  %7608 = vmatprep.subr.mxu0 0.0
  %7609 = vmatpush1.msra.mxu0 %v7140
  %7610 = vmatprep.subr.mxu0 0.0
  %7611 = vmatpush1.msra.mxu0 %v7207
  %7612 = vmatprep.subr.mxu0 0.0
  %7613 = vmatpush1.msra.mxu0 %v7274
  %7614 = vmatprep.subr.mxu0 0.0
  %7615 = vmatpush1.msra.mxu0 %v7341
  %7616 = vmatprep.subr.mxu0 0.0
  %7617 = vmatpush1.msra.mxu0 %v7408
  %7618 = vmatprep.subr.mxu0 0.0
  %7619 = vmatpush1.msra.mxu0 %v7475
  %7620 = vmatprep.subr.mxu0 0.0
  %7621 = vmatpush1.msra.mxu0 0.0
  %7622 = vmatprep.subr.mxu0 0.0
  %7623 = vmatpush1.msra.mxu0 0.0
  %7624 = vmatprep.subr.mxu0 0.0
  %7625 = vmatpush1.msra.mxu0 0.0
  %7626 = vmatprep.subr.mxu0 0.0
  %7627 = vmatpush1.msra.mxu0 0.0
  %7628 = vmatprep.subr.mxu0 0.0
  %7629 = vmatpush1.msra.mxu0 0.0
  %7630 = vmatprep.subr.mxu0 0.0
  %7631 = vmatpush1.msra.mxu0 0.0
  %7632 = vmatprep.subr.mxu0 0.0
  %7633 = vmatpush1.msra.mxu0 0.0
  %7634 = vmatprep.subr.mxu0 0.0
  %7635 = vmatpush1.msra.mxu0 0.0
  %7636 = vmatprep.subr.mxu0 0.0
  %7637 = vmatpush1.msra.mxu0 0.0
  %7638 = vmatprep.subr.mxu0 0.0
  %7639 = vmatpush1.msra.mxu0 0.0
  %7640 = vmatprep.mubr.f32.mxu0 %v7529
  %7641 = vmatmul.mubr.f32.gmra.mrb[0].mxu0 %v7496
  %v7642 = vpop.f32.mrb[0].mxu0
  %v7643 = vadd.f32 0.0, %v7642
  %v7644 = vpop.f32.mrb[0].mxu0
  %7645 = vmatprep.mubr.f32.mxu0 %v7532
  %7646 = vmatmul.mubr.f32.gmra.mrb[0].mxu0 %v7498
  %v7647 = vpop.f32.mrb[0].mxu0
  %v7648 = vadd.f32 0.0, %v7647
  %v7649 = vpop.f32.mrb[0].mxu0
  %7650 = vmatprep.mubr.f32.mxu0 %v7535
  %7651 = vmatmul.mubr.f32.gmra.mrb[0].mxu0 %v7500
  %v7652 = vpop.f32.mrb[0].mxu0
  %v7653 = vadd.f32 0.0, %v7652
  %v7654 = vpop.f32.mrb[0].mxu0
  %7655 = vmatprep.mubr.f32.mxu0 %v7538
  %7656 = vmatmul.mubr.f32.gmra.mrb[0].mxu0 %v7502
  %v7657 = vpop.f32.mrb[0].mxu0
  %v7658 = vadd.f32 0.0, %v7657
  %v7659 = vpop.f32.mrb[0].mxu0
  %7660 = vmatprep.mubr.f32.mxu0 %v7541
  %7661 = vmatmul.mubr.f32.gmra.mrb[0].mxu0 %v7504
  %v7662 = vpop.f32.mrb[0].mxu0
  %v7663 = vadd.f32 0.0, %v7662
  %v7664 = vpop.f32.mrb[0].mxu0
  %7665 = vmatprep.mubr.f32.mxu0 %v7544
  %7666 = vmatmul.mubr.f32.gmra.mrb[0].mxu0 %v7506
  %v7667 = vpop.f32.mrb[0].mxu0
  %v7668 = vadd.f32 0.0, %v7667
  %v7669 = vpop.f32.mrb[0].mxu0
  %7670 = vmatprep.mubr.f32.mxu0 %v7547
  %7671 = vmatmul.mubr.f32.gmra.mrb[0].mxu0 %v7508
  %v7672 = vpop.f32.mrb[0].mxu0
  %v7673 = vadd.f32 0.0, %v7672
  %v7674 = vpop.f32.mrb[0].mxu0
  %7675 = vmatprep.mubr.f32.mxu0 %v7550
  %7676 = vmatmul.mubr.f32.gmra.mrb[0].mxu0 %v7510
  %v7677 = vpop.f32.mrb[0].mxu0
  %v7678 = vadd.f32 0.0, %v7677
  %v7679 = vpop.f32.mrb[0].mxu0
  %7680 = vmatprep.mubr.f32.mxu0 %v7553
  %7681 = vmatmul.mubr.f32.gmra.mrb[0].mxu0 %v7512
  %v7682 = vpop.f32.mrb[0].mxu0
  %v7683 = vadd.f32 0.0, %v7682
  %v7684 = vpop.f32.mrb[0].mxu0
  %7685 = vmatprep.mubr.f32.mxu0 %v7556
  %7686 = vmatmul.mubr.f32.gmra.mrb[0].mxu0 %v7514
  %v7687 = vpop.f32.mrb[0].mxu0
  %v7688 = vadd.f32 0.0, %v7687
  %v7689 = vpop.f32.mrb[0].mxu0
  %7690 = vmatprep.mubr.f32.mxu0 %v7559
  %7691 = vmatmul.mubr.f32.gmra.mrb[0].mxu0 %v7516
  %v7692 = vpop.f32.mrb[0].mxu0
  %v7693 = vadd.f32 0.0, %v7692
  %v7694 = vpop.f32.mrb[0].mxu0
  %7695 = vmatprep.mubr.f32.mxu0 %v7562
  %7696 = vmatmul.mubr.f32.gmra.mrb[0].mxu0 %v7518
  %v7697 = vpop.f32.mrb[0].mxu0
  %v7698 = vadd.f32 0.0, %v7697
  %v7699 = vpop.f32.mrb[0].mxu0
  %7700 = vmatprep.mubr.f32.mxu0 %v7565
  %7701 = vmatmul.mubr.f32.gmra.mrb[0].mxu0 %v7520
  %v7702 = vpop.f32.mrb[0].mxu0
  %v7703 = vadd.f32 0.0, %v7702
  %v7704 = vpop.f32.mrb[0].mxu0
  %7705 = vmatprep.mubr.f32.mxu0 %v7568
  %7706 = vmatmul.mubr.f32.gmra.mrb[0].mxu0 %v7522
  %v7707 = vpop.f32.mrb[0].mxu0
  %v7708 = vadd.f32 0.0, %v7707
  %v7709 = vpop.f32.mrb[0].mxu0
  %7710 = vmatprep.mubr.f32.mxu0 %v7571
  %7711 = vmatmul.mubr.f32.gmra.mrb[0].mxu0 %v7524
  %v7712 = vpop.f32.mrb[0].mxu0
  %v7713 = vadd.f32 0.0, %v7712
  %v7714 = vpop.f32.mrb[0].mxu0
  %7715 = vmatprep.mubr.f32.mxu0 %v7574
  %7716 = vmatmul.mubr.f32.gmra.mrb[0].mxu0 %v7526
  %v7717 = vpop.f32.mrb[0].mxu0
  %v7718 = vadd.f32 0.0, %v7717
  %v7719 = vpop.f32.mrb[0].mxu0
  %7720 = vdwg.mxu0
  %7721 = vmatprep.subr.mxu0 0.0
  %7722 = vmatpush1.msra.mxu0 %v5424
  %7723 = vmatprep.subr.mxu0 0.0
  %7724 = vmatpush1.msra.mxu0 %v5425
  %7725 = vmatprep.subr.mxu0 0.0
  %7726 = vmatpush1.msra.mxu0 %v5426
  %7727 = vmatprep.subr.mxu0 0.0
  %7728 = vmatpush1.msra.mxu0 %v5427
  %7729 = vmatprep.subr.mxu0 0.0
  %7730 = vmatpush1.msra.mxu0 %v5428
  %7731 = vmatprep.subr.mxu0 0.0
  %7732 = vmatpush1.msra.mxu0 %v5429
  %7733 = vmatprep.subr.mxu0 0.0
  %7734 = vmatpush1.msra.mxu0 %v5430
  %7735 = vmatprep.subr.mxu0 0.0
  %7736 = vmatpush1.msra.mxu0 %v5431
  %7737 = vmatprep.subr.mxu0 0.0
  %7738 = vmatpush1.msra.mxu0 %v5432
  %7739 = vmatprep.subr.mxu0 0.0
  %7740 = vmatpush1.msra.mxu0 %v5433
  %7741 = vmatprep.subr.mxu0 0.0
  %7742 = vmatpush1.msra.mxu0 %v5434
  %7743 = vmatprep.subr.mxu0 0.0
  %7744 = vmatpush1.msra.mxu0 %v5435
  %7745 = vmatprep.subr.mxu0 0.0
  %7746 = vmatpush1.msra.mxu0 %v5436
  %7747 = vmatprep.subr.mxu0 0.0
  %7748 = vmatpush1.msra.mxu0 %v5437
  %7749 = vmatprep.subr.mxu0 0.0
  %7750 = vmatpush1.msra.mxu0 %v5438
  %7751 = vmatprep.subr.mxu0 0.0
  %7752 = vmatpush1.msra.mxu0 %v5439
  %7753 = vmatprep.subr.mxu0 0.0
  %7754 = vmatpush1.msra.mxu0 0.0
  %7755 = vmatprep.subr.mxu0 0.0
  %7756 = vmatpush1.msra.mxu0 0.0
  %7757 = vmatprep.subr.mxu0 0.0
  %7758 = vmatpush1.msra.mxu0 0.0
  %7759 = vmatprep.subr.mxu0 0.0
  %7760 = vmatpush1.msra.mxu0 0.0
  %7761 = vmatprep.subr.mxu0 0.0
  %7762 = vmatpush1.msra.mxu0 0.0
  %7763 = vmatprep.subr.mxu0 0.0
  %7764 = vmatpush1.msra.mxu0 0.0
  %7765 = vmatprep.subr.mxu0 0.0
  %7766 = vmatpush1.msra.mxu0 0.0
  %7767 = vmatprep.subr.mxu0 0.0
  %7768 = vmatpush1.msra.mxu0 0.0
  %7769 = vmatprep.subr.mxu0 0.0
  %7770 = vmatpush1.msra.mxu0 0.0
  %7771 = vmatprep.subr.mxu0 0.0
  %7772 = vmatpush1.msra.mxu0 0.0
  %7773 = vmatprep.subr.mxu0 0.0
  %7774 = vmatpush1.msra.mxu0 0.0
  %7775 = vmatprep.subr.mxu0 0.0
  %7776 = vmatpush1.msra.mxu0 0.0
  %7777 = vmatprep.subr.mxu0 0.0
  %7778 = vmatpush1.msra.mxu0 0.0
  %7779 = vmatprep.subr.mxu0 0.0
  %7780 = vmatpush1.msra.mxu0 0.0
  %7781 = vmatprep.subr.mxu0 0.0
  %7782 = vmatpush1.msra.mxu0 0.0
  %7783 = vmatprep.subr.mxu0 0.0
  %7784 = vmatpush1.msra.mxu0 0.0
  %7785 = vmatprep.mubr.f32.mxu0 0.0
  %7786 = vmatmul.mubr.f32.gmra.mrb[0].mxu0 %v7480
  %v7787 = vpop.f32.mrb[0].mxu0
  %v7788 = vadd.f32 %v7643, %v7787
  %v7789 = vpop.f32.mrb[0].mxu0
  %7790 = vmatprep.mubr.f32.mxu0 0.0
  %7791 = vmatmul.mubr.f32.gmra.mrb[0].mxu0 %v7481
  %v7792 = vpop.f32.mrb[0].mxu0
  %v7793 = vadd.f32 %v7648, %v7792
  %v7794 = vpop.f32.mrb[0].mxu0
  %7795 = vmatprep.mubr.f32.mxu0 0.0
  %7796 = vmatmul.mubr.f32.gmra.mrb[0].mxu0 %v7482
  %v7797 = vpop.f32.mrb[0].mxu0
  %v7798 = vadd.f32 %v7653, %v7797
  %v7799 = vpop.f32.mrb[0].mxu0
  %7800 = vmatprep.mubr.f32.mxu0 0.0
  %7801 = vmatmul.mubr.f32.gmra.mrb[0].mxu0 %v7483
  %v7802 = vpop.f32.mrb[0].mxu0
  %v7803 = vadd.f32 %v7658, %v7802
  %v7804 = vpop.f32.mrb[0].mxu0
  %7805 = vmatprep.mubr.f32.mxu0 0.0
  %7806 = vmatmul.mubr.f32.gmra.mrb[0].mxu0 %v7484
  %v7807 = vpop.f32.mrb[0].mxu0
  %v7808 = vadd.f32 %v7663, %v7807
  %v7809 = vpop.f32.mrb[0].mxu0
  %7810 = vmatprep.mubr.f32.mxu0 0.0
  %7811 = vmatmul.mubr.f32.gmra.mrb[0].mxu0 %v7485
  %v7812 = vpop.f32.mrb[0].mxu0
  %v7813 = vadd.f32 %v7668, %v7812
  %v7814 = vpop.f32.mrb[0].mxu0
  %7815 = vmatprep.mubr.f32.mxu0 0.0
  %7816 = vmatmul.mubr.f32.gmra.mrb[0].mxu0 %v7486
  %v7817 = vpop.f32.mrb[0].mxu0
  %v7818 = vadd.f32 %v7673, %v7817
  %v7819 = vpop.f32.mrb[0].mxu0
  %7820 = vmatprep.mubr.f32.mxu0 0.0
  %7821 = vmatmul.mubr.f32.gmra.mrb[0].mxu0 %v7487
  %v7822 = vpop.f32.mrb[0].mxu0
  %v7823 = vadd.f32 %v7678, %v7822
  %v7824 = vpop.f32.mrb[0].mxu0
  %7825 = vmatprep.mubr.f32.mxu0 0.0
  %7826 = vmatmul.mubr.f32.gmra.mrb[0].mxu0 %v7488
  %v7827 = vpop.f32.mrb[0].mxu0
  %v7828 = vadd.f32 %v7683, %v7827
  %v7829 = vpop.f32.mrb[0].mxu0
  %7830 = vmatprep.mubr.f32.mxu0 0.0
  %7831 = vmatmul.mubr.f32.gmra.mrb[0].mxu0 %v7489
  %v7832 = vpop.f32.mrb[0].mxu0
  %v7833 = vadd.f32 %v7688, %v7832
  %v7834 = vpop.f32.mrb[0].mxu0
  %7835 = vmatprep.mubr.f32.mxu0 0.0
  %7836 = vmatmul.mubr.f32.gmra.mrb[0].mxu0 %v7490
  %v7837 = vpop.f32.mrb[0].mxu0
  %v7838 = vadd.f32 %v7693, %v7837
  %v7839 = vpop.f32.mrb[0].mxu0
  %7840 = vmatprep.mubr.f32.mxu0 0.0
  %7841 = vmatmul.mubr.f32.gmra.mrb[0].mxu0 %v7491
  %v7842 = vpop.f32.mrb[0].mxu0
  %v7843 = vadd.f32 %v7698, %v7842
  %v7844 = vpop.f32.mrb[0].mxu0
  %7845 = vmatprep.mubr.f32.mxu0 0.0
  %7846 = vmatmul.mubr.f32.gmra.mrb[0].mxu0 %v7492
  %v7847 = vpop.f32.mrb[0].mxu0
  %v7848 = vadd.f32 %v7703, %v7847
  %v7849 = vpop.f32.mrb[0].mxu0
  %7850 = vmatprep.mubr.f32.mxu0 0.0
  %7851 = vmatmul.mubr.f32.gmra.mrb[0].mxu0 %v7493
  %v7852 = vpop.f32.mrb[0].mxu0
  %v7853 = vadd.f32 %v7708, %v7852
  %v7854 = vpop.f32.mrb[0].mxu0
  %7855 = vmatprep.mubr.f32.mxu0 0.0
  %7856 = vmatmul.mubr.f32.gmra.mrb[0].mxu0 %v7494
  %v7857 = vpop.f32.mrb[0].mxu0
  %v7858 = vadd.f32 %v7713, %v7857
  %v7859 = vpop.f32.mrb[0].mxu0
  %7860 = vmatprep.mubr.f32.mxu0 0.0
  %7861 = vmatmul.mubr.f32.gmra.mrb[0].mxu0 %v7495
  %v7862 = vpop.f32.mrb[0].mxu0
  %v7863 = vadd.f32 %v7718, %v7862
  %v7864 = vpop.f32.mrb[0].mxu0
  %7865 = vdwg.mxu0
  %v7866 = vadd.f32 %v7788, %v5548
  %v7867 = vadd.f32 %v7793, %v5551
  %v7868 = vadd.f32 %v7798, %v5556
  %v7869 = vadd.f32 %v7803, %v5559
  %v7870 = vadd.f32 %v7808, %v5564
  %v7871 = vadd.f32 %v7813, %v5567
  %v7872 = vadd.f32 %v7818, %v5572
  %v7873 = vadd.f32 %v7823, %v5575
  %v7874 = vadd.f32 %v7828, %v5580
  %v7875 = vadd.f32 %v7833, %v5583
  %v7876 = vadd.f32 %v7838, %v5588
  %v7877 = vadd.f32 %v7843, %v5591
  %v7878 = vadd.f32 %v7848, %v5596
  %v7879 = vadd.f32 %v7853, %v5599
  %v7880 = vadd.f32 %v7858, %v5604
  %v7881 = vadd.f32 %v7863, %v5607
  %v7882 = vmul.f32 %v7866, 0.5
  %v7883 = vmul.f32 %v7867, 0.5
  %v7884 = vmul.f32 %v7868, 0.5
  %v7885 = vmul.f32 %v7869, 0.5
  %v7886 = vmul.f32 %v7870, 0.5
  %v7887 = vmul.f32 %v7871, 0.5
  %v7888 = vmul.f32 %v7872, 0.5
  %v7889 = vmul.f32 %v7873, 0.5
  %v7890 = vmul.f32 %v7874, 0.5
  %v7891 = vmul.f32 %v7875, 0.5
  %v7892 = vmul.f32 %v7876, 0.5
  %v7893 = vmul.f32 %v7877, 0.5
  %v7894 = vmul.f32 %v7878, 0.5
  %v7895 = vmul.f32 %v7879, 0.5
  %v7896 = vmul.f32 %v7880, 0.5
  %v7897 = vmul.f32 %v7881, 0.5
  %v7898 = vmul.f32 %v7866, 0.044715
  %v7899 = vmul.f32 %v7867, 0.044715
  %v7900 = vmul.f32 %v7868, 0.044715
  %v7901 = vmul.f32 %v7869, 0.044715
  %v7902 = vmul.f32 %v7870, 0.044715
  %v7903 = vmul.f32 %v7871, 0.044715
  %v7904 = vmul.f32 %v7872, 0.044715
  %v7905 = vmul.f32 %v7873, 0.044715
  %v7906 = vmul.f32 %v7874, 0.044715
  %v7907 = vmul.f32 %v7875, 0.044715
  %v7908 = vmul.f32 %v7876, 0.044715
  %v7909 = vmul.f32 %v7877, 0.044715
  %v7910 = vmul.f32 %v7878, 0.044715
  %v7911 = vmul.f32 %v7879, 0.044715
  %v7912 = vmul.f32 %v7880, 0.044715
  %v7913 = vmul.f32 %v7881, 0.044715
  %v7914 = vmul.f32 %v7898, %v7866
  %v7915 = vmul.f32 %v7899, %v7867
  %v7916 = vmul.f32 %v7900, %v7868
  %v7917 = vmul.f32 %v7901, %v7869
  %v7918 = vmul.f32 %v7902, %v7870
  %v7919 = vmul.f32 %v7903, %v7871
  %v7920 = vmul.f32 %v7904, %v7872
  %v7921 = vmul.f32 %v7905, %v7873
  %v7922 = vmul.f32 %v7906, %v7874
  %v7923 = vmul.f32 %v7907, %v7875
  %v7924 = vmul.f32 %v7908, %v7876
  %v7925 = vmul.f32 %v7909, %v7877
  %v7926 = vmul.f32 %v7910, %v7878
  %v7927 = vmul.f32 %v7911, %v7879
  %v7928 = vmul.f32 %v7912, %v7880
  %v7929 = vmul.f32 %v7913, %v7881
  %v7930 = vmul.f32 %v7914, %v7866
  %v7931 = vmul.f32 %v7915, %v7867
  %v7932 = vmul.f32 %v7916, %v7868
  %v7933 = vmul.f32 %v7917, %v7869
  %v7934 = vmul.f32 %v7918, %v7870
  %v7935 = vmul.f32 %v7919, %v7871
  %v7936 = vmul.f32 %v7920, %v7872
  %v7937 = vmul.f32 %v7921, %v7873
  %v7938 = vmul.f32 %v7922, %v7874
  %v7939 = vmul.f32 %v7923, %v7875
  %v7940 = vmul.f32 %v7924, %v7876
  %v7941 = vmul.f32 %v7925, %v7877
  %v7942 = vmul.f32 %v7926, %v7878
  %v7943 = vmul.f32 %v7927, %v7879
  %v7944 = vmul.f32 %v7928, %v7880
  %v7945 = vmul.f32 %v7929, %v7881
  %v7946 = vadd.f32 %v7866, %v7930
  %v7947 = vadd.f32 %v7867, %v7931
  %v7948 = vadd.f32 %v7868, %v7932
  %v7949 = vadd.f32 %v7869, %v7933
  %v7950 = vadd.f32 %v7870, %v7934
  %v7951 = vadd.f32 %v7871, %v7935
  %v7952 = vadd.f32 %v7872, %v7936
  %v7953 = vadd.f32 %v7873, %v7937
  %v7954 = vadd.f32 %v7874, %v7938
  %v7955 = vadd.f32 %v7875, %v7939
  %v7956 = vadd.f32 %v7876, %v7940
  %v7957 = vadd.f32 %v7877, %v7941
  %v7958 = vadd.f32 %v7878, %v7942
  %v7959 = vadd.f32 %v7879, %v7943
  %v7960 = vadd.f32 %v7880, %v7944
  %v7961 = vadd.f32 %v7881, %v7945
  %v7962 = vmul.f32 %v7946, 0.7978846
  %v7963 = vmul.f32 %v7947, 0.7978846
  %v7964 = vmul.f32 %v7948, 0.7978846
  %v7965 = vmul.f32 %v7949, 0.7978846
  %v7966 = vmul.f32 %v7950, 0.7978846
  %v7967 = vmul.f32 %v7951, 0.7978846
  %v7968 = vmul.f32 %v7952, 0.7978846
  %v7969 = vmul.f32 %v7953, 0.7978846
  %v7970 = vmul.f32 %v7954, 0.7978846
  %v7971 = vmul.f32 %v7955, 0.7978846
  %v7972 = vmul.f32 %v7956, 0.7978846
  %v7973 = vmul.f32 %v7957, 0.7978846
  %v7974 = vmul.f32 %v7958, 0.7978846
  %v7975 = vmul.f32 %v7959, 0.7978846
  %v7976 = vmul.f32 %v7960, 0.7978846
  %v7977 = vmul.f32 %v7961, 0.7978846
  %v7978 = vtanh.pop %v7962
  %v7979 = vtanh.pop %v7963
  %v7980 = vtanh.pop %v7964
  %v7981 = vtanh.pop %v7965
  %v7982 = vtanh.pop %v7966
  %v7983 = vtanh.pop %v7967
  %v7984 = vtanh.pop %v7968
  %v7985 = vtanh.pop %v7969
  %v7986 = vtanh.pop %v7970
  %v7987 = vtanh.pop %v7971
  %v7988 = vtanh.pop %v7972
  %v7989 = vtanh.pop %v7973
  %v7990 = vtanh.pop %v7974
  %v7991 = vtanh.pop %v7975
  %v7992 = vtanh.pop %v7976
  %v7993 = vtanh.pop %v7977
  %v7994 = vadd.f32 %v7978, 1.0
  %v7995 = vadd.f32 %v7979, 1.0
  %v7996 = vadd.f32 %v7980, 1.0
  %v7997 = vadd.f32 %v7981, 1.0
  %v7998 = vadd.f32 %v7982, 1.0
  %v7999 = vadd.f32 %v7983, 1.0
  %v8000 = vadd.f32 %v7984, 1.0
  %v8001 = vadd.f32 %v7985, 1.0
  %v8002 = vadd.f32 %v7986, 1.0
  %v8003 = vadd.f32 %v7987, 1.0
  %v8004 = vadd.f32 %v7988, 1.0
  %v8005 = vadd.f32 %v7989, 1.0
  %v8006 = vadd.f32 %v7990, 1.0
  %v8007 = vadd.f32 %v7991, 1.0
  %v8008 = vadd.f32 %v7992, 1.0
  %v8009 = vadd.f32 %v7993, 1.0
  %v8010 = vmul.f32 %v7882, %v7994
  %v8011 = vmul.f32 %v7883, %v7995
  %v8012 = vmul.f32 %v7884, %v7996
  %v8013 = vmul.f32 %v7885, %v7997
  %v8014 = vmul.f32 %v7886, %v7998
  %v8015 = vmul.f32 %v7887, %v7999
  %v8016 = vmul.f32 %v7888, %v8000
  %v8017 = vmul.f32 %v7889, %v8001
  %v8018 = vmul.f32 %v7890, %v8002
  %v8019 = vmul.f32 %v7891, %v8003
  %v8020 = vmul.f32 %v7892, %v8004
  %v8021 = vmul.f32 %v7893, %v8005
  %v8022 = vmul.f32 %v7894, %v8006
  %v8023 = vmul.f32 %v7895, %v8007
  %v8024 = vmul.f32 %v7896, %v8008
  %v8025 = vmul.f32 %v7897, %v8009
  %v8026 = vpack.c.bf16 %v8011, %v8010
  %v8027 = vpack.c.bf16 %v8013, %v8012
  %v8028 = vpack.c.bf16 %v8015, %v8014
  %v8029 = vpack.c.bf16 %v8017, %v8016
  %v8030 = vpack.c.bf16 %v8019, %v8018
  %v8031 = vpack.c.bf16 %v8021, %v8020
  %v8032 = vpack.c.bf16 %v8023, %v8022
  %v8033 = vpack.c.bf16 %v8025, %v8024
  %s8034 = scalar_lea.vmem %s7, 96
  %v8035 = vld [vmem:[%s8034] sm:$0xf]
  %v8036 = vld [vmem:[%s8034 + $0x4] sm:$0xf]
  %v8037 = vld [vmem:[%s8034 + $0x8] sm:$0xf]
  %v8038 = vld [vmem:[%s8034 + $0xc] sm:$0xf]
  %v8039 = vld [vmem:[%s8034 + $0x10] sm:$0xf]
  %v8040 = vld [vmem:[%s8034 + $0x14] sm:$0xf]
  %v8041 = vld [vmem:[%s8034 + $0x18] sm:$0xf]
  %v8042 = vld [vmem:[%s8034 + $0x1c] sm:$0xf]
  %s8043 = scalar_lea.vmem %s8, 3
  %v8044 = vld [vmem:[%s8043] sm:$0x1]
  %v8046 = vlaneseq
  %v8047 = vshrl.u32 %v8046, 7
  %v8048 = vsub.s32 0, %v8047
  %v8049 = vrot.slane %v8044, %v8048
  %v8059 = vunpack.c.l.b16 %v8035
  %v8060 = vunpack.c.l.b16 %v8036
  %v8061 = vunpack.c.l.b16 %v8037
  %v8062 = vunpack.c.l.b16 %v8038
  %v8063 = vunpack.c.l.b16 %v8039
  %v8064 = vunpack.c.l.b16 %v8040
  %v8065 = vunpack.c.l.b16 %v8041
  %v8066 = vunpack.c.l.b16 %v8042
  %v8067 = vpack.c.b16 %v8060, %v8059
  %v8068 = vpack.c.b16 %v8062, %v8061
  %v8069 = vpack.c.b16 %v8064, %v8063
  %v8070 = vpack.c.b16 %v8066, %v8065
  %v8076 = vsel %vm316, %v8026, 0
  %v8079 = vsel %vm316, %v8027, 0
  %v8082 = vsel %vm316, %v8028, 0
  %v8085 = vsel %vm316, %v8029, 0
  %v8088 = vsel %vm316, %v8030, 0
  %v8091 = vsel %vm316, %v8031, 0
  %v8094 = vsel %vm316, %v8032, 0
  %v8097 = vsel %vm316, %v8033, 0
  %8099 = vmatprep.subr.bf16.mxu0 0
  %8100 = vmatpush1.bf16.msra.mxu0 %v8067
  %8101 = vmatprep.subr.bf16.mxu0 0
  %8102 = vmatpush1.bf16.msra.mxu0 %v8068
  %8103 = vmatprep.subr.bf16.mxu0 0
  %8104 = vmatpush1.bf16.msra.mxu0 %v8069
  %8105 = vmatprep.subr.bf16.mxu0 0
  %8106 = vmatpush1.bf16.msra.mxu0 %v8070
  %8107 = vmatprep.subr.bf16.mxu0 0
  %8108 = vmatpush1.bf16.msra.mxu0 0
  %8109 = vmatprep.subr.bf16.mxu0 0
  %8110 = vmatpush1.bf16.msra.mxu0 0
  %8111 = vmatprep.subr.bf16.mxu0 0
  %8112 = vmatpush1.bf16.msra.mxu0 0
  %8113 = vmatprep.subr.bf16.mxu0 0
  %8114 = vmatpush1.bf16.msra.mxu0 0
  %8115 = vmatprep.subr.bf16.mxu0 0
  %8116 = vmatpush1.bf16.msra.mxu0 0
  %8117 = vmatprep.subr.bf16.mxu0 0
  %8118 = vmatpush1.bf16.msra.mxu0 0
  %8119 = vmatprep.subr.bf16.mxu0 0
  %8120 = vmatpush1.bf16.msra.mxu0 0
  %8121 = vmatprep.subr.bf16.mxu0 0
  %8122 = vmatpush1.bf16.msra.mxu0 0
  %8123 = vmatprep.subr.bf16.mxu0 0
  %8124 = vmatpush1.bf16.msra.mxu0 0
  %8125 = vmatprep.subr.bf16.mxu0 0
  %8126 = vmatpush1.bf16.msra.mxu0 0
  %8127 = vmatprep.subr.bf16.mxu0 0
  %8128 = vmatpush1.bf16.msra.mxu0 0
  %8129 = vmatprep.subr.bf16.mxu0 0
  %8130 = vmatpush1.bf16.msra.mxu0 0
  %8131 = vmatprep.mubr.bf16.mxu0 0
  %8132 = vmatmul.mubr.bf16.gmra.mrb[0].mxu0 %v8076
  %v8133 = vpop.f32.mrb[0].mxu0
  %v8134 = vadd.f32 %v8049, %v8133
  %v8135 = vpop.f32.mrb[0].mxu0
  %v8136 = vpop.f32.mrb[0].mxu0
  %v8137 = vadd.f32 %v8049, %v8136
  %v8138 = vpop.f32.mrb[0].mxu0
  %8139 = vmatprep.mubr.bf16.mxu0 0
  %8140 = vmatmul.mubr.bf16.gmra.mrb[0].mxu0 %v8079
  %v8141 = vpop.f32.mrb[0].mxu0
  %v8142 = vadd.f32 %v8049, %v8141
  %v8143 = vpop.f32.mrb[0].mxu0
  %v8144 = vpop.f32.mrb[0].mxu0
  %v8145 = vadd.f32 %v8049, %v8144
  %v8146 = vpop.f32.mrb[0].mxu0
  %8147 = vmatprep.mubr.bf16.mxu0 0
  %8148 = vmatmul.mubr.bf16.gmra.mrb[0].mxu0 %v8082
  %v8149 = vpop.f32.mrb[0].mxu0
  %v8150 = vadd.f32 %v8049, %v8149
  %v8151 = vpop.f32.mrb[0].mxu0
  %v8152 = vpop.f32.mrb[0].mxu0
  %v8153 = vadd.f32 %v8049, %v8152
  %v8154 = vpop.f32.mrb[0].mxu0
  %8155 = vmatprep.mubr.bf16.mxu0 0
  %8156 = vmatmul.mubr.bf16.gmra.mrb[0].mxu0 %v8085
  %v8157 = vpop.f32.mrb[0].mxu0
  %v8158 = vadd.f32 %v8049, %v8157
  %v8159 = vpop.f32.mrb[0].mxu0
  %v8160 = vpop.f32.mrb[0].mxu0
  %v8161 = vadd.f32 %v8049, %v8160
  %v8162 = vpop.f32.mrb[0].mxu0
  %8163 = vmatprep.mubr.bf16.mxu0 0
  %8164 = vmatmul.mubr.bf16.gmra.mrb[0].mxu0 %v8088
  %v8165 = vpop.f32.mrb[0].mxu0
  %v8166 = vadd.f32 %v8049, %v8165
  %v8167 = vpop.f32.mrb[0].mxu0
  %v8168 = vpop.f32.mrb[0].mxu0
  %v8169 = vadd.f32 %v8049, %v8168
  %v8170 = vpop.f32.mrb[0].mxu0
  %8171 = vmatprep.mubr.bf16.mxu0 0
  %8172 = vmatmul.mubr.bf16.gmra.mrb[0].mxu0 %v8091
  %v8173 = vpop.f32.mrb[0].mxu0
  %v8174 = vadd.f32 %v8049, %v8173
  %v8175 = vpop.f32.mrb[0].mxu0
  %v8176 = vpop.f32.mrb[0].mxu0
  %v8177 = vadd.f32 %v8049, %v8176
  %v8178 = vpop.f32.mrb[0].mxu0
  %8179 = vmatprep.mubr.bf16.mxu0 0
  %8180 = vmatmul.mubr.bf16.gmra.mrb[0].mxu0 %v8094
  %v8181 = vpop.f32.mrb[0].mxu0
  %v8182 = vadd.f32 %v8049, %v8181
  %v8183 = vpop.f32.mrb[0].mxu0
  %v8184 = vpop.f32.mrb[0].mxu0
  %v8185 = vadd.f32 %v8049, %v8184
  %v8186 = vpop.f32.mrb[0].mxu0
  %8187 = vmatprep.mubr.bf16.mxu0 0
  %8188 = vmatmul.mubr.bf16.gmra.mrb[0].mxu0 %v8097
  %v8189 = vpop.f32.mrb[0].mxu0
  %v8190 = vadd.f32 %v8049, %v8189
  %v8191 = vpop.f32.mrb[0].mxu0
  %v8192 = vpop.f32.mrb[0].mxu0
  %v8193 = vadd.f32 %v8049, %v8192
  %v8194 = vpop.f32.mrb[0].mxu0
  %8195 = vdwg.mxu0
  %v8196 = vld [vmem:[%s3] sm:$0xff]
  %v8197 = vld [vmem:[%s3 + $0x8] sm:$0xff]
  %v8198 = vld [vmem:[%s3 + $0x10] sm:$0xff]
  %v8199 = vld [vmem:[%s3 + $0x18] sm:$0xff]
  %v8200 = vld [vmem:[%s3 + $0x20] sm:$0xff]
  %v8201 = vld [vmem:[%s3 + $0x28] sm:$0xff]
  %v8202 = vld [vmem:[%s3 + $0x30] sm:$0xff]
  %v8203 = vld [vmem:[%s3 + $0x38] sm:$0xff]
  %v8204 = vld [vmem:[%s3 + $0x40] sm:$0xff]
  %v8205 = vld [vmem:[%s3 + $0x48] sm:$0xff]
  %v8206 = vld [vmem:[%s3 + $0x50] sm:$0xff]
  %v8207 = vld [vmem:[%s3 + $0x58] sm:$0xff]
  %v8208 = vld [vmem:[%s3 + $0x60] sm:$0xff]
  %v8209 = vld [vmem:[%s3 + $0x68] sm:$0xff]
  %v8210 = vld [vmem:[%s3 + $0x70] sm:$0xff]
  %v8211 = vld [vmem:[%s3 + $0x78] sm:$0xff]
  %v8212 = vld [vmem:[%s3 + $0x80] sm:$0xff]
  %v8213 = vld [vmem:[%s3 + $0x88] sm:$0xff]
  %v8214 = vld [vmem:[%s3 + $0x90] sm:$0xff]
  %v8215 = vld [vmem:[%s3 + $0x98] sm:$0xff]
  %v8216 = vld [vmem:[%s3 + $0xa0] sm:$0xff]
  %v8217 = vld [vmem:[%s3 + $0xa8] sm:$0xff]
  %8218 = vmatprep.subr.mxu0 0.0
  %8219 = vmatpush1.msra.mxu0 %v8010
  %8220 = vmatprep.subr.mxu0 0.0
  %8221 = vmatpush1.msra.mxu0 %v8011
  %8222 = vmatprep.subr.mxu0 0.0
  %8223 = vmatpush1.msra.mxu0 %v8012
  %8224 = vmatprep.subr.mxu0 0.0
  %8225 = vmatpush1.msra.mxu0 %v8013
  %8226 = vmatprep.subr.mxu0 0.0
  %8227 = vmatpush1.msra.mxu0 %v8014
  %8228 = vmatprep.subr.mxu0 0.0
  %8229 = vmatpush1.msra.mxu0 %v8015
  %8230 = vmatprep.subr.mxu0 0.0
  %8231 = vmatpush1.msra.mxu0 %v8016
  %8232 = vmatprep.subr.mxu0 0.0
  %8233 = vmatpush1.msra.mxu0 %v8017
  %8234 = vmatprep.subr.mxu0 0.0
  %8235 = vmatpush1.msra.mxu0 %v8018
  %8236 = vmatprep.subr.mxu0 0.0
  %8237 = vmatpush1.msra.mxu0 %v8019
  %8238 = vmatprep.subr.mxu0 0.0
  %8239 = vmatpush1.msra.mxu0 %v8020
  %8240 = vmatprep.subr.mxu0 0.0
  %8241 = vmatpush1.msra.mxu0 %v8021
  %8242 = vmatprep.subr.mxu0 0.0
  %8243 = vmatpush1.msra.mxu0 %v8022
  %8244 = vmatprep.subr.mxu0 0.0
  %8245 = vmatpush1.msra.mxu0 %v8023
  %8246 = vmatprep.subr.mxu0 0.0
  %8247 = vmatpush1.msra.mxu0 %v8024
  %8248 = vmatprep.subr.mxu0 0.0
  %8249 = vmatpush1.msra.mxu0 %v8025
  %8250 = vmatprep.subr.mxu0 0.0
  %8251 = vmatpush1.msra.mxu0 0.0
  %8252 = vmatprep.subr.mxu0 0.0
  %8253 = vmatpush1.msra.mxu0 0.0
  %8254 = vmatprep.subr.mxu0 0.0
  %8255 = vmatpush1.msra.mxu0 0.0
  %8256 = vmatprep.subr.mxu0 0.0
  %8257 = vmatpush1.msra.mxu0 0.0
  %8258 = vmatprep.subr.mxu0 0.0
  %8259 = vmatpush1.msra.mxu0 0.0
  %8260 = vmatprep.subr.mxu0 0.0
  %8261 = vmatpush1.msra.mxu0 0.0
  %8262 = vmatprep.subr.mxu0 0.0
  %8263 = vmatpush1.msra.mxu0 0.0
  %8264 = vmatprep.subr.mxu0 0.0
  %8265 = vmatpush1.msra.mxu0 0.0
  %8266 = vmatprep.subr.mxu0 0.0
  %8267 = vmatpush1.msra.mxu0 0.0
  %8268 = vmatprep.subr.mxu0 0.0
  %8269 = vmatpush1.msra.mxu0 0.0
  %8270 = vmatprep.subr.mxu0 0.0
  %8271 = vmatpush1.msra.mxu0 0.0
  %8272 = vmatprep.subr.mxu0 0.0
  %8273 = vmatpush1.msra.mxu0 0.0
  %8274 = vmatprep.subr.mxu0 0.0
  %8275 = vmatpush1.msra.mxu0 0.0
  %8276 = vmatprep.subr.mxu0 0.0
  %8277 = vmatpush1.msra.mxu0 0.0
  %8278 = vmatprep.subr.mxu0 0.0
  %8279 = vmatpush1.msra.mxu0 0.0
  %8280 = vmatprep.subr.mxu0 0.0
  %8281 = vmatpush1.msra.mxu0 0.0
  %8282 = vmatprep.mubr.f32.mxu0 0.0
  %8283 = vmatmul.mubr.f32.gmra.mrb[0].mxu0 %v8196
  %v8284 = vpop.f32.mrb[0].mxu0
  %v8285 = vadd.f32 0.0, %v8284
  %v8286 = vpop.f32.mrb[0].mxu0
  %8287 = vmatprep.mubr.f32.mxu0 0.0
  %8288 = vmatmul.mubr.f32.gmra.mrb[0].mxu0 %v8197
  %v8289 = vpop.f32.mrb[0].mxu0
  %v8290 = vadd.f32 0.0, %v8289
  %v8291 = vpop.f32.mrb[0].mxu0
  %8292 = vmatprep.mubr.f32.mxu0 0.0
  %8293 = vmatmul.mubr.f32.gmra.mrb[0].mxu0 %v8198
  %v8294 = vpop.f32.mrb[0].mxu0
  %v8295 = vadd.f32 0.0, %v8294
  %v8296 = vpop.f32.mrb[0].mxu0
  %8297 = vmatprep.mubr.f32.mxu0 0.0
  %8298 = vmatmul.mubr.f32.gmra.mrb[0].mxu0 %v8199
  %v8299 = vpop.f32.mrb[0].mxu0
  %v8300 = vadd.f32 0.0, %v8299
  %v8301 = vpop.f32.mrb[0].mxu0
  %8302 = vmatprep.mubr.f32.mxu0 0.0
  %8303 = vmatmul.mubr.f32.gmra.mrb[0].mxu0 %v8200
  %v8304 = vpop.f32.mrb[0].mxu0
  %v8305 = vadd.f32 0.0, %v8304
  %v8306 = vpop.f32.mrb[0].mxu0
  %8307 = vmatprep.mubr.f32.mxu0 0.0
  %8308 = vmatmul.mubr.f32.gmra.mrb[0].mxu0 %v8201
  %v8309 = vpop.f32.mrb[0].mxu0
  %v8310 = vadd.f32 0.0, %v8309
  %v8311 = vpop.f32.mrb[0].mxu0
  %8312 = vmatprep.mubr.f32.mxu0 0.0
  %8313 = vmatmul.mubr.f32.gmra.mrb[0].mxu0 %v8202
  %v8314 = vpop.f32.mrb[0].mxu0
  %v8315 = vadd.f32 0.0, %v8314
  %v8316 = vpop.f32.mrb[0].mxu0
  %8317 = vmatprep.mubr.f32.mxu0 0.0
  %8318 = vmatmul.mubr.f32.gmra.mrb[0].mxu0 %v8203
  %v8319 = vpop.f32.mrb[0].mxu0
  %v8320 = vadd.f32 0.0, %v8319
  %v8321 = vpop.f32.mrb[0].mxu0
  %8322 = vmatprep.mubr.f32.mxu0 0.0
  %8323 = vmatmul.mubr.f32.gmra.mrb[0].mxu0 %v8204
  %v8324 = vpop.f32.mrb[0].mxu0
  %v8325 = vadd.f32 0.0, %v8324
  %v8326 = vpop.f32.mrb[0].mxu0
  %8327 = vmatprep.mubr.f32.mxu0 0.0
  %8328 = vmatmul.mubr.f32.gmra.mrb[0].mxu0 %v8205
  %v8329 = vpop.f32.mrb[0].mxu0
  %v8330 = vadd.f32 0.0, %v8329
  %v8331 = vpop.f32.mrb[0].mxu0
  %8332 = vmatprep.mubr.f32.mxu0 0.0
  %8333 = vmatmul.mubr.f32.gmra.mrb[0].mxu0 %v8206
  %v8334 = vpop.f32.mrb[0].mxu0
  %v8335 = vadd.f32 0.0, %v8334
  %v8336 = vpop.f32.mrb[0].mxu0
  %8337 = vmatprep.mubr.f32.mxu0 0.0
  %8338 = vmatmul.mubr.f32.gmra.mrb[0].mxu0 %v8207
  %v8339 = vpop.f32.mrb[0].mxu0
  %v8340 = vadd.f32 0.0, %v8339
  %v8341 = vpop.f32.mrb[0].mxu0
  %8342 = vmatprep.mubr.f32.mxu0 0.0
  %8343 = vmatmul.mubr.f32.gmra.mrb[0].mxu0 %v8208
  %v8344 = vpop.f32.mrb[0].mxu0
  %v8345 = vadd.f32 0.0, %v8344
  %v8346 = vpop.f32.mrb[0].mxu0
  %8347 = vmatprep.mubr.f32.mxu0 0.0
  %8348 = vmatmul.mubr.f32.gmra.mrb[0].mxu0 %v8209
  %v8349 = vpop.f32.mrb[0].mxu0
  %v8350 = vadd.f32 0.0, %v8349
  %v8351 = vpop.f32.mrb[0].mxu0
  %8352 = vmatprep.mubr.f32.mxu0 0.0
  %8353 = vmatmul.mubr.f32.gmra.mrb[0].mxu0 %v8210
  %v8354 = vpop.f32.mrb[0].mxu0
  %v8355 = vadd.f32 0.0, %v8354
  %v8356 = vpop.f32.mrb[0].mxu0
  %8357 = vmatprep.mubr.f32.mxu0 0.0
  %8358 = vmatmul.mubr.f32.gmra.mrb[0].mxu0 %v8211
  %v8359 = vpop.f32.mrb[0].mxu0
  %v8360 = vadd.f32 0.0, %v8359
  %v8361 = vpop.f32.mrb[0].mxu0
  %8362 = vmatprep.mubr.f32.mxu0 0.0
  %8363 = vmatmul.mubr.f32.gmra.mrb[0].mxu0 %v8212
  %v8364 = vpop.f32.mrb[0].mxu0
  %v8365 = vadd.f32 0.0, %v8364
  %v8366 = vpop.f32.mrb[0].mxu0
  %8367 = vmatprep.mubr.f32.mxu0 0.0
  %8368 = vmatmul.mubr.f32.gmra.mrb[0].mxu0 %v8213
  %v8369 = vpop.f32.mrb[0].mxu0
  %v8370 = vadd.f32 0.0, %v8369
  %v8371 = vpop.f32.mrb[0].mxu0
  %8372 = vmatprep.mubr.f32.mxu0 0.0
  %8373 = vmatmul.mubr.f32.gmra.mrb[0].mxu0 %v8214
  %v8374 = vpop.f32.mrb[0].mxu0
  %v8375 = vadd.f32 0.0, %v8374
  %v8376 = vpop.f32.mrb[0].mxu0
  %8377 = vmatprep.mubr.f32.mxu0 0.0
  %8378 = vmatmul.mubr.f32.gmra.mrb[0].mxu0 %v8215
  %v8379 = vpop.f32.mrb[0].mxu0
  %v8380 = vadd.f32 0.0, %v8379
  %v8381 = vpop.f32.mrb[0].mxu0
  %8382 = vmatprep.mubr.f32.mxu0 0.0
  %8383 = vmatmul.mubr.f32.gmra.mrb[0].mxu0 %v8216
  %v8384 = vpop.f32.mrb[0].mxu0
  %v8385 = vadd.f32 0.0, %v8384
  %v8386 = vpop.f32.mrb[0].mxu0
  %8387 = vmatprep.mubr.f32.mxu0 0.0
  %8388 = vmatmul.mubr.f32.gmra.mrb[0].mxu0 %v8217
  %v8389 = vpop.f32.mrb[0].mxu0
  %v8390 = vadd.f32 0.0, %v8389
  %v8391 = vpop.f32.mrb[0].mxu0
  %8392 = vdwg.mxu0
  %v8393 = vpack.c.bf16 %v8285, %v8285
  %v8394 = vpack.c.bf16 %v8290, %v8290
  %v8395 = vpack.c.bf16 %v8295, %v8295
  %v8396 = vpack.c.bf16 %v8300, %v8300
  %v8397 = vpack.c.bf16 %v8305, %v8305
  %v8398 = vpack.c.bf16 %v8310, %v8310
  %v8399 = vpack.c.bf16 %v8315, %v8315
  %v8400 = vpack.c.bf16 %v8320, %v8320
  %v8401 = vpack.c.bf16 %v8325, %v8325
  %v8402 = vpack.c.bf16 %v8330, %v8330
  %v8403 = vpack.c.bf16 %v8335, %v8335
  %v8404 = vpack.c.bf16 %v8340, %v8340
  %v8405 = vpack.c.bf16 %v8345, %v8345
  %v8406 = vpack.c.bf16 %v8350, %v8350
  %v8407 = vpack.c.bf16 %v8355, %v8355
  %v8408 = vpack.c.bf16 %v8360, %v8360
  %v8409 = vpack.c.bf16 %v8365, %v8365
  %v8410 = vpack.c.bf16 %v8370, %v8370
  %v8411 = vpack.c.bf16 %v8375, %v8375
  %v8412 = vpack.c.bf16 %v8380, %v8380
  %v8413 = vpack.c.bf16 %v8385, %v8385
  %v8414 = vpack.c.bf16 %v8390, %v8390
  %s8415 = scalar_lea.vmem %s6, 2112
  %v8416 = vld [vmem:[%s8415] sm:$0xf]
  %v8417 = vld [vmem:[%s8415 + $0x4] sm:$0xf]
  %v8418 = vld [vmem:[%s8415 + $0x8] sm:$0xf]
  %v8419 = vld [vmem:[%s8415 + $0xc] sm:$0xf]
  %v8420 = vld [vmem:[%s8415 + $0x10] sm:$0xf]
  %v8421 = vld [vmem:[%s8415 + $0x14] sm:$0xf]
  %v8422 = vld [vmem:[%s8415 + $0x18] sm:$0xf]
  %v8423 = vld [vmem:[%s8415 + $0x1c] sm:$0xf]
  %v8424 = vld [vmem:[%s8415 + $0x20] sm:$0xf]
  %v8425 = vld [vmem:[%s8415 + $0x24] sm:$0xf]
  %v8426 = vld [vmem:[%s8415 + $0x28] sm:$0xf]
  %v8427 = vld [vmem:[%s8415 + $0x2c] sm:$0xf]
  %v8428 = vld [vmem:[%s8415 + $0x30] sm:$0xf]
  %v8429 = vld [vmem:[%s8415 + $0x34] sm:$0xf]
  %v8430 = vld [vmem:[%s8415 + $0x38] sm:$0xf]
  %v8431 = vld [vmem:[%s8415 + $0x3c] sm:$0xf]
  %v8432 = vld [vmem:[%s8415 + $0x40] sm:$0xf]
  %v8433 = vld [vmem:[%s8415 + $0x44] sm:$0xf]
  %v8434 = vld [vmem:[%s8415 + $0x48] sm:$0xf]
  %v8435 = vld [vmem:[%s8415 + $0x4c] sm:$0xf]
  %v8436 = vld [vmem:[%s8415 + $0x50] sm:$0xf]
  %v8437 = vld [vmem:[%s8415 + $0x54] sm:$0xf]
  %v8438 = vld [vmem:[%s8415 + $0x58] sm:$0xf]
  %v8439 = vld [vmem:[%s8415 + $0x5c] sm:$0xf]
  %v8440 = vld [vmem:[%s8415 + $0x60] sm:$0xf]
  %v8441 = vld [vmem:[%s8415 + $0x64] sm:$0xf]
  %v8442 = vld [vmem:[%s8415 + $0x68] sm:$0xf]
  %v8443 = vld [vmem:[%s8415 + $0x6c] sm:$0xf]
  %v8444 = vld [vmem:[%s8415 + $0x70] sm:$0xf]
  %v8445 = vld [vmem:[%s8415 + $0x74] sm:$0xf]
  %v8446 = vld [vmem:[%s8415 + $0x78] sm:$0xf]
  %v8447 = vld [vmem:[%s8415 + $0x7c] sm:$0xf]
  %v8448 = vld [vmem:[%s8415 + $0x80] sm:$0xf]
  %v8449 = vld [vmem:[%s8415 + $0x84] sm:$0xf]
  %v8450 = vld [vmem:[%s8415 + $0x88] sm:$0xf]
  %v8451 = vld [vmem:[%s8415 + $0x8c] sm:$0xf]
  %v8452 = vld [vmem:[%s8415 + $0x90] sm:$0xf]
  %v8453 = vld [vmem:[%s8415 + $0x94] sm:$0xf]
  %v8454 = vld [vmem:[%s8415 + $0x98] sm:$0xf]
  %v8455 = vld [vmem:[%s8415 + $0x9c] sm:$0xf]
  %v8456 = vld [vmem:[%s8415 + $0xa0] sm:$0xf]
  %v8457 = vld [vmem:[%s8415 + $0xa4] sm:$0xf]
  %v8458 = vld [vmem:[%s8415 + $0xa8] sm:$0xf]
  %v8459 = vld [vmem:[%s8415 + $0xac] sm:$0xf]
  %v8460 = vld [vmem:[%s8415 + $0xb0] sm:$0xf]
  %v8461 = vld [vmem:[%s8415 + $0xb4] sm:$0xf]
  %v8462 = vld [vmem:[%s8415 + $0xb8] sm:$0xf]
  %v8463 = vld [vmem:[%s8415 + $0xbc] sm:$0xf]
  %v8464 = vld [vmem:[%s8415 + $0xc0] sm:$0xf]
  %v8465 = vld [vmem:[%s8415 + $0xc4] sm:$0xf]
  %v8466 = vld [vmem:[%s8415 + $0xc8] sm:$0xf]
  %v8467 = vld [vmem:[%s8415 + $0xcc] sm:$0xf]
  %v8468 = vld [vmem:[%s8415 + $0xd0] sm:$0xf]
  %v8469 = vld [vmem:[%s8415 + $0xd4] sm:$0xf]
  %v8470 = vld [vmem:[%s8415 + $0xd8] sm:$0xf]
  %v8471 = vld [vmem:[%s8415 + $0xdc] sm:$0xf]
  %v8472 = vld [vmem:[%s8415 + $0xe0] sm:$0xf]
  %v8473 = vld [vmem:[%s8415 + $0xe4] sm:$0xf]
  %v8474 = vld [vmem:[%s8415 + $0xe8] sm:$0xf]
  %v8475 = vld [vmem:[%s8415 + $0xec] sm:$0xf]
  %v8476 = vld [vmem:[%s8415 + $0xf0] sm:$0xf]
  %v8477 = vld [vmem:[%s8415 + $0xf4] sm:$0xf]
  %v8478 = vld [vmem:[%s8415 + $0xf8] sm:$0xf]
  %v8479 = vld [vmem:[%s8415 + $0xfc] sm:$0xf]
  %v8480 = vld [vmem:[%s8415 + $0x100] sm:$0xf]
  %v8481 = vld [vmem:[%s8415 + $0x104] sm:$0xf]
  %v8482 = vld [vmem:[%s8415 + $0x108] sm:$0xf]
  %v8483 = vld [vmem:[%s8415 + $0x10c] sm:$0xf]
  %v8484 = vld [vmem:[%s8415 + $0x110] sm:$0xf]
  %v8485 = vld [vmem:[%s8415 + $0x114] sm:$0xf]
  %v8486 = vld [vmem:[%s8415 + $0x118] sm:$0xf]
  %v8487 = vld [vmem:[%s8415 + $0x11c] sm:$0xf]
  %v8488 = vld [vmem:[%s8415 + $0x120] sm:$0xf]
  %v8489 = vld [vmem:[%s8415 + $0x124] sm:$0xf]
  %v8490 = vld [vmem:[%s8415 + $0x128] sm:$0xf]
  %v8491 = vld [vmem:[%s8415 + $0x12c] sm:$0xf]
  %v8492 = vld [vmem:[%s8415 + $0x130] sm:$0xf]
  %v8493 = vld [vmem:[%s8415 + $0x134] sm:$0xf]
  %v8494 = vld [vmem:[%s8415 + $0x138] sm:$0xf]
  %v8495 = vld [vmem:[%s8415 + $0x13c] sm:$0xf]
  %v8496 = vld [vmem:[%s8415 + $0x140] sm:$0xf]
  %v8497 = vld [vmem:[%s8415 + $0x144] sm:$0xf]
  %v8498 = vld [vmem:[%s8415 + $0x148] sm:$0xf]
  %v8499 = vld [vmem:[%s8415 + $0x14c] sm:$0xf]
  %v8500 = vld [vmem:[%s8415 + $0x150] sm:$0xf]
  %v8501 = vld [vmem:[%s8415 + $0x154] sm:$0xf]
  %v8502 = vld [vmem:[%s8415 + $0x158] sm:$0xf]
  %v8503 = vld [vmem:[%s8415 + $0x15c] sm:$0xf]
  %v8504 = vld [vmem:[%s8415 + $0x160] sm:$0xf]
  %v8505 = vld [vmem:[%s8415 + $0x164] sm:$0xf]
  %v8506 = vld [vmem:[%s8415 + $0x168] sm:$0xf]
  %v8507 = vld [vmem:[%s8415 + $0x16c] sm:$0xf]
  %v8508 = vld [vmem:[%s8415 + $0x170] sm:$0xf]
  %v8509 = vld [vmem:[%s8415 + $0x174] sm:$0xf]
  %v8510 = vld [vmem:[%s8415 + $0x178] sm:$0xf]
  %v8511 = vld [vmem:[%s8415 + $0x17c] sm:$0xf]
  %v8512 = vld [vmem:[%s8415 + $0x180] sm:$0xf]
  %v8513 = vld [vmem:[%s8415 + $0x184] sm:$0xf]
  %v8514 = vld [vmem:[%s8415 + $0x188] sm:$0xf]
  %v8515 = vld [vmem:[%s8415 + $0x18c] sm:$0xf]
  %v8516 = vld [vmem:[%s8415 + $0x190] sm:$0xf]
  %v8517 = vld [vmem:[%s8415 + $0x194] sm:$0xf]
  %v8518 = vld [vmem:[%s8415 + $0x198] sm:$0xf]
  %v8519 = vld [vmem:[%s8415 + $0x19c] sm:$0xf]
  %v8520 = vld [vmem:[%s8415 + $0x1a0] sm:$0xf]
  %v8521 = vld [vmem:[%s8415 + $0x1a4] sm:$0xf]
  %v8522 = vld [vmem:[%s8415 + $0x1a8] sm:$0xf]
  %v8523 = vld [vmem:[%s8415 + $0x1ac] sm:$0xf]
  %v8524 = vld [vmem:[%s8415 + $0x1b0] sm:$0xf]
  %v8525 = vld [vmem:[%s8415 + $0x1b4] sm:$0xf]
  %v8526 = vld [vmem:[%s8415 + $0x1b8] sm:$0xf]
  %v8527 = vld [vmem:[%s8415 + $0x1bc] sm:$0xf]
  %v8528 = vld [vmem:[%s8415 + $0x1c0] sm:$0xf]
  %v8529 = vld [vmem:[%s8415 + $0x1c4] sm:$0xf]
  %v8530 = vld [vmem:[%s8415 + $0x1c8] sm:$0xf]
  %v8531 = vld [vmem:[%s8415 + $0x1cc] sm:$0xf]
  %v8532 = vld [vmem:[%s8415 + $0x1d0] sm:$0xf]
  %v8533 = vld [vmem:[%s8415 + $0x1d4] sm:$0xf]
  %v8534 = vld [vmem:[%s8415 + $0x1d8] sm:$0xf]
  %v8535 = vld [vmem:[%s8415 + $0x1dc] sm:$0xf]
  %v8536 = vld [vmem:[%s8415 + $0x1e0] sm:$0xf]
  %v8537 = vld [vmem:[%s8415 + $0x1e4] sm:$0xf]
  %v8538 = vld [vmem:[%s8415 + $0x1e8] sm:$0xf]
  %v8539 = vld [vmem:[%s8415 + $0x1ec] sm:$0xf]
  %v8540 = vld [vmem:[%s8415 + $0x1f0] sm:$0xf]
  %v8541 = vld [vmem:[%s8415 + $0x1f4] sm:$0xf]
  %v8542 = vld [vmem:[%s8415 + $0x1f8] sm:$0xf]
  %v8543 = vld [vmem:[%s8415 + $0x1fc] sm:$0xf]
  %v8544 = vld [vmem:[%s8415 + $0x200] sm:$0xf]
  %v8545 = vld [vmem:[%s8415 + $0x204] sm:$0xf]
  %v8546 = vld [vmem:[%s8415 + $0x208] sm:$0xf]
  %v8547 = vld [vmem:[%s8415 + $0x20c] sm:$0xf]
  %v8548 = vld [vmem:[%s8415 + $0x210] sm:$0xf]
  %v8549 = vld [vmem:[%s8415 + $0x214] sm:$0xf]
  %v8550 = vld [vmem:[%s8415 + $0x218] sm:$0xf]
  %v8551 = vld [vmem:[%s8415 + $0x21c] sm:$0xf]
  %v8552 = vld [vmem:[%s8415 + $0x220] sm:$0xf]
  %v8553 = vld [vmem:[%s8415 + $0x224] sm:$0xf]
  %v8554 = vld [vmem:[%s8415 + $0x228] sm:$0xf]
  %v8555 = vld [vmem:[%s8415 + $0x22c] sm:$0xf]
  %v8556 = vld [vmem:[%s8415 + $0x230] sm:$0xf]
  %v8557 = vld [vmem:[%s8415 + $0x234] sm:$0xf]
  %v8558 = vld [vmem:[%s8415 + $0x238] sm:$0xf]
  %v8559 = vld [vmem:[%s8415 + $0x23c] sm:$0xf]
  %v8560 = vld [vmem:[%s8415 + $0x240] sm:$0xf]
  %v8561 = vld [vmem:[%s8415 + $0x244] sm:$0xf]
  %v8562 = vld [vmem:[%s8415 + $0x248] sm:$0xf]
  %v8563 = vld [vmem:[%s8415 + $0x24c] sm:$0xf]
  %v8564 = vld [vmem:[%s8415 + $0x250] sm:$0xf]
  %v8565 = vld [vmem:[%s8415 + $0x254] sm:$0xf]
  %v8566 = vld [vmem:[%s8415 + $0x258] sm:$0xf]
  %v8567 = vld [vmem:[%s8415 + $0x25c] sm:$0xf]
  %v8568 = vld [vmem:[%s8415 + $0x260] sm:$0xf]
  %v8569 = vld [vmem:[%s8415 + $0x264] sm:$0xf]
  %v8570 = vld [vmem:[%s8415 + $0x268] sm:$0xf]
  %v8571 = vld [vmem:[%s8415 + $0x26c] sm:$0xf]
  %v8572 = vld [vmem:[%s8415 + $0x270] sm:$0xf]
  %v8573 = vld [vmem:[%s8415 + $0x274] sm:$0xf]
  %v8574 = vld [vmem:[%s8415 + $0x278] sm:$0xf]
  %v8575 = vld [vmem:[%s8415 + $0x27c] sm:$0xf]
  %v8576 = vld [vmem:[%s8415 + $0x280] sm:$0xf]
  %v8577 = vld [vmem:[%s8415 + $0x284] sm:$0xf]
  %v8578 = vld [vmem:[%s8415 + $0x288] sm:$0xf]
  %v8579 = vld [vmem:[%s8415 + $0x28c] sm:$0xf]
  %v8580 = vld [vmem:[%s8415 + $0x290] sm:$0xf]
  %v8581 = vld [vmem:[%s8415 + $0x294] sm:$0xf]
  %v8582 = vld [vmem:[%s8415 + $0x298] sm:$0xf]
  %v8583 = vld [vmem:[%s8415 + $0x29c] sm:$0xf]
  %v8584 = vld [vmem:[%s8415 + $0x2a0] sm:$0xf]
  %v8585 = vld [vmem:[%s8415 + $0x2a4] sm:$0xf]
  %v8586 = vld [vmem:[%s8415 + $0x2a8] sm:$0xf]
  %v8587 = vld [vmem:[%s8415 + $0x2ac] sm:$0xf]
  %v8588 = vld [vmem:[%s8415 + $0x2b0] sm:$0xf]
  %v8589 = vld [vmem:[%s8415 + $0x2b4] sm:$0xf]
  %v8590 = vld [vmem:[%s8415 + $0x2b8] sm:$0xf]
  %v8591 = vld [vmem:[%s8415 + $0x2bc] sm:$0xf]
  %v8600 = vunpack.c.l.b16 %v8416
  %v8601 = vunpack.c.l.b16 %v8417
  %v8602 = vunpack.c.l.b16 %v8418
  %v8603 = vunpack.c.l.b16 %v8419
  %v8604 = vunpack.c.l.b16 %v8420
  %v8605 = vunpack.c.l.b16 %v8421
  %v8606 = vunpack.c.l.b16 %v8422
  %v8607 = vunpack.c.l.b16 %v8423
  %v8608 = vpack.c.b16 %v8601, %v8600
  %v8609 = vpack.c.b16 %v8603, %v8602
  %v8610 = vpack.c.b16 %v8605, %v8604
  %v8611 = vpack.c.b16 %v8607, %v8606
  %v8617 = vsel %vm316, %v8393, 0
  %8619 = vmatprep.subr.bf16.mxu0 0
  %8620 = vmatpush1.bf16.msra.mxu0 %v8608
  %8621 = vmatprep.subr.bf16.mxu0 0
  %8622 = vmatpush1.bf16.msra.mxu0 %v8609
  %8623 = vmatprep.subr.bf16.mxu0 0
  %8624 = vmatpush1.bf16.msra.mxu0 %v8610
  %8625 = vmatprep.subr.bf16.mxu0 0
  %8626 = vmatpush1.bf16.msra.mxu0 %v8611
  %8627 = vmatprep.subr.bf16.mxu0 0
  %8628 = vmatpush1.bf16.msra.mxu0 0
  %8629 = vmatprep.subr.bf16.mxu0 0
  %8630 = vmatpush1.bf16.msra.mxu0 0
  %8631 = vmatprep.subr.bf16.mxu0 0
  %8632 = vmatpush1.bf16.msra.mxu0 0
  %8633 = vmatprep.subr.bf16.mxu0 0
  %8634 = vmatpush1.bf16.msra.mxu0 0
  %8635 = vmatprep.subr.bf16.mxu0 0
  %8636 = vmatpush1.bf16.msra.mxu0 0
  %8637 = vmatprep.subr.bf16.mxu0 0
  %8638 = vmatpush1.bf16.msra.mxu0 0
  %8639 = vmatprep.subr.bf16.mxu0 0
  %8640 = vmatpush1.bf16.msra.mxu0 0
  %8641 = vmatprep.subr.bf16.mxu0 0
  %8642 = vmatpush1.bf16.msra.mxu0 0
  %8643 = vmatprep.subr.bf16.mxu0 0
  %8644 = vmatpush1.bf16.msra.mxu0 0
  %8645 = vmatprep.subr.bf16.mxu0 0
  %8646 = vmatpush1.bf16.msra.mxu0 0
  %8647 = vmatprep.subr.bf16.mxu0 0
  %8648 = vmatpush1.bf16.msra.mxu0 0
  %8649 = vmatprep.subr.bf16.mxu0 0
  %8650 = vmatpush1.bf16.msra.mxu0 0
  %8651 = vmatprep.mubr.bf16.mxu0 0
  %8652 = vmatmul.mubr.bf16.gmra.mrb[0].mxu0 %v8617
  %v8653 = vpop.f32.mrb[0].mxu0
  %v8654 = vadd.f32 0.0, %v8653
  %v8655 = vpop.f32.mrb[0].mxu0
  %v8656 = vpop.f32.mrb[0].mxu0
  %v8657 = vpop.f32.mrb[0].mxu0
  %8658 = vdwg.mxu0
  %v8667 = vunpack.c.l.b16 %v8424
  %v8668 = vunpack.c.l.b16 %v8425
  %v8669 = vunpack.c.l.b16 %v8426
  %v8670 = vunpack.c.l.b16 %v8427
  %v8671 = vunpack.c.l.b16 %v8428
  %v8672 = vunpack.c.l.b16 %v8429
  %v8673 = vunpack.c.l.b16 %v8430
  %v8674 = vunpack.c.l.b16 %v8431
  %v8675 = vpack.c.b16 %v8668, %v8667
  %v8676 = vpack.c.b16 %v8670, %v8669
  %v8677 = vpack.c.b16 %v8672, %v8671
  %v8678 = vpack.c.b16 %v8674, %v8673
  %v8684 = vsel %vm316, %v8394, 0
  %8686 = vmatprep.subr.bf16.mxu0 0
  %8687 = vmatpush1.bf16.msra.mxu0 %v8675
  %8688 = vmatprep.subr.bf16.mxu0 0
  %8689 = vmatpush1.bf16.msra.mxu0 %v8676
  %8690 = vmatprep.subr.bf16.mxu0 0
  %8691 = vmatpush1.bf16.msra.mxu0 %v8677
  %8692 = vmatprep.subr.bf16.mxu0 0
  %8693 = vmatpush1.bf16.msra.mxu0 %v8678
  %8694 = vmatprep.subr.bf16.mxu0 0
  %8695 = vmatpush1.bf16.msra.mxu0 0
  %8696 = vmatprep.subr.bf16.mxu0 0
  %8697 = vmatpush1.bf16.msra.mxu0 0
  %8698 = vmatprep.subr.bf16.mxu0 0
  %8699 = vmatpush1.bf16.msra.mxu0 0
  %8700 = vmatprep.subr.bf16.mxu0 0
  %8701 = vmatpush1.bf16.msra.mxu0 0
  %8702 = vmatprep.subr.bf16.mxu0 0
  %8703 = vmatpush1.bf16.msra.mxu0 0
  %8704 = vmatprep.subr.bf16.mxu0 0
  %8705 = vmatpush1.bf16.msra.mxu0 0
  %8706 = vmatprep.subr.bf16.mxu0 0
  %8707 = vmatpush1.bf16.msra.mxu0 0
  %8708 = vmatprep.subr.bf16.mxu0 0
  %8709 = vmatpush1.bf16.msra.mxu0 0
  %8710 = vmatprep.subr.bf16.mxu0 0
  %8711 = vmatpush1.bf16.msra.mxu0 0
  %8712 = vmatprep.subr.bf16.mxu0 0
  %8713 = vmatpush1.bf16.msra.mxu0 0
  %8714 = vmatprep.subr.bf16.mxu0 0
  %8715 = vmatpush1.bf16.msra.mxu0 0
  %8716 = vmatprep.subr.bf16.mxu0 0
  %8717 = vmatpush1.bf16.msra.mxu0 0
  %8718 = vmatprep.mubr.bf16.mxu0 0
  %8719 = vmatmul.mubr.bf16.gmra.mrb[0].mxu0 %v8684
  %v8720 = vpop.f32.mrb[0].mxu0
  %v8721 = vadd.f32 0.0, %v8720
  %v8722 = vpop.f32.mrb[0].mxu0
  %v8723 = vpop.f32.mrb[0].mxu0
  %v8724 = vpop.f32.mrb[0].mxu0
  %8725 = vdwg.mxu0
  %v8734 = vunpack.c.l.b16 %v8432
  %v8735 = vunpack.c.l.b16 %v8433
  %v8736 = vunpack.c.l.b16 %v8434
  %v8737 = vunpack.c.l.b16 %v8435
  %v8738 = vunpack.c.l.b16 %v8436
  %v8739 = vunpack.c.l.b16 %v8437
  %v8740 = vunpack.c.l.b16 %v8438
  %v8741 = vunpack.c.l.b16 %v8439
  %v8742 = vpack.c.b16 %v8735, %v8734
  %v8743 = vpack.c.b16 %v8737, %v8736
  %v8744 = vpack.c.b16 %v8739, %v8738
  %v8745 = vpack.c.b16 %v8741, %v8740
  %v8751 = vsel %vm316, %v8395, 0
  %8753 = vmatprep.subr.bf16.mxu0 0
  %8754 = vmatpush1.bf16.msra.mxu0 %v8742
  %8755 = vmatprep.subr.bf16.mxu0 0
  %8756 = vmatpush1.bf16.msra.mxu0 %v8743
  %8757 = vmatprep.subr.bf16.mxu0 0
  %8758 = vmatpush1.bf16.msra.mxu0 %v8744
  %8759 = vmatprep.subr.bf16.mxu0 0
  %8760 = vmatpush1.bf16.msra.mxu0 %v8745
  %8761 = vmatprep.subr.bf16.mxu0 0
  %8762 = vmatpush1.bf16.msra.mxu0 0
  %8763 = vmatprep.subr.bf16.mxu0 0
  %8764 = vmatpush1.bf16.msra.mxu0 0
  %8765 = vmatprep.subr.bf16.mxu0 0
  %8766 = vmatpush1.bf16.msra.mxu0 0
  %8767 = vmatprep.subr.bf16.mxu0 0
  %8768 = vmatpush1.bf16.msra.mxu0 0
  %8769 = vmatprep.subr.bf16.mxu0 0
  %8770 = vmatpush1.bf16.msra.mxu0 0
  %8771 = vmatprep.subr.bf16.mxu0 0
  %8772 = vmatpush1.bf16.msra.mxu0 0
  %8773 = vmatprep.subr.bf16.mxu0 0
  %8774 = vmatpush1.bf16.msra.mxu0 0
  %8775 = vmatprep.subr.bf16.mxu0 0
  %8776 = vmatpush1.bf16.msra.mxu0 0
  %8777 = vmatprep.subr.bf16.mxu0 0
  %8778 = vmatpush1.bf16.msra.mxu0 0
  %8779 = vmatprep.subr.bf16.mxu0 0
  %8780 = vmatpush1.bf16.msra.mxu0 0
  %8781 = vmatprep.subr.bf16.mxu0 0
  %8782 = vmatpush1.bf16.msra.mxu0 0
  %8783 = vmatprep.subr.bf16.mxu0 0
  %8784 = vmatpush1.bf16.msra.mxu0 0
  %8785 = vmatprep.mubr.bf16.mxu0 0
  %8786 = vmatmul.mubr.bf16.gmra.mrb[0].mxu0 %v8751
  %v8787 = vpop.f32.mrb[0].mxu0
  %v8788 = vadd.f32 0.0, %v8787
  %v8789 = vpop.f32.mrb[0].mxu0
  %v8790 = vpop.f32.mrb[0].mxu0
  %v8791 = vpop.f32.mrb[0].mxu0
  %8792 = vdwg.mxu0
  %v8801 = vunpack.c.l.b16 %v8440
  %v8802 = vunpack.c.l.b16 %v8441
  %v8803 = vunpack.c.l.b16 %v8442
  %v8804 = vunpack.c.l.b16 %v8443
  %v8805 = vunpack.c.l.b16 %v8444
  %v8806 = vunpack.c.l.b16 %v8445
  %v8807 = vunpack.c.l.b16 %v8446
  %v8808 = vunpack.c.l.b16 %v8447
  %v8809 = vpack.c.b16 %v8802, %v8801
  %v8810 = vpack.c.b16 %v8804, %v8803
  %v8811 = vpack.c.b16 %v8806, %v8805
  %v8812 = vpack.c.b16 %v8808, %v8807
  %v8818 = vsel %vm316, %v8396, 0
  %8820 = vmatprep.subr.bf16.mxu0 0
  %8821 = vmatpush1.bf16.msra.mxu0 %v8809
  %8822 = vmatprep.subr.bf16.mxu0 0
  %8823 = vmatpush1.bf16.msra.mxu0 %v8810
  %8824 = vmatprep.subr.bf16.mxu0 0
  %8825 = vmatpush1.bf16.msra.mxu0 %v8811
  %8826 = vmatprep.subr.bf16.mxu0 0
  %8827 = vmatpush1.bf16.msra.mxu0 %v8812
  %8828 = vmatprep.subr.bf16.mxu0 0
  %8829 = vmatpush1.bf16.msra.mxu0 0
  %8830 = vmatprep.subr.bf16.mxu0 0
  %8831 = vmatpush1.bf16.msra.mxu0 0
  %8832 = vmatprep.subr.bf16.mxu0 0
  %8833 = vmatpush1.bf16.msra.mxu0 0
  %8834 = vmatprep.subr.bf16.mxu0 0
  %8835 = vmatpush1.bf16.msra.mxu0 0
  %8836 = vmatprep.subr.bf16.mxu0 0
  %8837 = vmatpush1.bf16.msra.mxu0 0
  %8838 = vmatprep.subr.bf16.mxu0 0
  %8839 = vmatpush1.bf16.msra.mxu0 0
  %8840 = vmatprep.subr.bf16.mxu0 0
  %8841 = vmatpush1.bf16.msra.mxu0 0
  %8842 = vmatprep.subr.bf16.mxu0 0
  %8843 = vmatpush1.bf16.msra.mxu0 0
  %8844 = vmatprep.subr.bf16.mxu0 0
  %8845 = vmatpush1.bf16.msra.mxu0 0
  %8846 = vmatprep.subr.bf16.mxu0 0
  %8847 = vmatpush1.bf16.msra.mxu0 0
  %8848 = vmatprep.subr.bf16.mxu0 0
  %8849 = vmatpush1.bf16.msra.mxu0 0
  %8850 = vmatprep.subr.bf16.mxu0 0
  %8851 = vmatpush1.bf16.msra.mxu0 0
  %8852 = vmatprep.mubr.bf16.mxu0 0
  %8853 = vmatmul.mubr.bf16.gmra.mrb[0].mxu0 %v8818
  %v8854 = vpop.f32.mrb[0].mxu0
  %v8855 = vadd.f32 0.0, %v8854
  %v8856 = vpop.f32.mrb[0].mxu0
  %v8857 = vpop.f32.mrb[0].mxu0
  %v8858 = vpop.f32.mrb[0].mxu0
  %8859 = vdwg.mxu0
  %v8868 = vunpack.c.l.b16 %v8448
  %v8869 = vunpack.c.l.b16 %v8449
  %v8870 = vunpack.c.l.b16 %v8450
  %v8871 = vunpack.c.l.b16 %v8451
  %v8872 = vunpack.c.l.b16 %v8452
  %v8873 = vunpack.c.l.b16 %v8453
  %v8874 = vunpack.c.l.b16 %v8454
  %v8875 = vunpack.c.l.b16 %v8455
  %v8876 = vpack.c.b16 %v8869, %v8868
  %v8877 = vpack.c.b16 %v8871, %v8870
  %v8878 = vpack.c.b16 %v8873, %v8872
  %v8879 = vpack.c.b16 %v8875, %v8874
  %v8885 = vsel %vm316, %v8397, 0
  %8887 = vmatprep.subr.bf16.mxu0 0
  %8888 = vmatpush1.bf16.msra.mxu0 %v8876
  %8889 = vmatprep.subr.bf16.mxu0 0
  %8890 = vmatpush1.bf16.msra.mxu0 %v8877
  %8891 = vmatprep.subr.bf16.mxu0 0
  %8892 = vmatpush1.bf16.msra.mxu0 %v8878
  %8893 = vmatprep.subr.bf16.mxu0 0
  %8894 = vmatpush1.bf16.msra.mxu0 %v8879
  %8895 = vmatprep.subr.bf16.mxu0 0
  %8896 = vmatpush1.bf16.msra.mxu0 0
  %8897 = vmatprep.subr.bf16.mxu0 0
  %8898 = vmatpush1.bf16.msra.mxu0 0
  %8899 = vmatprep.subr.bf16.mxu0 0
  %8900 = vmatpush1.bf16.msra.mxu0 0
  %8901 = vmatprep.subr.bf16.mxu0 0
  %8902 = vmatpush1.bf16.msra.mxu0 0
  %8903 = vmatprep.subr.bf16.mxu0 0
  %8904 = vmatpush1.bf16.msra.mxu0 0
  %8905 = vmatprep.subr.bf16.mxu0 0
  %8906 = vmatpush1.bf16.msra.mxu0 0
  %8907 = vmatprep.subr.bf16.mxu0 0
  %8908 = vmatpush1.bf16.msra.mxu0 0
  %8909 = vmatprep.subr.bf16.mxu0 0
  %8910 = vmatpush1.bf16.msra.mxu0 0
  %8911 = vmatprep.subr.bf16.mxu0 0
  %8912 = vmatpush1.bf16.msra.mxu0 0
  %8913 = vmatprep.subr.bf16.mxu0 0
  %8914 = vmatpush1.bf16.msra.mxu0 0
  %8915 = vmatprep.subr.bf16.mxu0 0
  %8916 = vmatpush1.bf16.msra.mxu0 0
  %8917 = vmatprep.subr.bf16.mxu0 0
  %8918 = vmatpush1.bf16.msra.mxu0 0
  %8919 = vmatprep.mubr.bf16.mxu0 0
  %8920 = vmatmul.mubr.bf16.gmra.mrb[0].mxu0 %v8885
  %v8921 = vpop.f32.mrb[0].mxu0
  %v8922 = vadd.f32 0.0, %v8921
  %v8923 = vpop.f32.mrb[0].mxu0
  %v8924 = vpop.f32.mrb[0].mxu0
  %v8925 = vpop.f32.mrb[0].mxu0
  %8926 = vdwg.mxu0
  %v8935 = vunpack.c.l.b16 %v8456
  %v8936 = vunpack.c.l.b16 %v8457
  %v8937 = vunpack.c.l.b16 %v8458
  %v8938 = vunpack.c.l.b16 %v8459
  %v8939 = vunpack.c.l.b16 %v8460
  %v8940 = vunpack.c.l.b16 %v8461
  %v8941 = vunpack.c.l.b16 %v8462
  %v8942 = vunpack.c.l.b16 %v8463
  %v8943 = vpack.c.b16 %v8936, %v8935
  %v8944 = vpack.c.b16 %v8938, %v8937
  %v8945 = vpack.c.b16 %v8940, %v8939
  %v8946 = vpack.c.b16 %v8942, %v8941
  %v8952 = vsel %vm316, %v8398, 0
  %8954 = vmatprep.subr.bf16.mxu0 0
  %8955 = vmatpush1.bf16.msra.mxu0 %v8943
  %8956 = vmatprep.subr.bf16.mxu0 0
  %8957 = vmatpush1.bf16.msra.mxu0 %v8944
  %8958 = vmatprep.subr.bf16.mxu0 0
  %8959 = vmatpush1.bf16.msra.mxu0 %v8945
  %8960 = vmatprep.subr.bf16.mxu0 0
  %8961 = vmatpush1.bf16.msra.mxu0 %v8946
  %8962 = vmatprep.subr.bf16.mxu0 0
  %8963 = vmatpush1.bf16.msra.mxu0 0
  %8964 = vmatprep.subr.bf16.mxu0 0
  %8965 = vmatpush1.bf16.msra.mxu0 0
  %8966 = vmatprep.subr.bf16.mxu0 0
  %8967 = vmatpush1.bf16.msra.mxu0 0
  %8968 = vmatprep.subr.bf16.mxu0 0
  %8969 = vmatpush1.bf16.msra.mxu0 0
  %8970 = vmatprep.subr.bf16.mxu0 0
  %8971 = vmatpush1.bf16.msra.mxu0 0
  %8972 = vmatprep.subr.bf16.mxu0 0
  %8973 = vmatpush1.bf16.msra.mxu0 0
  %8974 = vmatprep.subr.bf16.mxu0 0
  %8975 = vmatpush1.bf16.msra.mxu0 0
  %8976 = vmatprep.subr.bf16.mxu0 0
  %8977 = vmatpush1.bf16.msra.mxu0 0
  %8978 = vmatprep.subr.bf16.mxu0 0
  %8979 = vmatpush1.bf16.msra.mxu0 0
  %8980 = vmatprep.subr.bf16.mxu0 0
  %8981 = vmatpush1.bf16.msra.mxu0 0
  %8982 = vmatprep.subr.bf16.mxu0 0
  %8983 = vmatpush1.bf16.msra.mxu0 0
  %8984 = vmatprep.subr.bf16.mxu0 0
  %8985 = vmatpush1.bf16.msra.mxu0 0
  %8986 = vmatprep.mubr.bf16.mxu0 0
  %8987 = vmatmul.mubr.bf16.gmra.mrb[0].mxu0 %v8952
  %v8988 = vpop.f32.mrb[0].mxu0
  %v8989 = vadd.f32 0.0, %v8988
  %v8990 = vpop.f32.mrb[0].mxu0
  %v8991 = vpop.f32.mrb[0].mxu0
  %v8992 = vpop.f32.mrb[0].mxu0
  %8993 = vdwg.mxu0
  %v9002 = vunpack.c.l.b16 %v8464
  %v9003 = vunpack.c.l.b16 %v8465
  %v9004 = vunpack.c.l.b16 %v8466
  %v9005 = vunpack.c.l.b16 %v8467
  %v9006 = vunpack.c.l.b16 %v8468
  %v9007 = vunpack.c.l.b16 %v8469
  %v9008 = vunpack.c.l.b16 %v8470
  %v9009 = vunpack.c.l.b16 %v8471
  %v9010 = vpack.c.b16 %v9003, %v9002
  %v9011 = vpack.c.b16 %v9005, %v9004
  %v9012 = vpack.c.b16 %v9007, %v9006
  %v9013 = vpack.c.b16 %v9009, %v9008
  %v9019 = vsel %vm316, %v8399, 0
  %9021 = vmatprep.subr.bf16.mxu0 0
  %9022 = vmatpush1.bf16.msra.mxu0 %v9010
  %9023 = vmatprep.subr.bf16.mxu0 0
  %9024 = vmatpush1.bf16.msra.mxu0 %v9011
  %9025 = vmatprep.subr.bf16.mxu0 0
  %9026 = vmatpush1.bf16.msra.mxu0 %v9012
  %9027 = vmatprep.subr.bf16.mxu0 0
  %9028 = vmatpush1.bf16.msra.mxu0 %v9013
  %9029 = vmatprep.subr.bf16.mxu0 0
  %9030 = vmatpush1.bf16.msra.mxu0 0
  %9031 = vmatprep.subr.bf16.mxu0 0
  %9032 = vmatpush1.bf16.msra.mxu0 0
  %9033 = vmatprep.subr.bf16.mxu0 0
  %9034 = vmatpush1.bf16.msra.mxu0 0
  %9035 = vmatprep.subr.bf16.mxu0 0
  %9036 = vmatpush1.bf16.msra.mxu0 0
  %9037 = vmatprep.subr.bf16.mxu0 0
  %9038 = vmatpush1.bf16.msra.mxu0 0
  %9039 = vmatprep.subr.bf16.mxu0 0
  %9040 = vmatpush1.bf16.msra.mxu0 0
  %9041 = vmatprep.subr.bf16.mxu0 0
  %9042 = vmatpush1.bf16.msra.mxu0 0
  %9043 = vmatprep.subr.bf16.mxu0 0
  %9044 = vmatpush1.bf16.msra.mxu0 0
  %9045 = vmatprep.subr.bf16.mxu0 0
  %9046 = vmatpush1.bf16.msra.mxu0 0
  %9047 = vmatprep.subr.bf16.mxu0 0
  %9048 = vmatpush1.bf16.msra.mxu0 0
  %9049 = vmatprep.subr.bf16.mxu0 0
  %9050 = vmatpush1.bf16.msra.mxu0 0
  %9051 = vmatprep.subr.bf16.mxu0 0
  %9052 = vmatpush1.bf16.msra.mxu0 0
  %9053 = vmatprep.mubr.bf16.mxu0 0
  %9054 = vmatmul.mubr.bf16.gmra.mrb[0].mxu0 %v9019
  %v9055 = vpop.f32.mrb[0].mxu0
  %v9056 = vadd.f32 0.0, %v9055
  %v9057 = vpop.f32.mrb[0].mxu0
  %v9058 = vpop.f32.mrb[0].mxu0
  %v9059 = vpop.f32.mrb[0].mxu0
  %9060 = vdwg.mxu0
  %v9069 = vunpack.c.l.b16 %v8472
  %v9070 = vunpack.c.l.b16 %v8473
  %v9071 = vunpack.c.l.b16 %v8474
  %v9072 = vunpack.c.l.b16 %v8475
  %v9073 = vunpack.c.l.b16 %v8476
  %v9074 = vunpack.c.l.b16 %v8477
  %v9075 = vunpack.c.l.b16 %v8478
  %v9076 = vunpack.c.l.b16 %v8479
  %v9077 = vpack.c.b16 %v9070, %v9069
  %v9078 = vpack.c.b16 %v9072, %v9071
  %v9079 = vpack.c.b16 %v9074, %v9073
  %v9080 = vpack.c.b16 %v9076, %v9075
  %v9086 = vsel %vm316, %v8400, 0
  %9088 = vmatprep.subr.bf16.mxu0 0
  %9089 = vmatpush1.bf16.msra.mxu0 %v9077
  %9090 = vmatprep.subr.bf16.mxu0 0
  %9091 = vmatpush1.bf16.msra.mxu0 %v9078
  %9092 = vmatprep.subr.bf16.mxu0 0
  %9093 = vmatpush1.bf16.msra.mxu0 %v9079
  %9094 = vmatprep.subr.bf16.mxu0 0
  %9095 = vmatpush1.bf16.msra.mxu0 %v9080
  %9096 = vmatprep.subr.bf16.mxu0 0
  %9097 = vmatpush1.bf16.msra.mxu0 0
  %9098 = vmatprep.subr.bf16.mxu0 0
  %9099 = vmatpush1.bf16.msra.mxu0 0
  %9100 = vmatprep.subr.bf16.mxu0 0
  %9101 = vmatpush1.bf16.msra.mxu0 0
  %9102 = vmatprep.subr.bf16.mxu0 0
  %9103 = vmatpush1.bf16.msra.mxu0 0
  %9104 = vmatprep.subr.bf16.mxu0 0
  %9105 = vmatpush1.bf16.msra.mxu0 0
  %9106 = vmatprep.subr.bf16.mxu0 0
  %9107 = vmatpush1.bf16.msra.mxu0 0
  %9108 = vmatprep.subr.bf16.mxu0 0
  %9109 = vmatpush1.bf16.msra.mxu0 0
  %9110 = vmatprep.subr.bf16.mxu0 0
  %9111 = vmatpush1.bf16.msra.mxu0 0
  %9112 = vmatprep.subr.bf16.mxu0 0
  %9113 = vmatpush1.bf16.msra.mxu0 0
  %9114 = vmatprep.subr.bf16.mxu0 0
  %9115 = vmatpush1.bf16.msra.mxu0 0
  %9116 = vmatprep.subr.bf16.mxu0 0
  %9117 = vmatpush1.bf16.msra.mxu0 0
  %9118 = vmatprep.subr.bf16.mxu0 0
  %9119 = vmatpush1.bf16.msra.mxu0 0
  %9120 = vmatprep.mubr.bf16.mxu0 0
  %9121 = vmatmul.mubr.bf16.gmra.mrb[0].mxu0 %v9086
  %v9122 = vpop.f32.mrb[0].mxu0
  %v9123 = vadd.f32 0.0, %v9122
  %v9124 = vpop.f32.mrb[0].mxu0
  %v9125 = vpop.f32.mrb[0].mxu0
  %v9126 = vpop.f32.mrb[0].mxu0
  %9127 = vdwg.mxu0
  %v9136 = vunpack.c.l.b16 %v8480
  %v9137 = vunpack.c.l.b16 %v8481
  %v9138 = vunpack.c.l.b16 %v8482
  %v9139 = vunpack.c.l.b16 %v8483
  %v9140 = vunpack.c.l.b16 %v8484
  %v9141 = vunpack.c.l.b16 %v8485
  %v9142 = vunpack.c.l.b16 %v8486
  %v9143 = vunpack.c.l.b16 %v8487
  %v9144 = vpack.c.b16 %v9137, %v9136
  %v9145 = vpack.c.b16 %v9139, %v9138
  %v9146 = vpack.c.b16 %v9141, %v9140
  %v9147 = vpack.c.b16 %v9143, %v9142
  %v9153 = vsel %vm316, %v8401, 0
  %9155 = vmatprep.subr.bf16.mxu0 0
  %9156 = vmatpush1.bf16.msra.mxu0 %v9144
  %9157 = vmatprep.subr.bf16.mxu0 0
  %9158 = vmatpush1.bf16.msra.mxu0 %v9145
  %9159 = vmatprep.subr.bf16.mxu0 0
  %9160 = vmatpush1.bf16.msra.mxu0 %v9146
  %9161 = vmatprep.subr.bf16.mxu0 0
  %9162 = vmatpush1.bf16.msra.mxu0 %v9147
  %9163 = vmatprep.subr.bf16.mxu0 0
  %9164 = vmatpush1.bf16.msra.mxu0 0
  %9165 = vmatprep.subr.bf16.mxu0 0
  %9166 = vmatpush1.bf16.msra.mxu0 0
  %9167 = vmatprep.subr.bf16.mxu0 0
  %9168 = vmatpush1.bf16.msra.mxu0 0
  %9169 = vmatprep.subr.bf16.mxu0 0
  %9170 = vmatpush1.bf16.msra.mxu0 0
  %9171 = vmatprep.subr.bf16.mxu0 0
  %9172 = vmatpush1.bf16.msra.mxu0 0
  %9173 = vmatprep.subr.bf16.mxu0 0
  %9174 = vmatpush1.bf16.msra.mxu0 0
  %9175 = vmatprep.subr.bf16.mxu0 0
  %9176 = vmatpush1.bf16.msra.mxu0 0
  %9177 = vmatprep.subr.bf16.mxu0 0
  %9178 = vmatpush1.bf16.msra.mxu0 0
  %9179 = vmatprep.subr.bf16.mxu0 0
  %9180 = vmatpush1.bf16.msra.mxu0 0
  %9181 = vmatprep.subr.bf16.mxu0 0
  %9182 = vmatpush1.bf16.msra.mxu0 0
  %9183 = vmatprep.subr.bf16.mxu0 0
  %9184 = vmatpush1.bf16.msra.mxu0 0
  %9185 = vmatprep.subr.bf16.mxu0 0
  %9186 = vmatpush1.bf16.msra.mxu0 0
  %9187 = vmatprep.mubr.bf16.mxu0 0
  %9188 = vmatmul.mubr.bf16.gmra.mrb[0].mxu0 %v9153
  %v9189 = vpop.f32.mrb[0].mxu0
  %v9190 = vadd.f32 0.0, %v9189
  %v9191 = vpop.f32.mrb[0].mxu0
  %v9192 = vpop.f32.mrb[0].mxu0
  %v9193 = vpop.f32.mrb[0].mxu0
  %9194 = vdwg.mxu0
  %v9203 = vunpack.c.l.b16 %v8488
  %v9204 = vunpack.c.l.b16 %v8489
  %v9205 = vunpack.c.l.b16 %v8490
  %v9206 = vunpack.c.l.b16 %v8491
  %v9207 = vunpack.c.l.b16 %v8492
  %v9208 = vunpack.c.l.b16 %v8493
  %v9209 = vunpack.c.l.b16 %v8494
  %v9210 = vunpack.c.l.b16 %v8495
  %v9211 = vpack.c.b16 %v9204, %v9203
  %v9212 = vpack.c.b16 %v9206, %v9205
  %v9213 = vpack.c.b16 %v9208, %v9207
  %v9214 = vpack.c.b16 %v9210, %v9209
  %v9220 = vsel %vm316, %v8402, 0
  %9222 = vmatprep.subr.bf16.mxu0 0
  %9223 = vmatpush1.bf16.msra.mxu0 %v9211
  %9224 = vmatprep.subr.bf16.mxu0 0
  %9225 = vmatpush1.bf16.msra.mxu0 %v9212
  %9226 = vmatprep.subr.bf16.mxu0 0
  %9227 = vmatpush1.bf16.msra.mxu0 %v9213
  %9228 = vmatprep.subr.bf16.mxu0 0
  %9229 = vmatpush1.bf16.msra.mxu0 %v9214
  %9230 = vmatprep.subr.bf16.mxu0 0
  %9231 = vmatpush1.bf16.msra.mxu0 0
  %9232 = vmatprep.subr.bf16.mxu0 0
  %9233 = vmatpush1.bf16.msra.mxu0 0
  %9234 = vmatprep.subr.bf16.mxu0 0
  %9235 = vmatpush1.bf16.msra.mxu0 0
  %9236 = vmatprep.subr.bf16.mxu0 0
  %9237 = vmatpush1.bf16.msra.mxu0 0
  %9238 = vmatprep.subr.bf16.mxu0 0
  %9239 = vmatpush1.bf16.msra.mxu0 0
  %9240 = vmatprep.subr.bf16.mxu0 0
  %9241 = vmatpush1.bf16.msra.mxu0 0
  %9242 = vmatprep.subr.bf16.mxu0 0
  %9243 = vmatpush1.bf16.msra.mxu0 0
  %9244 = vmatprep.subr.bf16.mxu0 0
  %9245 = vmatpush1.bf16.msra.mxu0 0
  %9246 = vmatprep.subr.bf16.mxu0 0
  %9247 = vmatpush1.bf16.msra.mxu0 0
  %9248 = vmatprep.subr.bf16.mxu0 0
  %9249 = vmatpush1.bf16.msra.mxu0 0
  %9250 = vmatprep.subr.bf16.mxu0 0
  %9251 = vmatpush1.bf16.msra.mxu0 0
  %9252 = vmatprep.subr.bf16.mxu0 0
  %9253 = vmatpush1.bf16.msra.mxu0 0
  %9254 = vmatprep.mubr.bf16.mxu0 0
  %9255 = vmatmul.mubr.bf16.gmra.mrb[0].mxu0 %v9220
  %v9256 = vpop.f32.mrb[0].mxu0
  %v9257 = vadd.f32 0.0, %v9256
  %v9258 = vpop.f32.mrb[0].mxu0
  %v9259 = vpop.f32.mrb[0].mxu0
  %v9260 = vpop.f32.mrb[0].mxu0
  %9261 = vdwg.mxu0
  %v9270 = vunpack.c.l.b16 %v8496
  %v9271 = vunpack.c.l.b16 %v8497
  %v9272 = vunpack.c.l.b16 %v8498
  %v9273 = vunpack.c.l.b16 %v8499
  %v9274 = vunpack.c.l.b16 %v8500
  %v9275 = vunpack.c.l.b16 %v8501
  %v9276 = vunpack.c.l.b16 %v8502
  %v9277 = vunpack.c.l.b16 %v8503
  %v9278 = vpack.c.b16 %v9271, %v9270
  %v9279 = vpack.c.b16 %v9273, %v9272
  %v9280 = vpack.c.b16 %v9275, %v9274
  %v9281 = vpack.c.b16 %v9277, %v9276
  %v9287 = vsel %vm316, %v8403, 0
  %9289 = vmatprep.subr.bf16.mxu0 0
  %9290 = vmatpush1.bf16.msra.mxu0 %v9278
  %9291 = vmatprep.subr.bf16.mxu0 0
  %9292 = vmatpush1.bf16.msra.mxu0 %v9279
  %9293 = vmatprep.subr.bf16.mxu0 0
  %9294 = vmatpush1.bf16.msra.mxu0 %v9280
  %9295 = vmatprep.subr.bf16.mxu0 0
  %9296 = vmatpush1.bf16.msra.mxu0 %v9281
  %9297 = vmatprep.subr.bf16.mxu0 0
  %9298 = vmatpush1.bf16.msra.mxu0 0
  %9299 = vmatprep.subr.bf16.mxu0 0
  %9300 = vmatpush1.bf16.msra.mxu0 0
  %9301 = vmatprep.subr.bf16.mxu0 0
  %9302 = vmatpush1.bf16.msra.mxu0 0
  %9303 = vmatprep.subr.bf16.mxu0 0
  %9304 = vmatpush1.bf16.msra.mxu0 0
  %9305 = vmatprep.subr.bf16.mxu0 0
  %9306 = vmatpush1.bf16.msra.mxu0 0
  %9307 = vmatprep.subr.bf16.mxu0 0
  %9308 = vmatpush1.bf16.msra.mxu0 0
  %9309 = vmatprep.subr.bf16.mxu0 0
  %9310 = vmatpush1.bf16.msra.mxu0 0
  %9311 = vmatprep.subr.bf16.mxu0 0
  %9312 = vmatpush1.bf16.msra.mxu0 0
  %9313 = vmatprep.subr.bf16.mxu0 0
  %9314 = vmatpush1.bf16.msra.mxu0 0
  %9315 = vmatprep.subr.bf16.mxu0 0
  %9316 = vmatpush1.bf16.msra.mxu0 0
  %9317 = vmatprep.subr.bf16.mxu0 0
  %9318 = vmatpush1.bf16.msra.mxu0 0
  %9319 = vmatprep.subr.bf16.mxu0 0
  %9320 = vmatpush1.bf16.msra.mxu0 0
  %9321 = vmatprep.mubr.bf16.mxu0 0
  %9322 = vmatmul.mubr.bf16.gmra.mrb[0].mxu0 %v9287
  %v9323 = vpop.f32.mrb[0].mxu0
  %v9324 = vadd.f32 0.0, %v9323
  %v9325 = vpop.f32.mrb[0].mxu0
  %v9326 = vpop.f32.mrb[0].mxu0
  %v9327 = vpop.f32.mrb[0].mxu0
  %9328 = vdwg.mxu0
  %v9337 = vunpack.c.l.b16 %v8504
  %v9338 = vunpack.c.l.b16 %v8505
  %v9339 = vunpack.c.l.b16 %v8506
  %v9340 = vunpack.c.l.b16 %v8507
  %v9341 = vunpack.c.l.b16 %v8508
  %v9342 = vunpack.c.l.b16 %v8509
  %v9343 = vunpack.c.l.b16 %v8510
  %v9344 = vunpack.c.l.b16 %v8511
  %v9345 = vpack.c.b16 %v9338, %v9337
  %v9346 = vpack.c.b16 %v9340, %v9339
  %v9347 = vpack.c.b16 %v9342, %v9341
  %v9348 = vpack.c.b16 %v9344, %v9343
  %v9354 = vsel %vm316, %v8404, 0
  %9356 = vmatprep.subr.bf16.mxu0 0
  %9357 = vmatpush1.bf16.msra.mxu0 %v9345
  %9358 = vmatprep.subr.bf16.mxu0 0
  %9359 = vmatpush1.bf16.msra.mxu0 %v9346
  %9360 = vmatprep.subr.bf16.mxu0 0
  %9361 = vmatpush1.bf16.msra.mxu0 %v9347
  %9362 = vmatprep.subr.bf16.mxu0 0
  %9363 = vmatpush1.bf16.msra.mxu0 %v9348
  %9364 = vmatprep.subr.bf16.mxu0 0
  %9365 = vmatpush1.bf16.msra.mxu0 0
  %9366 = vmatprep.subr.bf16.mxu0 0
  %9367 = vmatpush1.bf16.msra.mxu0 0
  %9368 = vmatprep.subr.bf16.mxu0 0
  %9369 = vmatpush1.bf16.msra.mxu0 0
  %9370 = vmatprep.subr.bf16.mxu0 0
  %9371 = vmatpush1.bf16.msra.mxu0 0
  %9372 = vmatprep.subr.bf16.mxu0 0
  %9373 = vmatpush1.bf16.msra.mxu0 0
  %9374 = vmatprep.subr.bf16.mxu0 0
  %9375 = vmatpush1.bf16.msra.mxu0 0
  %9376 = vmatprep.subr.bf16.mxu0 0
  %9377 = vmatpush1.bf16.msra.mxu0 0
  %9378 = vmatprep.subr.bf16.mxu0 0
  %9379 = vmatpush1.bf16.msra.mxu0 0
  %9380 = vmatprep.subr.bf16.mxu0 0
  %9381 = vmatpush1.bf16.msra.mxu0 0
  %9382 = vmatprep.subr.bf16.mxu0 0
  %9383 = vmatpush1.bf16.msra.mxu0 0
  %9384 = vmatprep.subr.bf16.mxu0 0
  %9385 = vmatpush1.bf16.msra.mxu0 0
  %9386 = vmatprep.subr.bf16.mxu0 0
  %9387 = vmatpush1.bf16.msra.mxu0 0
  %9388 = vmatprep.mubr.bf16.mxu0 0
  %9389 = vmatmul.mubr.bf16.gmra.mrb[0].mxu0 %v9354
  %v9390 = vpop.f32.mrb[0].mxu0
  %v9391 = vadd.f32 0.0, %v9390
  %v9392 = vpop.f32.mrb[0].mxu0
  %v9393 = vpop.f32.mrb[0].mxu0
  %v9394 = vpop.f32.mrb[0].mxu0
  %9395 = vdwg.mxu0
  %v9404 = vunpack.c.l.b16 %v8512
  %v9405 = vunpack.c.l.b16 %v8513
  %v9406 = vunpack.c.l.b16 %v8514
  %v9407 = vunpack.c.l.b16 %v8515
  %v9408 = vunpack.c.l.b16 %v8516
  %v9409 = vunpack.c.l.b16 %v8517
  %v9410 = vunpack.c.l.b16 %v8518
  %v9411 = vunpack.c.l.b16 %v8519
  %v9412 = vpack.c.b16 %v9405, %v9404
  %v9413 = vpack.c.b16 %v9407, %v9406
  %v9414 = vpack.c.b16 %v9409, %v9408
  %v9415 = vpack.c.b16 %v9411, %v9410
  %v9421 = vsel %vm316, %v8405, 0
  %9423 = vmatprep.subr.bf16.mxu0 0
  %9424 = vmatpush1.bf16.msra.mxu0 %v9412
  %9425 = vmatprep.subr.bf16.mxu0 0
  %9426 = vmatpush1.bf16.msra.mxu0 %v9413
  %9427 = vmatprep.subr.bf16.mxu0 0
  %9428 = vmatpush1.bf16.msra.mxu0 %v9414
  %9429 = vmatprep.subr.bf16.mxu0 0
  %9430 = vmatpush1.bf16.msra.mxu0 %v9415
  %9431 = vmatprep.subr.bf16.mxu0 0
  %9432 = vmatpush1.bf16.msra.mxu0 0
  %9433 = vmatprep.subr.bf16.mxu0 0
  %9434 = vmatpush1.bf16.msra.mxu0 0
  %9435 = vmatprep.subr.bf16.mxu0 0
  %9436 = vmatpush1.bf16.msra.mxu0 0
  %9437 = vmatprep.subr.bf16.mxu0 0
  %9438 = vmatpush1.bf16.msra.mxu0 0
  %9439 = vmatprep.subr.bf16.mxu0 0
  %9440 = vmatpush1.bf16.msra.mxu0 0
  %9441 = vmatprep.subr.bf16.mxu0 0
  %9442 = vmatpush1.bf16.msra.mxu0 0
  %9443 = vmatprep.subr.bf16.mxu0 0
  %9444 = vmatpush1.bf16.msra.mxu0 0
  %9445 = vmatprep.subr.bf16.mxu0 0
  %9446 = vmatpush1.bf16.msra.mxu0 0
  %9447 = vmatprep.subr.bf16.mxu0 0
  %9448 = vmatpush1.bf16.msra.mxu0 0
  %9449 = vmatprep.subr.bf16.mxu0 0
  %9450 = vmatpush1.bf16.msra.mxu0 0
  %9451 = vmatprep.subr.bf16.mxu0 0
  %9452 = vmatpush1.bf16.msra.mxu0 0
  %9453 = vmatprep.subr.bf16.mxu0 0
  %9454 = vmatpush1.bf16.msra.mxu0 0
  %9455 = vmatprep.mubr.bf16.mxu0 0
  %9456 = vmatmul.mubr.bf16.gmra.mrb[0].mxu0 %v9421
  %v9457 = vpop.f32.mrb[0].mxu0
  %v9458 = vadd.f32 0.0, %v9457
  %v9459 = vpop.f32.mrb[0].mxu0
  %v9460 = vpop.f32.mrb[0].mxu0
  %v9461 = vpop.f32.mrb[0].mxu0
  %9462 = vdwg.mxu0
  %v9471 = vunpack.c.l.b16 %v8520
  %v9472 = vunpack.c.l.b16 %v8521
  %v9473 = vunpack.c.l.b16 %v8522
  %v9474 = vunpack.c.l.b16 %v8523
  %v9475 = vunpack.c.l.b16 %v8524
  %v9476 = vunpack.c.l.b16 %v8525
  %v9477 = vunpack.c.l.b16 %v8526
  %v9478 = vunpack.c.l.b16 %v8527
  %v9479 = vpack.c.b16 %v9472, %v9471
  %v9480 = vpack.c.b16 %v9474, %v9473
  %v9481 = vpack.c.b16 %v9476, %v9475
  %v9482 = vpack.c.b16 %v9478, %v9477
  %v9488 = vsel %vm316, %v8406, 0
  %9490 = vmatprep.subr.bf16.mxu0 0
  %9491 = vmatpush1.bf16.msra.mxu0 %v9479
  %9492 = vmatprep.subr.bf16.mxu0 0
  %9493 = vmatpush1.bf16.msra.mxu0 %v9480
  %9494 = vmatprep.subr.bf16.mxu0 0
  %9495 = vmatpush1.bf16.msra.mxu0 %v9481
  %9496 = vmatprep.subr.bf16.mxu0 0
  %9497 = vmatpush1.bf16.msra.mxu0 %v9482
  %9498 = vmatprep.subr.bf16.mxu0 0
  %9499 = vmatpush1.bf16.msra.mxu0 0
  %9500 = vmatprep.subr.bf16.mxu0 0
  %9501 = vmatpush1.bf16.msra.mxu0 0
  %9502 = vmatprep.subr.bf16.mxu0 0
  %9503 = vmatpush1.bf16.msra.mxu0 0
  %9504 = vmatprep.subr.bf16.mxu0 0
  %9505 = vmatpush1.bf16.msra.mxu0 0
  %9506 = vmatprep.subr.bf16.mxu0 0
  %9507 = vmatpush1.bf16.msra.mxu0 0
  %9508 = vmatprep.subr.bf16.mxu0 0
  %9509 = vmatpush1.bf16.msra.mxu0 0
  %9510 = vmatprep.subr.bf16.mxu0 0
  %9511 = vmatpush1.bf16.msra.mxu0 0
  %9512 = vmatprep.subr.bf16.mxu0 0
  %9513 = vmatpush1.bf16.msra.mxu0 0
  %9514 = vmatprep.subr.bf16.mxu0 0
  %9515 = vmatpush1.bf16.msra.mxu0 0
  %9516 = vmatprep.subr.bf16.mxu0 0
  %9517 = vmatpush1.bf16.msra.mxu0 0
  %9518 = vmatprep.subr.bf16.mxu0 0
  %9519 = vmatpush1.bf16.msra.mxu0 0
  %9520 = vmatprep.subr.bf16.mxu0 0
  %9521 = vmatpush1.bf16.msra.mxu0 0
  %9522 = vmatprep.mubr.bf16.mxu0 0
  %9523 = vmatmul.mubr.bf16.gmra.mrb[0].mxu0 %v9488
  %v9524 = vpop.f32.mrb[0].mxu0
  %v9525 = vadd.f32 0.0, %v9524
  %v9526 = vpop.f32.mrb[0].mxu0
  %v9527 = vpop.f32.mrb[0].mxu0
  %v9528 = vpop.f32.mrb[0].mxu0
  %9529 = vdwg.mxu0
  %v9538 = vunpack.c.l.b16 %v8528
  %v9539 = vunpack.c.l.b16 %v8529
  %v9540 = vunpack.c.l.b16 %v8530
  %v9541 = vunpack.c.l.b16 %v8531
  %v9542 = vunpack.c.l.b16 %v8532
  %v9543 = vunpack.c.l.b16 %v8533
  %v9544 = vunpack.c.l.b16 %v8534
  %v9545 = vunpack.c.l.b16 %v8535
  %v9546 = vpack.c.b16 %v9539, %v9538
  %v9547 = vpack.c.b16 %v9541, %v9540
  %v9548 = vpack.c.b16 %v9543, %v9542
  %v9549 = vpack.c.b16 %v9545, %v9544
  %v9555 = vsel %vm316, %v8407, 0
  %9557 = vmatprep.subr.bf16.mxu0 0
  %9558 = vmatpush1.bf16.msra.mxu0 %v9546
  %9559 = vmatprep.subr.bf16.mxu0 0
  %9560 = vmatpush1.bf16.msra.mxu0 %v9547
  %9561 = vmatprep.subr.bf16.mxu0 0
  %9562 = vmatpush1.bf16.msra.mxu0 %v9548
  %9563 = vmatprep.subr.bf16.mxu0 0
  %9564 = vmatpush1.bf16.msra.mxu0 %v9549
  %9565 = vmatprep.subr.bf16.mxu0 0
  %9566 = vmatpush1.bf16.msra.mxu0 0
  %9567 = vmatprep.subr.bf16.mxu0 0
  %9568 = vmatpush1.bf16.msra.mxu0 0
  %9569 = vmatprep.subr.bf16.mxu0 0
  %9570 = vmatpush1.bf16.msra.mxu0 0
  %9571 = vmatprep.subr.bf16.mxu0 0
  %9572 = vmatpush1.bf16.msra.mxu0 0
  %9573 = vmatprep.subr.bf16.mxu0 0
  %9574 = vmatpush1.bf16.msra.mxu0 0
  %9575 = vmatprep.subr.bf16.mxu0 0
  %9576 = vmatpush1.bf16.msra.mxu0 0
  %9577 = vmatprep.subr.bf16.mxu0 0
  %9578 = vmatpush1.bf16.msra.mxu0 0
  %9579 = vmatprep.subr.bf16.mxu0 0
  %9580 = vmatpush1.bf16.msra.mxu0 0
  %9581 = vmatprep.subr.bf16.mxu0 0
  %9582 = vmatpush1.bf16.msra.mxu0 0
  %9583 = vmatprep.subr.bf16.mxu0 0
  %9584 = vmatpush1.bf16.msra.mxu0 0
  %9585 = vmatprep.subr.bf16.mxu0 0
  %9586 = vmatpush1.bf16.msra.mxu0 0
  %9587 = vmatprep.subr.bf16.mxu0 0
  %9588 = vmatpush1.bf16.msra.mxu0 0
  %9589 = vmatprep.mubr.bf16.mxu0 0
  %9590 = vmatmul.mubr.bf16.gmra.mrb[0].mxu0 %v9555
  %v9591 = vpop.f32.mrb[0].mxu0
  %v9592 = vadd.f32 0.0, %v9591
  %v9593 = vpop.f32.mrb[0].mxu0
  %v9594 = vpop.f32.mrb[0].mxu0
  %v9595 = vpop.f32.mrb[0].mxu0
  %9596 = vdwg.mxu0
  %v9605 = vunpack.c.l.b16 %v8536
  %v9606 = vunpack.c.l.b16 %v8537
  %v9607 = vunpack.c.l.b16 %v8538
  %v9608 = vunpack.c.l.b16 %v8539
  %v9609 = vunpack.c.l.b16 %v8540
  %v9610 = vunpack.c.l.b16 %v8541
  %v9611 = vunpack.c.l.b16 %v8542
  %v9612 = vunpack.c.l.b16 %v8543
  %v9613 = vpack.c.b16 %v9606, %v9605
  %v9614 = vpack.c.b16 %v9608, %v9607
  %v9615 = vpack.c.b16 %v9610, %v9609
  %v9616 = vpack.c.b16 %v9612, %v9611
  %v9622 = vsel %vm316, %v8408, 0
  %9624 = vmatprep.subr.bf16.mxu0 0
  %9625 = vmatpush1.bf16.msra.mxu0 %v9613
  %9626 = vmatprep.subr.bf16.mxu0 0
  %9627 = vmatpush1.bf16.msra.mxu0 %v9614
  %9628 = vmatprep.subr.bf16.mxu0 0
  %9629 = vmatpush1.bf16.msra.mxu0 %v9615
  %9630 = vmatprep.subr.bf16.mxu0 0
  %9631 = vmatpush1.bf16.msra.mxu0 %v9616
  %9632 = vmatprep.subr.bf16.mxu0 0
  %9633 = vmatpush1.bf16.msra.mxu0 0
  %9634 = vmatprep.subr.bf16.mxu0 0
  %9635 = vmatpush1.bf16.msra.mxu0 0
  %9636 = vmatprep.subr.bf16.mxu0 0
  %9637 = vmatpush1.bf16.msra.mxu0 0
  %9638 = vmatprep.subr.bf16.mxu0 0
  %9639 = vmatpush1.bf16.msra.mxu0 0
  %9640 = vmatprep.subr.bf16.mxu0 0
  %9641 = vmatpush1.bf16.msra.mxu0 0
  %9642 = vmatprep.subr.bf16.mxu0 0
  %9643 = vmatpush1.bf16.msra.mxu0 0
  %9644 = vmatprep.subr.bf16.mxu0 0
  %9645 = vmatpush1.bf16.msra.mxu0 0
  %9646 = vmatprep.subr.bf16.mxu0 0
  %9647 = vmatpush1.bf16.msra.mxu0 0
  %9648 = vmatprep.subr.bf16.mxu0 0
  %9649 = vmatpush1.bf16.msra.mxu0 0
  %9650 = vmatprep.subr.bf16.mxu0 0
  %9651 = vmatpush1.bf16.msra.mxu0 0
  %9652 = vmatprep.subr.bf16.mxu0 0
  %9653 = vmatpush1.bf16.msra.mxu0 0
  %9654 = vmatprep.subr.bf16.mxu0 0
  %9655 = vmatpush1.bf16.msra.mxu0 0
  %9656 = vmatprep.mubr.bf16.mxu0 0
  %9657 = vmatmul.mubr.bf16.gmra.mrb[0].mxu0 %v9622
  %v9658 = vpop.f32.mrb[0].mxu0
  %v9659 = vadd.f32 0.0, %v9658
  %v9660 = vpop.f32.mrb[0].mxu0
  %v9661 = vpop.f32.mrb[0].mxu0
  %v9662 = vpop.f32.mrb[0].mxu0
  %9663 = vdwg.mxu0
  %v9672 = vunpack.c.l.b16 %v8544
  %v9673 = vunpack.c.l.b16 %v8545
  %v9674 = vunpack.c.l.b16 %v8546
  %v9675 = vunpack.c.l.b16 %v8547
  %v9676 = vunpack.c.l.b16 %v8548
  %v9677 = vunpack.c.l.b16 %v8549
  %v9678 = vunpack.c.l.b16 %v8550
  %v9679 = vunpack.c.l.b16 %v8551
  %v9680 = vpack.c.b16 %v9673, %v9672
  %v9681 = vpack.c.b16 %v9675, %v9674
  %v9682 = vpack.c.b16 %v9677, %v9676
  %v9683 = vpack.c.b16 %v9679, %v9678
  %v9689 = vsel %vm316, %v8409, 0
  %9691 = vmatprep.subr.bf16.mxu0 0
  %9692 = vmatpush1.bf16.msra.mxu0 %v9680
  %9693 = vmatprep.subr.bf16.mxu0 0
  %9694 = vmatpush1.bf16.msra.mxu0 %v9681
  %9695 = vmatprep.subr.bf16.mxu0 0
  %9696 = vmatpush1.bf16.msra.mxu0 %v9682
  %9697 = vmatprep.subr.bf16.mxu0 0
  %9698 = vmatpush1.bf16.msra.mxu0 %v9683
  %9699 = vmatprep.subr.bf16.mxu0 0
  %9700 = vmatpush1.bf16.msra.mxu0 0
  %9701 = vmatprep.subr.bf16.mxu0 0
  %9702 = vmatpush1.bf16.msra.mxu0 0
  %9703 = vmatprep.subr.bf16.mxu0 0
  %9704 = vmatpush1.bf16.msra.mxu0 0
  %9705 = vmatprep.subr.bf16.mxu0 0
  %9706 = vmatpush1.bf16.msra.mxu0 0
  %9707 = vmatprep.subr.bf16.mxu0 0
  %9708 = vmatpush1.bf16.msra.mxu0 0
  %9709 = vmatprep.subr.bf16.mxu0 0
  %9710 = vmatpush1.bf16.msra.mxu0 0
  %9711 = vmatprep.subr.bf16.mxu0 0
  %9712 = vmatpush1.bf16.msra.mxu0 0
  %9713 = vmatprep.subr.bf16.mxu0 0
  %9714 = vmatpush1.bf16.msra.mxu0 0
  %9715 = vmatprep.subr.bf16.mxu0 0
  %9716 = vmatpush1.bf16.msra.mxu0 0
  %9717 = vmatprep.subr.bf16.mxu0 0
  %9718 = vmatpush1.bf16.msra.mxu0 0
  %9719 = vmatprep.subr.bf16.mxu0 0
  %9720 = vmatpush1.bf16.msra.mxu0 0
  %9721 = vmatprep.subr.bf16.mxu0 0
  %9722 = vmatpush1.bf16.msra.mxu0 0
  %9723 = vmatprep.mubr.bf16.mxu0 0
  %9724 = vmatmul.mubr.bf16.gmra.mrb[0].mxu0 %v9689
  %v9725 = vpop.f32.mrb[0].mxu0
  %v9726 = vadd.f32 0.0, %v9725
  %v9727 = vpop.f32.mrb[0].mxu0
  %v9728 = vpop.f32.mrb[0].mxu0
  %v9729 = vpop.f32.mrb[0].mxu0
  %9730 = vdwg.mxu0
  %v9739 = vunpack.c.l.b16 %v8552
  %v9740 = vunpack.c.l.b16 %v8553
  %v9741 = vunpack.c.l.b16 %v8554
  %v9742 = vunpack.c.l.b16 %v8555
  %v9743 = vunpack.c.l.b16 %v8556
  %v9744 = vunpack.c.l.b16 %v8557
  %v9745 = vunpack.c.l.b16 %v8558
  %v9746 = vunpack.c.l.b16 %v8559
  %v9747 = vpack.c.b16 %v9740, %v9739
  %v9748 = vpack.c.b16 %v9742, %v9741
  %v9749 = vpack.c.b16 %v9744, %v9743
  %v9750 = vpack.c.b16 %v9746, %v9745
  %v9756 = vsel %vm316, %v8410, 0
  %9758 = vmatprep.subr.bf16.mxu0 0
  %9759 = vmatpush1.bf16.msra.mxu0 %v9747
  %9760 = vmatprep.subr.bf16.mxu0 0
  %9761 = vmatpush1.bf16.msra.mxu0 %v9748
  %9762 = vmatprep.subr.bf16.mxu0 0
  %9763 = vmatpush1.bf16.msra.mxu0 %v9749
  %9764 = vmatprep.subr.bf16.mxu0 0
  %9765 = vmatpush1.bf16.msra.mxu0 %v9750
  %9766 = vmatprep.subr.bf16.mxu0 0
  %9767 = vmatpush1.bf16.msra.mxu0 0
  %9768 = vmatprep.subr.bf16.mxu0 0
  %9769 = vmatpush1.bf16.msra.mxu0 0
  %9770 = vmatprep.subr.bf16.mxu0 0
  %9771 = vmatpush1.bf16.msra.mxu0 0
  %9772 = vmatprep.subr.bf16.mxu0 0
  %9773 = vmatpush1.bf16.msra.mxu0 0
  %9774 = vmatprep.subr.bf16.mxu0 0
  %9775 = vmatpush1.bf16.msra.mxu0 0
  %9776 = vmatprep.subr.bf16.mxu0 0
  %9777 = vmatpush1.bf16.msra.mxu0 0
  %9778 = vmatprep.subr.bf16.mxu0 0
  %9779 = vmatpush1.bf16.msra.mxu0 0
  %9780 = vmatprep.subr.bf16.mxu0 0
  %9781 = vmatpush1.bf16.msra.mxu0 0
  %9782 = vmatprep.subr.bf16.mxu0 0
  %9783 = vmatpush1.bf16.msra.mxu0 0
  %9784 = vmatprep.subr.bf16.mxu0 0
  %9785 = vmatpush1.bf16.msra.mxu0 0
  %9786 = vmatprep.subr.bf16.mxu0 0
  %9787 = vmatpush1.bf16.msra.mxu0 0
  %9788 = vmatprep.subr.bf16.mxu0 0
  %9789 = vmatpush1.bf16.msra.mxu0 0
  %9790 = vmatprep.mubr.bf16.mxu0 0
  %9791 = vmatmul.mubr.bf16.gmra.mrb[0].mxu0 %v9756
  %v9792 = vpop.f32.mrb[0].mxu0
  %v9793 = vadd.f32 0.0, %v9792
  %v9794 = vpop.f32.mrb[0].mxu0
  %v9795 = vpop.f32.mrb[0].mxu0
  %v9796 = vpop.f32.mrb[0].mxu0
  %9797 = vdwg.mxu0
  %v9806 = vunpack.c.l.b16 %v8560
  %v9807 = vunpack.c.l.b16 %v8561
  %v9808 = vunpack.c.l.b16 %v8562
  %v9809 = vunpack.c.l.b16 %v8563
  %v9810 = vunpack.c.l.b16 %v8564
  %v9811 = vunpack.c.l.b16 %v8565
  %v9812 = vunpack.c.l.b16 %v8566
  %v9813 = vunpack.c.l.b16 %v8567
  %v9814 = vpack.c.b16 %v9807, %v9806
  %v9815 = vpack.c.b16 %v9809, %v9808
  %v9816 = vpack.c.b16 %v9811, %v9810
  %v9817 = vpack.c.b16 %v9813, %v9812
  %v9823 = vsel %vm316, %v8411, 0
  %9825 = vmatprep.subr.bf16.mxu0 0
  %9826 = vmatpush1.bf16.msra.mxu0 %v9814
  %9827 = vmatprep.subr.bf16.mxu0 0
  %9828 = vmatpush1.bf16.msra.mxu0 %v9815
  %9829 = vmatprep.subr.bf16.mxu0 0
  %9830 = vmatpush1.bf16.msra.mxu0 %v9816
  %9831 = vmatprep.subr.bf16.mxu0 0
  %9832 = vmatpush1.bf16.msra.mxu0 %v9817
  %9833 = vmatprep.subr.bf16.mxu0 0
  %9834 = vmatpush1.bf16.msra.mxu0 0
  %9835 = vmatprep.subr.bf16.mxu0 0
  %9836 = vmatpush1.bf16.msra.mxu0 0
  %9837 = vmatprep.subr.bf16.mxu0 0
  %9838 = vmatpush1.bf16.msra.mxu0 0
  %9839 = vmatprep.subr.bf16.mxu0 0
  %9840 = vmatpush1.bf16.msra.mxu0 0
  %9841 = vmatprep.subr.bf16.mxu0 0
  %9842 = vmatpush1.bf16.msra.mxu0 0
  %9843 = vmatprep.subr.bf16.mxu0 0
  %9844 = vmatpush1.bf16.msra.mxu0 0
  %9845 = vmatprep.subr.bf16.mxu0 0
  %9846 = vmatpush1.bf16.msra.mxu0 0
  %9847 = vmatprep.subr.bf16.mxu0 0
  %9848 = vmatpush1.bf16.msra.mxu0 0
  %9849 = vmatprep.subr.bf16.mxu0 0
  %9850 = vmatpush1.bf16.msra.mxu0 0
  %9851 = vmatprep.subr.bf16.mxu0 0
  %9852 = vmatpush1.bf16.msra.mxu0 0
  %9853 = vmatprep.subr.bf16.mxu0 0
  %9854 = vmatpush1.bf16.msra.mxu0 0
  %9855 = vmatprep.subr.bf16.mxu0 0
  %9856 = vmatpush1.bf16.msra.mxu0 0
  %9857 = vmatprep.mubr.bf16.mxu0 0
  %9858 = vmatmul.mubr.bf16.gmra.mrb[0].mxu0 %v9823
  %v9859 = vpop.f32.mrb[0].mxu0
  %v9860 = vadd.f32 0.0, %v9859
  %v9861 = vpop.f32.mrb[0].mxu0
  %v9862 = vpop.f32.mrb[0].mxu0
  %v9863 = vpop.f32.mrb[0].mxu0
  %9864 = vdwg.mxu0
  %v9873 = vunpack.c.l.b16 %v8568
  %v9874 = vunpack.c.l.b16 %v8569
  %v9875 = vunpack.c.l.b16 %v8570
  %v9876 = vunpack.c.l.b16 %v8571
  %v9877 = vunpack.c.l.b16 %v8572
  %v9878 = vunpack.c.l.b16 %v8573
  %v9879 = vunpack.c.l.b16 %v8574
  %v9880 = vunpack.c.l.b16 %v8575
  %v9881 = vpack.c.b16 %v9874, %v9873
  %v9882 = vpack.c.b16 %v9876, %v9875
  %v9883 = vpack.c.b16 %v9878, %v9877
  %v9884 = vpack.c.b16 %v9880, %v9879
  %v9890 = vsel %vm316, %v8412, 0
  %9892 = vmatprep.subr.bf16.mxu0 0
  %9893 = vmatpush1.bf16.msra.mxu0 %v9881
  %9894 = vmatprep.subr.bf16.mxu0 0
  %9895 = vmatpush1.bf16.msra.mxu0 %v9882
  %9896 = vmatprep.subr.bf16.mxu0 0
  %9897 = vmatpush1.bf16.msra.mxu0 %v9883
  %9898 = vmatprep.subr.bf16.mxu0 0
  %9899 = vmatpush1.bf16.msra.mxu0 %v9884
  %9900 = vmatprep.subr.bf16.mxu0 0
  %9901 = vmatpush1.bf16.msra.mxu0 0
  %9902 = vmatprep.subr.bf16.mxu0 0
  %9903 = vmatpush1.bf16.msra.mxu0 0
  %9904 = vmatprep.subr.bf16.mxu0 0
  %9905 = vmatpush1.bf16.msra.mxu0 0
  %9906 = vmatprep.subr.bf16.mxu0 0
  %9907 = vmatpush1.bf16.msra.mxu0 0
  %9908 = vmatprep.subr.bf16.mxu0 0
  %9909 = vmatpush1.bf16.msra.mxu0 0
  %9910 = vmatprep.subr.bf16.mxu0 0
  %9911 = vmatpush1.bf16.msra.mxu0 0
  %9912 = vmatprep.subr.bf16.mxu0 0
  %9913 = vmatpush1.bf16.msra.mxu0 0
  %9914 = vmatprep.subr.bf16.mxu0 0
  %9915 = vmatpush1.bf16.msra.mxu0 0
  %9916 = vmatprep.subr.bf16.mxu0 0
  %9917 = vmatpush1.bf16.msra.mxu0 0
  %9918 = vmatprep.subr.bf16.mxu0 0
  %9919 = vmatpush1.bf16.msra.mxu0 0
  %9920 = vmatprep.subr.bf16.mxu0 0
  %9921 = vmatpush1.bf16.msra.mxu0 0
  %9922 = vmatprep.subr.bf16.mxu0 0
  %9923 = vmatpush1.bf16.msra.mxu0 0
  %9924 = vmatprep.mubr.bf16.mxu0 0
  %9925 = vmatmul.mubr.bf16.gmra.mrb[0].mxu0 %v9890
  %v9926 = vpop.f32.mrb[0].mxu0
  %v9927 = vadd.f32 0.0, %v9926
  %v9928 = vpop.f32.mrb[0].mxu0
  %v9929 = vpop.f32.mrb[0].mxu0
  %v9930 = vpop.f32.mrb[0].mxu0
  %9931 = vdwg.mxu0
  %v9940 = vunpack.c.l.b16 %v8576
  %v9941 = vunpack.c.l.b16 %v8577
  %v9942 = vunpack.c.l.b16 %v8578
  %v9943 = vunpack.c.l.b16 %v8579
  %v9944 = vunpack.c.l.b16 %v8580
  %v9945 = vunpack.c.l.b16 %v8581
  %v9946 = vunpack.c.l.b16 %v8582
  %v9947 = vunpack.c.l.b16 %v8583
  %v9948 = vpack.c.b16 %v9941, %v9940
  %v9949 = vpack.c.b16 %v9943, %v9942
  %v9950 = vpack.c.b16 %v9945, %v9944
  %v9951 = vpack.c.b16 %v9947, %v9946
  %v9957 = vsel %vm316, %v8413, 0
  %9959 = vmatprep.subr.bf16.mxu0 0
  %9960 = vmatpush1.bf16.msra.mxu0 %v9948
  %9961 = vmatprep.subr.bf16.mxu0 0
  %9962 = vmatpush1.bf16.msra.mxu0 %v9949
  %9963 = vmatprep.subr.bf16.mxu0 0
  %9964 = vmatpush1.bf16.msra.mxu0 %v9950
  %9965 = vmatprep.subr.bf16.mxu0 0
  %9966 = vmatpush1.bf16.msra.mxu0 %v9951
  %9967 = vmatprep.subr.bf16.mxu0 0
  %9968 = vmatpush1.bf16.msra.mxu0 0
  %9969 = vmatprep.subr.bf16.mxu0 0
  %9970 = vmatpush1.bf16.msra.mxu0 0
  %9971 = vmatprep.subr.bf16.mxu0 0
  %9972 = vmatpush1.bf16.msra.mxu0 0
  %9973 = vmatprep.subr.bf16.mxu0 0
  %9974 = vmatpush1.bf16.msra.mxu0 0
  %9975 = vmatprep.subr.bf16.mxu0 0
  %9976 = vmatpush1.bf16.msra.mxu0 0
  %9977 = vmatprep.subr.bf16.mxu0 0
  %9978 = vmatpush1.bf16.msra.mxu0 0
  %9979 = vmatprep.subr.bf16.mxu0 0
  %9980 = vmatpush1.bf16.msra.mxu0 0
  %9981 = vmatprep.subr.bf16.mxu0 0
  %9982 = vmatpush1.bf16.msra.mxu0 0
  %9983 = vmatprep.subr.bf16.mxu0 0
  %9984 = vmatpush1.bf16.msra.mxu0 0
  %9985 = vmatprep.subr.bf16.mxu0 0
  %9986 = vmatpush1.bf16.msra.mxu0 0
  %9987 = vmatprep.subr.bf16.mxu0 0
  %9988 = vmatpush1.bf16.msra.mxu0 0
  %9989 = vmatprep.subr.bf16.mxu0 0
  %9990 = vmatpush1.bf16.msra.mxu0 0
  %9991 = vmatprep.mubr.bf16.mxu0 0
  %9992 = vmatmul.mubr.bf16.gmra.mrb[0].mxu0 %v9957
  %v9993 = vpop.f32.mrb[0].mxu0
  %v9994 = vadd.f32 0.0, %v9993
  %v9995 = vpop.f32.mrb[0].mxu0
  %v9996 = vpop.f32.mrb[0].mxu0
  %v9997 = vpop.f32.mrb[0].mxu0
  %9998 = vdwg.mxu0
  %v10007 = vunpack.c.l.b16 %v8584
  %v10008 = vunpack.c.l.b16 %v8585
  %v10009 = vunpack.c.l.b16 %v8586
  %v10010 = vunpack.c.l.b16 %v8587
  %v10011 = vunpack.c.l.b16 %v8588
  %v10012 = vunpack.c.l.b16 %v8589
  %v10013 = vunpack.c.l.b16 %v8590
  %v10014 = vunpack.c.l.b16 %v8591
  %v10015 = vpack.c.b16 %v10008, %v10007
  %v10016 = vpack.c.b16 %v10010, %v10009
  %v10017 = vpack.c.b16 %v10012, %v10011
  %v10018 = vpack.c.b16 %v10014, %v10013
  %v10024 = vsel %vm316, %v8414, 0
  %10026 = vmatprep.subr.bf16.mxu0 0
  %10027 = vmatpush1.bf16.msra.mxu0 %v10015
  %10028 = vmatprep.subr.bf16.mxu0 0
  %10029 = vmatpush1.bf16.msra.mxu0 %v10016
  %10030 = vmatprep.subr.bf16.mxu0 0
  %10031 = vmatpush1.bf16.msra.mxu0 %v10017
  %10032 = vmatprep.subr.bf16.mxu0 0
  %10033 = vmatpush1.bf16.msra.mxu0 %v10018
  %10034 = vmatprep.subr.bf16.mxu0 0
  %10035 = vmatpush1.bf16.msra.mxu0 0
  %10036 = vmatprep.subr.bf16.mxu0 0
  %10037 = vmatpush1.bf16.msra.mxu0 0
  %10038 = vmatprep.subr.bf16.mxu0 0
  %10039 = vmatpush1.bf16.msra.mxu0 0
  %10040 = vmatprep.subr.bf16.mxu0 0
  %10041 = vmatpush1.bf16.msra.mxu0 0
  %10042 = vmatprep.subr.bf16.mxu0 0
  %10043 = vmatpush1.bf16.msra.mxu0 0
  %10044 = vmatprep.subr.bf16.mxu0 0
  %10045 = vmatpush1.bf16.msra.mxu0 0
  %10046 = vmatprep.subr.bf16.mxu0 0
  %10047 = vmatpush1.bf16.msra.mxu0 0
  %10048 = vmatprep.subr.bf16.mxu0 0
  %10049 = vmatpush1.bf16.msra.mxu0 0
  %10050 = vmatprep.subr.bf16.mxu0 0
  %10051 = vmatpush1.bf16.msra.mxu0 0
  %10052 = vmatprep.subr.bf16.mxu0 0
  %10053 = vmatpush1.bf16.msra.mxu0 0
  %10054 = vmatprep.subr.bf16.mxu0 0
  %10055 = vmatpush1.bf16.msra.mxu0 0
  %10056 = vmatprep.subr.bf16.mxu0 0
  %10057 = vmatpush1.bf16.msra.mxu0 0
  %10058 = vmatprep.mubr.bf16.mxu0 0
  %10059 = vmatmul.mubr.bf16.gmra.mrb[0].mxu0 %v10024
  %v10060 = vpop.f32.mrb[0].mxu0
  %v10061 = vadd.f32 0.0, %v10060
  %v10062 = vpop.f32.mrb[0].mxu0
  %v10063 = vpop.f32.mrb[0].mxu0
  %v10064 = vpop.f32.mrb[0].mxu0
  %10065 = vdwg.mxu0
  %v10066 = vld [vmem:[%s5] sm:$0xff]
  %v10067 = vld [vmem:[%s5 + $0x8] sm:$0xff]
  %v10068 = vld [vmem:[%s5 + $0x10] sm:$0xff]
  %v10069 = vld [vmem:[%s5 + $0x18] sm:$0xff]
  %v10070 = vld [vmem:[%s5 + $0x20] sm:$0xff]
  %v10071 = vld [vmem:[%s5 + $0x28] sm:$0xff]
  %v10072 = vld [vmem:[%s5 + $0x30] sm:$0xff]
  %v10073 = vld [vmem:[%s5 + $0x38] sm:$0xff]
  %v10074 = vld [vmem:[%s5 + $0x40] sm:$0xff]
  %v10075 = vld [vmem:[%s5 + $0x48] sm:$0xff]
  %v10076 = vld [vmem:[%s5 + $0x50] sm:$0xff]
  %v10077 = vld [vmem:[%s5 + $0x58] sm:$0xff]
  %v10078 = vld [vmem:[%s5 + $0x60] sm:$0xff]
  %v10079 = vld [vmem:[%s5 + $0x68] sm:$0xff]
  %v10080 = vld [vmem:[%s5 + $0x70] sm:$0xff]
  %v10081 = vld [vmem:[%s5 + $0x78] sm:$0xff]
  %v10082 = vld [vmem:[%s4] sm:$0xff]
  %v10083 = vld [vmem:[%s4 + $0x8] sm:$0xff]
  %v10084 = vld [vmem:[%s4 + $0x10] sm:$0xff]
  %v10085 = vld [vmem:[%s4 + $0x18] sm:$0xff]
  %v10086 = vld [vmem:[%s4 + $0x20] sm:$0xff]
  %v10087 = vld [vmem:[%s4 + $0x28] sm:$0xff]
  %v10088 = vld [vmem:[%s4 + $0x30] sm:$0xff]
  %v10089 = vld [vmem:[%s4 + $0x38] sm:$0xff]
  %v10090 = vld [vmem:[%s4 + $0x40] sm:$0xff]
  %v10091 = vld [vmem:[%s4 + $0x48] sm:$0xff]
  %v10092 = vld [vmem:[%s4 + $0x50] sm:$0xff]
  %v10093 = vld [vmem:[%s4 + $0x58] sm:$0xff]
  %v10094 = vld [vmem:[%s4 + $0x60] sm:$0xff]
  %v10095 = vld [vmem:[%s4 + $0x68] sm:$0xff]
  %v10096 = vld [vmem:[%s4 + $0x70] sm:$0xff]
  %v10097 = vld [vmem:[%s4 + $0x78] sm:$0xff]
  %v10098 = vld [vmem:[%s4 + $0x80] sm:$0xff]
  %v10099 = vld [vmem:[%s4 + $0x88] sm:$0xff]
  %v10100 = vld [vmem:[%s4 + $0x90] sm:$0xff]
  %v10101 = vld [vmem:[%s4 + $0x98] sm:$0xff]
  %v10102 = vld [vmem:[%s4 + $0xa0] sm:$0xff]
  %v10103 = vld [vmem:[%s4 + $0xa8] sm:$0xff]
  %v10104 = vld [vmem:[%s4 + $0xb0] sm:$0xff]
  %v10105 = vld [vmem:[%s4 + $0xb8] sm:$0xff]
  %v10106 = vld [vmem:[%s4 + $0xc0] sm:$0xff]
  %v10107 = vld [vmem:[%s4 + $0xc8] sm:$0xff]
  %v10108 = vld [vmem:[%s4 + $0xd0] sm:$0xff]
  %v10109 = vld [vmem:[%s4 + $0xd8] sm:$0xff]
  %v10110 = vld [vmem:[%s4 + $0xe0] sm:$0xff]
  %v10111 = vld [vmem:[%s4 + $0xe8] sm:$0xff]
  %v10112 = vld [vmem:[%s4 + $0xf0] sm:$0xff]
  %v10113 = vld [vmem:[%s4 + $0xf8] sm:$0xff]
  %v10115 = vsel %vm2355, %v10083, 0
  %v10118 = vsel %vm2355, %v10085, 0
  %v10121 = vsel %vm2355, %v10087, 0
  %v10124 = vsel %vm2355, %v10089, 0
  %v10127 = vsel %vm2355, %v10091, 0
  %v10130 = vsel %vm2355, %v10093, 0
  %v10133 = vsel %vm2355, %v10095, 0
  %v10136 = vsel %vm2355, %v10097, 0
  %v10139 = vsel %vm2355, %v10099, 0
  %v10142 = vsel %vm2355, %v10101, 0
  %v10145 = vsel %vm2355, %v10103, 0
  %v10148 = vsel %vm2355, %v10105, 0
  %v10151 = vsel %vm2355, %v10107, 0
  %v10154 = vsel %vm2355, %v10109, 0
  %v10157 = vsel %vm2355, %v10111, 0
  %v10160 = vsel %vm2355, %v10113, 0
  %10162 = vmatprep.subr.mxu0 0.0
  %10163 = vmatpush1.msra.mxu0 %v8654
  %10164 = vmatprep.subr.mxu0 0.0
  %10165 = vmatpush1.msra.mxu0 %v8721
  %10166 = vmatprep.subr.mxu0 0.0
  %10167 = vmatpush1.msra.mxu0 %v8788
  %10168 = vmatprep.subr.mxu0 0.0
  %10169 = vmatpush1.msra.mxu0 %v8855
  %10170 = vmatprep.subr.mxu0 0.0
  %10171 = vmatpush1.msra.mxu0 %v8922
  %10172 = vmatprep.subr.mxu0 0.0
  %10173 = vmatpush1.msra.mxu0 %v8989
  %10174 = vmatprep.subr.mxu0 0.0
  %10175 = vmatpush1.msra.mxu0 %v9056
  %10176 = vmatprep.subr.mxu0 0.0
  %10177 = vmatpush1.msra.mxu0 %v9123
  %10178 = vmatprep.subr.mxu0 0.0
  %10179 = vmatpush1.msra.mxu0 %v9190
  %10180 = vmatprep.subr.mxu0 0.0
  %10181 = vmatpush1.msra.mxu0 %v9257
  %10182 = vmatprep.subr.mxu0 0.0
  %10183 = vmatpush1.msra.mxu0 %v9324
  %10184 = vmatprep.subr.mxu0 0.0
  %10185 = vmatpush1.msra.mxu0 %v9391
  %10186 = vmatprep.subr.mxu0 0.0
  %10187 = vmatpush1.msra.mxu0 %v9458
  %10188 = vmatprep.subr.mxu0 0.0
  %10189 = vmatpush1.msra.mxu0 %v9525
  %10190 = vmatprep.subr.mxu0 0.0
  %10191 = vmatpush1.msra.mxu0 %v9592
  %10192 = vmatprep.subr.mxu0 0.0
  %10193 = vmatpush1.msra.mxu0 %v9659
  %10194 = vmatprep.subr.mxu0 0.0
  %10195 = vmatpush1.msra.mxu0 %v9726
  %10196 = vmatprep.subr.mxu0 0.0
  %10197 = vmatpush1.msra.mxu0 %v9793
  %10198 = vmatprep.subr.mxu0 0.0
  %10199 = vmatpush1.msra.mxu0 %v9860
  %10200 = vmatprep.subr.mxu0 0.0
  %10201 = vmatpush1.msra.mxu0 %v9927
  %10202 = vmatprep.subr.mxu0 0.0
  %10203 = vmatpush1.msra.mxu0 %v9994
  %10204 = vmatprep.subr.mxu0 0.0
  %10205 = vmatpush1.msra.mxu0 %v10061
  %10206 = vmatprep.subr.mxu0 0.0
  %10207 = vmatpush1.msra.mxu0 0.0
  %10208 = vmatprep.subr.mxu0 0.0
  %10209 = vmatpush1.msra.mxu0 0.0
  %10210 = vmatprep.subr.mxu0 0.0
  %10211 = vmatpush1.msra.mxu0 0.0
  %10212 = vmatprep.subr.mxu0 0.0
  %10213 = vmatpush1.msra.mxu0 0.0
  %10214 = vmatprep.subr.mxu0 0.0
  %10215 = vmatpush1.msra.mxu0 0.0
  %10216 = vmatprep.subr.mxu0 0.0
  %10217 = vmatpush1.msra.mxu0 0.0
  %10218 = vmatprep.subr.mxu0 0.0
  %10219 = vmatpush1.msra.mxu0 0.0
  %10220 = vmatprep.subr.mxu0 0.0
  %10221 = vmatpush1.msra.mxu0 0.0
  %10222 = vmatprep.subr.mxu0 0.0
  %10223 = vmatpush1.msra.mxu0 0.0
  %10224 = vmatprep.subr.mxu0 0.0
  %10225 = vmatpush1.msra.mxu0 0.0
  %10226 = vmatprep.mubr.f32.mxu0 %v10115
  %10227 = vmatmul.mubr.f32.gmra.mrb[0].mxu0 %v10082
  %v10228 = vpop.f32.mrb[0].mxu0
  %v10229 = vadd.f32 0.0, %v10228
  %v10230 = vpop.f32.mrb[0].mxu0
  %10231 = vmatprep.mubr.f32.mxu0 %v10118
  %10232 = vmatmul.mubr.f32.gmra.mrb[0].mxu0 %v10084
  %v10233 = vpop.f32.mrb[0].mxu0
  %v10234 = vadd.f32 0.0, %v10233
  %v10235 = vpop.f32.mrb[0].mxu0
  %10236 = vmatprep.mubr.f32.mxu0 %v10121
  %10237 = vmatmul.mubr.f32.gmra.mrb[0].mxu0 %v10086
  %v10238 = vpop.f32.mrb[0].mxu0
  %v10239 = vadd.f32 0.0, %v10238
  %v10240 = vpop.f32.mrb[0].mxu0
  %10241 = vmatprep.mubr.f32.mxu0 %v10124
  %10242 = vmatmul.mubr.f32.gmra.mrb[0].mxu0 %v10088
  %v10243 = vpop.f32.mrb[0].mxu0
  %v10244 = vadd.f32 0.0, %v10243
  %v10245 = vpop.f32.mrb[0].mxu0
  %10246 = vmatprep.mubr.f32.mxu0 %v10127
  %10247 = vmatmul.mubr.f32.gmra.mrb[0].mxu0 %v10090
  %v10248 = vpop.f32.mrb[0].mxu0
  %v10249 = vadd.f32 0.0, %v10248
  %v10250 = vpop.f32.mrb[0].mxu0
  %10251 = vmatprep.mubr.f32.mxu0 %v10130
  %10252 = vmatmul.mubr.f32.gmra.mrb[0].mxu0 %v10092
  %v10253 = vpop.f32.mrb[0].mxu0
  %v10254 = vadd.f32 0.0, %v10253
  %v10255 = vpop.f32.mrb[0].mxu0
  %10256 = vmatprep.mubr.f32.mxu0 %v10133
  %10257 = vmatmul.mubr.f32.gmra.mrb[0].mxu0 %v10094
  %v10258 = vpop.f32.mrb[0].mxu0
  %v10259 = vadd.f32 0.0, %v10258
  %v10260 = vpop.f32.mrb[0].mxu0
  %10261 = vmatprep.mubr.f32.mxu0 %v10136
  %10262 = vmatmul.mubr.f32.gmra.mrb[0].mxu0 %v10096
  %v10263 = vpop.f32.mrb[0].mxu0
  %v10264 = vadd.f32 0.0, %v10263
  %v10265 = vpop.f32.mrb[0].mxu0
  %10266 = vmatprep.mubr.f32.mxu0 %v10139
  %10267 = vmatmul.mubr.f32.gmra.mrb[0].mxu0 %v10098
  %v10268 = vpop.f32.mrb[0].mxu0
  %v10269 = vadd.f32 0.0, %v10268
  %v10270 = vpop.f32.mrb[0].mxu0
  %10271 = vmatprep.mubr.f32.mxu0 %v10142
  %10272 = vmatmul.mubr.f32.gmra.mrb[0].mxu0 %v10100
  %v10273 = vpop.f32.mrb[0].mxu0
  %v10274 = vadd.f32 0.0, %v10273
  %v10275 = vpop.f32.mrb[0].mxu0
  %10276 = vmatprep.mubr.f32.mxu0 %v10145
  %10277 = vmatmul.mubr.f32.gmra.mrb[0].mxu0 %v10102
  %v10278 = vpop.f32.mrb[0].mxu0
  %v10279 = vadd.f32 0.0, %v10278
  %v10280 = vpop.f32.mrb[0].mxu0
  %10281 = vmatprep.mubr.f32.mxu0 %v10148
  %10282 = vmatmul.mubr.f32.gmra.mrb[0].mxu0 %v10104
  %v10283 = vpop.f32.mrb[0].mxu0
  %v10284 = vadd.f32 0.0, %v10283
  %v10285 = vpop.f32.mrb[0].mxu0
  %10286 = vmatprep.mubr.f32.mxu0 %v10151
  %10287 = vmatmul.mubr.f32.gmra.mrb[0].mxu0 %v10106
  %v10288 = vpop.f32.mrb[0].mxu0
  %v10289 = vadd.f32 0.0, %v10288
  %v10290 = vpop.f32.mrb[0].mxu0
  %10291 = vmatprep.mubr.f32.mxu0 %v10154
  %10292 = vmatmul.mubr.f32.gmra.mrb[0].mxu0 %v10108
  %v10293 = vpop.f32.mrb[0].mxu0
  %v10294 = vadd.f32 0.0, %v10293
  %v10295 = vpop.f32.mrb[0].mxu0
  %10296 = vmatprep.mubr.f32.mxu0 %v10157
  %10297 = vmatmul.mubr.f32.gmra.mrb[0].mxu0 %v10110
  %v10298 = vpop.f32.mrb[0].mxu0
  %v10299 = vadd.f32 0.0, %v10298
  %v10300 = vpop.f32.mrb[0].mxu0
  %10301 = vmatprep.mubr.f32.mxu0 %v10160
  %10302 = vmatmul.mubr.f32.gmra.mrb[0].mxu0 %v10112
  %v10303 = vpop.f32.mrb[0].mxu0
  %v10304 = vadd.f32 0.0, %v10303
  %v10305 = vpop.f32.mrb[0].mxu0
  %10306 = vdwg.mxu0
  %10307 = vmatprep.subr.mxu0 0.0
  %10308 = vmatpush1.msra.mxu0 %v8010
  %10309 = vmatprep.subr.mxu0 0.0
  %10310 = vmatpush1.msra.mxu0 %v8011
  %10311 = vmatprep.subr.mxu0 0.0
  %10312 = vmatpush1.msra.mxu0 %v8012
  %10313 = vmatprep.subr.mxu0 0.0
  %10314 = vmatpush1.msra.mxu0 %v8013
  %10315 = vmatprep.subr.mxu0 0.0
  %10316 = vmatpush1.msra.mxu0 %v8014
  %10317 = vmatprep.subr.mxu0 0.0
  %10318 = vmatpush1.msra.mxu0 %v8015
  %10319 = vmatprep.subr.mxu0 0.0
  %10320 = vmatpush1.msra.mxu0 %v8016
  %10321 = vmatprep.subr.mxu0 0.0
  %10322 = vmatpush1.msra.mxu0 %v8017
  %10323 = vmatprep.subr.mxu0 0.0
  %10324 = vmatpush1.msra.mxu0 %v8018
  %10325 = vmatprep.subr.mxu0 0.0
  %10326 = vmatpush1.msra.mxu0 %v8019
  %10327 = vmatprep.subr.mxu0 0.0
  %10328 = vmatpush1.msra.mxu0 %v8020
  %10329 = vmatprep.subr.mxu0 0.0
  %10330 = vmatpush1.msra.mxu0 %v8021
  %10331 = vmatprep.subr.mxu0 0.0
  %10332 = vmatpush1.msra.mxu0 %v8022
  %10333 = vmatprep.subr.mxu0 0.0
  %10334 = vmatpush1.msra.mxu0 %v8023
  %10335 = vmatprep.subr.mxu0 0.0
  %10336 = vmatpush1.msra.mxu0 %v8024
  %10337 = vmatprep.subr.mxu0 0.0
  %10338 = vmatpush1.msra.mxu0 %v8025
  %10339 = vmatprep.subr.mxu0 0.0
  %10340 = vmatpush1.msra.mxu0 0.0
  %10341 = vmatprep.subr.mxu0 0.0
  %10342 = vmatpush1.msra.mxu0 0.0
  %10343 = vmatprep.subr.mxu0 0.0
  %10344 = vmatpush1.msra.mxu0 0.0
  %10345 = vmatprep.subr.mxu0 0.0
  %10346 = vmatpush1.msra.mxu0 0.0
  %10347 = vmatprep.subr.mxu0 0.0
  %10348 = vmatpush1.msra.mxu0 0.0
  %10349 = vmatprep.subr.mxu0 0.0
  %10350 = vmatpush1.msra.mxu0 0.0
  %10351 = vmatprep.subr.mxu0 0.0
  %10352 = vmatpush1.msra.mxu0 0.0
  %10353 = vmatprep.subr.mxu0 0.0
  %10354 = vmatpush1.msra.mxu0 0.0
  %10355 = vmatprep.subr.mxu0 0.0
  %10356 = vmatpush1.msra.mxu0 0.0
  %10357 = vmatprep.subr.mxu0 0.0
  %10358 = vmatpush1.msra.mxu0 0.0
  %10359 = vmatprep.subr.mxu0 0.0
  %10360 = vmatpush1.msra.mxu0 0.0
  %10361 = vmatprep.subr.mxu0 0.0
  %10362 = vmatpush1.msra.mxu0 0.0
  %10363 = vmatprep.subr.mxu0 0.0
  %10364 = vmatpush1.msra.mxu0 0.0
  %10365 = vmatprep.subr.mxu0 0.0
  %10366 = vmatpush1.msra.mxu0 0.0
  %10367 = vmatprep.subr.mxu0 0.0
  %10368 = vmatpush1.msra.mxu0 0.0
  %10369 = vmatprep.subr.mxu0 0.0
  %10370 = vmatpush1.msra.mxu0 0.0
  %10371 = vmatprep.mubr.f32.mxu0 0.0
  %10372 = vmatmul.mubr.f32.gmra.mrb[0].mxu0 %v10066
  %v10373 = vpop.f32.mrb[0].mxu0
  %v10374 = vadd.f32 %v10229, %v10373
  %v10375 = vpop.f32.mrb[0].mxu0
  %10376 = vmatprep.mubr.f32.mxu0 0.0
  %10377 = vmatmul.mubr.f32.gmra.mrb[0].mxu0 %v10067
  %v10378 = vpop.f32.mrb[0].mxu0
  %v10379 = vadd.f32 %v10234, %v10378
  %v10380 = vpop.f32.mrb[0].mxu0
  %10381 = vmatprep.mubr.f32.mxu0 0.0
  %10382 = vmatmul.mubr.f32.gmra.mrb[0].mxu0 %v10068
  %v10383 = vpop.f32.mrb[0].mxu0
  %v10384 = vadd.f32 %v10239, %v10383
  %v10385 = vpop.f32.mrb[0].mxu0
  %10386 = vmatprep.mubr.f32.mxu0 0.0
  %10387 = vmatmul.mubr.f32.gmra.mrb[0].mxu0 %v10069
  %v10388 = vpop.f32.mrb[0].mxu0
  %v10389 = vadd.f32 %v10244, %v10388
  %v10390 = vpop.f32.mrb[0].mxu0
  %10391 = vmatprep.mubr.f32.mxu0 0.0
  %10392 = vmatmul.mubr.f32.gmra.mrb[0].mxu0 %v10070
  %v10393 = vpop.f32.mrb[0].mxu0
  %v10394 = vadd.f32 %v10249, %v10393
  %v10395 = vpop.f32.mrb[0].mxu0
  %10396 = vmatprep.mubr.f32.mxu0 0.0
  %10397 = vmatmul.mubr.f32.gmra.mrb[0].mxu0 %v10071
  %v10398 = vpop.f32.mrb[0].mxu0
  %v10399 = vadd.f32 %v10254, %v10398
  %v10400 = vpop.f32.mrb[0].mxu0
  %10401 = vmatprep.mubr.f32.mxu0 0.0
  %10402 = vmatmul.mubr.f32.gmra.mrb[0].mxu0 %v10072
  %v10403 = vpop.f32.mrb[0].mxu0
  %v10404 = vadd.f32 %v10259, %v10403
  %v10405 = vpop.f32.mrb[0].mxu0
  %10406 = vmatprep.mubr.f32.mxu0 0.0
  %10407 = vmatmul.mubr.f32.gmra.mrb[0].mxu0 %v10073
  %v10408 = vpop.f32.mrb[0].mxu0
  %v10409 = vadd.f32 %v10264, %v10408
  %v10410 = vpop.f32.mrb[0].mxu0
  %10411 = vmatprep.mubr.f32.mxu0 0.0
  %10412 = vmatmul.mubr.f32.gmra.mrb[0].mxu0 %v10074
  %v10413 = vpop.f32.mrb[0].mxu0
  %v10414 = vadd.f32 %v10269, %v10413
  %v10415 = vpop.f32.mrb[0].mxu0
  %10416 = vmatprep.mubr.f32.mxu0 0.0
  %10417 = vmatmul.mubr.f32.gmra.mrb[0].mxu0 %v10075
  %v10418 = vpop.f32.mrb[0].mxu0
  %v10419 = vadd.f32 %v10274, %v10418
  %v10420 = vpop.f32.mrb[0].mxu0
  %10421 = vmatprep.mubr.f32.mxu0 0.0
  %10422 = vmatmul.mubr.f32.gmra.mrb[0].mxu0 %v10076
  %v10423 = vpop.f32.mrb[0].mxu0
  %v10424 = vadd.f32 %v10279, %v10423
  %v10425 = vpop.f32.mrb[0].mxu0
  %10426 = vmatprep.mubr.f32.mxu0 0.0
  %10427 = vmatmul.mubr.f32.gmra.mrb[0].mxu0 %v10077
  %v10428 = vpop.f32.mrb[0].mxu0
  %v10429 = vadd.f32 %v10284, %v10428
  %v10430 = vpop.f32.mrb[0].mxu0
  %10431 = vmatprep.mubr.f32.mxu0 0.0
  %10432 = vmatmul.mubr.f32.gmra.mrb[0].mxu0 %v10078
  %v10433 = vpop.f32.mrb[0].mxu0
  %v10434 = vadd.f32 %v10289, %v10433
  %v10435 = vpop.f32.mrb[0].mxu0
  %10436 = vmatprep.mubr.f32.mxu0 0.0
  %10437 = vmatmul.mubr.f32.gmra.mrb[0].mxu0 %v10079
  %v10438 = vpop.f32.mrb[0].mxu0
  %v10439 = vadd.f32 %v10294, %v10438
  %v10440 = vpop.f32.mrb[0].mxu0
  %10441 = vmatprep.mubr.f32.mxu0 0.0
  %10442 = vmatmul.mubr.f32.gmra.mrb[0].mxu0 %v10080
  %v10443 = vpop.f32.mrb[0].mxu0
  %v10444 = vadd.f32 %v10299, %v10443
  %v10445 = vpop.f32.mrb[0].mxu0
  %10446 = vmatprep.mubr.f32.mxu0 0.0
  %10447 = vmatmul.mubr.f32.gmra.mrb[0].mxu0 %v10081
  %v10448 = vpop.f32.mrb[0].mxu0
  %v10449 = vadd.f32 %v10304, %v10448
  %v10450 = vpop.f32.mrb[0].mxu0
  %10451 = vdwg.mxu0
  %v10452 = vadd.f32 %v10374, %v8134
  %v10453 = vadd.f32 %v10379, %v8137
  %v10454 = vadd.f32 %v10384, %v8142
  %v10455 = vadd.f32 %v10389, %v8145
  %v10456 = vadd.f32 %v10394, %v8150
  %v10457 = vadd.f32 %v10399, %v8153
  %v10458 = vadd.f32 %v10404, %v8158
  %v10459 = vadd.f32 %v10409, %v8161
  %v10460 = vadd.f32 %v10414, %v8166
  %v10461 = vadd.f32 %v10419, %v8169
  %v10462 = vadd.f32 %v10424, %v8174
  %v10463 = vadd.f32 %v10429, %v8177
  %v10464 = vadd.f32 %v10434, %v8182
  %v10465 = vadd.f32 %v10439, %v8185
  %v10466 = vadd.f32 %v10444, %v8190
  %v10467 = vadd.f32 %v10449, %v8193
  %v10468 = vpack.c.bf16 %v10453, %v10452
  %v10469 = vpack.c.bf16 %v10455, %v10454
  %v10470 = vpack.c.bf16 %v10457, %v10456
  %v10471 = vpack.c.bf16 %v10459, %v10458
  %v10472 = vpack.c.bf16 %v10461, %v10460
  %v10473 = vpack.c.bf16 %v10463, %v10462
  %v10474 = vpack.c.bf16 %v10465, %v10464
  %v10475 = vpack.c.bf16 %v10467, %v10466
  %v10476 = vld [vmem:[%s9] sm:$0xf]
  %v10477 = vld [vmem:[%s9 + $0x4] sm:$0xf]
  %v10478 = vld [vmem:[%s9 + $0x8] sm:$0xf]
  %v10479 = vld [vmem:[%s9 + $0xc] sm:$0xf]
  %v10480 = vld [vmem:[%s9 + $0x10] sm:$0xf]
  %v10481 = vld [vmem:[%s9 + $0x14] sm:$0xf]
  %v10482 = vld [vmem:[%s9 + $0x18] sm:$0xf]
  %v10483 = vld [vmem:[%s9 + $0x1c] sm:$0xf]
  %v10484 = vld [vmem:[%s10] sm:$0x1]
  %v10486 = vlaneseq
  %v10487 = vshrl.u32 %v10486, 7
  %v10488 = vsub.s32 0, %v10487
  %v10489 = vrot.slane %v10484, %v10488
  %v10499 = vunpack.c.l.b16 %v10476
  %v10500 = vunpack.c.l.b16 %v10477
  %v10501 = vunpack.c.l.b16 %v10478
  %v10502 = vunpack.c.l.b16 %v10479
  %v10503 = vunpack.c.l.b16 %v10480
  %v10504 = vunpack.c.l.b16 %v10481
  %v10505 = vunpack.c.l.b16 %v10482
  %v10506 = vunpack.c.l.b16 %v10483
  %v10507 = vpack.c.b16 %v10500, %v10499
  %v10508 = vpack.c.b16 %v10502, %v10501
  %v10509 = vpack.c.b16 %v10504, %v10503
  %v10510 = vpack.c.b16 %v10506, %v10505
  %v10516 = vsel %vm316, %v10468, 0
  %v10519 = vsel %vm316, %v10469, 0
  %v10522 = vsel %vm316, %v10470, 0
  %v10525 = vsel %vm316, %v10471, 0
  %v10528 = vsel %vm316, %v10472, 0
  %v10531 = vsel %vm316, %v10473, 0
  %v10534 = vsel %vm316, %v10474, 0
  %v10537 = vsel %vm316, %v10475, 0
  %10539 = vmatprep.subr.bf16.mxu0 0
  %10540 = vmatpush1.bf16.msra.mxu0 %v10507
  %10541 = vmatprep.subr.bf16.mxu0 0
  %10542 = vmatpush1.bf16.msra.mxu0 %v10508
  %10543 = vmatprep.subr.bf16.mxu0 0
  %10544 = vmatpush1.bf16.msra.mxu0 %v10509
  %10545 = vmatprep.subr.bf16.mxu0 0
  %10546 = vmatpush1.bf16.msra.mxu0 %v10510
  %10547 = vmatprep.subr.bf16.mxu0 0
  %10548 = vmatpush1.bf16.msra.mxu0 0
  %10549 = vmatprep.subr.bf16.mxu0 0
  %10550 = vmatpush1.bf16.msra.mxu0 0
  %10551 = vmatprep.subr.bf16.mxu0 0
  %10552 = vmatpush1.bf16.msra.mxu0 0
  %10553 = vmatprep.subr.bf16.mxu0 0
  %10554 = vmatpush1.bf16.msra.mxu0 0
  %10555 = vmatprep.subr.bf16.mxu0 0
  %10556 = vmatpush1.bf16.msra.mxu0 0
  %10557 = vmatprep.subr.bf16.mxu0 0
  %10558 = vmatpush1.bf16.msra.mxu0 0
  %10559 = vmatprep.subr.bf16.mxu0 0
  %10560 = vmatpush1.bf16.msra.mxu0 0
  %10561 = vmatprep.subr.bf16.mxu0 0
  %10562 = vmatpush1.bf16.msra.mxu0 0
  %10563 = vmatprep.subr.bf16.mxu0 0
  %10564 = vmatpush1.bf16.msra.mxu0 0
  %10565 = vmatprep.subr.bf16.mxu0 0
  %10566 = vmatpush1.bf16.msra.mxu0 0
  %10567 = vmatprep.subr.bf16.mxu0 0
  %10568 = vmatpush1.bf16.msra.mxu0 0
  %10569 = vmatprep.subr.bf16.mxu0 0
  %10570 = vmatpush1.bf16.msra.mxu0 0
  %10571 = vmatprep.mubr.bf16.mxu0 0
  %10572 = vmatmul.mubr.bf16.gmra.mrb[0].mxu0 %v10516
  %v10573 = vpop.f32.mrb[0].mxu0
  %v10574 = vadd.f32 %v10489, %v10573
  %v10575 = vpop.f32.mrb[0].mxu0
  %v10576 = vpop.f32.mrb[0].mxu0
  %v10577 = vadd.f32 %v10489, %v10576
  %v10578 = vpop.f32.mrb[0].mxu0
  %10579 = vmatprep.mubr.bf16.mxu0 0
  %10580 = vmatmul.mubr.bf16.gmra.mrb[0].mxu0 %v10519
  %v10581 = vpop.f32.mrb[0].mxu0
  %v10582 = vadd.f32 %v10489, %v10581
  %v10583 = vpop.f32.mrb[0].mxu0
  %v10584 = vpop.f32.mrb[0].mxu0
  %v10585 = vadd.f32 %v10489, %v10584
  %v10586 = vpop.f32.mrb[0].mxu0
  %10587 = vmatprep.mubr.bf16.mxu0 0
  %10588 = vmatmul.mubr.bf16.gmra.mrb[0].mxu0 %v10522
  %v10589 = vpop.f32.mrb[0].mxu0
  %v10590 = vadd.f32 %v10489, %v10589
  %v10591 = vpop.f32.mrb[0].mxu0
  %v10592 = vpop.f32.mrb[0].mxu0
  %v10593 = vadd.f32 %v10489, %v10592
  %v10594 = vpop.f32.mrb[0].mxu0
  %10595 = vmatprep.mubr.bf16.mxu0 0
  %10596 = vmatmul.mubr.bf16.gmra.mrb[0].mxu0 %v10525
  %v10597 = vpop.f32.mrb[0].mxu0
  %v10598 = vadd.f32 %v10489, %v10597
  %v10599 = vpop.f32.mrb[0].mxu0
  %v10600 = vpop.f32.mrb[0].mxu0
  %v10601 = vadd.f32 %v10489, %v10600
  %v10602 = vpop.f32.mrb[0].mxu0
  %10603 = vmatprep.mubr.bf16.mxu0 0
  %10604 = vmatmul.mubr.bf16.gmra.mrb[0].mxu0 %v10528
  %v10605 = vpop.f32.mrb[0].mxu0
  %v10606 = vadd.f32 %v10489, %v10605
  %v10607 = vpop.f32.mrb[0].mxu0
  %v10608 = vpop.f32.mrb[0].mxu0
  %v10609 = vadd.f32 %v10489, %v10608
  %v10610 = vpop.f32.mrb[0].mxu0
  %10611 = vmatprep.mubr.bf16.mxu0 0
  %10612 = vmatmul.mubr.bf16.gmra.mrb[0].mxu0 %v10531
  %v10613 = vpop.f32.mrb[0].mxu0
  %v10614 = vadd.f32 %v10489, %v10613
  %v10615 = vpop.f32.mrb[0].mxu0
  %v10616 = vpop.f32.mrb[0].mxu0
  %v10617 = vadd.f32 %v10489, %v10616
  %v10618 = vpop.f32.mrb[0].mxu0
  %10619 = vmatprep.mubr.bf16.mxu0 0
  %10620 = vmatmul.mubr.bf16.gmra.mrb[0].mxu0 %v10534
  %v10621 = vpop.f32.mrb[0].mxu0
  %v10622 = vadd.f32 %v10489, %v10621
  %v10623 = vpop.f32.mrb[0].mxu0
  %v10624 = vpop.f32.mrb[0].mxu0
  %v10625 = vadd.f32 %v10489, %v10624
  %v10626 = vpop.f32.mrb[0].mxu0
  %10627 = vmatprep.mubr.bf16.mxu0 0
  %10628 = vmatmul.mubr.bf16.gmra.mrb[0].mxu0 %v10537
  %v10629 = vpop.f32.mrb[0].mxu0
  %v10630 = vadd.f32 %v10489, %v10629
  %v10631 = vpop.f32.mrb[0].mxu0
  %v10632 = vpop.f32.mrb[0].mxu0
  %v10633 = vadd.f32 %v10489, %v10632
  %v10634 = vpop.f32.mrb[0].mxu0
  %10635 = vdwg.mxu0
  %v10636 = vmul.f32 %v10574, 0.5
  %v10637 = vmul.f32 %v10577, 0.5
  %v10638 = vmul.f32 %v10582, 0.5
  %v10639 = vmul.f32 %v10585, 0.5
  %v10640 = vmul.f32 %v10590, 0.5
  %v10641 = vmul.f32 %v10593, 0.5
  %v10642 = vmul.f32 %v10598, 0.5
  %v10643 = vmul.f32 %v10601, 0.5
  %v10644 = vmul.f32 %v10606, 0.5
  %v10645 = vmul.f32 %v10609, 0.5
  %v10646 = vmul.f32 %v10614, 0.5
  %v10647 = vmul.f32 %v10617, 0.5
  %v10648 = vmul.f32 %v10622, 0.5
  %v10649 = vmul.f32 %v10625, 0.5
  %v10650 = vmul.f32 %v10630, 0.5
  %v10651 = vmul.f32 %v10633, 0.5
  %v10652 = vmul.f32 %v10574, 0.044715
  %v10653 = vmul.f32 %v10577, 0.044715
  %v10654 = vmul.f32 %v10582, 0.044715
  %v10655 = vmul.f32 %v10585, 0.044715
  %v10656 = vmul.f32 %v10590, 0.044715
  %v10657 = vmul.f32 %v10593, 0.044715
  %v10658 = vmul.f32 %v10598, 0.044715
  %v10659 = vmul.f32 %v10601, 0.044715
  %v10660 = vmul.f32 %v10606, 0.044715
  %v10661 = vmul.f32 %v10609, 0.044715
  %v10662 = vmul.f32 %v10614, 0.044715
  %v10663 = vmul.f32 %v10617, 0.044715
  %v10664 = vmul.f32 %v10622, 0.044715
  %v10665 = vmul.f32 %v10625, 0.044715
  %v10666 = vmul.f32 %v10630, 0.044715
  %v10667 = vmul.f32 %v10633, 0.044715
  %v10668 = vmul.f32 %v10652, %v10574
  %v10669 = vmul.f32 %v10653, %v10577
  %v10670 = vmul.f32 %v10654, %v10582
  %v10671 = vmul.f32 %v10655, %v10585
  %v10672 = vmul.f32 %v10656, %v10590
  %v10673 = vmul.f32 %v10657, %v10593
  %v10674 = vmul.f32 %v10658, %v10598
  %v10675 = vmul.f32 %v10659, %v10601
  %v10676 = vmul.f32 %v10660, %v10606
  %v10677 = vmul.f32 %v10661, %v10609
  %v10678 = vmul.f32 %v10662, %v10614
  %v10679 = vmul.f32 %v10663, %v10617
  %v10680 = vmul.f32 %v10664, %v10622
  %v10681 = vmul.f32 %v10665, %v10625
  %v10682 = vmul.f32 %v10666, %v10630
  %v10683 = vmul.f32 %v10667, %v10633
  %v10684 = vmul.f32 %v10668, %v10574
  %v10685 = vmul.f32 %v10669, %v10577
  %v10686 = vmul.f32 %v10670, %v10582
  %v10687 = vmul.f32 %v10671, %v10585
  %v10688 = vmul.f32 %v10672, %v10590
  %v10689 = vmul.f32 %v10673, %v10593
  %v10690 = vmul.f32 %v10674, %v10598
  %v10691 = vmul.f32 %v10675, %v10601
  %v10692 = vmul.f32 %v10676, %v10606
  %v10693 = vmul.f32 %v10677, %v10609
  %v10694 = vmul.f32 %v10678, %v10614
  %v10695 = vmul.f32 %v10679, %v10617
  %v10696 = vmul.f32 %v10680, %v10622
  %v10697 = vmul.f32 %v10681, %v10625
  %v10698 = vmul.f32 %v10682, %v10630
  %v10699 = vmul.f32 %v10683, %v10633
  %v10700 = vadd.f32 %v10574, %v10684
  %v10701 = vadd.f32 %v10577, %v10685
  %v10702 = vadd.f32 %v10582, %v10686
  %v10703 = vadd.f32 %v10585, %v10687
  %v10704 = vadd.f32 %v10590, %v10688
  %v10705 = vadd.f32 %v10593, %v10689
  %v10706 = vadd.f32 %v10598, %v10690
  %v10707 = vadd.f32 %v10601, %v10691
  %v10708 = vadd.f32 %v10606, %v10692
  %v10709 = vadd.f32 %v10609, %v10693
  %v10710 = vadd.f32 %v10614, %v10694
  %v10711 = vadd.f32 %v10617, %v10695
  %v10712 = vadd.f32 %v10622, %v10696
  %v10713 = vadd.f32 %v10625, %v10697
  %v10714 = vadd.f32 %v10630, %v10698
  %v10715 = vadd.f32 %v10633, %v10699
  %v10716 = vmul.f32 %v10700, 0.7978846
  %v10717 = vmul.f32 %v10701, 0.7978846
  %v10718 = vmul.f32 %v10702, 0.7978846
  %v10719 = vmul.f32 %v10703, 0.7978846
  %v10720 = vmul.f32 %v10704, 0.7978846
  %v10721 = vmul.f32 %v10705, 0.7978846
  %v10722 = vmul.f32 %v10706, 0.7978846
  %v10723 = vmul.f32 %v10707, 0.7978846
  %v10724 = vmul.f32 %v10708, 0.7978846
  %v10725 = vmul.f32 %v10709, 0.7978846
  %v10726 = vmul.f32 %v10710, 0.7978846
  %v10727 = vmul.f32 %v10711, 0.7978846
  %v10728 = vmul.f32 %v10712, 0.7978846
  %v10729 = vmul.f32 %v10713, 0.7978846
  %v10730 = vmul.f32 %v10714, 0.7978846
  %v10731 = vmul.f32 %v10715, 0.7978846
  %v10732 = vtanh.pop %v10716
  %v10733 = vtanh.pop %v10717
  %v10734 = vtanh.pop %v10718
  %v10735 = vtanh.pop %v10719
  %v10736 = vtanh.pop %v10720
  %v10737 = vtanh.pop %v10721
  %v10738 = vtanh.pop %v10722
  %v10739 = vtanh.pop %v10723
  %v10740 = vtanh.pop %v10724
  %v10741 = vtanh.pop %v10725
  %v10742 = vtanh.pop %v10726
  %v10743 = vtanh.pop %v10727
  %v10744 = vtanh.pop %v10728
  %v10745 = vtanh.pop %v10729
  %v10746 = vtanh.pop %v10730
  %v10747 = vtanh.pop %v10731
  %v10748 = vadd.f32 %v10732, 1.0
  %v10749 = vadd.f32 %v10733, 1.0
  %v10750 = vadd.f32 %v10734, 1.0
  %v10751 = vadd.f32 %v10735, 1.0
  %v10752 = vadd.f32 %v10736, 1.0
  %v10753 = vadd.f32 %v10737, 1.0
  %v10754 = vadd.f32 %v10738, 1.0
  %v10755 = vadd.f32 %v10739, 1.0
  %v10756 = vadd.f32 %v10740, 1.0
  %v10757 = vadd.f32 %v10741, 1.0
  %v10758 = vadd.f32 %v10742, 1.0
  %v10759 = vadd.f32 %v10743, 1.0
  %v10760 = vadd.f32 %v10744, 1.0
  %v10761 = vadd.f32 %v10745, 1.0
  %v10762 = vadd.f32 %v10746, 1.0
  %v10763 = vadd.f32 %v10747, 1.0
  %v10764 = vmul.f32 %v10636, %v10748
  %v10765 = vmul.f32 %v10637, %v10749
  %v10766 = vmul.f32 %v10638, %v10750
  %v10767 = vmul.f32 %v10639, %v10751
  %v10768 = vmul.f32 %v10640, %v10752
  %v10769 = vmul.f32 %v10641, %v10753
  %v10770 = vmul.f32 %v10642, %v10754
  %v10771 = vmul.f32 %v10643, %v10755
  %v10772 = vmul.f32 %v10644, %v10756
  %v10773 = vmul.f32 %v10645, %v10757
  %v10774 = vmul.f32 %v10646, %v10758
  %v10775 = vmul.f32 %v10647, %v10759
  %v10776 = vmul.f32 %v10648, %v10760
  %v10777 = vmul.f32 %v10649, %v10761
  %v10778 = vmul.f32 %v10650, %v10762
  %v10779 = vmul.f32 %v10651, %v10763
  %v10780 = vld [vmem:[%s11] sm:$0x1]
  %v10782 = vlaneseq
  %v10783 = vshrl.u32 %v10782, 7
  %v10784 = vsub.s32 0, %v10783
  %v10785 = vrot.slane %v10780, %v10784
  %v10787 = vmul.f32 %v10764, %v10785
  %v10788 = vmul.f32 %v10765, %v10785
  %v10789 = vmul.f32 %v10766, %v10785
  %v10790 = vmul.f32 %v10767, %v10785
  %v10791 = vmul.f32 %v10768, %v10785
  %v10792 = vmul.f32 %v10769, %v10785
  %v10793 = vmul.f32 %v10770, %v10785
  %v10794 = vmul.f32 %v10771, %v10785
  %v10795 = vmul.f32 %v10772, %v10785
  %v10796 = vmul.f32 %v10773, %v10785
  %v10797 = vmul.f32 %v10774, %v10785
  %v10798 = vmul.f32 %v10775, %v10785
  %v10799 = vmul.f32 %v10776, %v10785
  %v10800 = vmul.f32 %v10777, %v10785
  %v10801 = vmul.f32 %v10778, %v10785
  %v10802 = vmul.f32 %v10779, %v10785
  %10803 = vadd.xlane.f32.xlu0 %v10787
  %v10804 = vpop.xlane.xlu0 %10803
  %10805 = vadd.xlane.f32.xlu0 %v10788
  %v10806 = vpop.xlane.xlu0 %10805
  %10807 = vadd.xlane.f32.xlu0 %v10789
  %v10808 = vpop.xlane.xlu0 %10807
  %10809 = vadd.xlane.f32.xlu0 %v10790
  %v10810 = vpop.xlane.xlu0 %10809
  %10811 = vadd.xlane.f32.xlu0 %v10791
  %v10812 = vpop.xlane.xlu0 %10811
  %10813 = vadd.xlane.f32.xlu0 %v10792
  %v10814 = vpop.xlane.xlu0 %10813
  %10815 = vadd.xlane.f32.xlu0 %v10793
  %v10816 = vpop.xlane.xlu0 %10815
  %10817 = vadd.xlane.f32.xlu0 %v10794
  %v10818 = vpop.xlane.xlu0 %10817
  %10819 = vadd.xlane.f32.xlu0 %v10795
  %v10820 = vpop.xlane.xlu0 %10819
  %10821 = vadd.xlane.f32.xlu0 %v10796
  %v10822 = vpop.xlane.xlu0 %10821
  %10823 = vadd.xlane.f32.xlu0 %v10797
  %v10824 = vpop.xlane.xlu0 %10823
  %10825 = vadd.xlane.f32.xlu0 %v10798
  %v10826 = vpop.xlane.xlu0 %10825
  %10827 = vadd.xlane.f32.xlu0 %v10799
  %v10828 = vpop.xlane.xlu0 %10827
  %10829 = vadd.xlane.f32.xlu0 %v10800
  %v10830 = vpop.xlane.xlu0 %10829
  %10831 = vadd.xlane.f32.xlu0 %v10801
  %v10832 = vpop.xlane.xlu0 %10831
  %10833 = vadd.xlane.f32.xlu0 %v10802
  %v10834 = vpop.xlane.xlu0 %10833
  %v10835 = vld [vmem:[#allocation2] sm:$0x1]
  %v10837 = vlaneseq
  %v10838 = vshrl.u32 %v10837, 7
  %v10839 = vsub.s32 0, %v10838
  %v10840 = vrot.slane %v10835, %v10839
  %v10842 = vadd.f32 %v10804, %v10840
  %v10843 = vadd.f32 %v10806, %v10840
  %v10844 = vadd.f32 %v10808, %v10840
  %v10845 = vadd.f32 %v10810, %v10840
  %v10846 = vadd.f32 %v10812, %v10840
  %v10847 = vadd.f32 %v10814, %v10840
  %v10848 = vadd.f32 %v10816, %v10840
  %v10849 = vadd.f32 %v10818, %v10840
  %v10850 = vadd.f32 %v10820, %v10840
  %v10851 = vadd.f32 %v10822, %v10840
  %v10852 = vadd.f32 %v10824, %v10840
  %v10853 = vadd.f32 %v10826, %v10840
  %v10854 = vadd.f32 %v10828, %v10840
  %v10855 = vadd.f32 %v10830, %v10840
  %v10856 = vadd.f32 %v10832, %v10840
  %v10857 = vadd.f32 %v10834, %v10840
  %vm10858 = vcmask 7168
  %10859 = vst.msk [vmem:[%s13] sm:$0xff] %vm10858, %v10842
  %10860 = vst.msk [vmem:[%s13 + $0x8] sm:$0xff] %vm10858, %v10843
  %10861 = vst.msk [vmem:[%s13 + $0x10] sm:$0xff] %vm10858, %v10844
  %10862 = vst.msk [vmem:[%s13 + $0x18] sm:$0xff] %vm10858, %v10845
  %10863 = vst.msk [vmem:[%s13 + $0x20] sm:$0xff] %vm10858, %v10846
  %10864 = vst.msk [vmem:[%s13 + $0x28] sm:$0xff] %vm10858, %v10847
  %10865 = vst.msk [vmem:[%s13 + $0x30] sm:$0xff] %vm10858, %v10848
  %10866 = vst.msk [vmem:[%s13 + $0x38] sm:$0xff] %vm10858, %v10849
  %10867 = vst.msk [vmem:[%s13 + $0x40] sm:$0xff] %vm10858, %v10850
  %10868 = vst.msk [vmem:[%s13 + $0x48] sm:$0xff] %vm10858, %v10851
  %10869 = vst.msk [vmem:[%s13 + $0x50] sm:$0xff] %vm10858, %v10852
  %10870 = vst.msk [vmem:[%s13 + $0x58] sm:$0xff] %vm10858, %v10853
  %10871 = vst.msk [vmem:[%s13 + $0x60] sm:$0xff] %vm10858, %v10854
  %10872 = vst.msk [vmem:[%s13 + $0x68] sm:$0xff] %vm10858, %v10855
  %10873 = vst.msk [vmem:[%s13 + $0x70] sm:$0xff] %vm10858, %v10856
  %10874 = vst.msk [vmem:[%s13 + $0x78] sm:$0xff] %vm10858, %v10857
  // Predicated region
  $region54: #{forward.1} parent=0 // pred_check
    _
  $region55: #{forward.1} parent=0 // pred_check_branch
    %10876 = sbr.rel (0) target = $region57
  $region56: #{forward.1} parent=0 // pred_region
    _
  $region57: #{forward.1} parent=0 // pred_fallthru
    _
  // Predicated region
  $region58: #{forward.1} parent=0 // pred_check
    _
  $region59: #{forward.1} parent=0 // pred_check_branch
    %10878 = sbr.rel (0) target = $region61
  $region60: #{forward.1} parent=0 // pred_region
    _
  $region61: #{forward.1} parent=0 // pred_fallthru
    _

</llo_original>
